<compile_context>
chip_gen: v6e
topology: v6e:2x2x1
jax: 0.10.0
libtpu: 0.0.40
codegen_flags: <defaults>
</compile_context>

<pallas_src>
import functools
import math

import jax
import jax.numpy as jnp
from jax.experimental import pallas as pl
from jax.experimental.pallas import tpu as pltpu

_MXU_DTYPE = jnp.bfloat16   # operand dtype for the big matmuls (f32 accumulate)
_ROW_TILE = 256             # target row-tile for row-wise kernels


# ----------------------------------------------------------------------------
# small helpers (static-shape glue)
# ----------------------------------------------------------------------------

def _round_up(n, m):
    return ((n + m - 1) // m) * m


def _row_tile(n, target=_ROW_TILE):
    return min(target, _round_up(n, 8))


def _pad_rows(x2d, tm):
    n = x2d.shape[0]
    npad = _round_up(n, tm)
    if npad != n:
        x2d = jnp.pad(x2d, ((0, npad - n), (0, 0)))
    return x2d, n


# ----------------------------------------------------------------------------
# Fused multi-head attention kernel (QKV proj + SDPA + out proj), grid over B
# ----------------------------------------------------------------------------

def _mha_kernel(*refs, num_heads, causal, has_kpad):
    if has_kpad:
        (xq_ref, xkv_ref, wq_ref, bq_ref, wkv_ref, bkv_ref,
         wo_ref, bo_ref, kpad_ref, o_ref) = refs
    else:
        (xq_ref, xkv_ref, wq_ref, bq_ref, wkv_ref, bkv_ref,
         wo_ref, bo_ref, o_ref) = refs
        kpad_ref = None

    d = wq_ref.shape[0]
    dh = d // num_heads
    lq = xq_ref.shape[1]
    lk = xkv_ref.shape[1]

    xq = xq_ref[0]            # (Lq, D)
    xkv = xkv_ref[0]          # (Lk, D)

    # fused projections (bf16 operands, f32 accumulate)
    q = jnp.dot(xq.astype(_MXU_DTYPE), wq_ref[...].astype(_MXU_DTYPE),
                preferred_element_type=jnp.float32) + bq_ref[...]
    kv = jnp.dot(xkv.astype(_MXU_DTYPE), wkv_ref[...].astype(_MXU_DTYPE),
                 preferred_element_type=jnp.float32) + bkv_ref[...]
    k = kv[:, :d]             # (Lk, D)
    v = kv[:, d:]             # (Lk, D)

    # additive bias (shared across heads), built in-register — never touches HBM
    neg = jnp.float32(-1e9)
    bias = None
    if has_kpad:
        bias = kpad_ref[0] * neg                       # (1, Lk), 1.0 == ignore
    if causal:
        qi = jax.lax.broadcasted_iota(jnp.int32, (lq, lk), 0)
        ki = jax.lax.broadcasted_iota(jnp.int32, (lq, lk), 1)
        cm = jnp.where(ki > qi, neg, jnp.float32(0.0))
        bias = cm if bias is None else bias + cm       # (Lq, Lk)

    scale = jnp.float32(1.0 / math.sqrt(dh))
    q = q * scale
    kT = k.T                                           # (D, Lk), single transpose

    heads = []
    for h in range(num_heads):                         # static unroll over heads
        lo, hi = h * dh, (h + 1) * dh
        qh = q[:, lo:hi]                               # (Lq, dh)
        kTh = kT[lo:hi, :]                             # (dh, Lk)
        vh = v[:, lo:hi]                               # (Lk, dh)
        s = jnp.dot(qh, kTh, preferred_element_type=jnp.float32)
        if bias is not None:
            s = s + bias
        s = s - jnp.max(s, axis=-1, keepdims=True)
        p = jnp.exp(s)
        p = p * pl.reciprocal(jnp.sum(p, axis=-1, keepdims=True), approx=True)
        heads.append(jnp.dot(p, vh, preferred_element_type=jnp.float32))

    o = jnp.concatenate(heads, axis=-1)                # (Lq, D)
    y = jnp.dot(o.astype(_MXU_DTYPE), wo_ref[...].astype(_MXU_DTYPE),
                preferred_element_type=jnp.float32) + bo_ref[...]
    o_ref[0] = y


def mha(x_q, x_kv, p, *, key_pad=None, causal=False, num_heads=8):
    """x_q: (B, Lq, D), x_kv: (B, Lk, D), key_pad: (B, Lk) bool (True=ignore)."""
    b, lq, d = x_q.shape
    lk = x_kv.shape[1]

    kernel = functools.partial(_mha_kernel, num_heads=num_heads, causal=causal,
                               has_kpad=key_pad is not None)
    in_specs = [
        pl.BlockSpec((1, lq, d), lambda i: (i, 0, 0)),      # x_q
        pl.BlockSpec((1, lk, d), lambda i: (i, 0, 0)),      # x_kv
        pl.BlockSpec((d, d), lambda i: (0, 0)),             # wq  (VMEM-resident)
        pl.BlockSpec((1, d), lambda i: (0, 0)),             # bq
        pl.BlockSpec((d, 2 * d), lambda i: (0, 0)),         # wkv
        pl.BlockSpec((1, 2 * d), lambda i: (0, 0)),         # bkv
        pl.BlockSpec((d, d), lambda i: (0, 0)),             # wo
        pl.BlockSpec((1, d), lambda i: (0, 0)),             # bo
    ]
    args = [x_q, x_kv, p["wq"], p["bq"].reshape(1, -1),
            p["wkv"], p["bkv"].reshape(1, -1),
            p["wo"], p["bo"].reshape(1, -1)]
    if key_pad is not None:
        kp = key_pad.astype(jnp.float32).reshape(b, 1, lk)
        in_specs.append(pl.BlockSpec((1, 1, lk), lambda i: (i, 0, 0)))
        args.append(kp)

    return pl.pallas_call(
        kernel,
        out_shape=jax.ShapeDtypeStruct((b, lq, d), jnp.float32),
        grid=(b,),
        in_specs=in_specs,
        out_specs=pl.BlockSpec((1, lq, d), lambda i: (i, 0, 0)),
        compiler_params=pltpu.CompilerParams(dimension_semantics=("parallel",)),
    )(*args)


# ----------------------------------------------------------------------------
# Fused FFN kernel: lin1 + ReLU + lin2, row-tiled, hidden never leaves VMEM
# ----------------------------------------------------------------------------

def _ffn_kernel(x_ref, w1_ref, b1_ref, w2_ref, b2_ref, o_ref):
    x = x_ref[...].astype(_MXU_DTYPE)
    h = jnp.dot(x, w1_ref[...].astype(_MXU_DTYPE),
                preferred_element_type=jnp.float32) + b1_ref[...]
    h = jnp.maximum(h, 0.0)
    y = jnp.dot(h.astype(_MXU_DTYPE), w2_ref[...].astype(_MXU_DTYPE),
                preferred_element_type=jnp.float32) + b2_ref[...]
    o_ref[...] = y


def ffn(x3d, p):
    b, l, d = x3d.shape
    ff = p["w1"].shape[1]
    x2d = x3d.reshape(-1, d)
    tm = _row_tile(x2d.shape[0])
    xp, n0 = _pad_rows(x2d, tm)
    out = pl.pallas_call(
        _ffn_kernel,
        out_shape=jax.ShapeDtypeStruct((xp.shape[0], d), jnp.float32),
        grid=(xp.shape[0] // tm,),
        in_specs=[
            pl.BlockSpec((tm, d), lambda i: (i, 0)),
            pl.BlockSpec((d, ff), lambda i: (0, 0)),
            pl.BlockSpec((1, ff), lambda i: (0, 0)),
            pl.BlockSpec((ff, d), lambda i: (0, 0)),
            pl.BlockSpec((1, d), lambda i: (0, 0)),
        ],
        out_specs=pl.BlockSpec((tm, d), lambda i: (i, 0)),
        compiler_params=pltpu.CompilerParams(dimension_semantics=("parallel",)),
    )(xp, p["w1"], p["b1"].reshape(1, -1), p["w2"], p["b2"].reshape(1, -1))
    return out[:n0].reshape(b, l, d)


# ----------------------------------------------------------------------------
# Fused residual-add + LayerNorm (and plain LayerNorm), row-tiled
# ----------------------------------------------------------------------------

def _add_ln_kernel(x_ref, r_ref, g_ref, b_ref, o_ref, *, eps):
    x = x_ref[...] + r_ref[...]
    mu = jnp.mean(x, axis=-1, keepdims=True)
    xc = x - mu
    var = jnp.mean(xc * xc, axis=-1, keepdims=True)
    o_ref[...] = xc * jax.lax.rsqrt(var + eps) * g_ref[...] + b_ref[...]


def _ln_kernel(x_ref, g_ref, b_ref, o_ref, *, eps):
    x = x_ref[...]
    mu = jnp.mean(x, axis=-1, keepdims=True)
    xc = x - mu
    var = jnp.mean(xc * xc, axis=-1, keepdims=True)
    o_ref[...] = xc * jax.lax.rsqrt(var + eps) * g_ref[...] + b_ref[...]


def add_ln(x3d, r3d, p, eps):
    b, l, d = x3d.shape
    x2d = x3d.reshape(-1, d)
    r2d = r3d.reshape(-1, d)
    tm = _row_tile(x2d.shape[0])
    xp, n0 = _pad_rows(x2d, tm)
    rp, _ = _pad_rows(r2d, tm)
    out = pl.pallas_call(
        functools.partial(_add_ln_kernel, eps=eps),
        out_shape=jax.ShapeDtypeStruct((xp.shape[0], d), jnp.float32),
        grid=(xp.shape[0] // tm,),
        in_specs=[
            pl.BlockSpec((tm, d), lambda i: (i, 0)),
            pl.BlockSpec((tm, d), lambda i: (i, 0)),
            pl.BlockSpec((1, d), lambda i: (0, 0)),
            pl.BlockSpec((1, d), lambda i: (0, 0)),
        ],
        out_specs=pl.BlockSpec((tm, d), lambda i: (i, 0)),
        compiler_params=pltpu.CompilerParams(dimension_semantics=("parallel",)),
    )(xp, rp, p["g"].reshape(1, -1), p["b"].reshape(1, -1))
    return out[:n0].reshape(b, l, d)


def layer_norm(x3d, p, eps):
    b, l, d = x3d.shape
    x2d = x3d.reshape(-1, d)
    tm = _row_tile(x2d.shape[0])
    xp, n0 = _pad_rows(x2d, tm)
    out = pl.pallas_call(
        functools.partial(_ln_kernel, eps=eps),
        out_shape=jax.ShapeDtypeStruct((xp.shape[0], d), jnp.float32),
        grid=(xp.shape[0] // tm,),
        in_specs=[
            pl.BlockSpec((tm, d), lambda i: (i, 0)),
            pl.BlockSpec((1, d), lambda i: (0, 0)),
            pl.BlockSpec((1, d), lambda i: (0, 0)),
        ],
        out_specs=pl.BlockSpec((tm, d), lambda i: (i, 0)),
        compiler_params=pltpu.CompilerParams(dimension_semantics=("parallel",)),
    )(xp, p["g"].reshape(1, -1), p["b"].reshape(1, -1))
    return out[:n0].reshape(b, l, d)


# ----------------------------------------------------------------------------
# Fused generator linear + log_softmax, row-tiled (logits never hit HBM)
# ----------------------------------------------------------------------------

def _gen_logsoftmax_kernel(x_ref, w_ref, b_ref, o_ref):
    x = x_ref[...].astype(_MXU_DTYPE)
    logits = jnp.dot(x, w_ref[...].astype(_MXU_DTYPE),
                     preferred_element_type=jnp.float32) + b_ref[...]
    m = jnp.max(logits, axis=-1, keepdims=True)
    z = logits - m
    lse = jnp.log(jnp.sum(jnp.exp(z), axis=-1, keepdims=True))
    o_ref[...] = z - lse


def generator_log_softmax(y3d, w, bvec):
    # NOTE: vocab is kept as one lane-dense block (REINVENT SMILES vocabs are
    # small); for very large vocabs this would be tiled with an online LSE.
    b, t, d = y3d.shape
    vocab = w.shape[1]
    x2d = y3d.reshape(-1, d)
    tm = _row_tile(x2d.shape[0])
    xp, n0 = _pad_rows(x2d, tm)
    out = pl.pallas_call(
        _gen_logsoftmax_kernel,
        out_shape=jax.ShapeDtypeStruct((xp.shape[0], vocab), jnp.float32),
        grid=(xp.shape[0] // tm,),
        in_specs=[
            pl.BlockSpec((tm, d), lambda i: (i, 0)),
            pl.BlockSpec((d, vocab), lambda i: (0, 0)),
            pl.BlockSpec((1, vocab), lambda i: (0, 0)),
        ],
        out_specs=pl.BlockSpec((tm, vocab), lambda i: (i, 0)),
        compiler_params=pltpu.CompilerParams(dimension_semantics=("parallel",)),
    )(xp, w, bvec.reshape(1, -1))
    return out[:n0].reshape(b, t, vocab)


# ----------------------------------------------------------------------------
# Model glue (plain JAX): embeddings, positional encoding, layer composition
# ----------------------------------------------------------------------------

def positional_encoding(max_len, d_model):
    pos = jnp.arange(max_len, dtype=jnp.float32)[:, None]
    div = jnp.exp(jnp.arange(0, d_model, 2, dtype=jnp.float32)
                  * -(math.log(10000.0) / d_model))
    pe = jnp.zeros((max_len, d_model), jnp.float32)
    pe = pe.at[:, 0::2].set(jnp.sin(pos * div))
    pe = pe.at[:, 1::2].set(jnp.cos(pos * div))
    return pe


def encoder_layer(p, x, src_mask, num_heads, eps):
    # torch default: post-norm (norm_first=False)
    a = mha(x, x, p["self_attn"], key_pad=src_mask, causal=False, num_heads=num_heads)
    x = add_ln(x, a, p["ln1"], eps)
    f = ffn(x, p["ffn"])
    x = add_ln(x, f, p["ln2"], eps)
    return x


def decoder_layer(p, y, memory, trg_mask, num_heads, eps):
    a = mha(y, y, p["self_attn"], key_pad=trg_mask, causal=True, num_heads=num_heads)
    y = add_ln(y, a, p["ln1"], eps)
    # reference passes no memory_mask / memory_key_padding_mask to the decoder,
    # so cross-attention is unmasked (matches torch.nn.Transformer call above).
    c = mha(y, memory, p["cross_attn"], key_pad=None, causal=False, num_heads=num_heads)
    y = add_ln(y, c, p["ln2"], eps)
    f = ffn(y, p["ffn"])
    y = add_ln(y, f, p["ln3"], eps)
    return y


def one2one_forward(params, src, src_mask, trg, trg_mask, *, num_heads, eps):
    """Mirrors _One2One.forward (dropout = identity, eval semantics)."""
    b, s = src.shape
    t = trg.shape[1]
    pe = params["pe"]

    # TODO(synk): token-embedding gather + PE add stay in XLA (a Pallas DMA-gather
    # kernel is possible but not worthwhile at these sizes).
    src_emb = params["token_emb"][src] + pe[None, :s, :]
    trg_emb = params["token_emb"][trg] + pe[None, :t, :]

    x = src_emb
    for lp in params["encoder_layers"]:
        x = encoder_layer(lp, x, src_mask, num_heads, eps)
    memory = layer_norm(x, params["encoder_norm"], eps)

    y = trg_emb
    for lp in params["decoder_layers"]:
        y = decoder_layer(lp, y, memory, trg_mask, num_heads, eps)
    y = layer_norm(y, params["decoder_norm"], eps)

    return generator_log_softmax(y, params["gen"]["w"], params["gen"]["b"])


# ----------------------------------------------------------------------------
# Deterministic parameter init (synthetic weights; shapes from __init__)
# ----------------------------------------------------------------------------

def _ln_init(d):
    return {"g": jnp.ones((d,), jnp.float32), "b": jnp.zeros((d,), jnp.float32)}


def _mha_init(key, d, scale=0.02):
    ks = jax.random.split(key, 3)
    return {
        "wq": jax.random.normal(ks[0], (d, d), jnp.float32) * scale,
        "bq": jnp.zeros((d,), jnp.float32),
        "wkv": jax.random.normal(ks[1], (d, 2 * d), jnp.float32) * scale,
        "bkv": jnp.zeros((2 * d,), jnp.float32),
        "wo": jax.random.normal(ks[2], (d, d), jnp.float32) * scale,
        "bo": jnp.zeros((d,), jnp.float32),
    }


def _ffn_init(key, d, ff, scale=0.02):
    k1, k2 = jax.random.split(key)
    return {
        "w1": jax.random.normal(k1, (d, ff), jnp.float32) * scale,
        "b1": jnp.zeros((ff,), jnp.float32),
        "w2": jax.random.normal(k2, (ff, d), jnp.float32) * scale,
        "b2": jnp.zeros((d,), jnp.float32),
    }


def _enc_layer_init(key, d, ff):
    k1, k2 = jax.random.split(key)
    return {"self_attn": _mha_init(k1, d), "ffn": _ffn_init(k2, d, ff),
            "ln1": _ln_init(d), "ln2": _ln_init(d)}


def _dec_layer_init(key, d, ff):
    k1, k2, k3 = jax.random.split(key, 3)
    return {"self_attn": _mha_init(k1, d), "cross_attn": _mha_init(k2, d),
            "ffn": _ffn_init(k3, d, ff),
            "ln1": _ln_init(d), "ln2": _ln_init(d), "ln3": _ln_init(d)}


def init_one2one(key, *, vocabulary_size, d_model, num_layers, dim_feedforward,
                 max_len=64):
    ks = jax.random.split(key, 2 * num_layers + 2)
    return {
        "token_emb": jax.random.normal(ks[0], (vocabulary_size, d_model),
                                       jnp.float32) * 0.02,
        "pe": positional_encoding(max_len, d_model),
        "encoder_layers": [_enc_layer_init(ks[1 + i], d_model, dim_feedforward)
                           for i in range(num_layers)],
        "decoder_layers": [_dec_layer_init(ks[1 + num_layers + i], d_model,
                                           dim_feedforward)
                           for i in range(num_layers)],
        "encoder_norm": _ln_init(d_model),
        "decoder_norm": _ln_init(d_model),
        "gen": {"w": jax.random.normal(ks[-1], (d_model, vocabulary_size),
                                       jnp.float32) * 0.02,
                "b": jnp.zeros((vocabulary_size,), jnp.float32)},
    }


# ----------------------------------------------------------------------------
# Demo
# ----------------------------------------------------------------------------

if __name__ == "__main__":
    VOCAB = 128
    D_MODEL = 128
    NUM_HEADS = 8
    NUM_LAYERS = 2
    DIM_FF = 256
    EPS = 1e-6
    B, S, T = 2, 8, 8

    key = jax.random.PRNGKey(0)
    kp, ks, kt = jax.random.split(key, 3)

    params = init_one2one(kp, vocabulary_size=VOCAB, d_model=D_MODEL,
                          num_layers=NUM_LAYERS, dim_feedforward=DIM_FF)

    src = jax.random.randint(ks, (B, S), 1, VOCAB, dtype=jnp.int32)
    trg = jax.random.randint(kt, (B, T), 1, VOCAB, dtype=jnp.int32)
    # padding (token 0) to exercise the padding masks
    src = src.at[0, -2:].set(0)
    trg = trg.at[1, -3:].set(0)
    src_mask = src == 0
    trg_mask = trg == 0

    fwd = jax.jit(functools.partial(one2one_forward,
                                    num_heads=NUM_HEADS, eps=EPS))
    out = fwd(params, src, src_mask, trg, trg_mask)
    out = jax.block_until_ready(out)

    assert out.shape == (B, T, VOCAB), out.shape
    assert bool(jnp.all(jnp.isfinite(out)))
    # log-probabilities: rows must (approximately) exp-sum to 1
    row_sums = jnp.sum(jnp.exp(out), axis=-1)
    assert bool(jnp.all(jnp.abs(row_sums - 1.0) < 1e-3))

    print("KERNEL_OK")
</pallas_src>

<mosaic_0001>
module attributes {stable_mosaic.version = 11 : i64} {
  func.func @_add_ln_kernel(%arg0: i32, %arg1: memref<16x128xf32, #tpu.memory_space<vmem>>, %arg2: memref<16x128xf32, #tpu.memory_space<vmem>>, %arg3: memref<1x128xf32, #tpu.memory_space<vmem>>, %arg4: memref<1x128xf32, #tpu.memory_space<vmem>>, %arg5: memref<16x128xf32, #tpu.memory_space<vmem>>) attributes {dimension_semantics = [#tpu.dimension_semantics<parallel>], iteration_bounds = array<i64: 1>, scalar_prefetch = 0 : i64, scratch_operands = 0 : i64, tpu.core_type = #tpu.core_type<tc>, window_params = [{transform_indices = @transform_0, window_bounds = array<i64: 16, 128>}, {transform_indices = @transform_1, window_bounds = array<i64: 16, 128>}, {pipeline_mode = #tpu.pipeline_mode<synchronous>, transform_indices = @transform_2, window_bounds = array<i64: 1, 128>}, {pipeline_mode = #tpu.pipeline_mode<synchronous>, transform_indices = @transform_3, window_bounds = array<i64: 1, 128>}, {transform_indices = @transform_4, window_bounds = array<i64: 16, 128>}]} {
    %c0 = arith.constant 0 : index
    %c0_0 = arith.constant 0 : index
    %0 = vector.load %arg1[%c0, %c0_0] : memref<16x128xf32, #tpu.memory_space<vmem>>, vector<16x128xf32>
    %c0_1 = arith.constant 0 : index
    %c0_2 = arith.constant 0 : index
    %1 = vector.load %arg2[%c0_1, %c0_2] : memref<16x128xf32, #tpu.memory_space<vmem>>, vector<16x128xf32>
    %2 = arith.addf %0, %1 : vector<16x128xf32>
    %cst = arith.constant dense<0.000000e+00> : vector<16xf32>
    %3 = vector.multi_reduction <add>, %2, %cst [1] : vector<16x128xf32> to vector<16xf32>
    %4 = vector.shape_cast %3 : vector<16xf32> to vector<16x1xf32>
    %cst_3 = arith.constant 1.280000e+02 : f32
    %5 = vector.broadcast %cst_3 : f32 to vector<16x1xf32>
    %6 = arith.divf %4, %5 : vector<16x1xf32>
    %7 = vector.broadcast %6 : vector<16x1xf32> to vector<16x128xf32>
    %8 = arith.subf %2, %7 : vector<16x128xf32>
    %9 = arith.mulf %8, %8 : vector<16x128xf32>
    %cst_4 = arith.constant dense<0.000000e+00> : vector<16xf32>
    %10 = vector.multi_reduction <add>, %9, %cst_4 [1] : vector<16x128xf32> to vector<16xf32>
    %11 = vector.shape_cast %10 : vector<16xf32> to vector<16x1xf32>
    %cst_5 = arith.constant 1.280000e+02 : f32
    %12 = vector.broadcast %cst_5 : f32 to vector<16x1xf32>
    %13 = arith.divf %11, %12 : vector<16x1xf32>
    %cst_6 = arith.constant 9.99999997E-7 : f32
    %14 = vector.broadcast %cst_6 : f32 to vector<16x1xf32>
    %15 = arith.addf %13, %14 : vector<16x1xf32>
    %16 = math.rsqrt %15 : vector<16x1xf32>
    %17 = vector.broadcast %16 : vector<16x1xf32> to vector<16x128xf32>
    %18 = arith.mulf %8, %17 : vector<16x128xf32>
    %c0_7 = arith.constant 0 : index
    %c0_8 = arith.constant 0 : index
    %19 = vector.load %arg3[%c0_7, %c0_8] : memref<1x128xf32, #tpu.memory_space<vmem>>, vector<1x128xf32>
    %20 = vector.broadcast %19 : vector<1x128xf32> to vector<16x128xf32>
    %21 = arith.mulf %18, %20 : vector<16x128xf32>
    %c0_9 = arith.constant 0 : index
    %c0_10 = arith.constant 0 : index
    %22 = vector.load %arg4[%c0_9, %c0_10] : memref<1x128xf32, #tpu.memory_space<vmem>>, vector<1x128xf32>
    %23 = vector.broadcast %22 : vector<1x128xf32> to vector<16x128xf32>
    %24 = arith.addf %21, %23 : vector<16x128xf32>
    %c0_11 = arith.constant 0 : index
    %c0_12 = arith.constant 0 : index
    %25 = vector.load %arg5[%c0_11, %c0_12] : memref<16x128xf32, #tpu.memory_space<vmem>>, vector<16x128xf32>
    tpu.vector_store %arg5[%c0_11, %c0_12], %24 {strides = array<i32>} : memref<16x128xf32, #tpu.memory_space<vmem>>, vector<16x128xf32>,
    return
  }
  func.func @transform_0(%arg0: i32) -> (i32, i32) {
    %c0_i32 = arith.constant 0 : i32
    %c0_i32_0 = arith.constant 0 : i32
    return %arg0, %c0_i32 : i32, i32
  }
  func.func @transform_1(%arg0: i32) -> (i32, i32) {
    %c0_i32 = arith.constant 0 : i32
    %c0_i32_0 = arith.constant 0 : i32
    return %arg0, %c0_i32 : i32, i32
  }
  func.func @transform_2(%arg0: i32) -> (i32, i32) {
    %c0_i32 = arith.constant 0 : i32
    %c0_i32_0 = arith.constant 0 : i32
    %c0_i32_1 = arith.constant 0 : i32
    return %c0_i32, %c0_i32_0 : i32, i32
  }
  func.func @transform_3(%arg0: i32) -> (i32, i32) {
    %c0_i32 = arith.constant 0 : i32
    %c0_i32_0 = arith.constant 0 : i32
    %c0_i32_1 = arith.constant 0 : i32
    return %c0_i32, %c0_i32_0 : i32, i32
  }
  func.func @transform_4(%arg0: i32) -> (i32, i32) {
    %c0_i32 = arith.constant 0 : i32
    %c0_i32_0 = arith.constant 0 : i32
    return %arg0, %c0_i32 : i32, i32
  }
}

module attributes {stable_mosaic.version = 11 : i64} {
  func.func @_mha_kernel(%arg0: i32, %arg1: memref<1x8x128xf32, #tpu.memory_space<vmem>>, %arg2: memref<1x8x128xf32, #tpu.memory_space<vmem>>, %arg3: memref<128x128xf32, #tpu.memory_space<vmem>>, %arg4: memref<1x128xf32, #tpu.memory_space<vmem>>, %arg5: memref<128x256xf32, #tpu.memory_space<vmem>>, %arg6: memref<1x256xf32, #tpu.memory_space<vmem>>, %arg7: memref<128x128xf32, #tpu.memory_space<vmem>>, %arg8: memref<1x128xf32, #tpu.memory_space<vmem>>, %arg9: memref<1x1x8xf32, #tpu.memory_space<vmem>>, %arg10: memref<1x8x128xf32, #tpu.memory_space<vmem>>) attributes {dimension_semantics = [#tpu.dimension_semantics<parallel>], iteration_bounds = array<i64: 2>, scalar_prefetch = 0 : i64, scratch_operands = 0 : i64, tpu.core_type = #tpu.core_type<tc>, window_params = [{transform_indices = @transform_0, window_bounds = array<i64: 1, 8, 128>}, {transform_indices = @transform_1, window_bounds = array<i64: 1, 8, 128>}, {pipeline_mode = #tpu.pipeline_mode<synchronous>, transform_indices = @transform_2, window_bounds = array<i64: 128, 128>}, {pipeline_mode = #tpu.pipeline_mode<synchronous>, transform_indices = @transform_3, window_bounds = array<i64: 1, 128>}, {pipeline_mode = #tpu.pipeline_mode<synchronous>, transform_indices = @transform_4, window_bounds = array<i64: 128, 256>}, {pipeline_mode = #tpu.pipeline_mode<synchronous>, transform_indices = @transform_5, window_bounds = array<i64: 1, 256>}, {pipeline_mode = #tpu.pipeline_mode<synchronous>, transform_indices = @transform_6, window_bounds = array<i64: 128, 128>}, {pipeline_mode = #tpu.pipeline_mode<synchronous>, transform_indices = @transform_7, window_bounds = array<i64: 1, 128>}, {transform_indices = @transform_8, window_bounds = array<i64: 1, 1, 8>}, {transform_indices = @transform_9, window_bounds = array<i64: 1, 8, 128>}]} {
    %c0 = arith.constant 0 : index
    %c0_0 = arith.constant 0 : index
    %c0_1 = arith.constant 0 : index
    %0 = vector.load %arg1[%c0, %c0_0, %c0_1] : memref<1x8x128xf32, #tpu.memory_space<vmem>>, vector<1x8x128xf32>
    %1 = vector.shape_cast %0 : vector<1x8x128xf32> to vector<8x128xf32>
    %c0_2 = arith.constant 0 : index
    %c0_3 = arith.constant 0 : index
    %c0_4 = arith.constant 0 : index
    %2 = vector.load %arg2[%c0_2, %c0_3, %c0_4] : memref<1x8x128xf32, #tpu.memory_space<vmem>>, vector<1x8x128xf32>
    %3 = vector.shape_cast %2 : vector<1x8x128xf32> to vector<8x128xf32>
    %4 = arith.truncf %1 : vector<8x128xf32> to vector<8x128xbf16>
    %c0_5 = arith.constant 0 : index
    %c0_6 = arith.constant 0 : index
    %5 = vector.load %arg3[%c0_5, %c0_6] : memref<128x128xf32, #tpu.memory_space<vmem>>, vector<128x128xf32>
    %6 = arith.truncf %5 : vector<128x128xf32> to vector<128x128xbf16>
    %cst = arith.constant dense<0.000000e+00> : vector<8x128xf32>
    %7 = tpu.matmul %4, %6, %cst {dimension_numbers = #tpu.dot_dimension_numbers<[1], [0], [0], [1], [0, 0, 1, 1], [], []>} : vector<8x128xbf16>, vector<128x128xbf16>, vector<8x128xf32> -> vector<8x128xf32>
    %c0_7 = arith.constant 0 : index
    %c0_8 = arith.constant 0 : index
    %8 = vector.load %arg4[%c0_7, %c0_8] : memref<1x128xf32, #tpu.memory_space<vmem>>, vector<1x128xf32>
    %9 = vector.broadcast %8 : vector<1x128xf32> to vector<8x128xf32>
    %10 = arith.addf %7, %9 : vector<8x128xf32>
    %11 = arith.truncf %3 : vector<8x128xf32> to vector<8x128xbf16>
    %c0_9 = arith.constant 0 : index
    %c0_10 = arith.constant 0 : index
    %12 = vector.load %arg5[%c0_9, %c0_10] : memref<128x256xf32, #tpu.memory_space<vmem>>, vector<128x256xf32>
    %13 = arith.truncf %12 : vector<128x256xf32> to vector<128x256xbf16>
    %cst_11 = arith.constant dense<0.000000e+00> : vector<8x256xf32>
    %14 = tpu.matmul %11, %13, %cst_11 {dimension_numbers = #tpu.dot_dimension_numbers<[1], [0], [0], [1], [0, 0, 1, 1], [], []>} : vector<8x128xbf16>, vector<128x256xbf16>, vector<8x256xf32> -> vector<8x256xf32>
    %c0_12 = arith.constant 0 : index
    %c0_13 = arith.constant 0 : index
    %15 = vector.load %arg6[%c0_12, %c0_13] : memref<1x256xf32, #tpu.memory_space<vmem>>, vector<1x256xf32>
    %16 = vector.broadcast %15 : vector<1x256xf32> to vector<8x256xf32>
    %17 = arith.addf %14, %16 : vector<8x256xf32>
    %18 = vector.extract_strided_slice %17 {offsets = [0, 0], sizes = [8, 128], strides = [1, 1]} : vector<8x256xf32> to vector<8x128xf32>
    %19 = vector.extract_strided_slice %17 {offsets = [0, 128], sizes = [8, 128], strides = [1, 1]} : vector<8x256xf32> to vector<8x128xf32>
    %c0_14 = arith.constant 0 : index
    %c0_15 = arith.constant 0 : index
    %c0_16 = arith.constant 0 : index
    %20 = vector.load %arg9[%c0_14, %c0_15, %c0_16] : memref<1x1x8xf32, #tpu.memory_space<vmem>>, vector<1x1x8xf32>
    %21 = vector.shape_cast %20 : vector<1x1x8xf32> to vector<1x8xf32>
    %cst_17 = arith.constant -1.000000e+09 : f32
    %22 = vector.broadcast %cst_17 : f32 to vector<1x8xf32>
    %23 = arith.mulf %21, %22 : vector<1x8xf32>
    %cst_18 = arith.constant 2.500000e-01 : f32
    %24 = vector.broadcast %cst_18 : f32 to vector<8x128xf32>
    %25 = arith.mulf %10, %24 : vector<8x128xf32>
    %26 = tpu.transpose %18, [1, 0] : vector<8x128xf32> -> vector<128x8xf32>
    %27 = vector.extract_strided_slice %25 {offsets = [0, 0], sizes = [8, 16], strides = [1, 1]} : vector<8x128xf32> to vector<8x16xf32>
    %28 = vector.extract_strided_slice %26 {offsets = [0, 0], sizes = [16, 8], strides = [1, 1]} : vector<128x8xf32> to vector<16x8xf32>
    %29 = vector.extract_strided_slice %19 {offsets = [0, 0], sizes = [8, 16], strides = [1, 1]} : vector<8x128xf32> to vector<8x16xf32>
    %cst_19 = arith.constant dense<0.000000e+00> : vector<8x8xf32>
    %30 = tpu.matmul %27, %28, %cst_19 {dimension_numbers = #tpu.dot_dimension_numbers<[1], [0], [0], [1], [0, 0, 1, 1], [], []>} : vector<8x16xf32>, vector<16x8xf32>, vector<8x8xf32> -> vector<8x8xf32>
    %31 = vector.broadcast %23 : vector<1x8xf32> to vector<8x8xf32>
    %32 = arith.addf %30, %31 : vector<8x8xf32>
    %cst_20 = arith.constant dense<0xFF800000> : vector<8xf32>
    %33 = vector.multi_reduction <maximumf>, %32, %cst_20 [1] : vector<8x8xf32> to vector<8xf32>
    %34 = vector.shape_cast %33 : vector<8xf32> to vector<8x1xf32>
    %35 = vector.broadcast %34 : vector<8x1xf32> to vector<8x8xf32>
    %36 = arith.subf %32, %35 : vector<8x8xf32>
    %37 = math.exp %36 : vector<8x8xf32>
    %cst_21 = arith.constant dense<0.000000e+00> : vector<8xf32>
    %38 = vector.multi_reduction <add>, %37, %cst_21 [1] : vector<8x8xf32> to vector<8xf32>
    %39 = vector.shape_cast %38 : vector<8xf32> to vector<8x1xf32>
    %40 = tpu.reciprocal %39 {approx = true} : vector<8x1xf32> -> vector<8x1xf32>
    %41 = vector.broadcast %40 : vector<8x1xf32> to vector<8x8xf32>
    %42 = arith.mulf %37, %41 : vector<8x8xf32>
    %cst_22 = arith.constant dense<0.000000e+00> : vector<8x16xf32>
    %43 = tpu.matmul %42, %29, %cst_22 {dimension_numbers = #tpu.dot_dimension_numbers<[1], [0], [0], [1], [0, 0, 1, 1], [], []>} : vector<8x8xf32>, vector<8x16xf32>, vector<8x16xf32> -> vector<8x16xf32>
    %44 = vector.extract_strided_slice %25 {offsets = [0, 16], sizes = [8, 16], strides = [1, 1]} : vector<8x128xf32> to vector<8x16xf32>
    %45 = vector.extract_strided_slice %26 {offsets = [16, 0], sizes = [16, 8], strides = [1, 1]} : vector<128x8xf32> to vector<16x8xf32>
    %46 = vector.extract_strided_slice %19 {offsets = [0, 16], sizes = [8, 16], strides = [1, 1]} : vector<8x128xf32> to vector<8x16xf32>
    %cst_23 = arith.constant dense<0.000000e+00> : vector<8x8xf32>
    %47 = tpu.matmul %44, %45, %cst_23 {dimension_numbers = #tpu.dot_dimension_numbers<[1], [0], [0], [1], [0, 0, 1, 1], [], []>} : vector<8x16xf32>, vector<16x8xf32>, vector<8x8xf32> -> vector<8x8xf32>
    %48 = vector.broadcast %23 : vector<1x8xf32> to vector<8x8xf32>
    %49 = arith.addf %47, %48 : vector<8x8xf32>
    %cst_24 = arith.constant dense<0xFF800000> : vector<8xf32>
    %50 = vector.multi_reduction <maximumf>, %49, %cst_24 [1] : vector<8x8xf32> to vector<8xf32>
    %51 = vector.shape_cast %50 : vector<8xf32> to vector<8x1xf32>
    %52 = vector.broadcast %51 : vector<8x1xf32> to vector<8x8xf32>
    %53 = arith.subf %49, %52 : vector<8x8xf32>
    %54 = math.exp %53 : vector<8x8xf32>
    %cst_25 = arith.constant dense<0.000000e+00> : vector<8xf32>
    %55 = vector.multi_reduction <add>, %54, %cst_25 [1] : vector<8x8xf32> to vector<8xf32>
    %56 = vector.shape_cast %55 : vector<8xf32> to vector<8x1xf32>
    %57 = tpu.reciprocal %56 {approx = true} : vector<8x1xf32> -> vector<8x1xf32>
    %58 = vector.broadcast %57 : vector<8x1xf32> to vector<8x8xf32>
    %59 = arith.mulf %54, %58 : vector<8x8xf32>
    %cst_26 = arith.constant dense<0.000000e+00> : vector<8x16xf32>
    %60 = tpu.matmul %59, %46, %cst_26 {dimension_numbers = #tpu.dot_dimension_numbers<[1], [0], [0], [1], [0, 0, 1, 1], [], []>} : vector<8x8xf32>, vector<8x16xf32>, vector<8x16xf32> -> vector<8x16xf32>
    %61 = vector.extract_strided_slice %25 {offsets = [0, 32], sizes = [8, 16], strides = [1, 1]} : vector<8x128xf32> to vector<8x16xf32>
    %62 = vector.extract_strided_slice %26 {offsets = [32, 0], sizes = [16, 8], strides = [1, 1]} : vector<128x8xf32> to vector<16x8xf32>
    %63 = vector.extract_strided_slice %19 {offsets = [0, 32], sizes = [8, 16], strides = [1, 1]} : vector<8x128xf32> to vector<8x16xf32>
    %cst_27 = arith.constant dense<0.000000e+00> : vector<8x8xf32>
    %64 = tpu.matmul %61, %62, %cst_27 {dimension_numbers = #tpu.dot_dimension_numbers<[1], [0], [0], [1], [0, 0, 1, 1], [], []>} : vector<8x16xf32>, vector<16x8xf32>, vector<8x8xf32> -> vector<8x8xf32>
    %65 = vector.broadcast %23 : vector<1x8xf32> to vector<8x8xf32>
    %66 = arith.addf %64, %65 : vector<8x8xf32>
    %cst_28 = arith.constant dense<0xFF800000> : vector<8xf32>
    %67 = vector.multi_reduction <maximumf>, %66, %cst_28 [1] : vector<8x8xf32> to vector<8xf32>
    %68 = vector.shape_cast %67 : vector<8xf32> to vector<8x1xf32>
    %69 = vector.broadcast %68 : vector<8x1xf32> to vector<8x8xf32>
    %70 = arith.subf %66, %69 : vector<8x8xf32>
    %71 = math.exp %70 : vector<8x8xf32>
    %cst_29 = arith.constant dense<0.000000e+00> : vector<8xf32>
    %72 = vector.multi_reduction <add>, %71, %cst_29 [1] : vector<8x8xf32> to vector<8xf32>
    %73 = vector.shape_cast %72 : vector<8xf32> to vector<8x1xf32>
    %74 = tpu.reciprocal %73 {approx = true} : vector<8x1xf32> -> vector<8x1xf32>
    %75 = vector.broadcast %74 : vector<8x1xf32> to vector<8x8xf32>
    %76 = arith.mulf %71, %75 : vector<8x8xf32>
    %cst_30 = arith.constant dense<0.000000e+00> : vector<8x16xf32>
    %77 = tpu.matmul %76, %63, %cst_30 {dimension_numbers = #tpu.dot_dimension_numbers<[1], [0], [0], [1], [0, 0, 1, 1], [], []>} : vector<8x8xf32>, vector<8x16xf32>, vector<8x16xf32> -> vector<8x16xf32>
    %78 = vector.extract_strided_slice %25 {offsets = [0, 48], sizes = [8, 16], strides = [1, 1]} : vector<8x128xf32> to vector<8x16xf32>
    %79 = vector.extract_strided_slice %26 {offsets = [48, 0], sizes = [16, 8], strides = [1, 1]} : vector<128x8xf32> to vector<16x8xf32>
    %80 = vector.extract_strided_slice %19 {offsets = [0, 48], sizes = [8, 16], strides = [1, 1]} : vector<8x128xf32> to vector<8x16xf32>
    %cst_31 = arith.constant dense<0.000000e+00> : vector<8x8xf32>
    %81 = tpu.matmul %78, %79, %cst_31 {dimension_numbers = #tpu.dot_dimension_numbers<[1], [0], [0], [1], [0, 0, 1, 1], [], []>} : vector<8x16xf32>, vector<16x8xf32>, vector<8x8xf32> -> vector<8x8xf32>
    %82 = vector.broadcast %23 : vector<1x8xf32> to vector<8x8xf32>
    %83 = arith.addf %81, %82 : vector<8x8xf32>
    %cst_32 = arith.constant dense<0xFF800000> : vector<8xf32>
    %84 = vector.multi_reduction <maximumf>, %83, %cst_32 [1] : vector<8x8xf32> to vector<8xf32>
    %85 = vector.shape_cast %84 : vector<8xf32> to vector<8x1xf32>
    %86 = vector.broadcast %85 : vector<8x1xf32> to vector<8x8xf32>
    %87 = arith.subf %83, %86 : vector<8x8xf32>
    %88 = math.exp %87 : vector<8x8xf32>
    %cst_33 = arith.constant dense<0.000000e+00> : vector<8xf32>
    %89 = vector.multi_reduction <add>, %88, %cst_33 [1] : vector<8x8xf32> to vector<8xf32>
    %90 = vector.shape_cast %89 : vector<8xf32> to vector<8x1xf32>
    %91 = tpu.reciprocal %90 {approx = true} : vector<8x1xf32> -> vector<8x1xf32>
    %92 = vector.broadcast %91 : vector<8x1xf32> to vector<8x8xf32>
    %93 = arith.mulf %88, %92 : vector<8x8xf32>
    %cst_34 = arith.constant dense<0.000000e+00> : vector<8x16xf32>
    %94 = tpu.matmul %93, %80, %cst_34 {dimension_numbers = #tpu.dot_dimension_numbers<[1], [0], [0], [1], [0, 0, 1, 1], [], []>} : vector<8x8xf32>, vector<8x16xf32>, vector<8x16xf32> -> vector<8x16xf32>
    %95 = vector.extract_strided_slice %25 {offsets = [0, 64], sizes = [8, 16], strides = [1, 1]} : vector<8x128xf32> to vector<8x16xf32>
    %96 = vector.extract_strided_slice %26 {offsets = [64, 0], sizes = [16, 8], strides = [1, 1]} : vector<128x8xf32> to vector<16x8xf32>
    %97 = vector.extract_strided_slice %19 {offsets = [0, 64], sizes = [8, 16], strides = [1, 1]} : vector<8x128xf32> to vector<8x16xf32>
    %cst_35 = arith.constant dense<0.000000e+00> : vector<8x8xf32>
    %98 = tpu.matmul %95, %96, %cst_35 {dimension_numbers = #tpu.dot_dimension_numbers<[1], [0], [0], [1], [0, 0, 1, 1], [], []>} : vector<8x16xf32>, vector<16x8xf32>, vector<8x8xf32> -> vector<8x8xf32>
    %99 = vector.broadcast %23 : vector<1x8xf32> to vector<8x8xf32>
    %100 = arith.addf %98, %99 : vector<8x8xf32>
    %cst_36 = arith.constant dense<0xFF800000> : vector<8xf32>
    %101 = vector.multi_reduction <maximumf>, %100, %cst_36 [1] : vector<8x8xf32> to vector<8xf32>
    %102 = vector.shape_cast %101 : vector<8xf32> to vector<8x1xf32>
    %103 = vector.broadcast %102 : vector<8x1xf32> to vector<8x8xf32>
    %104 = arith.subf %100, %103 : vector<8x8xf32>
    %105 = math.exp %104 : vector<8x8xf32>
    %cst_37 = arith.constant dense<0.000000e+00> : vector<8xf32>
    %106 = vector.multi_reduction <add>, %105, %cst_37 [1] : vector<8x8xf32> to vector<8xf32>
    %107 = vector.shape_cast %106 : vector<8xf32> to vector<8x1xf32>
    %108 = tpu.reciprocal %107 {approx = true} : vector<8x1xf32> -> vector<8x1xf32>
    %109 = vector.broadcast %108 : vector<8x1xf32> to vector<8x8xf32>
    %110 = arith.mulf %105, %109 : vector<8x8xf32>
    %cst_38 = arith.constant dense<0.000000e+00> : vector<8x16xf32>
    %111 = tpu.matmul %110, %97, %cst_38 {dimension_numbers = #tpu.dot_dimension_numbers<[1], [0], [0], [1], [0, 0, 1, 1], [], []>} : vector<8x8xf32>, vector<8x16xf32>, vector<8x16xf32> -> vector<8x16xf32>
    %112 = vector.extract_strided_slice %25 {offsets = [0, 80], sizes = [8, 16], strides = [1, 1]} : vector<8x128xf32> to vector<8x16xf32>
    %113 = vector.extract_strided_slice %26 {offsets = [80, 0], sizes = [16, 8], strides = [1, 1]} : vector<128x8xf32> to vector<16x8xf32>
    %114 = vector.extract_strided_slice %19 {offsets = [0, 80], sizes = [8, 16], strides = [1, 1]} : vector<8x128xf32> to vector<8x16xf32>
    %cst_39 = arith.constant dense<0.000000e+00> : vector<8x8xf32>
    %115 = tpu.matmul %112, %113, %cst_39 {dimension_numbers = #tpu.dot_dimension_numbers<[1], [0], [0], [1], [0, 0, 1, 1], [], []>} : vector<8x16xf32>, vector<16x8xf32>, vector<8x8xf32> -> vector<8x8xf32>
    %116 = vector.broadcast %23 : vector<1x8xf32> to vector<8x8xf32>
    %117 = arith.addf %115, %116 : vector<8x8xf32>
    %cst_40 = arith.constant dense<0xFF800000> : vector<8xf32>
    %118 = vector.multi_reduction <maximumf>, %117, %cst_40 [1] : vector<8x8xf32> to vector<8xf32>
    %119 = vector.shape_cast %118 : vector<8xf32> to vector<8x1xf32>
    %120 = vector.broadcast %119 : vector<8x1xf32> to vector<8x8xf32>
    %121 = arith.subf %117, %120 : vector<8x8xf32>
    %122 = math.exp %121 : vector<8x8xf32>
    %cst_41 = arith.constant dense<0.000000e+00> : vector<8xf32>
    %123 = vector.multi_reduction <add>, %122, %cst_41 [1] : vector<8x8xf32> to vector<8xf32>
    %124 = vector.shape_cast %123 : vector<8xf32> to vector<8x1xf32>
    %125 = tpu.reciprocal %124 {approx = true} : vector<8x1xf32> -> vector<8x1xf32>
    %126 = vector.broadcast %125 : vector<8x1xf32> to vector<8x8xf32>
    %127 = arith.mulf %122, %126 : vector<8x8xf32>
    %cst_42 = arith.constant dense<0.000000e+00> : vector<8x16xf32>
    %128 = tpu.matmul %127, %114, %cst_42 {dimension_numbers = #tpu.dot_dimension_numbers<[1], [0], [0], [1], [0, 0, 1, 1], [], []>} : vector<8x8xf32>, vector<8x16xf32>, vector<8x16xf32> -> vector<8x16xf32>
    %129 = vector.extract_strided_slice %25 {offsets = [0, 96], sizes = [8, 16], strides = [1, 1]} : vector<8x128xf32> to vector<8x16xf32>
    %130 = vector.extract_strided_slice %26 {offsets = [96, 0], sizes = [16, 8], strides = [1, 1]} : vector<128x8xf32> to vector<16x8xf32>
    %131 = vector.extract_strided_slice %19 {offsets = [0, 96], sizes = [8, 16], strides = [1, 1]} : vector<8x128xf32> to vector<8x16xf32>
    %cst_43 = arith.constant dense<0.000000e+00> : vector<8x8xf32>
    %132 = tpu.matmul %129, %130, %cst_43 {dimension_numbers = #tpu.dot_dimension_numbers<[1], [0], [0], [1], [0, 0, 1, 1], [], []>} : vector<8x16xf32>, vector<16x8xf32>, vector<8x8xf32> -> vector<8x8xf32>
    %133 = vector.broadcast %23 : vector<1x8xf32> to vector<8x8xf32>
    %134 = arith.addf %132, %133 : vector<8x8xf32>
    %cst_44 = arith.constant dense<0xFF800000> : vector<8xf32>
    %135 = vector.multi_reduction <maximumf>, %134, %cst_44 [1] : vector<8x8xf32> to vector<8xf32>
    %136 = vector.shape_cast %135 : vector<8xf32> to vector<8x1xf32>
    %137 = vector.broadcast %136 : vector<8x1xf32> to vector<8x8xf32>
    %138 = arith.subf %134, %137 : vector<8x8xf32>
    %139 = math.exp %138 : vector<8x8xf32>
    %cst_45 = arith.constant dense<0.000000e+00> : vector<8xf32>
    %140 = vector.multi_reduction <add>, %139, %cst_45 [1] : vector<8x8xf32> to vector<8xf32>
    %141 = vector.shape_cast %140 : vector<8xf32> to vector<8x1xf32>
    %142 = tpu.reciprocal %141 {approx = true} : vector<8x1xf32> -> vector<8x1xf32>
    %143 = vector.broadcast %142 : vector<8x1xf32> to vector<8x8xf32>
    %144 = arith.mulf %139, %143 : vector<8x8xf32>
    %cst_46 = arith.constant dense<0.000000e+00> : vector<8x16xf32>
    %145 = tpu.matmul %144, %131, %cst_46 {dimension_numbers = #tpu.dot_dimension_numbers<[1], [0], [0], [1], [0, 0, 1, 1], [], []>} : vector<8x8xf32>, vector<8x16xf32>, vector<8x16xf32> -> vector<8x16xf32>
    %146 = vector.extract_strided_slice %25 {offsets = [0, 112], sizes = [8, 16], strides = [1, 1]} : vector<8x128xf32> to vector<8x16xf32>
    %147 = vector.extract_strided_slice %26 {offsets = [112, 0], sizes = [16, 8], strides = [1, 1]} : vector<128x8xf32> to vector<16x8xf32>
    %148 = vector.extract_strided_slice %19 {offsets = [0, 112], sizes = [8, 16], strides = [1, 1]} : vector<8x128xf32> to vector<8x16xf32>
    %cst_47 = arith.constant dense<0.000000e+00> : vector<8x8xf32>
    %149 = tpu.matmul %146, %147, %cst_47 {dimension_numbers = #tpu.dot_dimension_numbers<[1], [0], [0], [1], [0, 0, 1, 1], [], []>} : vector<8x16xf32>, vector<16x8xf32>, vector<8x8xf32> -> vector<8x8xf32>
    %150 = vector.broadcast %23 : vector<1x8xf32> to vector<8x8xf32>
    %151 = arith.addf %149, %150 : vector<8x8xf32>
    %cst_48 = arith.constant dense<0xFF800000> : vector<8xf32>
    %152 = vector.multi_reduction <maximumf>, %151, %cst_48 [1] : vector<8x8xf32> to vector<8xf32>
    %153 = vector.shape_cast %152 : vector<8xf32> to vector<8x1xf32>
    %154 = vector.broadcast %153 : vector<8x1xf32> to vector<8x8xf32>
    %155 = arith.subf %151, %154 : vector<8x8xf32>
    %156 = math.exp %155 : vector<8x8xf32>
    %cst_49 = arith.constant dense<0.000000e+00> : vector<8xf32>
    %157 = vector.multi_reduction <add>, %156, %cst_49 [1] : vector<8x8xf32> to vector<8xf32>
    %158 = vector.shape_cast %157 : vector<8xf32> to vector<8x1xf32>
    %159 = tpu.reciprocal %158 {approx = true} : vector<8x1xf32> -> vector<8x1xf32>
    %160 = vector.broadcast %159 : vector<8x1xf32> to vector<8x8xf32>
    %161 = arith.mulf %156, %160 : vector<8x8xf32>
    %cst_50 = arith.constant dense<0.000000e+00> : vector<8x16xf32>
    %162 = tpu.matmul %161, %148, %cst_50 {dimension_numbers = #tpu.dot_dimension_numbers<[1], [0], [0], [1], [0, 0, 1, 1], [], []>} : vector<8x8xf32>, vector<8x16xf32>, vector<8x16xf32> -> vector<8x16xf32>
    %163 = tpu.concatenate %43, %60, %77, %94, %111, %128, %145, %162 in 1 : vector<8x16xf32>, vector<8x16xf32>, vector<8x16xf32>, vector<8x16xf32>, vector<8x16xf32>, vector<8x16xf32>, vector<8x16xf32>, vector<8x16xf32> -> vector<8x128xf32>
    %164 = arith.truncf %163 : vector<8x128xf32> to vector<8x128xbf16>
    %c0_51 = arith.constant 0 : index
    %c0_52 = arith.constant 0 : index
    %165 = vector.load %arg7[%c0_51, %c0_52] : memref<128x128xf32, #tpu.memory_space<vmem>>, vector<128x128xf32>
    %166 = arith.truncf %165 : vector<128x128xf32> to vector<128x128xbf16>
    %cst_53 = arith.constant dense<0.000000e+00> : vector<8x128xf32>
    %167 = tpu.matmul %164, %166, %cst_53 {dimension_numbers = #tpu.dot_dimension_numbers<[1], [0], [0], [1], [0, 0, 1, 1], [], []>} : vector<8x128xbf16>, vector<128x128xbf16>, vector<8x128xf32> -> vector<8x128xf32>
    %c0_54 = arith.constant 0 : index
    %c0_55 = arith.constant 0 : index
    %168 = vector.load %arg8[%c0_54, %c0_55] : memref<1x128xf32, #tpu.memory_space<vmem>>, vector<1x128xf32>
    %169 = vector.broadcast %168 : vector<1x128xf32> to vector<8x128xf32>
    %170 = arith.addf %167, %169 : vector<8x128xf32>
    %c0_56 = arith.constant 0 : index
    %c0_57 = arith.constant 0 : index
    %c0_58 = arith.constant 0 : index
    %171 = vector.load %arg10[%c0_56, %c0_57, %c0_58] : memref<1x8x128xf32, #tpu.memory_space<vmem>>, vector<1x8x128xf32>
    %172 = vector.shape_cast %171 : vector<1x8x128xf32> to vector<8x128xf32>
    %173 = vector.shape_cast %170 : vector<8x128xf32> to vector<1x8x128xf32>
    tpu.vector_store %arg10[%c0_56, %c0_57, %c0_58], %173 {strides = array<i32>} : memref<1x8x128xf32, #tpu.memory_space<vmem>>, vector<1x8x128xf32>,
    return
  }
  func.func @transform_0(%arg0: i32) -> (i32, i32, i32) {
    %c0_i32 = arith.constant 0 : i32
    %c0_i32_0 = arith.constant 0 : i32
    %c0_i32_1 = arith.constant 0 : i32
    return %arg0, %c0_i32, %c0_i32_0 : i32, i32, i32
  }
  func.func @transform_1(%arg0: i32) -> (i32, i32, i32) {
    %c0_i32 = arith.constant 0 : i32
    %c0_i32_0 = arith.constant 0 : i32
    %c0_i32_1 = arith.constant 0 : i32
    return %arg0, %c0_i32, %c0_i32_0 : i32, i32, i32
  }
  func.func @transform_2(%arg0: i32) -> (i32, i32) {
    %c0_i32 = arith.constant 0 : i32
    %c0_i32_0 = arith.constant 0 : i32
    %c0_i32_1 = arith.constant 0 : i32
    return %c0_i32, %c0_i32_0 : i32, i32
  }
  func.func @transform_3(%arg0: i32) -> (i32, i32) {
    %c0_i32 = arith.constant 0 : i32
    %c0_i32_0 = arith.constant 0 : i32
    %c0_i32_1 = arith.constant 0 : i32
    return %c0_i32, %c0_i32_0 : i32, i32
  }
  func.func @transform_4(%arg0: i32) -> (i32, i32) {
    %c0_i32 = arith.constant 0 : i32
    %c0_i32_0 = arith.constant 0 : i32
    %c0_i32_1 = arith.constant 0 : i32
    return %c0_i32, %c0_i32_0 : i32, i32
  }
  func.func @transform_5(%arg0: i32) -> (i32, i32) {
    %c0_i32 = arith.constant 0 : i32
    %c0_i32_0 = arith.constant 0 : i32
    %c0_i32_1 = arith.constant 0 : i32
    return %c0_i32, %c0_i32_0 : i32, i32
  }
  func.func @transform_6(%arg0: i32) -> (i32, i32) {
    %c0_i32 = arith.constant 0 : i32
    %c0_i32_0 = arith.constant 0 : i32
    %c0_i32_1 = arith.constant 0 : i32
    return %c0_i32, %c0_i32_0 : i32, i32
  }
  func.func @transform_7(%arg0: i32) -> (i32, i32) {
    %c0_i32 = arith.constant 0 : i32
    %c0_i32_0 = arith.constant 0 : i32
    %c0_i32_1 = arith.constant 0 : i32
    return %c0_i32, %c0_i32_0 : i32, i32
  }
  func.func @transform_8(%arg0: i32) -> (i32, i32, i32) {
    %c0_i32 = arith.constant 0 : i32
    %c0_i32_0 = arith.constant 0 : i32
    %c0_i32_1 = arith.constant 0 : i32
    return %arg0, %c0_i32, %c0_i32_0 : i32, i32, i32
  }
  func.func @transform_9(%arg0: i32) -> (i32, i32, i32) {
    %c0_i32 = arith.constant 0 : i32
    %c0_i32_0 = arith.constant 0 : i32
    %c0_i32_1 = arith.constant 0 : i32
    return %arg0, %c0_i32, %c0_i32_0 : i32, i32, i32
  }
}

module attributes {stable_mosaic.version = 11 : i64} {
  func.func @_ffn_kernel(%arg0: i32, %arg1: memref<16x128xf32, #tpu.memory_space<vmem>>, %arg2: memref<128x256xf32, #tpu.memory_space<vmem>>, %arg3: memref<1x256xf32, #tpu.memory_space<vmem>>, %arg4: memref<256x128xf32, #tpu.memory_space<vmem>>, %arg5: memref<1x128xf32, #tpu.memory_space<vmem>>, %arg6: memref<16x128xf32, #tpu.memory_space<vmem>>) attributes {dimension_semantics = [#tpu.dimension_semantics<parallel>], iteration_bounds = array<i64: 1>, scalar_prefetch = 0 : i64, scratch_operands = 0 : i64, tpu.core_type = #tpu.core_type<tc>, window_params = [{transform_indices = @transform_0, window_bounds = array<i64: 16, 128>}, {pipeline_mode = #tpu.pipeline_mode<synchronous>, transform_indices = @transform_1, window_bounds = array<i64: 128, 256>}, {pipeline_mode = #tpu.pipeline_mode<synchronous>, transform_indices = @transform_2, window_bounds = array<i64: 1, 256>}, {pipeline_mode = #tpu.pipeline_mode<synchronous>, transform_indices = @transform_3, window_bounds = array<i64: 256, 128>}, {pipeline_mode = #tpu.pipeline_mode<synchronous>, transform_indices = @transform_4, window_bounds = array<i64: 1, 128>}, {transform_indices = @transform_5, window_bounds = array<i64: 16, 128>}]} {
    %c0 = arith.constant 0 : index
    %c0_0 = arith.constant 0 : index
    %0 = vector.load %arg1[%c0, %c0_0] : memref<16x128xf32, #tpu.memory_space<vmem>>, vector<16x128xf32>
    %1 = arith.truncf %0 : vector<16x128xf32> to vector<16x128xbf16>
    %c0_1 = arith.constant 0 : index
    %c0_2 = arith.constant 0 : index
    %2 = vector.load %arg2[%c0_1, %c0_2] : memref<128x256xf32, #tpu.memory_space<vmem>>, vector<128x256xf32>
    %3 = arith.truncf %2 : vector<128x256xf32> to vector<128x256xbf16>
    %cst = arith.constant dense<0.000000e+00> : vector<16x256xf32>
    %4 = tpu.matmul %1, %3, %cst {dimension_numbers = #tpu.dot_dimension_numbers<[1], [0], [0], [1], [0, 0, 1, 1], [], []>} : vector<16x128xbf16>, vector<128x256xbf16>, vector<16x256xf32> -> vector<16x256xf32>
    %c0_3 = arith.constant 0 : index
    %c0_4 = arith.constant 0 : index
    %5 = vector.load %arg3[%c0_3, %c0_4] : memref<1x256xf32, #tpu.memory_space<vmem>>, vector<1x256xf32>
    %6 = vector.broadcast %5 : vector<1x256xf32> to vector<16x256xf32>
    %7 = arith.addf %4, %6 : vector<16x256xf32>
    %cst_5 = arith.constant 0.000000e+00 : f32
    %8 = vector.broadcast %cst_5 : f32 to vector<16x256xf32>
    %9 = arith.maximumf %7, %8 : vector<16x256xf32>
    %10 = arith.truncf %9 : vector<16x256xf32> to vector<16x256xbf16>
    %c0_6 = arith.constant 0 : index
    %c0_7 = arith.constant 0 : index
    %11 = vector.load %arg4[%c0_6, %c0_7] : memref<256x128xf32, #tpu.memory_space<vmem>>, vector<256x128xf32>
    %12 = arith.truncf %11 : vector<256x128xf32> to vector<256x128xbf16>
    %cst_8 = arith.constant dense<0.000000e+00> : vector<16x128xf32>
    %13 = tpu.matmul %10, %12, %cst_8 {dimension_numbers = #tpu.dot_dimension_numbers<[1], [0], [0], [1], [0, 0, 1, 1], [], []>} : vector<16x256xbf16>, vector<256x128xbf16>, vector<16x128xf32> -> vector<16x128xf32>
    %c0_9 = arith.constant 0 : index
    %c0_10 = arith.constant 0 : index
    %14 = vector.load %arg5[%c0_9, %c0_10] : memref<1x128xf32, #tpu.memory_space<vmem>>, vector<1x128xf32>
    %15 = vector.broadcast %14 : vector<1x128xf32> to vector<16x128xf32>
    %16 = arith.addf %13, %15 : vector<16x128xf32>
    %c0_11 = arith.constant 0 : index
    %c0_12 = arith.constant 0 : index
    %17 = vector.load %arg6[%c0_11, %c0_12] : memref<16x128xf32, #tpu.memory_space<vmem>>, vector<16x128xf32>
    tpu.vector_store %arg6[%c0_11, %c0_12], %16 {strides = array<i32>} : memref<16x128xf32, #tpu.memory_space<vmem>>, vector<16x128xf32>,
    return
  }
  func.func @transform_0(%arg0: i32) -> (i32, i32) {
    %c0_i32 = arith.constant 0 : i32
    %c0_i32_0 = arith.constant 0 : i32
    return %arg0, %c0_i32 : i32, i32
  }
  func.func @transform_1(%arg0: i32) -> (i32, i32) {
    %c0_i32 = arith.constant 0 : i32
    %c0_i32_0 = arith.constant 0 : i32
    %c0_i32_1 = arith.constant 0 : i32
    return %c0_i32, %c0_i32_0 : i32, i32
  }
  func.func @transform_2(%arg0: i32) -> (i32, i32) {
    %c0_i32 = arith.constant 0 : i32
    %c0_i32_0 = arith.constant 0 : i32
    %c0_i32_1 = arith.constant 0 : i32
    return %c0_i32, %c0_i32_0 : i32, i32
  }
  func.func @transform_3(%arg0: i32) -> (i32, i32) {
    %c0_i32 = arith.constant 0 : i32
    %c0_i32_0 = arith.constant 0 : i32
    %c0_i32_1 = arith.constant 0 : i32
    return %c0_i32, %c0_i32_0 : i32, i32
  }
  func.func @transform_4(%arg0: i32) -> (i32, i32) {
    %c0_i32 = arith.constant 0 : i32
    %c0_i32_0 = arith.constant 0 : i32
    %c0_i32_1 = arith.constant 0 : i32
    return %c0_i32, %c0_i32_0 : i32, i32
  }
  func.func @transform_5(%arg0: i32) -> (i32, i32) {
    %c0_i32 = arith.constant 0 : i32
    %c0_i32_0 = arith.constant 0 : i32
    return %arg0, %c0_i32 : i32, i32
  }
}

module attributes {stable_mosaic.version = 11 : i64} {
  func.func @_ln_kernel(%arg0: i32, %arg1: memref<16x128xf32, #tpu.memory_space<vmem>>, %arg2: memref<1x128xf32, #tpu.memory_space<vmem>>, %arg3: memref<1x128xf32, #tpu.memory_space<vmem>>, %arg4: memref<16x128xf32, #tpu.memory_space<vmem>>) attributes {dimension_semantics = [#tpu.dimension_semantics<parallel>], iteration_bounds = array<i64: 1>, scalar_prefetch = 0 : i64, scratch_operands = 0 : i64, tpu.core_type = #tpu.core_type<tc>, window_params = [{transform_indices = @transform_0, window_bounds = array<i64: 16, 128>}, {pipeline_mode = #tpu.pipeline_mode<synchronous>, transform_indices = @transform_1, window_bounds = array<i64: 1, 128>}, {pipeline_mode = #tpu.pipeline_mode<synchronous>, transform_indices = @transform_2, window_bounds = array<i64: 1, 128>}, {transform_indices = @transform_3, window_bounds = array<i64: 16, 128>}]} {
    %c0 = arith.constant 0 : index
    %c0_0 = arith.constant 0 : index
    %0 = vector.load %arg1[%c0, %c0_0] : memref<16x128xf32, #tpu.memory_space<vmem>>, vector<16x128xf32>
    %cst = arith.constant dense<0.000000e+00> : vector<16xf32>
    %1 = vector.multi_reduction <add>, %0, %cst [1] : vector<16x128xf32> to vector<16xf32>
    %2 = vector.shape_cast %1 : vector<16xf32> to vector<16x1xf32>
    %cst_1 = arith.constant 1.280000e+02 : f32
    %3 = vector.broadcast %cst_1 : f32 to vector<16x1xf32>
    %4 = arith.divf %2, %3 : vector<16x1xf32>
    %5 = vector.broadcast %4 : vector<16x1xf32> to vector<16x128xf32>
    %6 = arith.subf %0, %5 : vector<16x128xf32>
    %7 = arith.mulf %6, %6 : vector<16x128xf32>
    %cst_2 = arith.constant dense<0.000000e+00> : vector<16xf32>
    %8 = vector.multi_reduction <add>, %7, %cst_2 [1] : vector<16x128xf32> to vector<16xf32>
    %9 = vector.shape_cast %8 : vector<16xf32> to vector<16x1xf32>
    %cst_3 = arith.constant 1.280000e+02 : f32
    %10 = vector.broadcast %cst_3 : f32 to vector<16x1xf32>
    %11 = arith.divf %9, %10 : vector<16x1xf32>
    %cst_4 = arith.constant 9.99999997E-7 : f32
    %12 = vector.broadcast %cst_4 : f32 to vector<16x1xf32>
    %13 = arith.addf %11, %12 : vector<16x1xf32>
    %14 = math.rsqrt %13 : vector<16x1xf32>
    %15 = vector.broadcast %14 : vector<16x1xf32> to vector<16x128xf32>
    %16 = arith.mulf %6, %15 : vector<16x128xf32>
    %c0_5 = arith.constant 0 : index
    %c0_6 = arith.constant 0 : index
    %17 = vector.load %arg2[%c0_5, %c0_6] : memref<1x128xf32, #tpu.memory_space<vmem>>, vector<1x128xf32>
    %18 = vector.broadcast %17 : vector<1x128xf32> to vector<16x128xf32>
    %19 = arith.mulf %16, %18 : vector<16x128xf32>
    %c0_7 = arith.constant 0 : index
    %c0_8 = arith.constant 0 : index
    %20 = vector.load %arg3[%c0_7, %c0_8] : memref<1x128xf32, #tpu.memory_space<vmem>>, vector<1x128xf32>
    %21 = vector.broadcast %20 : vector<1x128xf32> to vector<16x128xf32>
    %22 = arith.addf %19, %21 : vector<16x128xf32>
    %c0_9 = arith.constant 0 : index
    %c0_10 = arith.constant 0 : index
    %23 = vector.load %arg4[%c0_9, %c0_10] : memref<16x128xf32, #tpu.memory_space<vmem>>, vector<16x128xf32>
    tpu.vector_store %arg4[%c0_9, %c0_10], %22 {strides = array<i32>} : memref<16x128xf32, #tpu.memory_space<vmem>>, vector<16x128xf32>,
    return
  }
  func.func @transform_0(%arg0: i32) -> (i32, i32) {
    %c0_i32 = arith.constant 0 : i32
    %c0_i32_0 = arith.constant 0 : i32
    return %arg0, %c0_i32 : i32, i32
  }
  func.func @transform_1(%arg0: i32) -> (i32, i32) {
    %c0_i32 = arith.constant 0 : i32
    %c0_i32_0 = arith.constant 0 : i32
    %c0_i32_1 = arith.constant 0 : i32
    return %c0_i32, %c0_i32_0 : i32, i32
  }
  func.func @transform_2(%arg0: i32) -> (i32, i32) {
    %c0_i32 = arith.constant 0 : i32
    %c0_i32_0 = arith.constant 0 : i32
    %c0_i32_1 = arith.constant 0 : i32
    return %c0_i32, %c0_i32_0 : i32, i32
  }
  func.func @transform_3(%arg0: i32) -> (i32, i32) {
    %c0_i32 = arith.constant 0 : i32
    %c0_i32_0 = arith.constant 0 : i32
    return %arg0, %c0_i32 : i32, i32
  }
}

module attributes {stable_mosaic.version = 11 : i64} {
  func.func @_mha_kernel(%arg0: i32, %arg1: memref<1x8x128xf32, #tpu.memory_space<vmem>>, %arg2: memref<1x8x128xf32, #tpu.memory_space<vmem>>, %arg3: memref<128x128xf32, #tpu.memory_space<vmem>>, %arg4: memref<1x128xf32, #tpu.memory_space<vmem>>, %arg5: memref<128x256xf32, #tpu.memory_space<vmem>>, %arg6: memref<1x256xf32, #tpu.memory_space<vmem>>, %arg7: memref<128x128xf32, #tpu.memory_space<vmem>>, %arg8: memref<1x128xf32, #tpu.memory_space<vmem>>, %arg9: memref<1x8x128xf32, #tpu.memory_space<vmem>>) attributes {dimension_semantics = [#tpu.dimension_semantics<parallel>], iteration_bounds = array<i64: 2>, scalar_prefetch = 0 : i64, scratch_operands = 0 : i64, tpu.core_type = #tpu.core_type<tc>, window_params = [{transform_indices = @transform_0, window_bounds = array<i64: 1, 8, 128>}, {transform_indices = @transform_1, window_bounds = array<i64: 1, 8, 128>}, {pipeline_mode = #tpu.pipeline_mode<synchronous>, transform_indices = @transform_2, window_bounds = array<i64: 128, 128>}, {pipeline_mode = #tpu.pipeline_mode<synchronous>, transform_indices = @transform_3, window_bounds = array<i64: 1, 128>}, {pipeline_mode = #tpu.pipeline_mode<synchronous>, transform_indices = @transform_4, window_bounds = array<i64: 128, 256>}, {pipeline_mode = #tpu.pipeline_mode<synchronous>, transform_indices = @transform_5, window_bounds = array<i64: 1, 256>}, {pipeline_mode = #tpu.pipeline_mode<synchronous>, transform_indices = @transform_6, window_bounds = array<i64: 128, 128>}, {pipeline_mode = #tpu.pipeline_mode<synchronous>, transform_indices = @transform_7, window_bounds = array<i64: 1, 128>}, {transform_indices = @transform_8, window_bounds = array<i64: 1, 8, 128>}]} {
    %c0 = arith.constant 0 : index
    %c0_0 = arith.constant 0 : index
    %c0_1 = arith.constant 0 : index
    %0 = vector.load %arg1[%c0, %c0_0, %c0_1] : memref<1x8x128xf32, #tpu.memory_space<vmem>>, vector<1x8x128xf32>
    %1 = vector.shape_cast %0 : vector<1x8x128xf32> to vector<8x128xf32>
    %c0_2 = arith.constant 0 : index
    %c0_3 = arith.constant 0 : index
    %c0_4 = arith.constant 0 : index
    %2 = vector.load %arg2[%c0_2, %c0_3, %c0_4] : memref<1x8x128xf32, #tpu.memory_space<vmem>>, vector<1x8x128xf32>
    %3 = vector.shape_cast %2 : vector<1x8x128xf32> to vector<8x128xf32>
    %4 = arith.truncf %1 : vector<8x128xf32> to vector<8x128xbf16>
    %c0_5 = arith.constant 0 : index
    %c0_6 = arith.constant 0 : index
    %5 = vector.load %arg3[%c0_5, %c0_6] : memref<128x128xf32, #tpu.memory_space<vmem>>, vector<128x128xf32>
    %6 = arith.truncf %5 : vector<128x128xf32> to vector<128x128xbf16>
    %cst = arith.constant dense<0.000000e+00> : vector<8x128xf32>
    %7 = tpu.matmul %4, %6, %cst {dimension_numbers = #tpu.dot_dimension_numbers<[1], [0], [0], [1], [0, 0, 1, 1], [], []>} : vector<8x128xbf16>, vector<128x128xbf16>, vector<8x128xf32> -> vector<8x128xf32>
    %c0_7 = arith.constant 0 : index
    %c0_8 = arith.constant 0 : index
    %8 = vector.load %arg4[%c0_7, %c0_8] : memref<1x128xf32, #tpu.memory_space<vmem>>, vector<1x128xf32>
    %9 = vector.broadcast %8 : vector<1x128xf32> to vector<8x128xf32>
    %10 = arith.addf %7, %9 : vector<8x128xf32>
    %11 = arith.truncf %3 : vector<8x128xf32> to vector<8x128xbf16>
    %c0_9 = arith.constant 0 : index
    %c0_10 = arith.constant 0 : index
    %12 = vector.load %arg5[%c0_9, %c0_10] : memref<128x256xf32, #tpu.memory_space<vmem>>, vector<128x256xf32>
    %13 = arith.truncf %12 : vector<128x256xf32> to vector<128x256xbf16>
    %cst_11 = arith.constant dense<0.000000e+00> : vector<8x256xf32>
    %14 = tpu.matmul %11, %13, %cst_11 {dimension_numbers = #tpu.dot_dimension_numbers<[1], [0], [0], [1], [0, 0, 1, 1], [], []>} : vector<8x128xbf16>, vector<128x256xbf16>, vector<8x256xf32> -> vector<8x256xf32>
    %c0_12 = arith.constant 0 : index
    %c0_13 = arith.constant 0 : index
    %15 = vector.load %arg6[%c0_12, %c0_13] : memref<1x256xf32, #tpu.memory_space<vmem>>, vector<1x256xf32>
    %16 = vector.broadcast %15 : vector<1x256xf32> to vector<8x256xf32>
    %17 = arith.addf %14, %16 : vector<8x256xf32>
    %18 = vector.extract_strided_slice %17 {offsets = [0, 0], sizes = [8, 128], strides = [1, 1]} : vector<8x256xf32> to vector<8x128xf32>
    %19 = vector.extract_strided_slice %17 {offsets = [0, 128], sizes = [8, 128], strides = [1, 1]} : vector<8x256xf32> to vector<8x128xf32>
    %cst_14 = arith.constant 2.500000e-01 : f32
    %20 = vector.broadcast %cst_14 : f32 to vector<8x128xf32>
    %21 = arith.mulf %10, %20 : vector<8x128xf32>
    %22 = tpu.transpose %18, [1, 0] : vector<8x128xf32> -> vector<128x8xf32>
    %23 = vector.extract_strided_slice %21 {offsets = [0, 0], sizes = [8, 16], strides = [1, 1]} : vector<8x128xf32> to vector<8x16xf32>
    %24 = vector.extract_strided_slice %22 {offsets = [0, 0], sizes = [16, 8], strides = [1, 1]} : vector<128x8xf32> to vector<16x8xf32>
    %25 = vector.extract_strided_slice %19 {offsets = [0, 0], sizes = [8, 16], strides = [1, 1]} : vector<8x128xf32> to vector<8x16xf32>
    %cst_15 = arith.constant dense<0.000000e+00> : vector<8x8xf32>
    %26 = tpu.matmul %23, %24, %cst_15 {dimension_numbers = #tpu.dot_dimension_numbers<[1], [0], [0], [1], [0, 0, 1, 1], [], []>} : vector<8x16xf32>, vector<16x8xf32>, vector<8x8xf32> -> vector<8x8xf32>
    %cst_16 = arith.constant dense<0xFF800000> : vector<8xf32>
    %27 = vector.multi_reduction <maximumf>, %26, %cst_16 [1] : vector<8x8xf32> to vector<8xf32>
    %28 = vector.shape_cast %27 : vector<8xf32> to vector<8x1xf32>
    %29 = vector.broadcast %28 : vector<8x1xf32> to vector<8x8xf32>
    %30 = arith.subf %26, %29 : vector<8x8xf32>
    %31 = math.exp %30 : vector<8x8xf32>
    %cst_17 = arith.constant dense<0.000000e+00> : vector<8xf32>
    %32 = vector.multi_reduction <add>, %31, %cst_17 [1] : vector<8x8xf32> to vector<8xf32>
    %33 = vector.shape_cast %32 : vector<8xf32> to vector<8x1xf32>
    %34 = tpu.reciprocal %33 {approx = true} : vector<8x1xf32> -> vector<8x1xf32>
    %35 = vector.broadcast %34 : vector<8x1xf32> to vector<8x8xf32>
    %36 = arith.mulf %31, %35 : vector<8x8xf32>
    %cst_18 = arith.constant dense<0.000000e+00> : vector<8x16xf32>
    %37 = tpu.matmul %36, %25, %cst_18 {dimension_numbers = #tpu.dot_dimension_numbers<[1], [0], [0], [1], [0, 0, 1, 1], [], []>} : vector<8x8xf32>, vector<8x16xf32>, vector<8x16xf32> -> vector<8x16xf32>
    %38 = vector.extract_strided_slice %21 {offsets = [0, 16], sizes = [8, 16], strides = [1, 1]} : vector<8x128xf32> to vector<8x16xf32>
    %39 = vector.extract_strided_slice %22 {offsets = [16, 0], sizes = [16, 8], strides = [1, 1]} : vector<128x8xf32> to vector<16x8xf32>
    %40 = vector.extract_strided_slice %19 {offsets = [0, 16], sizes = [8, 16], strides = [1, 1]} : vector<8x128xf32> to vector<8x16xf32>
    %cst_19 = arith.constant dense<0.000000e+00> : vector<8x8xf32>
    %41 = tpu.matmul %38, %39, %cst_19 {dimension_numbers = #tpu.dot_dimension_numbers<[1], [0], [0], [1], [0, 0, 1, 1], [], []>} : vector<8x16xf32>, vector<16x8xf32>, vector<8x8xf32> -> vector<8x8xf32>
    %cst_20 = arith.constant dense<0xFF800000> : vector<8xf32>
    %42 = vector.multi_reduction <maximumf>, %41, %cst_20 [1] : vector<8x8xf32> to vector<8xf32>
    %43 = vector.shape_cast %42 : vector<8xf32> to vector<8x1xf32>
    %44 = vector.broadcast %43 : vector<8x1xf32> to vector<8x8xf32>
    %45 = arith.subf %41, %44 : vector<8x8xf32>
    %46 = math.exp %45 : vector<8x8xf32>
    %cst_21 = arith.constant dense<0.000000e+00> : vector<8xf32>
    %47 = vector.multi_reduction <add>, %46, %cst_21 [1] : vector<8x8xf32> to vector<8xf32>
    %48 = vector.shape_cast %47 : vector<8xf32> to vector<8x1xf32>
    %49 = tpu.reciprocal %48 {approx = true} : vector<8x1xf32> -> vector<8x1xf32>
    %50 = vector.broadcast %49 : vector<8x1xf32> to vector<8x8xf32>
    %51 = arith.mulf %46, %50 : vector<8x8xf32>
    %cst_22 = arith.constant dense<0.000000e+00> : vector<8x16xf32>
    %52 = tpu.matmul %51, %40, %cst_22 {dimension_numbers = #tpu.dot_dimension_numbers<[1], [0], [0], [1], [0, 0, 1, 1], [], []>} : vector<8x8xf32>, vector<8x16xf32>, vector<8x16xf32> -> vector<8x16xf32>
    %53 = vector.extract_strided_slice %21 {offsets = [0, 32], sizes = [8, 16], strides = [1, 1]} : vector<8x128xf32> to vector<8x16xf32>
    %54 = vector.extract_strided_slice %22 {offsets = [32, 0], sizes = [16, 8], strides = [1, 1]} : vector<128x8xf32> to vector<16x8xf32>
    %55 = vector.extract_strided_slice %19 {offsets = [0, 32], sizes = [8, 16], strides = [1, 1]} : vector<8x128xf32> to vector<8x16xf32>
    %cst_23 = arith.constant dense<0.000000e+00> : vector<8x8xf32>
    %56 = tpu.matmul %53, %54, %cst_23 {dimension_numbers = #tpu.dot_dimension_numbers<[1], [0], [0], [1], [0, 0, 1, 1], [], []>} : vector<8x16xf32>, vector<16x8xf32>, vector<8x8xf32> -> vector<8x8xf32>
    %cst_24 = arith.constant dense<0xFF800000> : vector<8xf32>
    %57 = vector.multi_reduction <maximumf>, %56, %cst_24 [1] : vector<8x8xf32> to vector<8xf32>
    %58 = vector.shape_cast %57 : vector<8xf32> to vector<8x1xf32>
    %59 = vector.broadcast %58 : vector<8x1xf32> to vector<8x8xf32>
    %60 = arith.subf %56, %59 : vector<8x8xf32>
    %61 = math.exp %60 : vector<8x8xf32>
    %cst_25 = arith.constant dense<0.000000e+00> : vector<8xf32>
    %62 = vector.multi_reduction <add>, %61, %cst_25 [1] : vector<8x8xf32> to vector<8xf32>
    %63 = vector.shape_cast %62 : vector<8xf32> to vector<8x1xf32>
    %64 = tpu.reciprocal %63 {approx = true} : vector<8x1xf32> -> vector<8x1xf32>
    %65 = vector.broadcast %64 : vector<8x1xf32> to vector<8x8xf32>
    %66 = arith.mulf %61, %65 : vector<8x8xf32>
    %cst_26 = arith.constant dense<0.000000e+00> : vector<8x16xf32>
    %67 = tpu.matmul %66, %55, %cst_26 {dimension_numbers = #tpu.dot_dimension_numbers<[1], [0], [0], [1], [0, 0, 1, 1], [], []>} : vector<8x8xf32>, vector<8x16xf32>, vector<8x16xf32> -> vector<8x16xf32>
    %68 = vector.extract_strided_slice %21 {offsets = [0, 48], sizes = [8, 16], strides = [1, 1]} : vector<8x128xf32> to vector<8x16xf32>
    %69 = vector.extract_strided_slice %22 {offsets = [48, 0], sizes = [16, 8], strides = [1, 1]} : vector<128x8xf32> to vector<16x8xf32>
    %70 = vector.extract_strided_slice %19 {offsets = [0, 48], sizes = [8, 16], strides = [1, 1]} : vector<8x128xf32> to vector<8x16xf32>
    %cst_27 = arith.constant dense<0.000000e+00> : vector<8x8xf32>
    %71 = tpu.matmul %68, %69, %cst_27 {dimension_numbers = #tpu.dot_dimension_numbers<[1], [0], [0], [1], [0, 0, 1, 1], [], []>} : vector<8x16xf32>, vector<16x8xf32>, vector<8x8xf32> -> vector<8x8xf32>
    %cst_28 = arith.constant dense<0xFF800000> : vector<8xf32>
    %72 = vector.multi_reduction <maximumf>, %71, %cst_28 [1] : vector<8x8xf32> to vector<8xf32>
    %73 = vector.shape_cast %72 : vector<8xf32> to vector<8x1xf32>
    %74 = vector.broadcast %73 : vector<8x1xf32> to vector<8x8xf32>
    %75 = arith.subf %71, %74 : vector<8x8xf32>
    %76 = math.exp %75 : vector<8x8xf32>
    %cst_29 = arith.constant dense<0.000000e+00> : vector<8xf32>
    %77 = vector.multi_reduction <add>, %76, %cst_29 [1] : vector<8x8xf32> to vector<8xf32>
    %78 = vector.shape_cast %77 : vector<8xf32> to vector<8x1xf32>
    %79 = tpu.reciprocal %78 {approx = true} : vector<8x1xf32> -> vector<8x1xf32>
    %80 = vector.broadcast %79 : vector<8x1xf32> to vector<8x8xf32>
    %81 = arith.mulf %76, %80 : vector<8x8xf32>
    %cst_30 = arith.constant dense<0.000000e+00> : vector<8x16xf32>
    %82 = tpu.matmul %81, %70, %cst_30 {dimension_numbers = #tpu.dot_dimension_numbers<[1], [0], [0], [1], [0, 0, 1, 1], [], []>} : vector<8x8xf32>, vector<8x16xf32>, vector<8x16xf32> -> vector<8x16xf32>
    %83 = vector.extract_strided_slice %21 {offsets = [0, 64], sizes = [8, 16], strides = [1, 1]} : vector<8x128xf32> to vector<8x16xf32>
    %84 = vector.extract_strided_slice %22 {offsets = [64, 0], sizes = [16, 8], strides = [1, 1]} : vector<128x8xf32> to vector<16x8xf32>
    %85 = vector.extract_strided_slice %19 {offsets = [0, 64], sizes = [8, 16], strides = [1, 1]} : vector<8x128xf32> to vector<8x16xf32>
    %cst_31 = arith.constant dense<0.000000e+00> : vector<8x8xf32>
    %86 = tpu.matmul %83, %84, %cst_31 {dimension_numbers = #tpu.dot_dimension_numbers<[1], [0], [0], [1], [0, 0, 1, 1], [], []>} : vector<8x16xf32>, vector<16x8xf32>, vector<8x8xf32> -> vector<8x8xf32>
    %cst_32 = arith.constant dense<0xFF800000> : vector<8xf32>
    %87 = vector.multi_reduction <maximumf>, %86, %cst_32 [1] : vector<8x8xf32> to vector<8xf32>
    %88 = vector.shape_cast %87 : vector<8xf32> to vector<8x1xf32>
    %89 = vector.broadcast %88 : vector<8x1xf32> to vector<8x8xf32>
    %90 = arith.subf %86, %89 : vector<8x8xf32>
    %91 = math.exp %90 : vector<8x8xf32>
    %cst_33 = arith.constant dense<0.000000e+00> : vector<8xf32>
    %92 = vector.multi_reduction <add>, %91, %cst_33 [1] : vector<8x8xf32> to vector<8xf32>
    %93 = vector.shape_cast %92 : vector<8xf32> to vector<8x1xf32>
    %94 = tpu.reciprocal %93 {approx = true} : vector<8x1xf32> -> vector<8x1xf32>
    %95 = vector.broadcast %94 : vector<8x1xf32> to vector<8x8xf32>
    %96 = arith.mulf %91, %95 : vector<8x8xf32>
    %cst_34 = arith.constant dense<0.000000e+00> : vector<8x16xf32>
    %97 = tpu.matmul %96, %85, %cst_34 {dimension_numbers = #tpu.dot_dimension_numbers<[1], [0], [0], [1], [0, 0, 1, 1], [], []>} : vector<8x8xf32>, vector<8x16xf32>, vector<8x16xf32> -> vector<8x16xf32>
    %98 = vector.extract_strided_slice %21 {offsets = [0, 80], sizes = [8, 16], strides = [1, 1]} : vector<8x128xf32> to vector<8x16xf32>
    %99 = vector.extract_strided_slice %22 {offsets = [80, 0], sizes = [16, 8], strides = [1, 1]} : vector<128x8xf32> to vector<16x8xf32>
    %100 = vector.extract_strided_slice %19 {offsets = [0, 80], sizes = [8, 16], strides = [1, 1]} : vector<8x128xf32> to vector<8x16xf32>
    %cst_35 = arith.constant dense<0.000000e+00> : vector<8x8xf32>
    %101 = tpu.matmul %98, %99, %cst_35 {dimension_numbers = #tpu.dot_dimension_numbers<[1], [0], [0], [1], [0, 0, 1, 1], [], []>} : vector<8x16xf32>, vector<16x8xf32>, vector<8x8xf32> -> vector<8x8xf32>
    %cst_36 = arith.constant dense<0xFF800000> : vector<8xf32>
    %102 = vector.multi_reduction <maximumf>, %101, %cst_36 [1] : vector<8x8xf32> to vector<8xf32>
    %103 = vector.shape_cast %102 : vector<8xf32> to vector<8x1xf32>
    %104 = vector.broadcast %103 : vector<8x1xf32> to vector<8x8xf32>
    %105 = arith.subf %101, %104 : vector<8x8xf32>
    %106 = math.exp %105 : vector<8x8xf32>
    %cst_37 = arith.constant dense<0.000000e+00> : vector<8xf32>
    %107 = vector.multi_reduction <add>, %106, %cst_37 [1] : vector<8x8xf32> to vector<8xf32>
    %108 = vector.shape_cast %107 : vector<8xf32> to vector<8x1xf32>
    %109 = tpu.reciprocal %108 {approx = true} : vector<8x1xf32> -> vector<8x1xf32>
    %110 = vector.broadcast %109 : vector<8x1xf32> to vector<8x8xf32>
    %111 = arith.mulf %106, %110 : vector<8x8xf32>
    %cst_38 = arith.constant dense<0.000000e+00> : vector<8x16xf32>
    %112 = tpu.matmul %111, %100, %cst_38 {dimension_numbers = #tpu.dot_dimension_numbers<[1], [0], [0], [1], [0, 0, 1, 1], [], []>} : vector<8x8xf32>, vector<8x16xf32>, vector<8x16xf32> -> vector<8x16xf32>
    %113 = vector.extract_strided_slice %21 {offsets = [0, 96], sizes = [8, 16], strides = [1, 1]} : vector<8x128xf32> to vector<8x16xf32>
    %114 = vector.extract_strided_slice %22 {offsets = [96, 0], sizes = [16, 8], strides = [1, 1]} : vector<128x8xf32> to vector<16x8xf32>
    %115 = vector.extract_strided_slice %19 {offsets = [0, 96], sizes = [8, 16], strides = [1, 1]} : vector<8x128xf32> to vector<8x16xf32>
    %cst_39 = arith.constant dense<0.000000e+00> : vector<8x8xf32>
    %116 = tpu.matmul %113, %114, %cst_39 {dimension_numbers = #tpu.dot_dimension_numbers<[1], [0], [0], [1], [0, 0, 1, 1], [], []>} : vector<8x16xf32>, vector<16x8xf32>, vector<8x8xf32> -> vector<8x8xf32>
    %cst_40 = arith.constant dense<0xFF800000> : vector<8xf32>
    %117 = vector.multi_reduction <maximumf>, %116, %cst_40 [1] : vector<8x8xf32> to vector<8xf32>
    %118 = vector.shape_cast %117 : vector<8xf32> to vector<8x1xf32>
    %119 = vector.broadcast %118 : vector<8x1xf32> to vector<8x8xf32>
    %120 = arith.subf %116, %119 : vector<8x8xf32>
    %121 = math.exp %120 : vector<8x8xf32>
    %cst_41 = arith.constant dense<0.000000e+00> : vector<8xf32>
    %122 = vector.multi_reduction <add>, %121, %cst_41 [1] : vector<8x8xf32> to vector<8xf32>
    %123 = vector.shape_cast %122 : vector<8xf32> to vector<8x1xf32>
    %124 = tpu.reciprocal %123 {approx = true} : vector<8x1xf32> -> vector<8x1xf32>
    %125 = vector.broadcast %124 : vector<8x1xf32> to vector<8x8xf32>
    %126 = arith.mulf %121, %125 : vector<8x8xf32>
    %cst_42 = arith.constant dense<0.000000e+00> : vector<8x16xf32>
    %127 = tpu.matmul %126, %115, %cst_42 {dimension_numbers = #tpu.dot_dimension_numbers<[1], [0], [0], [1], [0, 0, 1, 1], [], []>} : vector<8x8xf32>, vector<8x16xf32>, vector<8x16xf32> -> vector<8x16xf32>
    %128 = vector.extract_strided_slice %21 {offsets = [0, 112], sizes = [8, 16], strides = [1, 1]} : vector<8x128xf32> to vector<8x16xf32>
    %129 = vector.extract_strided_slice %22 {offsets = [112, 0], sizes = [16, 8], strides = [1, 1]} : vector<128x8xf32> to vector<16x8xf32>
    %130 = vector.extract_strided_slice %19 {offsets = [0, 112], sizes = [8, 16], strides = [1, 1]} : vector<8x128xf32> to vector<8x16xf32>
    %cst_43 = arith.constant dense<0.000000e+00> : vector<8x8xf32>
    %131 = tpu.matmul %128, %129, %cst_43 {dimension_numbers = #tpu.dot_dimension_numbers<[1], [0], [0], [1], [0, 0, 1, 1], [], []>} : vector<8x16xf32>, vector<16x8xf32>, vector<8x8xf32> -> vector<8x8xf32>
    %cst_44 = arith.constant dense<0xFF800000> : vector<8xf32>
    %132 = vector.multi_reduction <maximumf>, %131, %cst_44 [1] : vector<8x8xf32> to vector<8xf32>
    %133 = vector.shape_cast %132 : vector<8xf32> to vector<8x1xf32>
    %134 = vector.broadcast %133 : vector<8x1xf32> to vector<8x8xf32>
    %135 = arith.subf %131, %134 : vector<8x8xf32>
    %136 = math.exp %135 : vector<8x8xf32>
    %cst_45 = arith.constant dense<0.000000e+00> : vector<8xf32>
    %137 = vector.multi_reduction <add>, %136, %cst_45 [1] : vector<8x8xf32> to vector<8xf32>
    %138 = vector.shape_cast %137 : vector<8xf32> to vector<8x1xf32>
    %139 = tpu.reciprocal %138 {approx = true} : vector<8x1xf32> -> vector<8x1xf32>
    %140 = vector.broadcast %139 : vector<8x1xf32> to vector<8x8xf32>
    %141 = arith.mulf %136, %140 : vector<8x8xf32>
    %cst_46 = arith.constant dense<0.000000e+00> : vector<8x16xf32>
    %142 = tpu.matmul %141, %130, %cst_46 {dimension_numbers = #tpu.dot_dimension_numbers<[1], [0], [0], [1], [0, 0, 1, 1], [], []>} : vector<8x8xf32>, vector<8x16xf32>, vector<8x16xf32> -> vector<8x16xf32>
    %143 = tpu.concatenate %37, %52, %67, %82, %97, %112, %127, %142 in 1 : vector<8x16xf32>, vector<8x16xf32>, vector<8x16xf32>, vector<8x16xf32>, vector<8x16xf32>, vector<8x16xf32>, vector<8x16xf32>, vector<8x16xf32> -> vector<8x128xf32>
    %144 = arith.truncf %143 : vector<8x128xf32> to vector<8x128xbf16>
    %c0_47 = arith.constant 0 : index
    %c0_48 = arith.constant 0 : index
    %145 = vector.load %arg7[%c0_47, %c0_48] : memref<128x128xf32, #tpu.memory_space<vmem>>, vector<128x128xf32>
    %146 = arith.truncf %145 : vector<128x128xf32> to vector<128x128xbf16>
    %cst_49 = arith.constant dense<0.000000e+00> : vector<8x128xf32>
    %147 = tpu.matmul %144, %146, %cst_49 {dimension_numbers = #tpu.dot_dimension_numbers<[1], [0], [0], [1], [0, 0, 1, 1], [], []>} : vector<8x128xbf16>, vector<128x128xbf16>, vector<8x128xf32> -> vector<8x128xf32>
    %c0_50 = arith.constant 0 : index
    %c0_51 = arith.constant 0 : index
    %148 = vector.load %arg8[%c0_50, %c0_51] : memref<1x128xf32, #tpu.memory_space<vmem>>, vector<1x128xf32>
    %149 = vector.broadcast %148 : vector<1x128xf32> to vector<8x128xf32>
    %150 = arith.addf %147, %149 : vector<8x128xf32>
    %c0_52 = arith.constant 0 : index
    %c0_53 = arith.constant 0 : index
    %c0_54 = arith.constant 0 : index
    %151 = vector.load %arg9[%c0_52, %c0_53, %c0_54] : memref<1x8x128xf32, #tpu.memory_space<vmem>>, vector<1x8x128xf32>
    %152 = vector.shape_cast %151 : vector<1x8x128xf32> to vector<8x128xf32>
    %153 = vector.shape_cast %150 : vector<8x128xf32> to vector<1x8x128xf32>
    tpu.vector_store %arg9[%c0_52, %c0_53, %c0_54], %153 {strides = array<i32>} : memref<1x8x128xf32, #tpu.memory_space<vmem>>, vector<1x8x128xf32>,
    return
  }
  func.func @transform_0(%arg0: i32) -> (i32, i32, i32) {
    %c0_i32 = arith.constant 0 : i32
    %c0_i32_0 = arith.constant 0 : i32
    %c0_i32_1 = arith.constant 0 : i32
    return %arg0, %c0_i32, %c0_i32_0 : i32, i32, i32
  }
  func.func @transform_1(%arg0: i32) -> (i32, i32, i32) {
    %c0_i32 = arith.constant 0 : i32
    %c0_i32_0 = arith.constant 0 : i32
    %c0_i32_1 = arith.constant 0 : i32
    return %arg0, %c0_i32, %c0_i32_0 : i32, i32, i32
  }
  func.func @transform_2(%arg0: i32) -> (i32, i32) {
    %c0_i32 = arith.constant 0 : i32
    %c0_i32_0 = arith.constant 0 : i32
    %c0_i32_1 = arith.constant 0 : i32
    return %c0_i32, %c0_i32_0 : i32, i32
  }
  func.func @transform_3(%arg0: i32) -> (i32, i32) {
    %c0_i32 = arith.constant 0 : i32
    %c0_i32_0 = arith.constant 0 : i32
    %c0_i32_1 = arith.constant 0 : i32
    return %c0_i32, %c0_i32_0 : i32, i32
  }
  func.func @transform_4(%arg0: i32) -> (i32, i32) {
    %c0_i32 = arith.constant 0 : i32
    %c0_i32_0 = arith.constant 0 : i32
    %c0_i32_1 = arith.constant 0 : i32
    return %c0_i32, %c0_i32_0 : i32, i32
  }
  func.func @transform_5(%arg0: i32) -> (i32, i32) {
    %c0_i32 = arith.constant 0 : i32
    %c0_i32_0 = arith.constant 0 : i32
    %c0_i32_1 = arith.constant 0 : i32
    return %c0_i32, %c0_i32_0 : i32, i32
  }
  func.func @transform_6(%arg0: i32) -> (i32, i32) {
    %c0_i32 = arith.constant 0 : i32
    %c0_i32_0 = arith.constant 0 : i32
    %c0_i32_1 = arith.constant 0 : i32
    return %c0_i32, %c0_i32_0 : i32, i32
  }
  func.func @transform_7(%arg0: i32) -> (i32, i32) {
    %c0_i32 = arith.constant 0 : i32
    %c0_i32_0 = arith.constant 0 : i32
    %c0_i32_1 = arith.constant 0 : i32
    return %c0_i32, %c0_i32_0 : i32, i32
  }
  func.func @transform_8(%arg0: i32) -> (i32, i32, i32) {
    %c0_i32 = arith.constant 0 : i32
    %c0_i32_0 = arith.constant 0 : i32
    %c0_i32_1 = arith.constant 0 : i32
    return %arg0, %c0_i32, %c0_i32_0 : i32, i32, i32
  }
}

module attributes {stable_mosaic.version = 11 : i64} {
  func.func @_mha_kernel(%arg0: i32, %arg1: memref<1x8x128xf32, #tpu.memory_space<vmem>>, %arg2: memref<1x8x128xf32, #tpu.memory_space<vmem>>, %arg3: memref<128x128xf32, #tpu.memory_space<vmem>>, %arg4: memref<1x128xf32, #tpu.memory_space<vmem>>, %arg5: memref<128x256xf32, #tpu.memory_space<vmem>>, %arg6: memref<1x256xf32, #tpu.memory_space<vmem>>, %arg7: memref<128x128xf32, #tpu.memory_space<vmem>>, %arg8: memref<1x128xf32, #tpu.memory_space<vmem>>, %arg9: memref<1x1x8xf32, #tpu.memory_space<vmem>>, %arg10: memref<1x8x128xf32, #tpu.memory_space<vmem>>) attributes {dimension_semantics = [#tpu.dimension_semantics<parallel>], iteration_bounds = array<i64: 2>, scalar_prefetch = 0 : i64, scratch_operands = 0 : i64, tpu.core_type = #tpu.core_type<tc>, window_params = [{transform_indices = @transform_0, window_bounds = array<i64: 1, 8, 128>}, {transform_indices = @transform_1, window_bounds = array<i64: 1, 8, 128>}, {pipeline_mode = #tpu.pipeline_mode<synchronous>, transform_indices = @transform_2, window_bounds = array<i64: 128, 128>}, {pipeline_mode = #tpu.pipeline_mode<synchronous>, transform_indices = @transform_3, window_bounds = array<i64: 1, 128>}, {pipeline_mode = #tpu.pipeline_mode<synchronous>, transform_indices = @transform_4, window_bounds = array<i64: 128, 256>}, {pipeline_mode = #tpu.pipeline_mode<synchronous>, transform_indices = @transform_5, window_bounds = array<i64: 1, 256>}, {pipeline_mode = #tpu.pipeline_mode<synchronous>, transform_indices = @transform_6, window_bounds = array<i64: 128, 128>}, {pipeline_mode = #tpu.pipeline_mode<synchronous>, transform_indices = @transform_7, window_bounds = array<i64: 1, 128>}, {transform_indices = @transform_8, window_bounds = array<i64: 1, 1, 8>}, {transform_indices = @transform_9, window_bounds = array<i64: 1, 8, 128>}]} {
    %c0 = arith.constant 0 : index
    %c0_0 = arith.constant 0 : index
    %c0_1 = arith.constant 0 : index
    %0 = vector.load %arg1[%c0, %c0_0, %c0_1] : memref<1x8x128xf32, #tpu.memory_space<vmem>>, vector<1x8x128xf32>
    %1 = vector.shape_cast %0 : vector<1x8x128xf32> to vector<8x128xf32>
    %c0_2 = arith.constant 0 : index
    %c0_3 = arith.constant 0 : index
    %c0_4 = arith.constant 0 : index
    %2 = vector.load %arg2[%c0_2, %c0_3, %c0_4] : memref<1x8x128xf32, #tpu.memory_space<vmem>>, vector<1x8x128xf32>
    %3 = vector.shape_cast %2 : vector<1x8x128xf32> to vector<8x128xf32>
    %4 = arith.truncf %1 : vector<8x128xf32> to vector<8x128xbf16>
    %c0_5 = arith.constant 0 : index
    %c0_6 = arith.constant 0 : index
    %5 = vector.load %arg3[%c0_5, %c0_6] : memref<128x128xf32, #tpu.memory_space<vmem>>, vector<128x128xf32>
    %6 = arith.truncf %5 : vector<128x128xf32> to vector<128x128xbf16>
    %cst = arith.constant dense<0.000000e+00> : vector<8x128xf32>
    %7 = tpu.matmul %4, %6, %cst {dimension_numbers = #tpu.dot_dimension_numbers<[1], [0], [0], [1], [0, 0, 1, 1], [], []>} : vector<8x128xbf16>, vector<128x128xbf16>, vector<8x128xf32> -> vector<8x128xf32>
    %c0_7 = arith.constant 0 : index
    %c0_8 = arith.constant 0 : index
    %8 = vector.load %arg4[%c0_7, %c0_8] : memref<1x128xf32, #tpu.memory_space<vmem>>, vector<1x128xf32>
    %9 = vector.broadcast %8 : vector<1x128xf32> to vector<8x128xf32>
    %10 = arith.addf %7, %9 : vector<8x128xf32>
    %11 = arith.truncf %3 : vector<8x128xf32> to vector<8x128xbf16>
    %c0_9 = arith.constant 0 : index
    %c0_10 = arith.constant 0 : index
    %12 = vector.load %arg5[%c0_9, %c0_10] : memref<128x256xf32, #tpu.memory_space<vmem>>, vector<128x256xf32>
    %13 = arith.truncf %12 : vector<128x256xf32> to vector<128x256xbf16>
    %cst_11 = arith.constant dense<0.000000e+00> : vector<8x256xf32>
    %14 = tpu.matmul %11, %13, %cst_11 {dimension_numbers = #tpu.dot_dimension_numbers<[1], [0], [0], [1], [0, 0, 1, 1], [], []>} : vector<8x128xbf16>, vector<128x256xbf16>, vector<8x256xf32> -> vector<8x256xf32>
    %c0_12 = arith.constant 0 : index
    %c0_13 = arith.constant 0 : index
    %15 = vector.load %arg6[%c0_12, %c0_13] : memref<1x256xf32, #tpu.memory_space<vmem>>, vector<1x256xf32>
    %16 = vector.broadcast %15 : vector<1x256xf32> to vector<8x256xf32>
    %17 = arith.addf %14, %16 : vector<8x256xf32>
    %18 = vector.extract_strided_slice %17 {offsets = [0, 0], sizes = [8, 128], strides = [1, 1]} : vector<8x256xf32> to vector<8x128xf32>
    %19 = vector.extract_strided_slice %17 {offsets = [0, 128], sizes = [8, 128], strides = [1, 1]} : vector<8x256xf32> to vector<8x128xf32>
    %c0_14 = arith.constant 0 : index
    %c0_15 = arith.constant 0 : index
    %c0_16 = arith.constant 0 : index
    %20 = vector.load %arg9[%c0_14, %c0_15, %c0_16] : memref<1x1x8xf32, #tpu.memory_space<vmem>>, vector<1x1x8xf32>
    %21 = vector.shape_cast %20 : vector<1x1x8xf32> to vector<1x8xf32>
    %cst_17 = arith.constant -1.000000e+09 : f32
    %22 = vector.broadcast %cst_17 : f32 to vector<1x8xf32>
    %23 = arith.mulf %21, %22 : vector<1x8xf32>
    %24 = tpu.iota {dimensions = array<i32: 0>} : vector<8x8xi32>
    %25 = tpu.iota {dimensions = array<i32: 1>} : vector<8x8xi32>
    %26 = arith.cmpi sgt, %25, %24 : vector<8x8xi32>
    %cst_18 = arith.constant -1.000000e+09 : f32
    %cst_19 = arith.constant 0.000000e+00 : f32
    %27 = vector.broadcast %cst_18 : f32 to vector<8x8xf32>
    %28 = vector.broadcast %cst_19 : f32 to vector<8x8xf32>
    %29 = arith.select %26, %27, %28 : vector<8x8xi1>, vector<8x8xf32>
    %30 = vector.broadcast %23 : vector<1x8xf32> to vector<8x8xf32>
    %31 = arith.addf %30, %29 : vector<8x8xf32>
    %cst_20 = arith.constant 2.500000e-01 : f32
    %32 = vector.broadcast %cst_20 : f32 to vector<8x128xf32>
    %33 = arith.mulf %10, %32 : vector<8x128xf32>
    %34 = tpu.transpose %18, [1, 0] : vector<8x128xf32> -> vector<128x8xf32>
    %35 = vector.extract_strided_slice %33 {offsets = [0, 0], sizes = [8, 16], strides = [1, 1]} : vector<8x128xf32> to vector<8x16xf32>
    %36 = vector.extract_strided_slice %34 {offsets = [0, 0], sizes = [16, 8], strides = [1, 1]} : vector<128x8xf32> to vector<16x8xf32>
    %37 = vector.extract_strided_slice %19 {offsets = [0, 0], sizes = [8, 16], strides = [1, 1]} : vector<8x128xf32> to vector<8x16xf32>
    %cst_21 = arith.constant dense<0.000000e+00> : vector<8x8xf32>
    %38 = tpu.matmul %35, %36, %cst_21 {dimension_numbers = #tpu.dot_dimension_numbers<[1], [0], [0], [1], [0, 0, 1, 1], [], []>} : vector<8x16xf32>, vector<16x8xf32>, vector<8x8xf32> -> vector<8x8xf32>
    %39 = arith.addf %38, %31 : vector<8x8xf32>
    %cst_22 = arith.constant dense<0xFF800000> : vector<8xf32>
    %40 = vector.multi_reduction <maximumf>, %39, %cst_22 [1] : vector<8x8xf32> to vector<8xf32>
    %41 = vector.shape_cast %40 : vector<8xf32> to vector<8x1xf32>
    %42 = vector.broadcast %41 : vector<8x1xf32> to vector<8x8xf32>
    %43 = arith.subf %39, %42 : vector<8x8xf32>
    %44 = math.exp %43 : vector<8x8xf32>
    %cst_23 = arith.constant dense<0.000000e+00> : vector<8xf32>
    %45 = vector.multi_reduction <add>, %44, %cst_23 [1] : vector<8x8xf32> to vector<8xf32>
    %46 = vector.shape_cast %45 : vector<8xf32> to vector<8x1xf32>
    %47 = tpu.reciprocal %46 {approx = true} : vector<8x1xf32> -> vector<8x1xf32>
    %48 = vector.broadcast %47 : vector<8x1xf32> to vector<8x8xf32>
    %49 = arith.mulf %44, %48 : vector<8x8xf32>
    %cst_24 = arith.constant dense<0.000000e+00> : vector<8x16xf32>
    %50 = tpu.matmul %49, %37, %cst_24 {dimension_numbers = #tpu.dot_dimension_numbers<[1], [0], [0], [1], [0, 0, 1, 1], [], []>} : vector<8x8xf32>, vector<8x16xf32>, vector<8x16xf32> -> vector<8x16xf32>
    %51 = vector.extract_strided_slice %33 {offsets = [0, 16], sizes = [8, 16], strides = [1, 1]} : vector<8x128xf32> to vector<8x16xf32>
    %52 = vector.extract_strided_slice %34 {offsets = [16, 0], sizes = [16, 8], strides = [1, 1]} : vector<128x8xf32> to vector<16x8xf32>
    %53 = vector.extract_strided_slice %19 {offsets = [0, 16], sizes = [8, 16], strides = [1, 1]} : vector<8x128xf32> to vector<8x16xf32>
    %cst_25 = arith.constant dense<0.000000e+00> : vector<8x8xf32>
    %54 = tpu.matmul %51, %52, %cst_25 {dimension_numbers = #tpu.dot_dimension_numbers<[1], [0], [0], [1], [0, 0, 1, 1], [], []>} : vector<8x16xf32>, vector<16x8xf32>, vector<8x8xf32> -> vector<8x8xf32>
    %55 = arith.addf %54, %31 : vector<8x8xf32>
    %cst_26 = arith.constant dense<0xFF800000> : vector<8xf32>
    %56 = vector.multi_reduction <maximumf>, %55, %cst_26 [1] : vector<8x8xf32> to vector<8xf32>
    %57 = vector.shape_cast %56 : vector<8xf32> to vector<8x1xf32>
    %58 = vector.broadcast %57 : vector<8x1xf32> to vector<8x8xf32>
    %59 = arith.subf %55, %58 : vector<8x8xf32>
    %60 = math.exp %59 : vector<8x8xf32>
    %cst_27 = arith.constant dense<0.000000e+00> : vector<8xf32>
    %61 = vector.multi_reduction <add>, %60, %cst_27 [1] : vector<8x8xf32> to vector<8xf32>
    %62 = vector.shape_cast %61 : vector<8xf32> to vector<8x1xf32>
    %63 = tpu.reciprocal %62 {approx = true} : vector<8x1xf32> -> vector<8x1xf32>
    %64 = vector.broadcast %63 : vector<8x1xf32> to vector<8x8xf32>
    %65 = arith.mulf %60, %64 : vector<8x8xf32>
    %cst_28 = arith.constant dense<0.000000e+00> : vector<8x16xf32>
    %66 = tpu.matmul %65, %53, %cst_28 {dimension_numbers = #tpu.dot_dimension_numbers<[1], [0], [0], [1], [0, 0, 1, 1], [], []>} : vector<8x8xf32>, vector<8x16xf32>, vector<8x16xf32> -> vector<8x16xf32>
    %67 = vector.extract_strided_slice %33 {offsets = [0, 32], sizes = [8, 16], strides = [1, 1]} : vector<8x128xf32> to vector<8x16xf32>
    %68 = vector.extract_strided_slice %34 {offsets = [32, 0], sizes = [16, 8], strides = [1, 1]} : vector<128x8xf32> to vector<16x8xf32>
    %69 = vector.extract_strided_slice %19 {offsets = [0, 32], sizes = [8, 16], strides = [1, 1]} : vector<8x128xf32> to vector<8x16xf32>
    %cst_29 = arith.constant dense<0.000000e+00> : vector<8x8xf32>
    %70 = tpu.matmul %67, %68, %cst_29 {dimension_numbers = #tpu.dot_dimension_numbers<[1], [0], [0], [1], [0, 0, 1, 1], [], []>} : vector<8x16xf32>, vector<16x8xf32>, vector<8x8xf32> -> vector<8x8xf32>
    %71 = arith.addf %70, %31 : vector<8x8xf32>
    %cst_30 = arith.constant dense<0xFF800000> : vector<8xf32>
    %72 = vector.multi_reduction <maximumf>, %71, %cst_30 [1] : vector<8x8xf32> to vector<8xf32>
    %73 = vector.shape_cast %72 : vector<8xf32> to vector<8x1xf32>
    %74 = vector.broadcast %73 : vector<8x1xf32> to vector<8x8xf32>
    %75 = arith.subf %71, %74 : vector<8x8xf32>
    %76 = math.exp %75 : vector<8x8xf32>
    %cst_31 = arith.constant dense<0.000000e+00> : vector<8xf32>
    %77 = vector.multi_reduction <add>, %76, %cst_31 [1] : vector<8x8xf32> to vector<8xf32>
    %78 = vector.shape_cast %77 : vector<8xf32> to vector<8x1xf32>
    %79 = tpu.reciprocal %78 {approx = true} : vector<8x1xf32> -> vector<8x1xf32>
    %80 = vector.broadcast %79 : vector<8x1xf32> to vector<8x8xf32>
    %81 = arith.mulf %76, %80 : vector<8x8xf32>
    %cst_32 = arith.constant dense<0.000000e+00> : vector<8x16xf32>
    %82 = tpu.matmul %81, %69, %cst_32 {dimension_numbers = #tpu.dot_dimension_numbers<[1], [0], [0], [1], [0, 0, 1, 1], [], []>} : vector<8x8xf32>, vector<8x16xf32>, vector<8x16xf32> -> vector<8x16xf32>
    %83 = vector.extract_strided_slice %33 {offsets = [0, 48], sizes = [8, 16], strides = [1, 1]} : vector<8x128xf32> to vector<8x16xf32>
    %84 = vector.extract_strided_slice %34 {offsets = [48, 0], sizes = [16, 8], strides = [1, 1]} : vector<128x8xf32> to vector<16x8xf32>
    %85 = vector.extract_strided_slice %19 {offsets = [0, 48], sizes = [8, 16], strides = [1, 1]} : vector<8x128xf32> to vector<8x16xf32>
    %cst_33 = arith.constant dense<0.000000e+00> : vector<8x8xf32>
    %86 = tpu.matmul %83, %84, %cst_33 {dimension_numbers = #tpu.dot_dimension_numbers<[1], [0], [0], [1], [0, 0, 1, 1], [], []>} : vector<8x16xf32>, vector<16x8xf32>, vector<8x8xf32> -> vector<8x8xf32>
    %87 = arith.addf %86, %31 : vector<8x8xf32>
    %cst_34 = arith.constant dense<0xFF800000> : vector<8xf32>
    %88 = vector.multi_reduction <maximumf>, %87, %cst_34 [1] : vector<8x8xf32> to vector<8xf32>
    %89 = vector.shape_cast %88 : vector<8xf32> to vector<8x1xf32>
    %90 = vector.broadcast %89 : vector<8x1xf32> to vector<8x8xf32>
    %91 = arith.subf %87, %90 : vector<8x8xf32>
    %92 = math.exp %91 : vector<8x8xf32>
    %cst_35 = arith.constant dense<0.000000e+00> : vector<8xf32>
    %93 = vector.multi_reduction <add>, %92, %cst_35 [1] : vector<8x8xf32> to vector<8xf32>
    %94 = vector.shape_cast %93 : vector<8xf32> to vector<8x1xf32>
    %95 = tpu.reciprocal %94 {approx = true} : vector<8x1xf32> -> vector<8x1xf32>
    %96 = vector.broadcast %95 : vector<8x1xf32> to vector<8x8xf32>
    %97 = arith.mulf %92, %96 : vector<8x8xf32>
    %cst_36 = arith.constant dense<0.000000e+00> : vector<8x16xf32>
    %98 = tpu.matmul %97, %85, %cst_36 {dimension_numbers = #tpu.dot_dimension_numbers<[1], [0], [0], [1], [0, 0, 1, 1], [], []>} : vector<8x8xf32>, vector<8x16xf32>, vector<8x16xf32> -> vector<8x16xf32>
    %99 = vector.extract_strided_slice %33 {offsets = [0, 64], sizes = [8, 16], strides = [1, 1]} : vector<8x128xf32> to vector<8x16xf32>
    %100 = vector.extract_strided_slice %34 {offsets = [64, 0], sizes = [16, 8], strides = [1, 1]} : vector<128x8xf32> to vector<16x8xf32>
    %101 = vector.extract_strided_slice %19 {offsets = [0, 64], sizes = [8, 16], strides = [1, 1]} : vector<8x128xf32> to vector<8x16xf32>
    %cst_37 = arith.constant dense<0.000000e+00> : vector<8x8xf32>
    %102 = tpu.matmul %99, %100, %cst_37 {dimension_numbers = #tpu.dot_dimension_numbers<[1], [0], [0], [1], [0, 0, 1, 1], [], []>} : vector<8x16xf32>, vector<16x8xf32>, vector<8x8xf32> -> vector<8x8xf32>
    %103 = arith.addf %102, %31 : vector<8x8xf32>
    %cst_38 = arith.constant dense<0xFF800000> : vector<8xf32>
    %104 = vector.multi_reduction <maximumf>, %103, %cst_38 [1] : vector<8x8xf32> to vector<8xf32>
    %105 = vector.shape_cast %104 : vector<8xf32> to vector<8x1xf32>
    %106 = vector.broadcast %105 : vector<8x1xf32> to vector<8x8xf32>
    %107 = arith.subf %103, %106 : vector<8x8xf32>
    %108 = math.exp %107 : vector<8x8xf32>
    %cst_39 = arith.constant dense<0.000000e+00> : vector<8xf32>
    %109 = vector.multi_reduction <add>, %108, %cst_39 [1] : vector<8x8xf32> to vector<8xf32>
    %110 = vector.shape_cast %109 : vector<8xf32> to vector<8x1xf32>
    %111 = tpu.reciprocal %110 {approx = true} : vector<8x1xf32> -> vector<8x1xf32>
    %112 = vector.broadcast %111 : vector<8x1xf32> to vector<8x8xf32>
    %113 = arith.mulf %108, %112 : vector<8x8xf32>
    %cst_40 = arith.constant dense<0.000000e+00> : vector<8x16xf32>
    %114 = tpu.matmul %113, %101, %cst_40 {dimension_numbers = #tpu.dot_dimension_numbers<[1], [0], [0], [1], [0, 0, 1, 1], [], []>} : vector<8x8xf32>, vector<8x16xf32>, vector<8x16xf32> -> vector<8x16xf32>
    %115 = vector.extract_strided_slice %33 {offsets = [0, 80], sizes = [8, 16], strides = [1, 1]} : vector<8x128xf32> to vector<8x16xf32>
    %116 = vector.extract_strided_slice %34 {offsets = [80, 0], sizes = [16, 8], strides = [1, 1]} : vector<128x8xf32> to vector<16x8xf32>
    %117 = vector.extract_strided_slice %19 {offsets = [0, 80], sizes = [8, 16], strides = [1, 1]} : vector<8x128xf32> to vector<8x16xf32>
    %cst_41 = arith.constant dense<0.000000e+00> : vector<8x8xf32>
    %118 = tpu.matmul %115, %116, %cst_41 {dimension_numbers = #tpu.dot_dimension_numbers<[1], [0], [0], [1], [0, 0, 1, 1], [], []>} : vector<8x16xf32>, vector<16x8xf32>, vector<8x8xf32> -> vector<8x8xf32>
    %119 = arith.addf %118, %31 : vector<8x8xf32>
    %cst_42 = arith.constant dense<0xFF800000> : vector<8xf32>
    %120 = vector.multi_reduction <maximumf>, %119, %cst_42 [1] : vector<8x8xf32> to vector<8xf32>
    %121 = vector.shape_cast %120 : vector<8xf32> to vector<8x1xf32>
    %122 = vector.broadcast %121 : vector<8x1xf32> to vector<8x8xf32>
    %123 = arith.subf %119, %122 : vector<8x8xf32>
    %124 = math.exp %123 : vector<8x8xf32>
    %cst_43 = arith.constant dense<0.000000e+00> : vector<8xf32>
    %125 = vector.multi_reduction <add>, %124, %cst_43 [1] : vector<8x8xf32> to vector<8xf32>
    %126 = vector.shape_cast %125 : vector<8xf32> to vector<8x1xf32>
    %127 = tpu.reciprocal %126 {approx = true} : vector<8x1xf32> -> vector<8x1xf32>
    %128 = vector.broadcast %127 : vector<8x1xf32> to vector<8x8xf32>
    %129 = arith.mulf %124, %128 : vector<8x8xf32>
    %cst_44 = arith.constant dense<0.000000e+00> : vector<8x16xf32>
    %130 = tpu.matmul %129, %117, %cst_44 {dimension_numbers = #tpu.dot_dimension_numbers<[1], [0], [0], [1], [0, 0, 1, 1], [], []>} : vector<8x8xf32>, vector<8x16xf32>, vector<8x16xf32> -> vector<8x16xf32>
    %131 = vector.extract_strided_slice %33 {offsets = [0, 96], sizes = [8, 16], strides = [1, 1]} : vector<8x128xf32> to vector<8x16xf32>
    %132 = vector.extract_strided_slice %34 {offsets = [96, 0], sizes = [16, 8], strides = [1, 1]} : vector<128x8xf32> to vector<16x8xf32>
    %133 = vector.extract_strided_slice %19 {offsets = [0, 96], sizes = [8, 16], strides = [1, 1]} : vector<8x128xf32> to vector<8x16xf32>
    %cst_45 = arith.constant dense<0.000000e+00> : vector<8x8xf32>
    %134 = tpu.matmul %131, %132, %cst_45 {dimension_numbers = #tpu.dot_dimension_numbers<[1], [0], [0], [1], [0, 0, 1, 1], [], []>} : vector<8x16xf32>, vector<16x8xf32>, vector<8x8xf32> -> vector<8x8xf32>
    %135 = arith.addf %134, %31 : vector<8x8xf32>
    %cst_46 = arith.constant dense<0xFF800000> : vector<8xf32>
    %136 = vector.multi_reduction <maximumf>, %135, %cst_46 [1] : vector<8x8xf32> to vector<8xf32>
    %137 = vector.shape_cast %136 : vector<8xf32> to vector<8x1xf32>
    %138 = vector.broadcast %137 : vector<8x1xf32> to vector<8x8xf32>
    %139 = arith.subf %135, %138 : vector<8x8xf32>
    %140 = math.exp %139 : vector<8x8xf32>
    %cst_47 = arith.constant dense<0.000000e+00> : vector<8xf32>
    %141 = vector.multi_reduction <add>, %140, %cst_47 [1] : vector<8x8xf32> to vector<8xf32>
    %142 = vector.shape_cast %141 : vector<8xf32> to vector<8x1xf32>
    %143 = tpu.reciprocal %142 {approx = true} : vector<8x1xf32> -> vector<8x1xf32>
    %144 = vector.broadcast %143 : vector<8x1xf32> to vector<8x8xf32>
    %145 = arith.mulf %140, %144 : vector<8x8xf32>
    %cst_48 = arith.constant dense<0.000000e+00> : vector<8x16xf32>
    %146 = tpu.matmul %145, %133, %cst_48 {dimension_numbers = #tpu.dot_dimension_numbers<[1], [0], [0], [1], [0, 0, 1, 1], [], []>} : vector<8x8xf32>, vector<8x16xf32>, vector<8x16xf32> -> vector<8x16xf32>
    %147 = vector.extract_strided_slice %33 {offsets = [0, 112], sizes = [8, 16], strides = [1, 1]} : vector<8x128xf32> to vector<8x16xf32>
    %148 = vector.extract_strided_slice %34 {offsets = [112, 0], sizes = [16, 8], strides = [1, 1]} : vector<128x8xf32> to vector<16x8xf32>
    %149 = vector.extract_strided_slice %19 {offsets = [0, 112], sizes = [8, 16], strides = [1, 1]} : vector<8x128xf32> to vector<8x16xf32>
    %cst_49 = arith.constant dense<0.000000e+00> : vector<8x8xf32>
    %150 = tpu.matmul %147, %148, %cst_49 {dimension_numbers = #tpu.dot_dimension_numbers<[1], [0], [0], [1], [0, 0, 1, 1], [], []>} : vector<8x16xf32>, vector<16x8xf32>, vector<8x8xf32> -> vector<8x8xf32>
    %151 = arith.addf %150, %31 : vector<8x8xf32>
    %cst_50 = arith.constant dense<0xFF800000> : vector<8xf32>
    %152 = vector.multi_reduction <maximumf>, %151, %cst_50 [1] : vector<8x8xf32> to vector<8xf32>
    %153 = vector.shape_cast %152 : vector<8xf32> to vector<8x1xf32>
    %154 = vector.broadcast %153 : vector<8x1xf32> to vector<8x8xf32>
    %155 = arith.subf %151, %154 : vector<8x8xf32>
    %156 = math.exp %155 : vector<8x8xf32>
    %cst_51 = arith.constant dense<0.000000e+00> : vector<8xf32>
    %157 = vector.multi_reduction <add>, %156, %cst_51 [1] : vector<8x8xf32> to vector<8xf32>
    %158 = vector.shape_cast %157 : vector<8xf32> to vector<8x1xf32>
    %159 = tpu.reciprocal %158 {approx = true} : vector<8x1xf32> -> vector<8x1xf32>
    %160 = vector.broadcast %159 : vector<8x1xf32> to vector<8x8xf32>
    %161 = arith.mulf %156, %160 : vector<8x8xf32>
    %cst_52 = arith.constant dense<0.000000e+00> : vector<8x16xf32>
    %162 = tpu.matmul %161, %149, %cst_52 {dimension_numbers = #tpu.dot_dimension_numbers<[1], [0], [0], [1], [0, 0, 1, 1], [], []>} : vector<8x8xf32>, vector<8x16xf32>, vector<8x16xf32> -> vector<8x16xf32>
    %163 = tpu.concatenate %50, %66, %82, %98, %114, %130, %146, %162 in 1 : vector<8x16xf32>, vector<8x16xf32>, vector<8x16xf32>, vector<8x16xf32>, vector<8x16xf32>, vector<8x16xf32>, vector<8x16xf32>, vector<8x16xf32> -> vector<8x128xf32>
    %164 = arith.truncf %163 : vector<8x128xf32> to vector<8x128xbf16>
    %c0_53 = arith.constant 0 : index
    %c0_54 = arith.constant 0 : index
    %165 = vector.load %arg7[%c0_53, %c0_54] : memref<128x128xf32, #tpu.memory_space<vmem>>, vector<128x128xf32>
    %166 = arith.truncf %165 : vector<128x128xf32> to vector<128x128xbf16>
    %cst_55 = arith.constant dense<0.000000e+00> : vector<8x128xf32>
    %167 = tpu.matmul %164, %166, %cst_55 {dimension_numbers = #tpu.dot_dimension_numbers<[1], [0], [0], [1], [0, 0, 1, 1], [], []>} : vector<8x128xbf16>, vector<128x128xbf16>, vector<8x128xf32> -> vector<8x128xf32>
    %c0_56 = arith.constant 0 : index
    %c0_57 = arith.constant 0 : index
    %168 = vector.load %arg8[%c0_56, %c0_57] : memref<1x128xf32, #tpu.memory_space<vmem>>, vector<1x128xf32>
    %169 = vector.broadcast %168 : vector<1x128xf32> to vector<8x128xf32>
    %170 = arith.addf %167, %169 : vector<8x128xf32>
    %c0_58 = arith.constant 0 : index
    %c0_59 = arith.constant 0 : index
    %c0_60 = arith.constant 0 : index
    %171 = vector.load %arg10[%c0_58, %c0_59, %c0_60] : memref<1x8x128xf32, #tpu.memory_space<vmem>>, vector<1x8x128xf32>
    %172 = vector.shape_cast %171 : vector<1x8x128xf32> to vector<8x128xf32>
    %173 = vector.shape_cast %170 : vector<8x128xf32> to vector<1x8x128xf32>
    tpu.vector_store %arg10[%c0_58, %c0_59, %c0_60], %173 {strides = array<i32>} : memref<1x8x128xf32, #tpu.memory_space<vmem>>, vector<1x8x128xf32>,
    return
  }
  func.func @transform_0(%arg0: i32) -> (i32, i32, i32) {
    %c0_i32 = arith.constant 0 : i32
    %c0_i32_0 = arith.constant 0 : i32
    %c0_i32_1 = arith.constant 0 : i32
    return %arg0, %c0_i32, %c0_i32_0 : i32, i32, i32
  }
  func.func @transform_1(%arg0: i32) -> (i32, i32, i32) {
    %c0_i32 = arith.constant 0 : i32
    %c0_i32_0 = arith.constant 0 : i32
    %c0_i32_1 = arith.constant 0 : i32
    return %arg0, %c0_i32, %c0_i32_0 : i32, i32, i32
  }
  func.func @transform_2(%arg0: i32) -> (i32, i32) {
    %c0_i32 = arith.constant 0 : i32
    %c0_i32_0 = arith.constant 0 : i32
    %c0_i32_1 = arith.constant 0 : i32
    return %c0_i32, %c0_i32_0 : i32, i32
  }
  func.func @transform_3(%arg0: i32) -> (i32, i32) {
    %c0_i32 = arith.constant 0 : i32
    %c0_i32_0 = arith.constant 0 : i32
    %c0_i32_1 = arith.constant 0 : i32
    return %c0_i32, %c0_i32_0 : i32, i32
  }
  func.func @transform_4(%arg0: i32) -> (i32, i32) {
    %c0_i32 = arith.constant 0 : i32
    %c0_i32_0 = arith.constant 0 : i32
    %c0_i32_1 = arith.constant 0 : i32
    return %c0_i32, %c0_i32_0 : i32, i32
  }
  func.func @transform_5(%arg0: i32) -> (i32, i32) {
    %c0_i32 = arith.constant 0 : i32
    %c0_i32_0 = arith.constant 0 : i32
    %c0_i32_1 = arith.constant 0 : i32
    return %c0_i32, %c0_i32_0 : i32, i32
  }
  func.func @transform_6(%arg0: i32) -> (i32, i32) {
    %c0_i32 = arith.constant 0 : i32
    %c0_i32_0 = arith.constant 0 : i32
    %c0_i32_1 = arith.constant 0 : i32
    return %c0_i32, %c0_i32_0 : i32, i32
  }
  func.func @transform_7(%arg0: i32) -> (i32, i32) {
    %c0_i32 = arith.constant 0 : i32
    %c0_i32_0 = arith.constant 0 : i32
    %c0_i32_1 = arith.constant 0 : i32
    return %c0_i32, %c0_i32_0 : i32, i32
  }
  func.func @transform_8(%arg0: i32) -> (i32, i32, i32) {
    %c0_i32 = arith.constant 0 : i32
    %c0_i32_0 = arith.constant 0 : i32
    %c0_i32_1 = arith.constant 0 : i32
    return %arg0, %c0_i32, %c0_i32_0 : i32, i32, i32
  }
  func.func @transform_9(%arg0: i32) -> (i32, i32, i32) {
    %c0_i32 = arith.constant 0 : i32
    %c0_i32_0 = arith.constant 0 : i32
    %c0_i32_1 = arith.constant 0 : i32
    return %arg0, %c0_i32, %c0_i32_0 : i32, i32, i32
  }
}

module attributes {stable_mosaic.version = 11 : i64} {
  func.func @_gen_logsoftmax_kernel(%arg0: i32, %arg1: memref<16x128xf32, #tpu.memory_space<vmem>>, %arg2: memref<128x128xf32, #tpu.memory_space<vmem>>, %arg3: memref<1x128xf32, #tpu.memory_space<vmem>>, %arg4: memref<16x128xf32, #tpu.memory_space<vmem>>) attributes {dimension_semantics = [#tpu.dimension_semantics<parallel>], iteration_bounds = array<i64: 1>, scalar_prefetch = 0 : i64, scratch_operands = 0 : i64, tpu.core_type = #tpu.core_type<tc>, window_params = [{transform_indices = @transform_0, window_bounds = array<i64: 16, 128>}, {pipeline_mode = #tpu.pipeline_mode<synchronous>, transform_indices = @transform_1, window_bounds = array<i64: 128, 128>}, {pipeline_mode = #tpu.pipeline_mode<synchronous>, transform_indices = @transform_2, window_bounds = array<i64: 1, 128>}, {transform_indices = @transform_3, window_bounds = array<i64: 16, 128>}]} {
    %c0 = arith.constant 0 : index
    %c0_0 = arith.constant 0 : index
    %0 = vector.load %arg1[%c0, %c0_0] : memref<16x128xf32, #tpu.memory_space<vmem>>, vector<16x128xf32>
    %1 = arith.truncf %0 : vector<16x128xf32> to vector<16x128xbf16>
    %c0_1 = arith.constant 0 : index
    %c0_2 = arith.constant 0 : index
    %2 = vector.load %arg2[%c0_1, %c0_2] : memref<128x128xf32, #tpu.memory_space<vmem>>, vector<128x128xf32>
    %3 = arith.truncf %2 : vector<128x128xf32> to vector<128x128xbf16>
    %cst = arith.constant dense<0.000000e+00> : vector<16x128xf32>
    %4 = tpu.matmul %1, %3, %cst {dimension_numbers = #tpu.dot_dimension_numbers<[1], [0], [0], [1], [0, 0, 1, 1], [], []>} : vector<16x128xbf16>, vector<128x128xbf16>, vector<16x128xf32> -> vector<16x128xf32>
    %c0_3 = arith.constant 0 : index
    %c0_4 = arith.constant 0 : index
    %5 = vector.load %arg3[%c0_3, %c0_4] : memref<1x128xf32, #tpu.memory_space<vmem>>, vector<1x128xf32>
    %6 = vector.broadcast %5 : vector<1x128xf32> to vector<16x128xf32>
    %7 = arith.addf %4, %6 : vector<16x128xf32>
    %cst_5 = arith.constant dense<0xFF800000> : vector<16xf32>
    %8 = vector.multi_reduction <maximumf>, %7, %cst_5 [1] : vector<16x128xf32> to vector<16xf32>
    %9 = vector.shape_cast %8 : vector<16xf32> to vector<16x1xf32>
    %10 = vector.broadcast %9 : vector<16x1xf32> to vector<16x128xf32>
    %11 = arith.subf %7, %10 : vector<16x128xf32>
    %12 = math.exp %11 : vector<16x128xf32>
    %cst_6 = arith.constant dense<0.000000e+00> : vector<16xf32>
    %13 = vector.multi_reduction <add>, %12, %cst_6 [1] : vector<16x128xf32> to vector<16xf32>
    %14 = vector.shape_cast %13 : vector<16xf32> to vector<16x1xf32>
    %15 = math.log %14 : vector<16x1xf32>
    %16 = vector.broadcast %15 : vector<16x1xf32> to vector<16x128xf32>
    %17 = arith.subf %11, %16 : vector<16x128xf32>
    %c0_7 = arith.constant 0 : index
    %c0_8 = arith.constant 0 : index
    %18 = vector.load %arg4[%c0_7, %c0_8] : memref<16x128xf32, #tpu.memory_space<vmem>>, vector<16x128xf32>
    tpu.vector_store %arg4[%c0_7, %c0_8], %17 {strides = array<i32>} : memref<16x128xf32, #tpu.memory_space<vmem>>, vector<16x128xf32>,
    return
  }
  func.func @transform_0(%arg0: i32) -> (i32, i32) {
    %c0_i32 = arith.constant 0 : i32
    %c0_i32_0 = arith.constant 0 : i32
    return %arg0, %c0_i32 : i32, i32
  }
  func.func @transform_1(%arg0: i32) -> (i32, i32) {
    %c0_i32 = arith.constant 0 : i32
    %c0_i32_0 = arith.constant 0 : i32
    %c0_i32_1 = arith.constant 0 : i32
    return %c0_i32, %c0_i32_0 : i32, i32
  }
  func.func @transform_2(%arg0: i32) -> (i32, i32) {
    %c0_i32 = arith.constant 0 : i32
    %c0_i32_0 = arith.constant 0 : i32
    %c0_i32_1 = arith.constant 0 : i32
    return %c0_i32, %c0_i32_0 : i32, i32
  }
  func.func @transform_3(%arg0: i32) -> (i32, i32) {
    %c0_i32 = arith.constant 0 : i32
    %c0_i32_0 = arith.constant 0 : i32
    return %arg0, %c0_i32 : i32, i32
  }
}

</mosaic_0001>

<llo_original>
// kernel: one2one_forward.31
$region0: #{one2one_forward.31}
  #allocation0 [shape = 'u32[]', space=smem, size = 0x4, offset = 0x4, fixed_abs, tag = 'smem constant byte address 0x4 - core index']
  #allocation1 [shape = 'u32[144,128]{1,0:T(1,128)}', space=vmem, size = 0x12000, scoped, tag = 'internal scratch']
  %s0 = inlined_call_operand.vmem [shape: f32[16,128], index: 0, kind: input, shape index: {}]
  %s1 = inlined_call_operand.vmem [shape: f32[1,128], index: 1, kind: input, shape index: {}]
  %s2 = inlined_call_operand.vmem [shape: f32[1,128], index: 2, kind: input, shape index: {}]
  %s3 = inlined_call_operand.vmem [shape: f32[16,128], index: 3, kind: output, shape index: {}]
  %s4 = sld [smem:[#allocation0]]
  $region22: #{one2one_forward.31} parent=0
    _
  %s6 = ssub.s32 1, %s4
  %s7 = scalar_select 0, %s6, %s4
  // Predicated region
  $region2: #{one2one_forward.31} parent=0 // pred_check
    _
  $region3: #{one2one_forward.31} parent=0 // pred_check_branch
    %9 = sbr.rel (0) target = $region5
  $region4: #{one2one_forward.31} parent=0 // pred_region
    _
  $region5: #{one2one_forward.31} parent=0 // pred_fallthru
    _
  // Predicated region
  $region6: #{one2one_forward.31} parent=0 // pred_check
    _
  $region7: #{one2one_forward.31} parent=0 // pred_check_branch
    %11 = sbr.rel (0) target = $region9
  $region8: #{one2one_forward.31} parent=0 // pred_region
    _
  $region9: #{one2one_forward.31} parent=0 // pred_fallthru
    _
  // Predicated region
  $region10: #{one2one_forward.31} parent=0 // pred_check
    _
  $region11: #{one2one_forward.31} parent=0 // pred_check_branch
    %13 = sbr.rel (0) target = $region13
  $region12: #{one2one_forward.31} parent=0 // pred_region
    _
  $region13: #{one2one_forward.31} parent=0 // pred_fallthru
    _
  %v14 = vld [vmem:[%s0] sm:$0xff]
  %v15 = vld [vmem:[%s0 + $0x8] sm:$0xff]
  %16 = vadd.xlane.f32.xlu0 %v14
  %v17 = vpop.xlane.xlu0 %16
  %18 = vadd.xlane.f32.xlu0 %v15
  %v19 = vpop.xlane.xlu0 %18
  %v20 = vrcp.pop 128.0
  %v21 = vmul.f32 %v17, %v20
  %v22 = vmul.f32 %v19, %v20
  %v23 = vsub.f32 %v14, %v21
  %v24 = vsub.f32 %v15, %v22
  %v25 = vmul.f32 %v23, %v23
  %v26 = vmul.f32 %v24, %v24
  %27 = vadd.xlane.f32.xlu0 %v25
  %v28 = vpop.xlane.xlu0 %27
  %29 = vadd.xlane.f32.xlu0 %v26
  %v30 = vpop.xlane.xlu0 %29
  %v31 = vmul.f32 %v28, %v20
  %v32 = vmul.f32 %v30, %v20
  %v33 = vadd.f32 %v31, 1e-06
  %v34 = vadd.f32 %v32, 1e-06
  %v35 = vrsqrt.pop %v33
  %v36 = vrsqrt.pop %v34
  %v37 = vmul.f32 %v23, %v35
  %v38 = vmul.f32 %v24, %v36
  %v39 = vld [vmem:[%s1] sm:$0x1]
  %v41 = vlaneseq
  %v42 = vshrl.u32 %v41, 7
  %v43 = vsub.s32 0, %v42
  %v44 = vrot.slane %v39, %v43
  %v46 = vmul.f32 %v37, %v44
  %v47 = vmul.f32 %v38, %v44
  %v48 = vld [vmem:[%s2] sm:$0x1]
  %v50 = vlaneseq
  %v51 = vshrl.u32 %v50, 7
  %v52 = vsub.s32 0, %v51
  %v53 = vrot.slane %v48, %v52
  %v55 = vadd.f32 %v46, %v53
  %v56 = vadd.f32 %v47, %v53
  %57 = vst [vmem:[%s3] sm:$0xff] %v55
  %58 = vst [vmem:[%s3 + $0x8] sm:$0xff] %v56
  // Predicated region
  $region14: #{one2one_forward.31} parent=0 // pred_check
    _
  $region15: #{one2one_forward.31} parent=0 // pred_check_branch
    %60 = sbr.rel (0) target = $region17
  $region16: #{one2one_forward.31} parent=0 // pred_region
    _
  $region17: #{one2one_forward.31} parent=0 // pred_fallthru
    _
  // Predicated region
  $region18: #{one2one_forward.31} parent=0 // pred_check
    _
  $region19: #{one2one_forward.31} parent=0 // pred_check_branch
    %62 = sbr.rel (0) target = $region21
  $region20: #{one2one_forward.31} parent=0 // pred_region
    _
  $region21: #{one2one_forward.31} parent=0 // pred_fallthru
    _

// kernel: one2one_forward.24
$region0: #{one2one_forward.24}
  #allocation0 [shape = 'u32[]', space=smem, size = 0x4, offset = 0x4, fixed_abs, tag = 'smem constant byte address 0x4 - core index']
  #allocation1 [shape = 'u32[144,128]{1,0:T(1,128)}', space=vmem, size = 0x12000, scoped, tag = 'internal scratch']
  %s0 = inlined_call_operand.vmem [shape: f32[16,128], index: 0, kind: input, shape index: {}]
  %s1 = inlined_call_operand.vmem [shape: f32[16,128], index: 1, kind: input, shape index: {}]
  %s2 = inlined_call_operand.vmem [shape: f32[1,128], index: 2, kind: input, shape index: {}]
  %s3 = inlined_call_operand.vmem [shape: f32[1,128], index: 3, kind: input, shape index: {}]
  %s4 = inlined_call_operand.vmem [shape: f32[16,128], index: 4, kind: output, shape index: {}]
  %s5 = sld [smem:[#allocation0]]
  $region26: #{one2one_forward.24} parent=0
    _
  %s7 = ssub.s32 1, %s5
  %s8 = scalar_select 0, %s7, %s5
  // Predicated region
  $region2: #{one2one_forward.24} parent=0 // pred_check
    _
  $region3: #{one2one_forward.24} parent=0 // pred_check_branch
    %10 = sbr.rel (0) target = $region5
  $region4: #{one2one_forward.24} parent=0 // pred_region
    _
  $region5: #{one2one_forward.24} parent=0 // pred_fallthru
    _
  // Predicated region
  $region6: #{one2one_forward.24} parent=0 // pred_check
    _
  $region7: #{one2one_forward.24} parent=0 // pred_check_branch
    %12 = sbr.rel (0) target = $region9
  $region8: #{one2one_forward.24} parent=0 // pred_region
    _
  $region9: #{one2one_forward.24} parent=0 // pred_fallthru
    _
  // Predicated region
  $region10: #{one2one_forward.24} parent=0 // pred_check
    _
  $region11: #{one2one_forward.24} parent=0 // pred_check_branch
    %14 = sbr.rel (0) target = $region13
  $region12: #{one2one_forward.24} parent=0 // pred_region
    _
  $region13: #{one2one_forward.24} parent=0 // pred_fallthru
    _
  // Predicated region
  $region14: #{one2one_forward.24} parent=0 // pred_check
    _
  $region15: #{one2one_forward.24} parent=0 // pred_check_branch
    %16 = sbr.rel (0) target = $region17
  $region16: #{one2one_forward.24} parent=0 // pred_region
    _
  $region17: #{one2one_forward.24} parent=0 // pred_fallthru
    _
  %v17 = vld [vmem:[%s0] sm:$0xff]
  %v18 = vld [vmem:[%s0 + $0x8] sm:$0xff]
  %v19 = vld [vmem:[%s1] sm:$0xff]
  %v20 = vld [vmem:[%s1 + $0x8] sm:$0xff]
  %v21 = vadd.f32 %v17, %v19
  %v22 = vadd.f32 %v18, %v20
  %23 = vadd.xlane.f32.xlu0 %v21
  %v24 = vpop.xlane.xlu0 %23
  %25 = vadd.xlane.f32.xlu0 %v22
  %v26 = vpop.xlane.xlu0 %25
  %v27 = vrcp.pop 128.0
  %v28 = vmul.f32 %v24, %v27
  %v29 = vmul.f32 %v26, %v27
  %v30 = vsub.f32 %v21, %v28
  %v31 = vsub.f32 %v22, %v29
  %v32 = vmul.f32 %v30, %v30
  %v33 = vmul.f32 %v31, %v31
  %34 = vadd.xlane.f32.xlu0 %v32
  %v35 = vpop.xlane.xlu0 %34
  %36 = vadd.xlane.f32.xlu0 %v33
  %v37 = vpop.xlane.xlu0 %36
  %v38 = vmul.f32 %v35, %v27
  %v39 = vmul.f32 %v37, %v27
  %v40 = vadd.f32 %v38, 1e-06
  %v41 = vadd.f32 %v39, 1e-06
  %v42 = vrsqrt.pop %v40
  %v43 = vrsqrt.pop %v41
  %v44 = vmul.f32 %v30, %v42
  %v45 = vmul.f32 %v31, %v43
  %v46 = vld [vmem:[%s2] sm:$0x1]
  %v48 = vlaneseq
  %v49 = vshrl.u32 %v48, 7
  %v50 = vsub.s32 0, %v49
  %v51 = vrot.slane %v46, %v50
  %v53 = vmul.f32 %v44, %v51
  %v54 = vmul.f32 %v45, %v51
  %v55 = vld [vmem:[%s3] sm:$0x1]
  %v57 = vlaneseq
  %v58 = vshrl.u32 %v57, 7
  %v59 = vsub.s32 0, %v58
  %v60 = vrot.slane %v55, %v59
  %v62 = vadd.f32 %v53, %v60
  %v63 = vadd.f32 %v54, %v60
  %64 = vst [vmem:[%s4] sm:$0xff] %v62
  %65 = vst [vmem:[%s4 + $0x8] sm:$0xff] %v63
  // Predicated region
  $region18: #{one2one_forward.24} parent=0 // pred_check
    _
  $region19: #{one2one_forward.24} parent=0 // pred_check_branch
    %67 = sbr.rel (0) target = $region21
  $region20: #{one2one_forward.24} parent=0 // pred_region
    _
  $region21: #{one2one_forward.24} parent=0 // pred_fallthru
    _
  // Predicated region
  $region22: #{one2one_forward.24} parent=0 // pred_check
    _
  $region23: #{one2one_forward.24} parent=0 // pred_check_branch
    %69 = sbr.rel (0) target = $region25
  $region24: #{one2one_forward.24} parent=0 // pred_region
    _
  $region25: #{one2one_forward.24} parent=0 // pred_fallthru
    _

// kernel: one2one_forward.25
$region0: #{one2one_forward.25}
  #allocation0 [shape = 'u32[]', space=smem, size = 0x4, offset = 0x4, fixed_abs, tag = 'smem constant byte address 0x4 - core index']
  #allocation1 [shape = 'u32[144,128]{1,0:T(1,128)}', space=vmem, size = 0x12000, scoped, tag = 'internal scratch']
  %s0 = inlined_call_operand.vmem [shape: f32[16,128], index: 0, kind: input, shape index: {}]
  %s1 = inlined_call_operand.vmem [shape: f32[128,256], index: 1, kind: input, shape index: {}]
  %s2 = inlined_call_operand.vmem [shape: f32[1,256], index: 2, kind: input, shape index: {}]
  %s3 = inlined_call_operand.vmem [shape: f32[256,128], index: 3, kind: input, shape index: {}]
  %s4 = inlined_call_operand.vmem [shape: f32[1,128], index: 4, kind: input, shape index: {}]
  %s5 = inlined_call_operand.vmem [shape: f32[16,128], index: 5, kind: output, shape index: {}]
  %s6 = sld [smem:[#allocation0]]
  $region30: #{one2one_forward.25} parent=0
    _
  %s8 = ssub.s32 1, %s6
  %s9 = scalar_select 0, %s8, %s6
  // Predicated region
  $region2: #{one2one_forward.25} parent=0 // pred_check
    _
  $region3: #{one2one_forward.25} parent=0 // pred_check_branch
    %11 = sbr.rel (0) target = $region5
  $region4: #{one2one_forward.25} parent=0 // pred_region
    _
  $region5: #{one2one_forward.25} parent=0 // pred_fallthru
    _
  // Predicated region
  $region6: #{one2one_forward.25} parent=0 // pred_check
    _
  $region7: #{one2one_forward.25} parent=0 // pred_check_branch
    %13 = sbr.rel (0) target = $region9
  $region8: #{one2one_forward.25} parent=0 // pred_region
    _
  $region9: #{one2one_forward.25} parent=0 // pred_fallthru
    _
  // Predicated region
  $region10: #{one2one_forward.25} parent=0 // pred_check
    _
  $region11: #{one2one_forward.25} parent=0 // pred_check_branch
    %15 = sbr.rel (0) target = $region13
  $region12: #{one2one_forward.25} parent=0 // pred_region
    _
  $region13: #{one2one_forward.25} parent=0 // pred_fallthru
    _
  // Predicated region
  $region14: #{one2one_forward.25} parent=0 // pred_check
    _
  $region15: #{one2one_forward.25} parent=0 // pred_check_branch
    %17 = sbr.rel (0) target = $region17
  $region16: #{one2one_forward.25} parent=0 // pred_region
    _
  $region17: #{one2one_forward.25} parent=0 // pred_fallthru
    _
  // Predicated region
  $region18: #{one2one_forward.25} parent=0 // pred_check
    _
  $region19: #{one2one_forward.25} parent=0 // pred_check_branch
    %19 = sbr.rel (0) target = $region21
  $region20: #{one2one_forward.25} parent=0 // pred_region
    _
  $region21: #{one2one_forward.25} parent=0 // pred_fallthru
    _
  %v21 = vld [vmem:[%s0] sm:$0xff]
  %v22 = vld [vmem:[%s0 + $0x8] sm:$0xff]
  %v23 = vpack.c.bf16 %v22, %v21
  %v24 = vld [vmem:[%s1] sm:$0xff]
  %v25 = vld [vmem:[%s1 + $0x8] sm:$0xff]
  %v26 = vld [vmem:[%s1 + $0x10] sm:$0xff]
  %v27 = vld [vmem:[%s1 + $0x18] sm:$0xff]
  %v28 = vld [vmem:[%s1 + $0x20] sm:$0xff]
  %v29 = vld [vmem:[%s1 + $0x28] sm:$0xff]
  %v30 = vld [vmem:[%s1 + $0x30] sm:$0xff]
  %v31 = vld [vmem:[%s1 + $0x38] sm:$0xff]
  %v32 = vld [vmem:[%s1 + $0x40] sm:$0xff]
  %v33 = vld [vmem:[%s1 + $0x48] sm:$0xff]
  %v34 = vld [vmem:[%s1 + $0x50] sm:$0xff]
  %v35 = vld [vmem:[%s1 + $0x58] sm:$0xff]
  %v36 = vld [vmem:[%s1 + $0x60] sm:$0xff]
  %v37 = vld [vmem:[%s1 + $0x68] sm:$0xff]
  %v38 = vld [vmem:[%s1 + $0x70] sm:$0xff]
  %v39 = vld [vmem:[%s1 + $0x78] sm:$0xff]
  %v40 = vld [vmem:[%s1 + $0x80] sm:$0xff]
  %v41 = vld [vmem:[%s1 + $0x88] sm:$0xff]
  %v42 = vld [vmem:[%s1 + $0x90] sm:$0xff]
  %v43 = vld [vmem:[%s1 + $0x98] sm:$0xff]
  %v44 = vld [vmem:[%s1 + $0xa0] sm:$0xff]
  %v45 = vld [vmem:[%s1 + $0xa8] sm:$0xff]
  %v46 = vld [vmem:[%s1 + $0xb0] sm:$0xff]
  %v47 = vld [vmem:[%s1 + $0xb8] sm:$0xff]
  %v48 = vld [vmem:[%s1 + $0xc0] sm:$0xff]
  %v49 = vld [vmem:[%s1 + $0xc8] sm:$0xff]
  %v50 = vld [vmem:[%s1 + $0xd0] sm:$0xff]
  %v51 = vld [vmem:[%s1 + $0xd8] sm:$0xff]
  %v52 = vld [vmem:[%s1 + $0xe0] sm:$0xff]
  %v53 = vld [vmem:[%s1 + $0xe8] sm:$0xff]
  %v54 = vld [vmem:[%s1 + $0xf0] sm:$0xff]
  %v55 = vld [vmem:[%s1 + $0xf8] sm:$0xff]
  %v56 = vpack.c.bf16 %v26, %v24
  %v57 = vpack.c.bf16 %v27, %v25
  %v58 = vpack.c.bf16 %v30, %v28
  %v59 = vpack.c.bf16 %v31, %v29
  %v60 = vpack.c.bf16 %v34, %v32
  %v61 = vpack.c.bf16 %v35, %v33
  %v62 = vpack.c.bf16 %v38, %v36
  %v63 = vpack.c.bf16 %v39, %v37
  %v64 = vpack.c.bf16 %v42, %v40
  %v65 = vpack.c.bf16 %v43, %v41
  %v66 = vpack.c.bf16 %v46, %v44
  %v67 = vpack.c.bf16 %v47, %v45
  %v68 = vpack.c.bf16 %v50, %v48
  %v69 = vpack.c.bf16 %v51, %v49
  %v70 = vpack.c.bf16 %v54, %v52
  %v71 = vpack.c.bf16 %v55, %v53
  %v72 = vld [vmem:[%s2] sm:$0x3]
  %v74 = vlaneseq
  %v75 = vshrl.u32 %v74, 7
  %v76 = vsub.s32 0, %v75
  %v77 = vrot.slane %v72, %v76
  %v78 = vlaneseq
  %v79 = vshrl.u32 %v78, 7
  %v80 = vsub.s32 1, %v79
  %v81 = vrot.slane %v72, %v80
  %84 = vmatprep.subr.bf16.mxu0 %v71
  %85 = vmatpush1.bf16.msra.mxu0 %v70
  %86 = vmatprep.subr.bf16.mxu0 %v69
  %87 = vmatpush1.bf16.msra.mxu0 %v68
  %88 = vmatprep.subr.bf16.mxu0 %v67
  %89 = vmatpush1.bf16.msra.mxu0 %v66
  %90 = vmatprep.subr.bf16.mxu0 %v65
  %91 = vmatpush1.bf16.msra.mxu0 %v64
  %92 = vmatprep.subr.bf16.mxu0 %v63
  %93 = vmatpush1.bf16.msra.mxu0 %v62
  %94 = vmatprep.subr.bf16.mxu0 %v61
  %95 = vmatpush1.bf16.msra.mxu0 %v60
  %96 = vmatprep.subr.bf16.mxu0 %v59
  %97 = vmatpush1.bf16.msra.mxu0 %v58
  %98 = vmatprep.subr.bf16.mxu0 %v57
  %99 = vmatpush1.bf16.msra.mxu0 %v56
  %100 = vmatprep.subr.bf16.mxu0 0
  %101 = vmatpush2.bf16.msra.mxu0 0
  %102 = vmatprep.subr.bf16.mxu0 0
  %103 = vmatpush2.bf16.msra.mxu0 0
  %104 = vmatprep.subr.bf16.mxu0 0
  %105 = vmatpush2.bf16.msra.mxu0 0
  %106 = vmatprep.subr.bf16.mxu0 0
  %107 = vmatpush2.bf16.msra.mxu0 0
  %108 = vmatprep.subr.bf16.mxu0 0
  %109 = vmatpush2.bf16.msra.mxu0 0
  %110 = vmatprep.subr.bf16.mxu0 0
  %111 = vmatpush2.bf16.msra.mxu0 0
  %112 = vmatprep.subr.bf16.mxu0 0
  %113 = vmatpush2.bf16.msra.mxu0 0
  %114 = vmatprep.subr.bf16.mxu0 0
  %115 = vmatpush2.bf16.msra.mxu0 0
  %116 = vmatprep.mubr.bf16.mxu0 0
  %117 = vmatmul.mubr.bf16.gmra.mxu0 %v23
  %v118 = vpop.f32.mrf.mxu0
  %v119 = vadd.f32 %v77, %v118
  %v120 = vpop.f32.mrf.mxu0
  %v121 = vadd.f32 %v81, %v120
  %v122 = vpop.f32.mrf.mxu0
  %v123 = vadd.f32 %v77, %v122
  %v124 = vpop.f32.mrf.mxu0
  %v125 = vadd.f32 %v81, %v124
  %126 = vdwg.mxu0
  %v127 = vmax.f32 %v119, 0.0
  %v128 = vmax.f32 %v121, 0.0
  %v129 = vmax.f32 %v123, 0.0
  %v130 = vmax.f32 %v125, 0.0
  %v131 = vpack.c.bf16 %v129, %v127
  %v132 = vpack.c.bf16 %v130, %v128
  %v133 = vld [vmem:[%s3] sm:$0xff]
  %v134 = vld [vmem:[%s3 + $0x8] sm:$0xff]
  %v135 = vld [vmem:[%s3 + $0x10] sm:$0xff]
  %v136 = vld [vmem:[%s3 + $0x18] sm:$0xff]
  %v137 = vld [vmem:[%s3 + $0x20] sm:$0xff]
  %v138 = vld [vmem:[%s3 + $0x28] sm:$0xff]
  %v139 = vld [vmem:[%s3 + $0x30] sm:$0xff]
  %v140 = vld [vmem:[%s3 + $0x38] sm:$0xff]
  %v141 = vld [vmem:[%s3 + $0x40] sm:$0xff]
  %v142 = vld [vmem:[%s3 + $0x48] sm:$0xff]
  %v143 = vld [vmem:[%s3 + $0x50] sm:$0xff]
  %v144 = vld [vmem:[%s3 + $0x58] sm:$0xff]
  %v145 = vld [vmem:[%s3 + $0x60] sm:$0xff]
  %v146 = vld [vmem:[%s3 + $0x68] sm:$0xff]
  %v147 = vld [vmem:[%s3 + $0x70] sm:$0xff]
  %v148 = vld [vmem:[%s3 + $0x78] sm:$0xff]
  %v149 = vld [vmem:[%s3 + $0x80] sm:$0xff]
  %v150 = vld [vmem:[%s3 + $0x88] sm:$0xff]
  %v151 = vld [vmem:[%s3 + $0x90] sm:$0xff]
  %v152 = vld [vmem:[%s3 + $0x98] sm:$0xff]
  %v153 = vld [vmem:[%s3 + $0xa0] sm:$0xff]
  %v154 = vld [vmem:[%s3 + $0xa8] sm:$0xff]
  %v155 = vld [vmem:[%s3 + $0xb0] sm:$0xff]
  %v156 = vld [vmem:[%s3 + $0xb8] sm:$0xff]
  %v157 = vld [vmem:[%s3 + $0xc0] sm:$0xff]
  %v158 = vld [vmem:[%s3 + $0xc8] sm:$0xff]
  %v159 = vld [vmem:[%s3 + $0xd0] sm:$0xff]
  %v160 = vld [vmem:[%s3 + $0xd8] sm:$0xff]
  %v161 = vld [vmem:[%s3 + $0xe0] sm:$0xff]
  %v162 = vld [vmem:[%s3 + $0xe8] sm:$0xff]
  %v163 = vld [vmem:[%s3 + $0xf0] sm:$0xff]
  %v164 = vld [vmem:[%s3 + $0xf8] sm:$0xff]
  %v165 = vpack.c.bf16 %v134, %v133
  %v166 = vpack.c.bf16 %v136, %v135
  %v167 = vpack.c.bf16 %v138, %v137
  %v168 = vpack.c.bf16 %v140, %v139
  %v169 = vpack.c.bf16 %v142, %v141
  %v170 = vpack.c.bf16 %v144, %v143
  %v171 = vpack.c.bf16 %v146, %v145
  %v172 = vpack.c.bf16 %v148, %v147
  %v173 = vpack.c.bf16 %v150, %v149
  %v174 = vpack.c.bf16 %v152, %v151
  %v175 = vpack.c.bf16 %v154, %v153
  %v176 = vpack.c.bf16 %v156, %v155
  %v177 = vpack.c.bf16 %v158, %v157
  %v178 = vpack.c.bf16 %v160, %v159
  %v179 = vpack.c.bf16 %v162, %v161
  %v180 = vpack.c.bf16 %v164, %v163
  %v181 = vld [vmem:[%s4] sm:$0x1]
  %v183 = vlaneseq
  %v184 = vshrl.u32 %v183, 7
  %v185 = vsub.s32 0, %v184
  %v186 = vrot.slane %v181, %v185
  %188 = vmatprep.subr.bf16.mxu0 0
  %189 = vmatpush1.bf16.msra.mxu0 %v172
  %190 = vmatprep.subr.bf16.mxu0 0
  %191 = vmatpush1.bf16.msra.mxu0 %v171
  %192 = vmatprep.subr.bf16.mxu0 0
  %193 = vmatpush1.bf16.msra.mxu0 %v170
  %194 = vmatprep.subr.bf16.mxu0 0
  %195 = vmatpush1.bf16.msra.mxu0 %v169
  %196 = vmatprep.subr.bf16.mxu0 0
  %197 = vmatpush1.bf16.msra.mxu0 %v168
  %198 = vmatprep.subr.bf16.mxu0 0
  %199 = vmatpush1.bf16.msra.mxu0 %v167
  %200 = vmatprep.subr.bf16.mxu0 0
  %201 = vmatpush1.bf16.msra.mxu0 %v166
  %202 = vmatprep.subr.bf16.mxu0 0
  %203 = vmatpush1.bf16.msra.mxu0 %v165
  %204 = vmatprep.subr.bf16.mxu0 0
  %205 = vmatpush2.bf16.msra.mxu0 %v180
  %206 = vmatprep.subr.bf16.mxu0 0
  %207 = vmatpush2.bf16.msra.mxu0 %v179
  %208 = vmatprep.subr.bf16.mxu0 0
  %209 = vmatpush2.bf16.msra.mxu0 %v178
  %210 = vmatprep.subr.bf16.mxu0 0
  %211 = vmatpush2.bf16.msra.mxu0 %v177
  %212 = vmatprep.subr.bf16.mxu0 0
  %213 = vmatpush2.bf16.msra.mxu0 %v176
  %214 = vmatprep.subr.bf16.mxu0 0
  %215 = vmatpush2.bf16.msra.mxu0 %v175
  %216 = vmatprep.subr.bf16.mxu0 0
  %217 = vmatpush2.bf16.msra.mxu0 %v174
  %218 = vmatprep.subr.bf16.mxu0 0
  %219 = vmatpush2.bf16.msra.mxu0 %v173
  %220 = vmatprep.mubr.bf16.mxu0 %v132
  %221 = vmatmul.mubr.bf16.gmra.mxu0 %v131
  %v222 = vpop.f32.mrf.mxu0
  %v223 = vadd.f32 %v186, %v222
  %v224 = vpop.f32.mrf.mxu0
  %v225 = vpop.f32.mrf.mxu0
  %v226 = vadd.f32 %v186, %v225
  %v227 = vpop.f32.mrf.mxu0
  %228 = vdwg.mxu0
  %229 = vst [vmem:[%s5] sm:$0xff] %v223
  %230 = vst [vmem:[%s5 + $0x8] sm:$0xff] %v226
  // Predicated region
  $region22: #{one2one_forward.25} parent=0 // pred_check
    _
  $region23: #{one2one_forward.25} parent=0 // pred_check_branch
    %232 = sbr.rel (0) target = $region25
  $region24: #{one2one_forward.25} parent=0 // pred_region
    _
  $region25: #{one2one_forward.25} parent=0 // pred_fallthru
    _
  // Predicated region
  $region26: #{one2one_forward.25} parent=0 // pred_check
    _
  $region27: #{one2one_forward.25} parent=0 // pred_check_branch
    %234 = sbr.rel (0) target = $region29
  $region28: #{one2one_forward.25} parent=0 // pred_region
    _
  $region29: #{one2one_forward.25} parent=0 // pred_fallthru
    _

// kernel: one2one_forward.23
$region0: #{one2one_forward.23}
  #allocation0 [shape = 'u32[]', space=smem, size = 0x4, offset = 0x4, fixed_abs, tag = 'smem constant byte address 0x4 - core index']
  #allocation1 [shape = 'u32[144,128]{1,0:T(1,128)}', space=vmem, size = 0x12000, scoped, tag = 'internal scratch']
  %s0 = inlined_call_operand.vmem [shape: f32[2,8,128], index: 0, kind: input, shape index: {}, may-alias: {0,1}]
  %s1 = inlined_call_operand.vmem [shape: f32[2,8,128], index: 1, kind: input, shape index: {}, may-alias: {0,1}]
  %s2 = inlined_call_operand.vmem [shape: f32[128,128], index: 2, kind: input, shape index: {}]
  %s3 = inlined_call_operand.vmem [shape: f32[1,128], index: 3, kind: input, shape index: {}]
  %s4 = inlined_call_operand.vmem [shape: f32[128,256], index: 4, kind: input, shape index: {}]
  %s5 = inlined_call_operand.vmem [shape: f32[1,256], index: 5, kind: input, shape index: {}]
  %s6 = inlined_call_operand.vmem [shape: f32[128,128], index: 6, kind: input, shape index: {}]
  %s7 = inlined_call_operand.vmem [shape: f32[1,128], index: 7, kind: input, shape index: {}]
  %s8 = inlined_call_operand.vmem [shape: f32[2,1,8], index: 8, kind: input, shape index: {}]
  %s9 = inlined_call_operand.vmem [shape: f32[2,8,128], index: 9, kind: output, shape index: {}]
  %s10 = sld [smem:[#allocation0]]
  $region69: #{one2one_forward.23} parent=0
    _
  %s12 = ssub.s32 1, %s10
  %s13 = scalar_select 0, %s12, %s10
  loop: start=0, step=1, limit=4
  $region2: #{one2one_forward.23} parent=0 // loop_pre_header
    _
  $region3: #{one2one_forward.23} parent=0 // loop_header
    %s15 = sphi 0, %s19
    %p16 = scmp.ge.s32.totalorder %s15, 4
    %s25 = sphi 0, %s27
    %s28 = sphi 0, %s25
    %s29 = sphi 0, %s28
    %s45 = sphi 0, %s29
    %s51 = sphi 0, %s53
    %s54 = sphi 0, %s51
    %s55 = sphi 0, %s54
    %s71 = sphi 0, %s55
    %s75 = sphi 0, %s75
    %s77 = sphi 0, %s75
    %s78 = sphi 0, %s77
    %s92 = sphi 0, %s78
    %s96 = sphi 0, %s96
    %s98 = sphi 0, %s96
    %s99 = sphi 0, %s98
    %s113 = sphi 0, %s99
    %s117 = sphi 0, %s117
    %s119 = sphi 0, %s117
    %s120 = sphi 0, %s119
    %s134 = sphi 0, %s120
    %s138 = sphi 0, %s138
    %s140 = sphi 0, %s138
    %s141 = sphi 0, %s140
    %s155 = sphi 0, %s141
    %s159 = sphi 0, %s159
    %s161 = sphi 0, %s159
    %s162 = sphi 0, %s161
    %s176 = sphi 0, %s162
    %s180 = sphi 0, %s180
    %s182 = sphi 0, %s180
    %s183 = sphi 0, %s182
    %s197 = sphi 0, %s183
    %s203 = sphi 0, %s205
    %s206 = sphi 0, %s203
    %s207 = sphi 0, %s206
    %s223 = sphi 0, %s207
    %s229 = sphi 0, %s231
    %s232 = sphi 0, %s229
    %s233 = sphi 0, %s232
    %s249 = sphi 0, %s233
  $region4: #{one2one_forward.23} parent=0 // loop_header_branch
    %18 = sbr.rel (%p16) target = $region8
  $region5: #{one2one_forward.23} parent=0 // loop_body
    %s20 = ssub.s32 %s15, 1
    %s21 = ssub.s32 %s15, 2
    %s22 = sadd.s32 %s15, 1
    %s23 = ssub.s32 %s15, %s22
    %p24 = scmp.eq.s32.totalorder %s23, 0
    %s26 = sadd.s32 %s25, 1
    %s27 = scalar_select %p24, %s25, %s26
    %p30 = pneg %p24
    %p31 = scmp.eq.s32.totalorder %s15, 1
    %p32 = por %p30, %p31
    %p33 = scmp.ne.s32.totalorder %s25, %s28
    %p34 = scmp.eq.s32.totalorder %s15, 0
    %p35 = por %p33, %p34
    %p36 = scmp.ne.s32.totalorder %s25, %s28
    %p37 = scmp.eq.s32.totalorder %s20, 1
    %p38 = por %p36, %p37
    %p39 = scmp.ne.s32.totalorder %s28, %s29
    %p40 = scmp.eq.s32.totalorder %s20, 0
    %p41 = por %p39, %p40
    %p42 = scmp.ne.s32.totalorder %s28, %s29
    %p43 = scmp.eq.s32.totalorder %s21, 1
    %p44 = por %p42, %p43
    %p46 = scmp.ne.s32.totalorder %s29, %s45
    %p47 = scmp.eq.s32.totalorder %s21, 0
    %p48 = por %p46, %p47
    %s49 = ssub.s32 %s15, %s22
    %p50 = scmp.eq.s32.totalorder %s49, 0
    %s52 = sadd.s32 %s51, 1
    %s53 = scalar_select %p50, %s51, %s52
    %p56 = pneg %p50
    %p57 = scmp.eq.s32.totalorder %s15, 1
    %p58 = por %p56, %p57
    %p59 = scmp.ne.s32.totalorder %s51, %s54
    %p60 = scmp.eq.s32.totalorder %s15, 0
    %p61 = por %p59, %p60
    %p62 = scmp.ne.s32.totalorder %s51, %s54
    %p63 = scmp.eq.s32.totalorder %s20, 1
    %p64 = por %p62, %p63
    %p65 = scmp.ne.s32.totalorder %s54, %s55
    %p66 = scmp.eq.s32.totalorder %s20, 0
    %p67 = por %p65, %p66
    %p68 = scmp.ne.s32.totalorder %s54, %s55
    %p69 = scmp.eq.s32.totalorder %s21, 1
    %p70 = por %p68, %p69
    %p72 = scmp.ne.s32.totalorder %s55, %s71
    %p73 = scmp.eq.s32.totalorder %s21, 0
    %p74 = por %p72, %p73
    %s76 = sadd.s32 %s75, 1
    %p79 = scmp.eq.s32.totalorder %s15, 1
    %p80 = scmp.ne.s32.totalorder %s75, %s77
    %p81 = scmp.eq.s32.totalorder %s15, 0
    %p82 = por %p80, %p81
    %p83 = scmp.ne.s32.totalorder %s75, %s77
    %p84 = scmp.eq.s32.totalorder %s20, 1
    %p85 = por %p83, %p84
    %p86 = scmp.ne.s32.totalorder %s77, %s78
    %p87 = scmp.eq.s32.totalorder %s20, 0
    %p88 = por %p86, %p87
    %p89 = scmp.ne.s32.totalorder %s77, %s78
    %p90 = scmp.eq.s32.totalorder %s21, 1
    %p91 = por %p89, %p90
    %p93 = scmp.ne.s32.totalorder %s78, %s92
    %p94 = scmp.eq.s32.totalorder %s21, 0
    %p95 = por %p93, %p94
    %s97 = sadd.s32 %s96, 1
    %p100 = scmp.eq.s32.totalorder %s15, 1
    %p101 = scmp.ne.s32.totalorder %s96, %s98
    %p102 = scmp.eq.s32.totalorder %s15, 0
    %p103 = por %p101, %p102
    %p104 = scmp.ne.s32.totalorder %s96, %s98
    %p105 = scmp.eq.s32.totalorder %s20, 1
    %p106 = por %p104, %p105
    %p107 = scmp.ne.s32.totalorder %s98, %s99
    %p108 = scmp.eq.s32.totalorder %s20, 0
    %p109 = por %p107, %p108
    %p110 = scmp.ne.s32.totalorder %s98, %s99
    %p111 = scmp.eq.s32.totalorder %s21, 1
    %p112 = por %p110, %p111
    %p114 = scmp.ne.s32.totalorder %s99, %s113
    %p115 = scmp.eq.s32.totalorder %s21, 0
    %p116 = por %p114, %p115
    %s118 = sadd.s32 %s117, 1
    %p121 = scmp.eq.s32.totalorder %s15, 1
    %p122 = scmp.ne.s32.totalorder %s117, %s119
    %p123 = scmp.eq.s32.totalorder %s15, 0
    %p124 = por %p122, %p123
    %p125 = scmp.ne.s32.totalorder %s117, %s119
    %p126 = scmp.eq.s32.totalorder %s20, 1
    %p127 = por %p125, %p126
    %p128 = scmp.ne.s32.totalorder %s119, %s120
    %p129 = scmp.eq.s32.totalorder %s20, 0
    %p130 = por %p128, %p129
    %p131 = scmp.ne.s32.totalorder %s119, %s120
    %p132 = scmp.eq.s32.totalorder %s21, 1
    %p133 = por %p131, %p132
    %p135 = scmp.ne.s32.totalorder %s120, %s134
    %p136 = scmp.eq.s32.totalorder %s21, 0
    %p137 = por %p135, %p136
    %s139 = sadd.s32 %s138, 1
    %p142 = scmp.eq.s32.totalorder %s15, 1
    %p143 = scmp.ne.s32.totalorder %s138, %s140
    %p144 = scmp.eq.s32.totalorder %s15, 0
    %p145 = por %p143, %p144
    %p146 = scmp.ne.s32.totalorder %s138, %s140
    %p147 = scmp.eq.s32.totalorder %s20, 1
    %p148 = por %p146, %p147
    %p149 = scmp.ne.s32.totalorder %s140, %s141
    %p150 = scmp.eq.s32.totalorder %s20, 0
    %p151 = por %p149, %p150
    %p152 = scmp.ne.s32.totalorder %s140, %s141
    %p153 = scmp.eq.s32.totalorder %s21, 1
    %p154 = por %p152, %p153
    %p156 = scmp.ne.s32.totalorder %s141, %s155
    %p157 = scmp.eq.s32.totalorder %s21, 0
    %p158 = por %p156, %p157
    %s160 = sadd.s32 %s159, 1
    %p163 = scmp.eq.s32.totalorder %s15, 1
    %p164 = scmp.ne.s32.totalorder %s159, %s161
    %p165 = scmp.eq.s32.totalorder %s15, 0
    %p166 = por %p164, %p165
    %p167 = scmp.ne.s32.totalorder %s159, %s161
    %p168 = scmp.eq.s32.totalorder %s20, 1
    %p169 = por %p167, %p168
    %p170 = scmp.ne.s32.totalorder %s161, %s162
    %p171 = scmp.eq.s32.totalorder %s20, 0
    %p172 = por %p170, %p171
    %p173 = scmp.ne.s32.totalorder %s161, %s162
    %p174 = scmp.eq.s32.totalorder %s21, 1
    %p175 = por %p173, %p174
    %p177 = scmp.ne.s32.totalorder %s162, %s176
    %p178 = scmp.eq.s32.totalorder %s21, 0
    %p179 = por %p177, %p178
    %s181 = sadd.s32 %s180, 1
    %p184 = scmp.eq.s32.totalorder %s15, 1
    %p185 = scmp.ne.s32.totalorder %s180, %s182
    %p186 = scmp.eq.s32.totalorder %s15, 0
    %p187 = por %p185, %p186
    %p188 = scmp.ne.s32.totalorder %s180, %s182
    %p189 = scmp.eq.s32.totalorder %s20, 1
    %p190 = por %p188, %p189
    %p191 = scmp.ne.s32.totalorder %s182, %s183
    %p192 = scmp.eq.s32.totalorder %s20, 0
    %p193 = por %p191, %p192
    %p194 = scmp.ne.s32.totalorder %s182, %s183
    %p195 = scmp.eq.s32.totalorder %s21, 1
    %p196 = por %p194, %p195
    %p198 = scmp.ne.s32.totalorder %s183, %s197
    %p199 = scmp.eq.s32.totalorder %s21, 0
    %p200 = por %p198, %p199
    %s201 = ssub.s32 %s15, %s22
    %p202 = scmp.eq.s32.totalorder %s201, 0
    %s204 = sadd.s32 %s203, 1
    %s205 = scalar_select %p202, %s203, %s204
    %p208 = pneg %p202
    %p209 = scmp.eq.s32.totalorder %s15, 1
    %p210 = por %p208, %p209
    %p211 = scmp.ne.s32.totalorder %s203, %s206
    %p212 = scmp.eq.s32.totalorder %s15, 0
    %p213 = por %p211, %p212
    %p214 = scmp.ne.s32.totalorder %s203, %s206
    %p215 = scmp.eq.s32.totalorder %s20, 1
    %p216 = por %p214, %p215
    %p217 = scmp.ne.s32.totalorder %s206, %s207
    %p218 = scmp.eq.s32.totalorder %s20, 0
    %p219 = por %p217, %p218
    %p220 = scmp.ne.s32.totalorder %s206, %s207
    %p221 = scmp.eq.s32.totalorder %s21, 1
    %p222 = por %p220, %p221
    %p224 = scmp.ne.s32.totalorder %s207, %s223
    %p225 = scmp.eq.s32.totalorder %s21, 0
    %p226 = por %p224, %p225
    %s227 = ssub.s32 %s15, %s22
    %p228 = scmp.eq.s32.totalorder %s227, 0
    %s230 = sadd.s32 %s229, 1
    %s231 = scalar_select %p228, %s229, %s230
    %p234 = pneg %p228
    %p235 = scmp.eq.s32.totalorder %s15, 1
    %p236 = por %p234, %p235
    %p237 = scmp.ne.s32.totalorder %s229, %s232
    %p238 = scmp.eq.s32.totalorder %s15, 0
    %p239 = por %p237, %p238
    %p240 = scmp.ne.s32.totalorder %s229, %s232
    %p241 = scmp.eq.s32.totalorder %s20, 1
    %p242 = por %p240, %p241
    %p243 = scmp.ne.s32.totalorder %s232, %s233
    %p244 = scmp.eq.s32.totalorder %s20, 0
    %p245 = por %p243, %p244
    %p246 = scmp.ne.s32.totalorder %s232, %s233
    %p247 = scmp.eq.s32.totalorder %s21, 1
    %p248 = por %p246, %p247
    %p250 = scmp.ne.s32.totalorder %s233, %s249
    %p251 = scmp.eq.s32.totalorder %s21, 0
    %p252 = por %p250, %p251
    %p253 = scmp.le.s32.totalorder 1, %s15
    %p254 = scmp.lt.s32.totalorder %s15, 3
    %p255 = pnand %p253, %p254
    %p256 = pneg %p255
    // Predicated region
    $region9: #{one2one_forward.23} parent=5 // pred_check
      _
    $region10: #{one2one_forward.23} parent=5 // pred_check_branch
      %258 = sbr.rel (%p255) target = $region12
    $region11: #{one2one_forward.23} parent=5 // pred_region
      %s259 = ssub.s32 %s15, 1
      // Predicated region
      $region13: #{one2one_forward.23} parent=11 // pred_check
        %p260 = pneg %p88
      $region14: #{one2one_forward.23} parent=11 // pred_check_branch
        %262 = sbr.rel (%p260) target = $region16
      $region15: #{one2one_forward.23} parent=11 // pred_region
        _
      $region16: #{one2one_forward.23} parent=11 // pred_fallthru
        _
      // Predicated region
      $region17: #{one2one_forward.23} parent=11 // pred_check
        %p263 = pneg %p109
      $region18: #{one2one_forward.23} parent=11 // pred_check_branch
        %265 = sbr.rel (%p263) target = $region20
      $region19: #{one2one_forward.23} parent=11 // pred_region
        _
      $region20: #{one2one_forward.23} parent=11 // pred_fallthru
        _
      // Predicated region
      $region21: #{one2one_forward.23} parent=11 // pred_check
        %p266 = pneg %p130
      $region22: #{one2one_forward.23} parent=11 // pred_check_branch
        %268 = sbr.rel (%p266) target = $region24
      $region23: #{one2one_forward.23} parent=11 // pred_region
        _
      $region24: #{one2one_forward.23} parent=11 // pred_fallthru
        _
      // Predicated region
      $region25: #{one2one_forward.23} parent=11 // pred_check
        %p269 = pneg %p151
      $region26: #{one2one_forward.23} parent=11 // pred_check_branch
        %271 = sbr.rel (%p269) target = $region28
      $region27: #{one2one_forward.23} parent=11 // pred_region
        _
      $region28: #{one2one_forward.23} parent=11 // pred_fallthru
        _
      // Predicated region
      $region29: #{one2one_forward.23} parent=11 // pred_check
        %p272 = pneg %p172
      $region30: #{one2one_forward.23} parent=11 // pred_check_branch
        %274 = sbr.rel (%p272) target = $region32
      $region31: #{one2one_forward.23} parent=11 // pred_region
        _
      $region32: #{one2one_forward.23} parent=11 // pred_fallthru
        _
      // Predicated region
      $region33: #{one2one_forward.23} parent=11 // pred_check
        %p275 = pneg %p193
      $region34: #{one2one_forward.23} parent=11 // pred_check_branch
        %277 = sbr.rel (%p275) target = $region36
      $region35: #{one2one_forward.23} parent=11 // pred_region
        _
      $region36: #{one2one_forward.23} parent=11 // pred_fallthru
        _
    $region12: #{one2one_forward.23} parent=5 // pred_fallthru
      _
    %p278 = scmp.lt.s32.totalorder %s15, 2
    // Predicated region
    $region37: #{one2one_forward.23} parent=5 // pred_check
      %p279 = pneg %p278
    $region38: #{one2one_forward.23} parent=5 // pred_check_branch
      %281 = sbr.rel (%p279) target = $region40
    $region39: #{one2one_forward.23} parent=5 // pred_region
      // Predicated region
      $region41: #{one2one_forward.23} parent=39 // pred_check
        %p282 = pneg %p35
      $region42: #{one2one_forward.23} parent=39 // pred_check_branch
        %284 = sbr.rel (%p282) target = $region44
      $region43: #{one2one_forward.23} parent=39 // pred_region
        %p285 = scmp.lt.s32.totalorder %s15, 1
        %s286 = scalar_select %p285, %s15, 1
        %s287 = smul.addr %s286, 8
        %s288 = scalar_lea.vmem %s0, %s287
      $region44: #{one2one_forward.23} parent=39 // pred_fallthru
        _
      // Predicated region
      $region45: #{one2one_forward.23} parent=39 // pred_check
        %p289 = pneg %p61
      $region46: #{one2one_forward.23} parent=39 // pred_check_branch
        %291 = sbr.rel (%p289) target = $region48
      $region47: #{one2one_forward.23} parent=39 // pred_region
        %p292 = scmp.lt.s32.totalorder %s15, 1
        %s293 = scalar_select %p292, %s15, 1
        %s294 = smul.addr %s293, 8
        %s295 = scalar_lea.vmem %s1, %s294
      $region48: #{one2one_forward.23} parent=39 // pred_fallthru
        _
      // Predicated region
      $region49: #{one2one_forward.23} parent=39 // pred_check
        %p296 = pneg %p213
      $region50: #{one2one_forward.23} parent=39 // pred_check_branch
        %298 = sbr.rel (%p296) target = $region52
      $region51: #{one2one_forward.23} parent=39 // pred_region
        %p299 = scmp.lt.s32.totalorder %s15, 1
        %s300 = scalar_select %p299, %s15, 1
        %s301 = scalar_lea.vmem %s8, %s300
      $region52: #{one2one_forward.23} parent=39 // pred_fallthru
        _
    $region40: #{one2one_forward.23} parent=5 // pred_fallthru
      _
    %p302 = scmp.le.s32.totalorder 1, %s15
    %p303 = scmp.lt.s32.totalorder %s15, 3
    %p304 = pnand %p302, %p303
    %p305 = pneg %p304
    // Predicated region
    $region53: #{one2one_forward.23} parent=5 // pred_check
      _
    $region54: #{one2one_forward.23} parent=5 // pred_check_branch
      %307 = sbr.rel (%p304) target = $region56
    $region55: #{one2one_forward.23} parent=5 // pred_region
      %s308 = ssub.s32 %s15, 1
      %p309 = scmp.lt.s32.totalorder %s20, 1
      %s310 = scalar_select %p309, %s20, 1
      %s311 = smul.addr %s310, 8
      %s312 = scalar_lea.vmem %s0, %s311
      %p313 = pneg %p41
      %p314 = pneg %p38
      %p315 = scmp.lt.s32.totalorder %s20, 1
      %s316 = scalar_select %p315, %s20, 1
      %s317 = smul.addr %s316, 8
      %s318 = scalar_lea.vmem %s1, %s317
      %p319 = pneg %p67
      %p320 = pneg %p64
      %p321 = pneg %p88
      %p322 = pneg %p85
      %p323 = pneg %p109
      %p324 = pneg %p106
      %p325 = pneg %p130
      %p326 = pneg %p127
      %p327 = pneg %p151
      %p328 = pneg %p148
      %p329 = pneg %p172
      %p330 = pneg %p169
      %p331 = pneg %p193
      %p332 = pneg %p190
      %p333 = scmp.lt.s32.totalorder %s20, 1
      %s334 = scalar_select %p333, %s20, 1
      %s335 = scalar_lea.vmem %s8, %s334
      %p336 = pneg %p219
      %p337 = pneg %p216
      %p338 = pneg %p245
      %p339 = pneg %p242
      %p340 = scmp.lt.s32.totalorder %s20, 1
      %s341 = scalar_select %p340, %s20, 1
      %s342 = smul.addr %s341, 8
      %s343 = scalar_lea.vmem %s9, %s342
      %p344 = scmp.lt.s32.totalorder %s20, 1
      %s345 = scalar_select %p344, %s20, 1
      %s346 = smul.addr %s345, 8
      %s347 = scalar_lea.vmem %s0, %s346
      %p348 = scmp.lt.s32.totalorder %s20, 1
      %s349 = scalar_select %p348, %s20, 1
      %s350 = smul.addr %s349, 8
      %s351 = scalar_lea.vmem %s1, %s350
      %p352 = scmp.lt.s32.totalorder %s20, 1
      %s353 = scalar_select %p352, %s20, 1
      %s354 = scalar_lea.vmem %s8, %s353
      %p355 = scmp.lt.s32.totalorder %s20, 1
      %s356 = scalar_select %p355, %s20, 1
      %s357 = smul.addr %s356, 8
      %s358 = scalar_lea.vmem %s9, %s357
      %v360 = vld [vmem:[%s347] sm:$0xff]
      %v361 = vld [vmem:[%s351] sm:$0xff]
      %v362 = vpack.c.bf16 %v360, %v360
      %v363 = vld [vmem:[%s2] sm:$0xff]
      %v364 = vld [vmem:[%s2 + $0x8] sm:$0xff]
      %v365 = vld [vmem:[%s2 + $0x10] sm:$0xff]
      %v366 = vld [vmem:[%s2 + $0x18] sm:$0xff]
      %v367 = vld [vmem:[%s2 + $0x20] sm:$0xff]
      %v368 = vld [vmem:[%s2 + $0x28] sm:$0xff]
      %v369 = vld [vmem:[%s2 + $0x30] sm:$0xff]
      %v370 = vld [vmem:[%s2 + $0x38] sm:$0xff]
      %v371 = vld [vmem:[%s2 + $0x40] sm:$0xff]
      %v372 = vld [vmem:[%s2 + $0x48] sm:$0xff]
      %v373 = vld [vmem:[%s2 + $0x50] sm:$0xff]
      %v374 = vld [vmem:[%s2 + $0x58] sm:$0xff]
      %v375 = vld [vmem:[%s2 + $0x60] sm:$0xff]
      %v376 = vld [vmem:[%s2 + $0x68] sm:$0xff]
      %v377 = vld [vmem:[%s2 + $0x70] sm:$0xff]
      %v378 = vld [vmem:[%s2 + $0x78] sm:$0xff]
      %v379 = vpack.c.bf16 %v364, %v363
      %v380 = vpack.c.bf16 %v366, %v365
      %v381 = vpack.c.bf16 %v368, %v367
      %v382 = vpack.c.bf16 %v370, %v369
      %v383 = vpack.c.bf16 %v372, %v371
      %v384 = vpack.c.bf16 %v374, %v373
      %v385 = vpack.c.bf16 %v376, %v375
      %v386 = vpack.c.bf16 %v378, %v377
      %v387 = vld [vmem:[%s3] sm:$0x1]
      %v389 = vlaneseq
      %v390 = vshrl.u32 %v389, 7
      %v391 = vsub.s32 0, %v390
      %v392 = vrot.slane %v387, %v391
      %394 = vmatprep.subr.bf16.mxu0 0
      %395 = vmatpush1.bf16.msra.mxu0 %v386
      %396 = vmatprep.subr.bf16.mxu0 0
      %397 = vmatpush1.bf16.msra.mxu0 %v385
      %398 = vmatprep.subr.bf16.mxu0 0
      %399 = vmatpush1.bf16.msra.mxu0 %v384
      %400 = vmatprep.subr.bf16.mxu0 0
      %401 = vmatpush1.bf16.msra.mxu0 %v383
      %402 = vmatprep.subr.bf16.mxu0 0
      %403 = vmatpush1.bf16.msra.mxu0 %v382
      %404 = vmatprep.subr.bf16.mxu0 0
      %405 = vmatpush1.bf16.msra.mxu0 %v381
      %406 = vmatprep.subr.bf16.mxu0 0
      %407 = vmatpush1.bf16.msra.mxu0 %v380
      %408 = vmatprep.subr.bf16.mxu0 0
      %409 = vmatpush1.bf16.msra.mxu0 %v379
      %410 = vmatprep.subr.bf16.mxu0 0
      %411 = vmatpush2.bf16.msra.mxu0 0
      %412 = vmatprep.subr.bf16.mxu0 0
      %413 = vmatpush2.bf16.msra.mxu0 0
      %414 = vmatprep.subr.bf16.mxu0 0
      %415 = vmatpush2.bf16.msra.mxu0 0
      %416 = vmatprep.subr.bf16.mxu0 0
      %417 = vmatpush2.bf16.msra.mxu0 0
      %418 = vmatprep.subr.bf16.mxu0 0
      %419 = vmatpush2.bf16.msra.mxu0 0
      %420 = vmatprep.subr.bf16.mxu0 0
      %421 = vmatpush2.bf16.msra.mxu0 0
      %422 = vmatprep.subr.bf16.mxu0 0
      %423 = vmatpush2.bf16.msra.mxu0 0
      %424 = vmatprep.subr.bf16.mxu0 0
      %425 = vmatpush2.bf16.msra.mxu0 0
      %426 = vmatprep.mubr.bf16.mxu0 0
      %427 = vmatmul.mubr.bf16.gmra.mxu0 %v362
      %v428 = vpop.f32.mrf.mxu0
      %v429 = vadd.f32 %v392, %v428
      %v430 = vpop.f32.mrf.mxu0
      %v431 = vpop.f32.mrf.mxu0
      %v432 = vpop.f32.mrf.mxu0
      %433 = vdwg.mxu0
      %v434 = vpack.c.bf16 %v361, %v361
      %v435 = vld [vmem:[%s4] sm:$0xff]
      %v436 = vld [vmem:[%s4 + $0x8] sm:$0xff]
      %v437 = vld [vmem:[%s4 + $0x10] sm:$0xff]
      %v438 = vld [vmem:[%s4 + $0x18] sm:$0xff]
      %v439 = vld [vmem:[%s4 + $0x20] sm:$0xff]
      %v440 = vld [vmem:[%s4 + $0x28] sm:$0xff]
      %v441 = vld [vmem:[%s4 + $0x30] sm:$0xff]
      %v442 = vld [vmem:[%s4 + $0x38] sm:$0xff]
      %v443 = vld [vmem:[%s4 + $0x40] sm:$0xff]
      %v444 = vld [vmem:[%s4 + $0x48] sm:$0xff]
      %v445 = vld [vmem:[%s4 + $0x50] sm:$0xff]
      %v446 = vld [vmem:[%s4 + $0x58] sm:$0xff]
      %v447 = vld [vmem:[%s4 + $0x60] sm:$0xff]
      %v448 = vld [vmem:[%s4 + $0x68] sm:$0xff]
      %v449 = vld [vmem:[%s4 + $0x70] sm:$0xff]
      %v450 = vld [vmem:[%s4 + $0x78] sm:$0xff]
      %v451 = vld [vmem:[%s4 + $0x80] sm:$0xff]
      %v452 = vld [vmem:[%s4 + $0x88] sm:$0xff]
      %v453 = vld [vmem:[%s4 + $0x90] sm:$0xff]
      %v454 = vld [vmem:[%s4 + $0x98] sm:$0xff]
      %v455 = vld [vmem:[%s4 + $0xa0] sm:$0xff]
      %v456 = vld [vmem:[%s4 + $0xa8] sm:$0xff]
      %v457 = vld [vmem:[%s4 + $0xb0] sm:$0xff]
      %v458 = vld [vmem:[%s4 + $0xb8] sm:$0xff]
      %v459 = vld [vmem:[%s4 + $0xc0] sm:$0xff]
      %v460 = vld [vmem:[%s4 + $0xc8] sm:$0xff]
      %v461 = vld [vmem:[%s4 + $0xd0] sm:$0xff]
      %v462 = vld [vmem:[%s4 + $0xd8] sm:$0xff]
      %v463 = vld [vmem:[%s4 + $0xe0] sm:$0xff]
      %v464 = vld [vmem:[%s4 + $0xe8] sm:$0xff]
      %v465 = vld [vmem:[%s4 + $0xf0] sm:$0xff]
      %v466 = vld [vmem:[%s4 + $0xf8] sm:$0xff]
      %v467 = vpack.c.bf16 %v437, %v435
      %v468 = vpack.c.bf16 %v438, %v436
      %v469 = vpack.c.bf16 %v441, %v439
      %v470 = vpack.c.bf16 %v442, %v440
      %v471 = vpack.c.bf16 %v445, %v443
      %v472 = vpack.c.bf16 %v446, %v444
      %v473 = vpack.c.bf16 %v449, %v447
      %v474 = vpack.c.bf16 %v450, %v448
      %v475 = vpack.c.bf16 %v453, %v451
      %v476 = vpack.c.bf16 %v454, %v452
      %v477 = vpack.c.bf16 %v457, %v455
      %v478 = vpack.c.bf16 %v458, %v456
      %v479 = vpack.c.bf16 %v461, %v459
      %v480 = vpack.c.bf16 %v462, %v460
      %v481 = vpack.c.bf16 %v465, %v463
      %v482 = vpack.c.bf16 %v466, %v464
      %v483 = vld [vmem:[%s5] sm:$0x3]
      %v485 = vlaneseq
      %v486 = vshrl.u32 %v485, 7
      %v487 = vsub.s32 0, %v486
      %v488 = vrot.slane %v483, %v487
      %v489 = vlaneseq
      %v490 = vshrl.u32 %v489, 7
      %v491 = vsub.s32 1, %v490
      %v492 = vrot.slane %v483, %v491
      %495 = vmatprep.subr.bf16.mxu0 %v482
      %496 = vmatpush1.bf16.msra.mxu0 %v481
      %497 = vmatprep.subr.bf16.mxu0 %v480
      %498 = vmatpush1.bf16.msra.mxu0 %v479
      %499 = vmatprep.subr.bf16.mxu0 %v478
      %500 = vmatpush1.bf16.msra.mxu0 %v477
      %501 = vmatprep.subr.bf16.mxu0 %v476
      %502 = vmatpush1.bf16.msra.mxu0 %v475
      %503 = vmatprep.subr.bf16.mxu0 %v474
      %504 = vmatpush1.bf16.msra.mxu0 %v473
      %505 = vmatprep.subr.bf16.mxu0 %v472
      %506 = vmatpush1.bf16.msra.mxu0 %v471
      %507 = vmatprep.subr.bf16.mxu0 %v470
      %508 = vmatpush1.bf16.msra.mxu0 %v469
      %509 = vmatprep.subr.bf16.mxu0 %v468
      %510 = vmatpush1.bf16.msra.mxu0 %v467
      %511 = vmatprep.subr.bf16.mxu0 0
      %512 = vmatpush2.bf16.msra.mxu0 0
      %513 = vmatprep.subr.bf16.mxu0 0
      %514 = vmatpush2.bf16.msra.mxu0 0
      %515 = vmatprep.subr.bf16.mxu0 0
      %516 = vmatpush2.bf16.msra.mxu0 0
      %517 = vmatprep.subr.bf16.mxu0 0
      %518 = vmatpush2.bf16.msra.mxu0 0
      %519 = vmatprep.subr.bf16.mxu0 0
      %520 = vmatpush2.bf16.msra.mxu0 0
      %521 = vmatprep.subr.bf16.mxu0 0
      %522 = vmatpush2.bf16.msra.mxu0 0
      %523 = vmatprep.subr.bf16.mxu0 0
      %524 = vmatpush2.bf16.msra.mxu0 0
      %525 = vmatprep.subr.bf16.mxu0 0
      %526 = vmatpush2.bf16.msra.mxu0 0
      %527 = vmatprep.mubr.bf16.mxu0 0
      %528 = vmatmul.mubr.bf16.gmra.mxu0 %v434
      %v529 = vpop.f32.mrf.mxu0
      %v530 = vadd.f32 %v488, %v529
      %v531 = vpop.f32.mrf.mxu0
      %v532 = vadd.f32 %v492, %v531
      %v533 = vpop.f32.mrf.mxu0
      %v534 = vpop.f32.mrf.mxu0
      %535 = vdwg.mxu0
      %v536 = vld [vmem:[%s354] sm:$0x1]
      %v537 = vmul.f32 %v536, -1e+09
      %v538 = vmul.f32 %v429, 0.25
      %v540 = vlaneseq
      %v541 = vshrl.u32 %v540, 7
      %v542 = vsub.s32 0, %v541
      %v543 = vrot.slane %v537, %v542
      %vm545 = vcmask 130048
      %v547 = vsel %vm545, %v538, 0
      %v550 = vsel %vm545, %v530, 0
      %552 = vmatprep.subr.mxu0 0.0
      %553 = vmatpush1.xpose.msra.mxu0 0.0
      %554 = vmatprep.subr.mxu0 0.0
      %555 = vmatpush1.xpose.msra.mxu0 0.0
      %556 = vmatprep.subr.mxu0 0.0
      %557 = vmatpush1.xpose.msra.mxu0 0.0
      %558 = vmatprep.subr.mxu0 0.0
      %559 = vmatpush1.xpose.msra.mxu0 0.0
      %560 = vmatprep.subr.mxu0 0.0
      %561 = vmatpush1.xpose.msra.mxu0 0.0
      %562 = vmatprep.subr.mxu0 0.0
      %563 = vmatpush1.xpose.msra.mxu0 0.0
      %564 = vmatprep.subr.mxu0 0.0
      %565 = vmatpush1.xpose.msra.mxu0 0.0
      %566 = vmatprep.subr.mxu0 0.0
      %567 = vmatpush1.xpose.msra.mxu0 0.0
      %568 = vmatprep.subr.mxu0 0.0
      %569 = vmatpush1.xpose.msra.mxu0 0.0
      %570 = vmatprep.subr.mxu0 0.0
      %571 = vmatpush1.xpose.msra.mxu0 0.0
      %572 = vmatprep.subr.mxu0 0.0
      %573 = vmatpush1.xpose.msra.mxu0 0.0
      %574 = vmatprep.subr.mxu0 0.0
      %575 = vmatpush1.xpose.msra.mxu0 0.0
      %576 = vmatprep.subr.mxu0 0.0
      %577 = vmatpush1.xpose.msra.mxu0 0.0
      %578 = vmatprep.subr.mxu0 0.0
      %579 = vmatpush1.xpose.msra.mxu0 0.0
      %580 = vmatprep.subr.mxu0 0.0
      %581 = vmatpush1.xpose.msra.mxu0 0.0
      %582 = vmatprep.subr.mxu0 0.0
      %583 = vmatpush1.xpose.msra.mxu0 %v550
      %584 = vmatprep.subr.mxu0 0.0
      %585 = vmatpush2.xpose.msra.mxu0 0.0
      %586 = vmatprep.subr.mxu0 0.0
      %587 = vmatpush2.xpose.msra.mxu0 0.0
      %588 = vmatprep.subr.mxu0 0.0
      %589 = vmatpush2.xpose.msra.mxu0 0.0
      %590 = vmatprep.subr.mxu0 0.0
      %591 = vmatpush2.xpose.msra.mxu0 0.0
      %592 = vmatprep.subr.mxu0 0.0
      %593 = vmatpush2.xpose.msra.mxu0 0.0
      %594 = vmatprep.subr.mxu0 0.0
      %595 = vmatpush2.xpose.msra.mxu0 0.0
      %596 = vmatprep.subr.mxu0 0.0
      %597 = vmatpush2.xpose.msra.mxu0 0.0
      %598 = vmatprep.subr.mxu0 0.0
      %599 = vmatpush2.xpose.msra.mxu0 0.0
      %600 = vmatprep.subr.mxu0 0.0
      %601 = vmatpush2.xpose.msra.mxu0 0.0
      %602 = vmatprep.subr.mxu0 0.0
      %603 = vmatpush2.xpose.msra.mxu0 0.0
      %604 = vmatprep.subr.mxu0 0.0
      %605 = vmatpush2.xpose.msra.mxu0 0.0
      %606 = vmatprep.subr.mxu0 0.0
      %607 = vmatpush2.xpose.msra.mxu0 0.0
      %608 = vmatprep.subr.mxu0 0.0
      %609 = vmatpush2.xpose.msra.mxu0 0.0
      %610 = vmatprep.subr.mxu0 0.0
      %611 = vmatpush2.xpose.msra.mxu0 0.0
      %612 = vmatprep.subr.mxu0 0.0
      %613 = vmatpush2.xpose.msra.mxu0 0.0
      %614 = vmatprep.subr.mxu0 0.0
      %615 = vmatpush2.xpose.msra.mxu0 0.0
      %616 = vmatprep.mubr.f32.mxu0 0.0
      %617 = vmatmul.mubr.f32.gmra.mxu0 %v547
      %v618 = vpop.f32.mrf.mxu0
      %v619 = vadd.f32 %v543, %v618
      %v620 = vpop.f32.mrf.mxu0
      %621 = vdwg.mxu0
      %vm622 = vcmask 64512
      %v623 = vsel %vm622, %v619, -inf
      %624 = vmax.xlane.f32.xlu0 %v623
      %v625 = vpop.xlane.xlu0 %624
      %v626 = vsub.f32 %v619, %v625
      %v627 = vmul.f32 %v626, 1.442695
      %v628 = vpow.pop %v627
      %v629 = vsel %vm622, %v628, 0.0
      %630 = vadd.xlane.f32.xlu0 %v629
      %v631 = vpop.xlane.xlu0 %630
      %v632 = vrcp.pop %v631
      %v633 = vmul.f32 %v628, %v632
      %v635 = vsel %vm622, %v633, 0
      %637 = vmatprep.subr.mxu0 0.0
      %638 = vmatpush1.msra.mxu0 0.0
      %639 = vmatprep.subr.mxu0 0.0
      %640 = vmatpush1.msra.mxu0 0.0
      %641 = vmatprep.subr.mxu0 0.0
      %642 = vmatpush1.msra.mxu0 0.0
      %643 = vmatprep.subr.mxu0 0.0
      %644 = vmatpush1.msra.mxu0 0.0
      %645 = vmatprep.subr.mxu0 0.0
      %646 = vmatpush1.msra.mxu0 0.0
      %647 = vmatprep.subr.mxu0 0.0
      %648 = vmatpush1.msra.mxu0 0.0
      %649 = vmatprep.subr.mxu0 0.0
      %650 = vmatpush1.msra.mxu0 0.0
      %651 = vmatprep.subr.mxu0 0.0
      %652 = vmatpush1.msra.mxu0 0.0
      %653 = vmatprep.subr.mxu0 0.0
      %654 = vmatpush1.msra.mxu0 0.0
      %655 = vmatprep.subr.mxu0 0.0
      %656 = vmatpush1.msra.mxu0 0.0
      %657 = vmatprep.subr.mxu0 0.0
      %658 = vmatpush1.msra.mxu0 0.0
      %659 = vmatprep.subr.mxu0 0.0
      %660 = vmatpush1.msra.mxu0 0.0
      %661 = vmatprep.subr.mxu0 0.0
      %662 = vmatpush1.msra.mxu0 0.0
      %663 = vmatprep.subr.mxu0 0.0
      %664 = vmatpush1.msra.mxu0 0.0
      %665 = vmatprep.subr.mxu0 0.0
      %666 = vmatpush1.msra.mxu0 0.0
      %667 = vmatprep.subr.mxu0 0.0
      %668 = vmatpush1.msra.mxu0 %v532
      %669 = vmatprep.subr.mxu0 0.0
      %670 = vmatpush2.msra.mxu0 0.0
      %671 = vmatprep.subr.mxu0 0.0
      %672 = vmatpush2.msra.mxu0 0.0
      %673 = vmatprep.subr.mxu0 0.0
      %674 = vmatpush2.msra.mxu0 0.0
      %675 = vmatprep.subr.mxu0 0.0
      %676 = vmatpush2.msra.mxu0 0.0
      %677 = vmatprep.subr.mxu0 0.0
      %678 = vmatpush2.msra.mxu0 0.0
      %679 = vmatprep.subr.mxu0 0.0
      %680 = vmatpush2.msra.mxu0 0.0
      %681 = vmatprep.subr.mxu0 0.0
      %682 = vmatpush2.msra.mxu0 0.0
      %683 = vmatprep.subr.mxu0 0.0
      %684 = vmatpush2.msra.mxu0 0.0
      %685 = vmatprep.subr.mxu0 0.0
      %686 = vmatpush2.msra.mxu0 0.0
      %687 = vmatprep.subr.mxu0 0.0
      %688 = vmatpush2.msra.mxu0 0.0
      %689 = vmatprep.subr.mxu0 0.0
      %690 = vmatpush2.msra.mxu0 0.0
      %691 = vmatprep.subr.mxu0 0.0
      %692 = vmatpush2.msra.mxu0 0.0
      %693 = vmatprep.subr.mxu0 0.0
      %694 = vmatpush2.msra.mxu0 0.0
      %695 = vmatprep.subr.mxu0 0.0
      %696 = vmatpush2.msra.mxu0 0.0
      %697 = vmatprep.subr.mxu0 0.0
      %698 = vmatpush2.msra.mxu0 0.0
      %699 = vmatprep.subr.mxu0 0.0
      %700 = vmatpush2.msra.mxu0 0.0
      %701 = vmatprep.mubr.f32.mxu0 0.0
      %702 = vmatmul.mubr.f32.gmra.mxu0 %v635
      %v703 = vpop.f32.mrf.mxu0
      %v704 = vadd.f32 0.0, %v703
      %v705 = vpop.f32.mrf.mxu0
      %706 = vdwg.mxu0
      %707 = vrot.lane.b32.xlu0 %v538, 112
      %v708 = vpop.permute.xlu0 %707
      %709 = vrot.lane.b32.xlu0 %v530, 112
      %v710 = vpop.permute.xlu0 %709
      %v711 = vsel %vm545, %v708, 0
      %v713 = vsel %vm545, %v710, 0
      %715 = vmatprep.subr.mxu0 0.0
      %716 = vmatpush1.xpose.msra.mxu0 0.0
      %717 = vmatprep.subr.mxu0 0.0
      %718 = vmatpush1.xpose.msra.mxu0 0.0
      %719 = vmatprep.subr.mxu0 0.0
      %720 = vmatpush1.xpose.msra.mxu0 0.0
      %721 = vmatprep.subr.mxu0 0.0
      %722 = vmatpush1.xpose.msra.mxu0 0.0
      %723 = vmatprep.subr.mxu0 0.0
      %724 = vmatpush1.xpose.msra.mxu0 0.0
      %725 = vmatprep.subr.mxu0 0.0
      %726 = vmatpush1.xpose.msra.mxu0 0.0
      %727 = vmatprep.subr.mxu0 0.0
      %728 = vmatpush1.xpose.msra.mxu0 0.0
      %729 = vmatprep.subr.mxu0 0.0
      %730 = vmatpush1.xpose.msra.mxu0 0.0
      %731 = vmatprep.subr.mxu0 0.0
      %732 = vmatpush1.xpose.msra.mxu0 0.0
      %733 = vmatprep.subr.mxu0 0.0
      %734 = vmatpush1.xpose.msra.mxu0 0.0
      %735 = vmatprep.subr.mxu0 0.0
      %736 = vmatpush1.xpose.msra.mxu0 0.0
      %737 = vmatprep.subr.mxu0 0.0
      %738 = vmatpush1.xpose.msra.mxu0 0.0
      %739 = vmatprep.subr.mxu0 0.0
      %740 = vmatpush1.xpose.msra.mxu0 0.0
      %741 = vmatprep.subr.mxu0 0.0
      %742 = vmatpush1.xpose.msra.mxu0 0.0
      %743 = vmatprep.subr.mxu0 0.0
      %744 = vmatpush1.xpose.msra.mxu0 0.0
      %745 = vmatprep.subr.mxu0 0.0
      %746 = vmatpush1.xpose.msra.mxu0 %v713
      %747 = vmatprep.subr.mxu0 0.0
      %748 = vmatpush2.xpose.msra.mxu0 0.0
      %749 = vmatprep.subr.mxu0 0.0
      %750 = vmatpush2.xpose.msra.mxu0 0.0
      %751 = vmatprep.subr.mxu0 0.0
      %752 = vmatpush2.xpose.msra.mxu0 0.0
      %753 = vmatprep.subr.mxu0 0.0
      %754 = vmatpush2.xpose.msra.mxu0 0.0
      %755 = vmatprep.subr.mxu0 0.0
      %756 = vmatpush2.xpose.msra.mxu0 0.0
      %757 = vmatprep.subr.mxu0 0.0
      %758 = vmatpush2.xpose.msra.mxu0 0.0
      %759 = vmatprep.subr.mxu0 0.0
      %760 = vmatpush2.xpose.msra.mxu0 0.0
      %761 = vmatprep.subr.mxu0 0.0
      %762 = vmatpush2.xpose.msra.mxu0 0.0
      %763 = vmatprep.subr.mxu0 0.0
      %764 = vmatpush2.xpose.msra.mxu0 0.0
      %765 = vmatprep.subr.mxu0 0.0
      %766 = vmatpush2.xpose.msra.mxu0 0.0
      %767 = vmatprep.subr.mxu0 0.0
      %768 = vmatpush2.xpose.msra.mxu0 0.0
      %769 = vmatprep.subr.mxu0 0.0
      %770 = vmatpush2.xpose.msra.mxu0 0.0
      %771 = vmatprep.subr.mxu0 0.0
      %772 = vmatpush2.xpose.msra.mxu0 0.0
      %773 = vmatprep.subr.mxu0 0.0
      %774 = vmatpush2.xpose.msra.mxu0 0.0
      %775 = vmatprep.subr.mxu0 0.0
      %776 = vmatpush2.xpose.msra.mxu0 0.0
      %777 = vmatprep.subr.mxu0 0.0
      %778 = vmatpush2.xpose.msra.mxu0 0.0
      %779 = vmatprep.mubr.f32.mxu0 0.0
      %780 = vmatmul.mubr.f32.gmra.mxu0 %v711
      %v781 = vpop.f32.mrf.mxu0
      %v782 = vadd.f32 %v543, %v781
      %v783 = vpop.f32.mrf.mxu0
      %784 = vdwg.mxu0
      %v785 = vsel %vm622, %v782, -inf
      %786 = vmax.xlane.f32.xlu0 %v785
      %v787 = vpop.xlane.xlu0 %786
      %v788 = vsub.f32 %v782, %v787
      %v789 = vmul.f32 %v788, 1.442695
      %v790 = vpow.pop %v789
      %v791 = vsel %vm622, %v790, 0.0
      %792 = vadd.xlane.f32.xlu0 %v791
      %v793 = vpop.xlane.xlu0 %792
      %v794 = vrcp.pop %v793
      %v795 = vmul.f32 %v790, %v794
      %797 = vrot.lane.b32.xlu0 %v532, 112
      %v798 = vpop.permute.xlu0 %797
      %v801 = vsel %vm622, %v795, 0
      %803 = vmatprep.subr.mxu0 0.0
      %804 = vmatpush1.msra.mxu0 0.0
      %805 = vmatprep.subr.mxu0 0.0
      %806 = vmatpush1.msra.mxu0 0.0
      %807 = vmatprep.subr.mxu0 0.0
      %808 = vmatpush1.msra.mxu0 0.0
      %809 = vmatprep.subr.mxu0 0.0
      %810 = vmatpush1.msra.mxu0 0.0
      %811 = vmatprep.subr.mxu0 0.0
      %812 = vmatpush1.msra.mxu0 0.0
      %813 = vmatprep.subr.mxu0 0.0
      %814 = vmatpush1.msra.mxu0 0.0
      %815 = vmatprep.subr.mxu0 0.0
      %816 = vmatpush1.msra.mxu0 0.0
      %817 = vmatprep.subr.mxu0 0.0
      %818 = vmatpush1.msra.mxu0 0.0
      %819 = vmatprep.subr.mxu0 0.0
      %820 = vmatpush1.msra.mxu0 0.0
      %821 = vmatprep.subr.mxu0 0.0
      %822 = vmatpush1.msra.mxu0 0.0
      %823 = vmatprep.subr.mxu0 0.0
      %824 = vmatpush1.msra.mxu0 0.0
      %825 = vmatprep.subr.mxu0 0.0
      %826 = vmatpush1.msra.mxu0 0.0
      %827 = vmatprep.subr.mxu0 0.0
      %828 = vmatpush1.msra.mxu0 0.0
      %829 = vmatprep.subr.mxu0 0.0
      %830 = vmatpush1.msra.mxu0 0.0
      %831 = vmatprep.subr.mxu0 0.0
      %832 = vmatpush1.msra.mxu0 0.0
      %833 = vmatprep.subr.mxu0 0.0
      %834 = vmatpush1.msra.mxu0 %v798
      %835 = vmatprep.subr.mxu0 0.0
      %836 = vmatpush2.msra.mxu0 0.0
      %837 = vmatprep.subr.mxu0 0.0
      %838 = vmatpush2.msra.mxu0 0.0
      %839 = vmatprep.subr.mxu0 0.0
      %840 = vmatpush2.msra.mxu0 0.0
      %841 = vmatprep.subr.mxu0 0.0
      %842 = vmatpush2.msra.mxu0 0.0
      %843 = vmatprep.subr.mxu0 0.0
      %844 = vmatpush2.msra.mxu0 0.0
      %845 = vmatprep.subr.mxu0 0.0
      %846 = vmatpush2.msra.mxu0 0.0
      %847 = vmatprep.subr.mxu0 0.0
      %848 = vmatpush2.msra.mxu0 0.0
      %849 = vmatprep.subr.mxu0 0.0
      %850 = vmatpush2.msra.mxu0 0.0
      %851 = vmatprep.subr.mxu0 0.0
      %852 = vmatpush2.msra.mxu0 0.0
      %853 = vmatprep.subr.mxu0 0.0
      %854 = vmatpush2.msra.mxu0 0.0
      %855 = vmatprep.subr.mxu0 0.0
      %856 = vmatpush2.msra.mxu0 0.0
      %857 = vmatprep.subr.mxu0 0.0
      %858 = vmatpush2.msra.mxu0 0.0
      %859 = vmatprep.subr.mxu0 0.0
      %860 = vmatpush2.msra.mxu0 0.0
      %861 = vmatprep.subr.mxu0 0.0
      %862 = vmatpush2.msra.mxu0 0.0
      %863 = vmatprep.subr.mxu0 0.0
      %864 = vmatpush2.msra.mxu0 0.0
      %865 = vmatprep.subr.mxu0 0.0
      %866 = vmatpush2.msra.mxu0 0.0
      %867 = vmatprep.mubr.f32.mxu0 0.0
      %868 = vmatmul.mubr.f32.gmra.mxu0 %v801
      %v869 = vpop.f32.mrf.mxu0
      %v870 = vadd.f32 0.0, %v869
      %v871 = vpop.f32.mrf.mxu0
      %872 = vdwg.mxu0
      %873 = vrot.lane.b32.xlu0 %v538, 96
      %v874 = vpop.permute.xlu0 %873
      %875 = vrot.lane.b32.xlu0 %v530, 96
      %v876 = vpop.permute.xlu0 %875
      %v877 = vsel %vm545, %v874, 0
      %v879 = vsel %vm545, %v876, 0
      %881 = vmatprep.subr.mxu0 0.0
      %882 = vmatpush1.xpose.msra.mxu0 0.0
      %883 = vmatprep.subr.mxu0 0.0
      %884 = vmatpush1.xpose.msra.mxu0 0.0
      %885 = vmatprep.subr.mxu0 0.0
      %886 = vmatpush1.xpose.msra.mxu0 0.0
      %887 = vmatprep.subr.mxu0 0.0
      %888 = vmatpush1.xpose.msra.mxu0 0.0
      %889 = vmatprep.subr.mxu0 0.0
      %890 = vmatpush1.xpose.msra.mxu0 0.0
      %891 = vmatprep.subr.mxu0 0.0
      %892 = vmatpush1.xpose.msra.mxu0 0.0
      %893 = vmatprep.subr.mxu0 0.0
      %894 = vmatpush1.xpose.msra.mxu0 0.0
      %895 = vmatprep.subr.mxu0 0.0
      %896 = vmatpush1.xpose.msra.mxu0 0.0
      %897 = vmatprep.subr.mxu0 0.0
      %898 = vmatpush1.xpose.msra.mxu0 0.0
      %899 = vmatprep.subr.mxu0 0.0
      %900 = vmatpush1.xpose.msra.mxu0 0.0
      %901 = vmatprep.subr.mxu0 0.0
      %902 = vmatpush1.xpose.msra.mxu0 0.0
      %903 = vmatprep.subr.mxu0 0.0
      %904 = vmatpush1.xpose.msra.mxu0 0.0
      %905 = vmatprep.subr.mxu0 0.0
      %906 = vmatpush1.xpose.msra.mxu0 0.0
      %907 = vmatprep.subr.mxu0 0.0
      %908 = vmatpush1.xpose.msra.mxu0 0.0
      %909 = vmatprep.subr.mxu0 0.0
      %910 = vmatpush1.xpose.msra.mxu0 0.0
      %911 = vmatprep.subr.mxu0 0.0
      %912 = vmatpush1.xpose.msra.mxu0 %v879
      %913 = vmatprep.subr.mxu0 0.0
      %914 = vmatpush2.xpose.msra.mxu0 0.0
      %915 = vmatprep.subr.mxu0 0.0
      %916 = vmatpush2.xpose.msra.mxu0 0.0
      %917 = vmatprep.subr.mxu0 0.0
      %918 = vmatpush2.xpose.msra.mxu0 0.0
      %919 = vmatprep.subr.mxu0 0.0
      %920 = vmatpush2.xpose.msra.mxu0 0.0
      %921 = vmatprep.subr.mxu0 0.0
      %922 = vmatpush2.xpose.msra.mxu0 0.0
      %923 = vmatprep.subr.mxu0 0.0
      %924 = vmatpush2.xpose.msra.mxu0 0.0
      %925 = vmatprep.subr.mxu0 0.0
      %926 = vmatpush2.xpose.msra.mxu0 0.0
      %927 = vmatprep.subr.mxu0 0.0
      %928 = vmatpush2.xpose.msra.mxu0 0.0
      %929 = vmatprep.subr.mxu0 0.0
      %930 = vmatpush2.xpose.msra.mxu0 0.0
      %931 = vmatprep.subr.mxu0 0.0
      %932 = vmatpush2.xpose.msra.mxu0 0.0
      %933 = vmatprep.subr.mxu0 0.0
      %934 = vmatpush2.xpose.msra.mxu0 0.0
      %935 = vmatprep.subr.mxu0 0.0
      %936 = vmatpush2.xpose.msra.mxu0 0.0
      %937 = vmatprep.subr.mxu0 0.0
      %938 = vmatpush2.xpose.msra.mxu0 0.0
      %939 = vmatprep.subr.mxu0 0.0
      %940 = vmatpush2.xpose.msra.mxu0 0.0
      %941 = vmatprep.subr.mxu0 0.0
      %942 = vmatpush2.xpose.msra.mxu0 0.0
      %943 = vmatprep.subr.mxu0 0.0
      %944 = vmatpush2.xpose.msra.mxu0 0.0
      %945 = vmatprep.mubr.f32.mxu0 0.0
      %946 = vmatmul.mubr.f32.gmra.mxu0 %v877
      %v947 = vpop.f32.mrf.mxu0
      %v948 = vadd.f32 %v543, %v947
      %v949 = vpop.f32.mrf.mxu0
      %950 = vdwg.mxu0
      %v951 = vsel %vm622, %v948, -inf
      %952 = vmax.xlane.f32.xlu0 %v951
      %v953 = vpop.xlane.xlu0 %952
      %v954 = vsub.f32 %v948, %v953
      %v955 = vmul.f32 %v954, 1.442695
      %v956 = vpow.pop %v955
      %v957 = vsel %vm622, %v956, 0.0
      %958 = vadd.xlane.f32.xlu0 %v957
      %v959 = vpop.xlane.xlu0 %958
      %v960 = vrcp.pop %v959
      %v961 = vmul.f32 %v956, %v960
      %962 = vrot.lane.b32.xlu0 %v532, 96
      %v963 = vpop.permute.xlu0 %962
      %v966 = vsel %vm622, %v961, 0
      %968 = vmatprep.subr.mxu0 0.0
      %969 = vmatpush1.msra.mxu0 0.0
      %970 = vmatprep.subr.mxu0 0.0
      %971 = vmatpush1.msra.mxu0 0.0
      %972 = vmatprep.subr.mxu0 0.0
      %973 = vmatpush1.msra.mxu0 0.0
      %974 = vmatprep.subr.mxu0 0.0
      %975 = vmatpush1.msra.mxu0 0.0
      %976 = vmatprep.subr.mxu0 0.0
      %977 = vmatpush1.msra.mxu0 0.0
      %978 = vmatprep.subr.mxu0 0.0
      %979 = vmatpush1.msra.mxu0 0.0
      %980 = vmatprep.subr.mxu0 0.0
      %981 = vmatpush1.msra.mxu0 0.0
      %982 = vmatprep.subr.mxu0 0.0
      %983 = vmatpush1.msra.mxu0 0.0
      %984 = vmatprep.subr.mxu0 0.0
      %985 = vmatpush1.msra.mxu0 0.0
      %986 = vmatprep.subr.mxu0 0.0
      %987 = vmatpush1.msra.mxu0 0.0
      %988 = vmatprep.subr.mxu0 0.0
      %989 = vmatpush1.msra.mxu0 0.0
      %990 = vmatprep.subr.mxu0 0.0
      %991 = vmatpush1.msra.mxu0 0.0
      %992 = vmatprep.subr.mxu0 0.0
      %993 = vmatpush1.msra.mxu0 0.0
      %994 = vmatprep.subr.mxu0 0.0
      %995 = vmatpush1.msra.mxu0 0.0
      %996 = vmatprep.subr.mxu0 0.0
      %997 = vmatpush1.msra.mxu0 0.0
      %998 = vmatprep.subr.mxu0 0.0
      %999 = vmatpush1.msra.mxu0 %v963
      %1000 = vmatprep.subr.mxu0 0.0
      %1001 = vmatpush2.msra.mxu0 0.0
      %1002 = vmatprep.subr.mxu0 0.0
      %1003 = vmatpush2.msra.mxu0 0.0
      %1004 = vmatprep.subr.mxu0 0.0
      %1005 = vmatpush2.msra.mxu0 0.0
      %1006 = vmatprep.subr.mxu0 0.0
      %1007 = vmatpush2.msra.mxu0 0.0
      %1008 = vmatprep.subr.mxu0 0.0
      %1009 = vmatpush2.msra.mxu0 0.0
      %1010 = vmatprep.subr.mxu0 0.0
      %1011 = vmatpush2.msra.mxu0 0.0
      %1012 = vmatprep.subr.mxu0 0.0
      %1013 = vmatpush2.msra.mxu0 0.0
      %1014 = vmatprep.subr.mxu0 0.0
      %1015 = vmatpush2.msra.mxu0 0.0
      %1016 = vmatprep.subr.mxu0 0.0
      %1017 = vmatpush2.msra.mxu0 0.0
      %1018 = vmatprep.subr.mxu0 0.0
      %1019 = vmatpush2.msra.mxu0 0.0
      %1020 = vmatprep.subr.mxu0 0.0
      %1021 = vmatpush2.msra.mxu0 0.0
      %1022 = vmatprep.subr.mxu0 0.0
      %1023 = vmatpush2.msra.mxu0 0.0
      %1024 = vmatprep.subr.mxu0 0.0
      %1025 = vmatpush2.msra.mxu0 0.0
      %1026 = vmatprep.subr.mxu0 0.0
      %1027 = vmatpush2.msra.mxu0 0.0
      %1028 = vmatprep.subr.mxu0 0.0
      %1029 = vmatpush2.msra.mxu0 0.0
      %1030 = vmatprep.subr.mxu0 0.0
      %1031 = vmatpush2.msra.mxu0 0.0
      %1032 = vmatprep.mubr.f32.mxu0 0.0
      %1033 = vmatmul.mubr.f32.gmra.mxu0 %v966
      %v1034 = vpop.f32.mrf.mxu0
      %v1035 = vadd.f32 0.0, %v1034
      %v1036 = vpop.f32.mrf.mxu0
      %1037 = vdwg.mxu0
      %1038 = vrot.lane.b32.xlu0 %v538, 80
      %v1039 = vpop.permute.xlu0 %1038
      %1040 = vrot.lane.b32.xlu0 %v530, 80
      %v1041 = vpop.permute.xlu0 %1040
      %v1042 = vsel %vm545, %v1039, 0
      %v1044 = vsel %vm545, %v1041, 0
      %1046 = vmatprep.subr.mxu0 0.0
      %1047 = vmatpush1.xpose.msra.mxu0 0.0
      %1048 = vmatprep.subr.mxu0 0.0
      %1049 = vmatpush1.xpose.msra.mxu0 0.0
      %1050 = vmatprep.subr.mxu0 0.0
      %1051 = vmatpush1.xpose.msra.mxu0 0.0
      %1052 = vmatprep.subr.mxu0 0.0
      %1053 = vmatpush1.xpose.msra.mxu0 0.0
      %1054 = vmatprep.subr.mxu0 0.0
      %1055 = vmatpush1.xpose.msra.mxu0 0.0
      %1056 = vmatprep.subr.mxu0 0.0
      %1057 = vmatpush1.xpose.msra.mxu0 0.0
      %1058 = vmatprep.subr.mxu0 0.0
      %1059 = vmatpush1.xpose.msra.mxu0 0.0
      %1060 = vmatprep.subr.mxu0 0.0
      %1061 = vmatpush1.xpose.msra.mxu0 0.0
      %1062 = vmatprep.subr.mxu0 0.0
      %1063 = vmatpush1.xpose.msra.mxu0 0.0
      %1064 = vmatprep.subr.mxu0 0.0
      %1065 = vmatpush1.xpose.msra.mxu0 0.0
      %1066 = vmatprep.subr.mxu0 0.0
      %1067 = vmatpush1.xpose.msra.mxu0 0.0
      %1068 = vmatprep.subr.mxu0 0.0
      %1069 = vmatpush1.xpose.msra.mxu0 0.0
      %1070 = vmatprep.subr.mxu0 0.0
      %1071 = vmatpush1.xpose.msra.mxu0 0.0
      %1072 = vmatprep.subr.mxu0 0.0
      %1073 = vmatpush1.xpose.msra.mxu0 0.0
      %1074 = vmatprep.subr.mxu0 0.0
      %1075 = vmatpush1.xpose.msra.mxu0 0.0
      %1076 = vmatprep.subr.mxu0 0.0
      %1077 = vmatpush1.xpose.msra.mxu0 %v1044
      %1078 = vmatprep.subr.mxu0 0.0
      %1079 = vmatpush2.xpose.msra.mxu0 0.0
      %1080 = vmatprep.subr.mxu0 0.0
      %1081 = vmatpush2.xpose.msra.mxu0 0.0
      %1082 = vmatprep.subr.mxu0 0.0
      %1083 = vmatpush2.xpose.msra.mxu0 0.0
      %1084 = vmatprep.subr.mxu0 0.0
      %1085 = vmatpush2.xpose.msra.mxu0 0.0
      %1086 = vmatprep.subr.mxu0 0.0
      %1087 = vmatpush2.xpose.msra.mxu0 0.0
      %1088 = vmatprep.subr.mxu0 0.0
      %1089 = vmatpush2.xpose.msra.mxu0 0.0
      %1090 = vmatprep.subr.mxu0 0.0
      %1091 = vmatpush2.xpose.msra.mxu0 0.0
      %1092 = vmatprep.subr.mxu0 0.0
      %1093 = vmatpush2.xpose.msra.mxu0 0.0
      %1094 = vmatprep.subr.mxu0 0.0
      %1095 = vmatpush2.xpose.msra.mxu0 0.0
      %1096 = vmatprep.subr.mxu0 0.0
      %1097 = vmatpush2.xpose.msra.mxu0 0.0
      %1098 = vmatprep.subr.mxu0 0.0
      %1099 = vmatpush2.xpose.msra.mxu0 0.0
      %1100 = vmatprep.subr.mxu0 0.0
      %1101 = vmatpush2.xpose.msra.mxu0 0.0
      %1102 = vmatprep.subr.mxu0 0.0
      %1103 = vmatpush2.xpose.msra.mxu0 0.0
      %1104 = vmatprep.subr.mxu0 0.0
      %1105 = vmatpush2.xpose.msra.mxu0 0.0
      %1106 = vmatprep.subr.mxu0 0.0
      %1107 = vmatpush2.xpose.msra.mxu0 0.0
      %1108 = vmatprep.subr.mxu0 0.0
      %1109 = vmatpush2.xpose.msra.mxu0 0.0
      %1110 = vmatprep.mubr.f32.mxu0 0.0
      %1111 = vmatmul.mubr.f32.gmra.mxu0 %v1042
      %v1112 = vpop.f32.mrf.mxu0
      %v1113 = vadd.f32 %v543, %v1112
      %v1114 = vpop.f32.mrf.mxu0
      %1115 = vdwg.mxu0
      %v1116 = vsel %vm622, %v1113, -inf
      %1117 = vmax.xlane.f32.xlu0 %v1116
      %v1118 = vpop.xlane.xlu0 %1117
      %v1119 = vsub.f32 %v1113, %v1118
      %v1120 = vmul.f32 %v1119, 1.442695
      %v1121 = vpow.pop %v1120
      %v1122 = vsel %vm622, %v1121, 0.0
      %1123 = vadd.xlane.f32.xlu0 %v1122
      %v1124 = vpop.xlane.xlu0 %1123
      %v1125 = vrcp.pop %v1124
      %v1126 = vmul.f32 %v1121, %v1125
      %1127 = vrot.lane.b32.xlu0 %v532, 80
      %v1128 = vpop.permute.xlu0 %1127
      %v1131 = vsel %vm622, %v1126, 0
      %1133 = vmatprep.subr.mxu0 0.0
      %1134 = vmatpush1.msra.mxu0 0.0
      %1135 = vmatprep.subr.mxu0 0.0
      %1136 = vmatpush1.msra.mxu0 0.0
      %1137 = vmatprep.subr.mxu0 0.0
      %1138 = vmatpush1.msra.mxu0 0.0
      %1139 = vmatprep.subr.mxu0 0.0
      %1140 = vmatpush1.msra.mxu0 0.0
      %1141 = vmatprep.subr.mxu0 0.0
      %1142 = vmatpush1.msra.mxu0 0.0
      %1143 = vmatprep.subr.mxu0 0.0
      %1144 = vmatpush1.msra.mxu0 0.0
      %1145 = vmatprep.subr.mxu0 0.0
      %1146 = vmatpush1.msra.mxu0 0.0
      %1147 = vmatprep.subr.mxu0 0.0
      %1148 = vmatpush1.msra.mxu0 0.0
      %1149 = vmatprep.subr.mxu0 0.0
      %1150 = vmatpush1.msra.mxu0 0.0
      %1151 = vmatprep.subr.mxu0 0.0
      %1152 = vmatpush1.msra.mxu0 0.0
      %1153 = vmatprep.subr.mxu0 0.0
      %1154 = vmatpush1.msra.mxu0 0.0
      %1155 = vmatprep.subr.mxu0 0.0
      %1156 = vmatpush1.msra.mxu0 0.0
      %1157 = vmatprep.subr.mxu0 0.0
      %1158 = vmatpush1.msra.mxu0 0.0
      %1159 = vmatprep.subr.mxu0 0.0
      %1160 = vmatpush1.msra.mxu0 0.0
      %1161 = vmatprep.subr.mxu0 0.0
      %1162 = vmatpush1.msra.mxu0 0.0
      %1163 = vmatprep.subr.mxu0 0.0
      %1164 = vmatpush1.msra.mxu0 %v1128
      %1165 = vmatprep.subr.mxu0 0.0
      %1166 = vmatpush2.msra.mxu0 0.0
      %1167 = vmatprep.subr.mxu0 0.0
      %1168 = vmatpush2.msra.mxu0 0.0
      %1169 = vmatprep.subr.mxu0 0.0
      %1170 = vmatpush2.msra.mxu0 0.0
      %1171 = vmatprep.subr.mxu0 0.0
      %1172 = vmatpush2.msra.mxu0 0.0
      %1173 = vmatprep.subr.mxu0 0.0
      %1174 = vmatpush2.msra.mxu0 0.0
      %1175 = vmatprep.subr.mxu0 0.0
      %1176 = vmatpush2.msra.mxu0 0.0
      %1177 = vmatprep.subr.mxu0 0.0
      %1178 = vmatpush2.msra.mxu0 0.0
      %1179 = vmatprep.subr.mxu0 0.0
      %1180 = vmatpush2.msra.mxu0 0.0
      %1181 = vmatprep.subr.mxu0 0.0
      %1182 = vmatpush2.msra.mxu0 0.0
      %1183 = vmatprep.subr.mxu0 0.0
      %1184 = vmatpush2.msra.mxu0 0.0
      %1185 = vmatprep.subr.mxu0 0.0
      %1186 = vmatpush2.msra.mxu0 0.0
      %1187 = vmatprep.subr.mxu0 0.0
      %1188 = vmatpush2.msra.mxu0 0.0
      %1189 = vmatprep.subr.mxu0 0.0
      %1190 = vmatpush2.msra.mxu0 0.0
      %1191 = vmatprep.subr.mxu0 0.0
      %1192 = vmatpush2.msra.mxu0 0.0
      %1193 = vmatprep.subr.mxu0 0.0
      %1194 = vmatpush2.msra.mxu0 0.0
      %1195 = vmatprep.subr.mxu0 0.0
      %1196 = vmatpush2.msra.mxu0 0.0
      %1197 = vmatprep.mubr.f32.mxu0 0.0
      %1198 = vmatmul.mubr.f32.gmra.mxu0 %v1131
      %v1199 = vpop.f32.mrf.mxu0
      %v1200 = vadd.f32 0.0, %v1199
      %v1201 = vpop.f32.mrf.mxu0
      %1202 = vdwg.mxu0
      %1203 = vrot.lane.b32.xlu0 %v538, 64
      %v1204 = vpop.permute.xlu0 %1203
      %1205 = vrot.lane.b32.xlu0 %v530, 64
      %v1206 = vpop.permute.xlu0 %1205
      %v1207 = vsel %vm545, %v1204, 0
      %v1209 = vsel %vm545, %v1206, 0
      %1211 = vmatprep.subr.mxu0 0.0
      %1212 = vmatpush1.xpose.msra.mxu0 0.0
      %1213 = vmatprep.subr.mxu0 0.0
      %1214 = vmatpush1.xpose.msra.mxu0 0.0
      %1215 = vmatprep.subr.mxu0 0.0
      %1216 = vmatpush1.xpose.msra.mxu0 0.0
      %1217 = vmatprep.subr.mxu0 0.0
      %1218 = vmatpush1.xpose.msra.mxu0 0.0
      %1219 = vmatprep.subr.mxu0 0.0
      %1220 = vmatpush1.xpose.msra.mxu0 0.0
      %1221 = vmatprep.subr.mxu0 0.0
      %1222 = vmatpush1.xpose.msra.mxu0 0.0
      %1223 = vmatprep.subr.mxu0 0.0
      %1224 = vmatpush1.xpose.msra.mxu0 0.0
      %1225 = vmatprep.subr.mxu0 0.0
      %1226 = vmatpush1.xpose.msra.mxu0 0.0
      %1227 = vmatprep.subr.mxu0 0.0
      %1228 = vmatpush1.xpose.msra.mxu0 0.0
      %1229 = vmatprep.subr.mxu0 0.0
      %1230 = vmatpush1.xpose.msra.mxu0 0.0
      %1231 = vmatprep.subr.mxu0 0.0
      %1232 = vmatpush1.xpose.msra.mxu0 0.0
      %1233 = vmatprep.subr.mxu0 0.0
      %1234 = vmatpush1.xpose.msra.mxu0 0.0
      %1235 = vmatprep.subr.mxu0 0.0
      %1236 = vmatpush1.xpose.msra.mxu0 0.0
      %1237 = vmatprep.subr.mxu0 0.0
      %1238 = vmatpush1.xpose.msra.mxu0 0.0
      %1239 = vmatprep.subr.mxu0 0.0
      %1240 = vmatpush1.xpose.msra.mxu0 0.0
      %1241 = vmatprep.subr.mxu0 0.0
      %1242 = vmatpush1.xpose.msra.mxu0 %v1209
      %1243 = vmatprep.subr.mxu0 0.0
      %1244 = vmatpush2.xpose.msra.mxu0 0.0
      %1245 = vmatprep.subr.mxu0 0.0
      %1246 = vmatpush2.xpose.msra.mxu0 0.0
      %1247 = vmatprep.subr.mxu0 0.0
      %1248 = vmatpush2.xpose.msra.mxu0 0.0
      %1249 = vmatprep.subr.mxu0 0.0
      %1250 = vmatpush2.xpose.msra.mxu0 0.0
      %1251 = vmatprep.subr.mxu0 0.0
      %1252 = vmatpush2.xpose.msra.mxu0 0.0
      %1253 = vmatprep.subr.mxu0 0.0
      %1254 = vmatpush2.xpose.msra.mxu0 0.0
      %1255 = vmatprep.subr.mxu0 0.0
      %1256 = vmatpush2.xpose.msra.mxu0 0.0
      %1257 = vmatprep.subr.mxu0 0.0
      %1258 = vmatpush2.xpose.msra.mxu0 0.0
      %1259 = vmatprep.subr.mxu0 0.0
      %1260 = vmatpush2.xpose.msra.mxu0 0.0
      %1261 = vmatprep.subr.mxu0 0.0
      %1262 = vmatpush2.xpose.msra.mxu0 0.0
      %1263 = vmatprep.subr.mxu0 0.0
      %1264 = vmatpush2.xpose.msra.mxu0 0.0
      %1265 = vmatprep.subr.mxu0 0.0
      %1266 = vmatpush2.xpose.msra.mxu0 0.0
      %1267 = vmatprep.subr.mxu0 0.0
      %1268 = vmatpush2.xpose.msra.mxu0 0.0
      %1269 = vmatprep.subr.mxu0 0.0
      %1270 = vmatpush2.xpose.msra.mxu0 0.0
      %1271 = vmatprep.subr.mxu0 0.0
      %1272 = vmatpush2.xpose.msra.mxu0 0.0
      %1273 = vmatprep.subr.mxu0 0.0
      %1274 = vmatpush2.xpose.msra.mxu0 0.0
      %1275 = vmatprep.mubr.f32.mxu0 0.0
      %1276 = vmatmul.mubr.f32.gmra.mxu0 %v1207
      %v1277 = vpop.f32.mrf.mxu0
      %v1278 = vadd.f32 %v543, %v1277
      %v1279 = vpop.f32.mrf.mxu0
      %1280 = vdwg.mxu0
      %v1281 = vsel %vm622, %v1278, -inf
      %1282 = vmax.xlane.f32.xlu0 %v1281
      %v1283 = vpop.xlane.xlu0 %1282
      %v1284 = vsub.f32 %v1278, %v1283
      %v1285 = vmul.f32 %v1284, 1.442695
      %v1286 = vpow.pop %v1285
      %v1287 = vsel %vm622, %v1286, 0.0
      %1288 = vadd.xlane.f32.xlu0 %v1287
      %v1289 = vpop.xlane.xlu0 %1288
      %v1290 = vrcp.pop %v1289
      %v1291 = vmul.f32 %v1286, %v1290
      %1292 = vrot.lane.b32.xlu0 %v532, 64
      %v1293 = vpop.permute.xlu0 %1292
      %v1296 = vsel %vm622, %v1291, 0
      %1298 = vmatprep.subr.mxu0 0.0
      %1299 = vmatpush1.msra.mxu0 0.0
      %1300 = vmatprep.subr.mxu0 0.0
      %1301 = vmatpush1.msra.mxu0 0.0
      %1302 = vmatprep.subr.mxu0 0.0
      %1303 = vmatpush1.msra.mxu0 0.0
      %1304 = vmatprep.subr.mxu0 0.0
      %1305 = vmatpush1.msra.mxu0 0.0
      %1306 = vmatprep.subr.mxu0 0.0
      %1307 = vmatpush1.msra.mxu0 0.0
      %1308 = vmatprep.subr.mxu0 0.0
      %1309 = vmatpush1.msra.mxu0 0.0
      %1310 = vmatprep.subr.mxu0 0.0
      %1311 = vmatpush1.msra.mxu0 0.0
      %1312 = vmatprep.subr.mxu0 0.0
      %1313 = vmatpush1.msra.mxu0 0.0
      %1314 = vmatprep.subr.mxu0 0.0
      %1315 = vmatpush1.msra.mxu0 0.0
      %1316 = vmatprep.subr.mxu0 0.0
      %1317 = vmatpush1.msra.mxu0 0.0
      %1318 = vmatprep.subr.mxu0 0.0
      %1319 = vmatpush1.msra.mxu0 0.0
      %1320 = vmatprep.subr.mxu0 0.0
      %1321 = vmatpush1.msra.mxu0 0.0
      %1322 = vmatprep.subr.mxu0 0.0
      %1323 = vmatpush1.msra.mxu0 0.0
      %1324 = vmatprep.subr.mxu0 0.0
      %1325 = vmatpush1.msra.mxu0 0.0
      %1326 = vmatprep.subr.mxu0 0.0
      %1327 = vmatpush1.msra.mxu0 0.0
      %1328 = vmatprep.subr.mxu0 0.0
      %1329 = vmatpush1.msra.mxu0 %v1293
      %1330 = vmatprep.subr.mxu0 0.0
      %1331 = vmatpush2.msra.mxu0 0.0
      %1332 = vmatprep.subr.mxu0 0.0
      %1333 = vmatpush2.msra.mxu0 0.0
      %1334 = vmatprep.subr.mxu0 0.0
      %1335 = vmatpush2.msra.mxu0 0.0
      %1336 = vmatprep.subr.mxu0 0.0
      %1337 = vmatpush2.msra.mxu0 0.0
      %1338 = vmatprep.subr.mxu0 0.0
      %1339 = vmatpush2.msra.mxu0 0.0
      %1340 = vmatprep.subr.mxu0 0.0
      %1341 = vmatpush2.msra.mxu0 0.0
      %1342 = vmatprep.subr.mxu0 0.0
      %1343 = vmatpush2.msra.mxu0 0.0
      %1344 = vmatprep.subr.mxu0 0.0
      %1345 = vmatpush2.msra.mxu0 0.0
      %1346 = vmatprep.subr.mxu0 0.0
      %1347 = vmatpush2.msra.mxu0 0.0
      %1348 = vmatprep.subr.mxu0 0.0
      %1349 = vmatpush2.msra.mxu0 0.0
      %1350 = vmatprep.subr.mxu0 0.0
      %1351 = vmatpush2.msra.mxu0 0.0
      %1352 = vmatprep.subr.mxu0 0.0
      %1353 = vmatpush2.msra.mxu0 0.0
      %1354 = vmatprep.subr.mxu0 0.0
      %1355 = vmatpush2.msra.mxu0 0.0
      %1356 = vmatprep.subr.mxu0 0.0
      %1357 = vmatpush2.msra.mxu0 0.0
      %1358 = vmatprep.subr.mxu0 0.0
      %1359 = vmatpush2.msra.mxu0 0.0
      %1360 = vmatprep.subr.mxu0 0.0
      %1361 = vmatpush2.msra.mxu0 0.0
      %1362 = vmatprep.mubr.f32.mxu0 0.0
      %1363 = vmatmul.mubr.f32.gmra.mxu0 %v1296
      %v1364 = vpop.f32.mrf.mxu0
      %v1365 = vadd.f32 0.0, %v1364
      %v1366 = vpop.f32.mrf.mxu0
      %1367 = vdwg.mxu0
      %1368 = vrot.lane.b32.xlu0 %v538, 48
      %v1369 = vpop.permute.xlu0 %1368
      %1370 = vrot.lane.b32.xlu0 %v530, 48
      %v1371 = vpop.permute.xlu0 %1370
      %v1372 = vsel %vm545, %v1369, 0
      %v1374 = vsel %vm545, %v1371, 0
      %1376 = vmatprep.subr.mxu0 0.0
      %1377 = vmatpush1.xpose.msra.mxu0 0.0
      %1378 = vmatprep.subr.mxu0 0.0
      %1379 = vmatpush1.xpose.msra.mxu0 0.0
      %1380 = vmatprep.subr.mxu0 0.0
      %1381 = vmatpush1.xpose.msra.mxu0 0.0
      %1382 = vmatprep.subr.mxu0 0.0
      %1383 = vmatpush1.xpose.msra.mxu0 0.0
      %1384 = vmatprep.subr.mxu0 0.0
      %1385 = vmatpush1.xpose.msra.mxu0 0.0
      %1386 = vmatprep.subr.mxu0 0.0
      %1387 = vmatpush1.xpose.msra.mxu0 0.0
      %1388 = vmatprep.subr.mxu0 0.0
      %1389 = vmatpush1.xpose.msra.mxu0 0.0
      %1390 = vmatprep.subr.mxu0 0.0
      %1391 = vmatpush1.xpose.msra.mxu0 0.0
      %1392 = vmatprep.subr.mxu0 0.0
      %1393 = vmatpush1.xpose.msra.mxu0 0.0
      %1394 = vmatprep.subr.mxu0 0.0
      %1395 = vmatpush1.xpose.msra.mxu0 0.0
      %1396 = vmatprep.subr.mxu0 0.0
      %1397 = vmatpush1.xpose.msra.mxu0 0.0
      %1398 = vmatprep.subr.mxu0 0.0
      %1399 = vmatpush1.xpose.msra.mxu0 0.0
      %1400 = vmatprep.subr.mxu0 0.0
      %1401 = vmatpush1.xpose.msra.mxu0 0.0
      %1402 = vmatprep.subr.mxu0 0.0
      %1403 = vmatpush1.xpose.msra.mxu0 0.0
      %1404 = vmatprep.subr.mxu0 0.0
      %1405 = vmatpush1.xpose.msra.mxu0 0.0
      %1406 = vmatprep.subr.mxu0 0.0
      %1407 = vmatpush1.xpose.msra.mxu0 %v1374
      %1408 = vmatprep.subr.mxu0 0.0
      %1409 = vmatpush2.xpose.msra.mxu0 0.0
      %1410 = vmatprep.subr.mxu0 0.0
      %1411 = vmatpush2.xpose.msra.mxu0 0.0
      %1412 = vmatprep.subr.mxu0 0.0
      %1413 = vmatpush2.xpose.msra.mxu0 0.0
      %1414 = vmatprep.subr.mxu0 0.0
      %1415 = vmatpush2.xpose.msra.mxu0 0.0
      %1416 = vmatprep.subr.mxu0 0.0
      %1417 = vmatpush2.xpose.msra.mxu0 0.0
      %1418 = vmatprep.subr.mxu0 0.0
      %1419 = vmatpush2.xpose.msra.mxu0 0.0
      %1420 = vmatprep.subr.mxu0 0.0
      %1421 = vmatpush2.xpose.msra.mxu0 0.0
      %1422 = vmatprep.subr.mxu0 0.0
      %1423 = vmatpush2.xpose.msra.mxu0 0.0
      %1424 = vmatprep.subr.mxu0 0.0
      %1425 = vmatpush2.xpose.msra.mxu0 0.0
      %1426 = vmatprep.subr.mxu0 0.0
      %1427 = vmatpush2.xpose.msra.mxu0 0.0
      %1428 = vmatprep.subr.mxu0 0.0
      %1429 = vmatpush2.xpose.msra.mxu0 0.0
      %1430 = vmatprep.subr.mxu0 0.0
      %1431 = vmatpush2.xpose.msra.mxu0 0.0
      %1432 = vmatprep.subr.mxu0 0.0
      %1433 = vmatpush2.xpose.msra.mxu0 0.0
      %1434 = vmatprep.subr.mxu0 0.0
      %1435 = vmatpush2.xpose.msra.mxu0 0.0
      %1436 = vmatprep.subr.mxu0 0.0
      %1437 = vmatpush2.xpose.msra.mxu0 0.0
      %1438 = vmatprep.subr.mxu0 0.0
      %1439 = vmatpush2.xpose.msra.mxu0 0.0
      %1440 = vmatprep.mubr.f32.mxu0 0.0
      %1441 = vmatmul.mubr.f32.gmra.mxu0 %v1372
      %v1442 = vpop.f32.mrf.mxu0
      %v1443 = vadd.f32 %v543, %v1442
      %v1444 = vpop.f32.mrf.mxu0
      %1445 = vdwg.mxu0
      %v1446 = vsel %vm622, %v1443, -inf
      %1447 = vmax.xlane.f32.xlu0 %v1446
      %v1448 = vpop.xlane.xlu0 %1447
      %v1449 = vsub.f32 %v1443, %v1448
      %v1450 = vmul.f32 %v1449, 1.442695
      %v1451 = vpow.pop %v1450
      %v1452 = vsel %vm622, %v1451, 0.0
      %1453 = vadd.xlane.f32.xlu0 %v1452
      %v1454 = vpop.xlane.xlu0 %1453
      %v1455 = vrcp.pop %v1454
      %v1456 = vmul.f32 %v1451, %v1455
      %1457 = vrot.lane.b32.xlu0 %v532, 48
      %v1458 = vpop.permute.xlu0 %1457
      %v1461 = vsel %vm622, %v1456, 0
      %1463 = vmatprep.subr.mxu0 0.0
      %1464 = vmatpush1.msra.mxu0 0.0
      %1465 = vmatprep.subr.mxu0 0.0
      %1466 = vmatpush1.msra.mxu0 0.0
      %1467 = vmatprep.subr.mxu0 0.0
      %1468 = vmatpush1.msra.mxu0 0.0
      %1469 = vmatprep.subr.mxu0 0.0
      %1470 = vmatpush1.msra.mxu0 0.0
      %1471 = vmatprep.subr.mxu0 0.0
      %1472 = vmatpush1.msra.mxu0 0.0
      %1473 = vmatprep.subr.mxu0 0.0
      %1474 = vmatpush1.msra.mxu0 0.0
      %1475 = vmatprep.subr.mxu0 0.0
      %1476 = vmatpush1.msra.mxu0 0.0
      %1477 = vmatprep.subr.mxu0 0.0
      %1478 = vmatpush1.msra.mxu0 0.0
      %1479 = vmatprep.subr.mxu0 0.0
      %1480 = vmatpush1.msra.mxu0 0.0
      %1481 = vmatprep.subr.mxu0 0.0
      %1482 = vmatpush1.msra.mxu0 0.0
      %1483 = vmatprep.subr.mxu0 0.0
      %1484 = vmatpush1.msra.mxu0 0.0
      %1485 = vmatprep.subr.mxu0 0.0
      %1486 = vmatpush1.msra.mxu0 0.0
      %1487 = vmatprep.subr.mxu0 0.0
      %1488 = vmatpush1.msra.mxu0 0.0
      %1489 = vmatprep.subr.mxu0 0.0
      %1490 = vmatpush1.msra.mxu0 0.0
      %1491 = vmatprep.subr.mxu0 0.0
      %1492 = vmatpush1.msra.mxu0 0.0
      %1493 = vmatprep.subr.mxu0 0.0
      %1494 = vmatpush1.msra.mxu0 %v1458
      %1495 = vmatprep.subr.mxu0 0.0
      %1496 = vmatpush2.msra.mxu0 0.0
      %1497 = vmatprep.subr.mxu0 0.0
      %1498 = vmatpush2.msra.mxu0 0.0
      %1499 = vmatprep.subr.mxu0 0.0
      %1500 = vmatpush2.msra.mxu0 0.0
      %1501 = vmatprep.subr.mxu0 0.0
      %1502 = vmatpush2.msra.mxu0 0.0
      %1503 = vmatprep.subr.mxu0 0.0
      %1504 = vmatpush2.msra.mxu0 0.0
      %1505 = vmatprep.subr.mxu0 0.0
      %1506 = vmatpush2.msra.mxu0 0.0
      %1507 = vmatprep.subr.mxu0 0.0
      %1508 = vmatpush2.msra.mxu0 0.0
      %1509 = vmatprep.subr.mxu0 0.0
      %1510 = vmatpush2.msra.mxu0 0.0
      %1511 = vmatprep.subr.mxu0 0.0
      %1512 = vmatpush2.msra.mxu0 0.0
      %1513 = vmatprep.subr.mxu0 0.0
      %1514 = vmatpush2.msra.mxu0 0.0
      %1515 = vmatprep.subr.mxu0 0.0
      %1516 = vmatpush2.msra.mxu0 0.0
      %1517 = vmatprep.subr.mxu0 0.0
      %1518 = vmatpush2.msra.mxu0 0.0
      %1519 = vmatprep.subr.mxu0 0.0
      %1520 = vmatpush2.msra.mxu0 0.0
      %1521 = vmatprep.subr.mxu0 0.0
      %1522 = vmatpush2.msra.mxu0 0.0
      %1523 = vmatprep.subr.mxu0 0.0
      %1524 = vmatpush2.msra.mxu0 0.0
      %1525 = vmatprep.subr.mxu0 0.0
      %1526 = vmatpush2.msra.mxu0 0.0
      %1527 = vmatprep.mubr.f32.mxu0 0.0
      %1528 = vmatmul.mubr.f32.gmra.mxu0 %v1461
      %v1529 = vpop.f32.mrf.mxu0
      %v1530 = vadd.f32 0.0, %v1529
      %v1531 = vpop.f32.mrf.mxu0
      %1532 = vdwg.mxu0
      %1533 = vrot.lane.b32.xlu0 %v538, 32
      %v1534 = vpop.permute.xlu0 %1533
      %1535 = vrot.lane.b32.xlu0 %v530, 32
      %v1536 = vpop.permute.xlu0 %1535
      %v1537 = vsel %vm545, %v1534, 0
      %v1539 = vsel %vm545, %v1536, 0
      %1541 = vmatprep.subr.mxu0 0.0
      %1542 = vmatpush1.xpose.msra.mxu0 0.0
      %1543 = vmatprep.subr.mxu0 0.0
      %1544 = vmatpush1.xpose.msra.mxu0 0.0
      %1545 = vmatprep.subr.mxu0 0.0
      %1546 = vmatpush1.xpose.msra.mxu0 0.0
      %1547 = vmatprep.subr.mxu0 0.0
      %1548 = vmatpush1.xpose.msra.mxu0 0.0
      %1549 = vmatprep.subr.mxu0 0.0
      %1550 = vmatpush1.xpose.msra.mxu0 0.0
      %1551 = vmatprep.subr.mxu0 0.0
      %1552 = vmatpush1.xpose.msra.mxu0 0.0
      %1553 = vmatprep.subr.mxu0 0.0
      %1554 = vmatpush1.xpose.msra.mxu0 0.0
      %1555 = vmatprep.subr.mxu0 0.0
      %1556 = vmatpush1.xpose.msra.mxu0 0.0
      %1557 = vmatprep.subr.mxu0 0.0
      %1558 = vmatpush1.xpose.msra.mxu0 0.0
      %1559 = vmatprep.subr.mxu0 0.0
      %1560 = vmatpush1.xpose.msra.mxu0 0.0
      %1561 = vmatprep.subr.mxu0 0.0
      %1562 = vmatpush1.xpose.msra.mxu0 0.0
      %1563 = vmatprep.subr.mxu0 0.0
      %1564 = vmatpush1.xpose.msra.mxu0 0.0
      %1565 = vmatprep.subr.mxu0 0.0
      %1566 = vmatpush1.xpose.msra.mxu0 0.0
      %1567 = vmatprep.subr.mxu0 0.0
      %1568 = vmatpush1.xpose.msra.mxu0 0.0
      %1569 = vmatprep.subr.mxu0 0.0
      %1570 = vmatpush1.xpose.msra.mxu0 0.0
      %1571 = vmatprep.subr.mxu0 0.0
      %1572 = vmatpush1.xpose.msra.mxu0 %v1539
      %1573 = vmatprep.subr.mxu0 0.0
      %1574 = vmatpush2.xpose.msra.mxu0 0.0
      %1575 = vmatprep.subr.mxu0 0.0
      %1576 = vmatpush2.xpose.msra.mxu0 0.0
      %1577 = vmatprep.subr.mxu0 0.0
      %1578 = vmatpush2.xpose.msra.mxu0 0.0
      %1579 = vmatprep.subr.mxu0 0.0
      %1580 = vmatpush2.xpose.msra.mxu0 0.0
      %1581 = vmatprep.subr.mxu0 0.0
      %1582 = vmatpush2.xpose.msra.mxu0 0.0
      %1583 = vmatprep.subr.mxu0 0.0
      %1584 = vmatpush2.xpose.msra.mxu0 0.0
      %1585 = vmatprep.subr.mxu0 0.0
      %1586 = vmatpush2.xpose.msra.mxu0 0.0
      %1587 = vmatprep.subr.mxu0 0.0
      %1588 = vmatpush2.xpose.msra.mxu0 0.0
      %1589 = vmatprep.subr.mxu0 0.0
      %1590 = vmatpush2.xpose.msra.mxu0 0.0
      %1591 = vmatprep.subr.mxu0 0.0
      %1592 = vmatpush2.xpose.msra.mxu0 0.0
      %1593 = vmatprep.subr.mxu0 0.0
      %1594 = vmatpush2.xpose.msra.mxu0 0.0
      %1595 = vmatprep.subr.mxu0 0.0
      %1596 = vmatpush2.xpose.msra.mxu0 0.0
      %1597 = vmatprep.subr.mxu0 0.0
      %1598 = vmatpush2.xpose.msra.mxu0 0.0
      %1599 = vmatprep.subr.mxu0 0.0
      %1600 = vmatpush2.xpose.msra.mxu0 0.0
      %1601 = vmatprep.subr.mxu0 0.0
      %1602 = vmatpush2.xpose.msra.mxu0 0.0
      %1603 = vmatprep.subr.mxu0 0.0
      %1604 = vmatpush2.xpose.msra.mxu0 0.0
      %1605 = vmatprep.mubr.f32.mxu0 0.0
      %1606 = vmatmul.mubr.f32.gmra.mxu0 %v1537
      %v1607 = vpop.f32.mrf.mxu0
      %v1608 = vadd.f32 %v543, %v1607
      %v1609 = vpop.f32.mrf.mxu0
      %1610 = vdwg.mxu0
      %v1611 = vsel %vm622, %v1608, -inf
      %1612 = vmax.xlane.f32.xlu0 %v1611
      %v1613 = vpop.xlane.xlu0 %1612
      %v1614 = vsub.f32 %v1608, %v1613
      %v1615 = vmul.f32 %v1614, 1.442695
      %v1616 = vpow.pop %v1615
      %v1617 = vsel %vm622, %v1616, 0.0
      %1618 = vadd.xlane.f32.xlu0 %v1617
      %v1619 = vpop.xlane.xlu0 %1618
      %v1620 = vrcp.pop %v1619
      %v1621 = vmul.f32 %v1616, %v1620
      %1622 = vrot.lane.b32.xlu0 %v532, 32
      %v1623 = vpop.permute.xlu0 %1622
      %v1626 = vsel %vm622, %v1621, 0
      %1628 = vmatprep.subr.mxu0 0.0
      %1629 = vmatpush1.msra.mxu0 0.0
      %1630 = vmatprep.subr.mxu0 0.0
      %1631 = vmatpush1.msra.mxu0 0.0
      %1632 = vmatprep.subr.mxu0 0.0
      %1633 = vmatpush1.msra.mxu0 0.0
      %1634 = vmatprep.subr.mxu0 0.0
      %1635 = vmatpush1.msra.mxu0 0.0
      %1636 = vmatprep.subr.mxu0 0.0
      %1637 = vmatpush1.msra.mxu0 0.0
      %1638 = vmatprep.subr.mxu0 0.0
      %1639 = vmatpush1.msra.mxu0 0.0
      %1640 = vmatprep.subr.mxu0 0.0
      %1641 = vmatpush1.msra.mxu0 0.0
      %1642 = vmatprep.subr.mxu0 0.0
      %1643 = vmatpush1.msra.mxu0 0.0
      %1644 = vmatprep.subr.mxu0 0.0
      %1645 = vmatpush1.msra.mxu0 0.0
      %1646 = vmatprep.subr.mxu0 0.0
      %1647 = vmatpush1.msra.mxu0 0.0
      %1648 = vmatprep.subr.mxu0 0.0
      %1649 = vmatpush1.msra.mxu0 0.0
      %1650 = vmatprep.subr.mxu0 0.0
      %1651 = vmatpush1.msra.mxu0 0.0
      %1652 = vmatprep.subr.mxu0 0.0
      %1653 = vmatpush1.msra.mxu0 0.0
      %1654 = vmatprep.subr.mxu0 0.0
      %1655 = vmatpush1.msra.mxu0 0.0
      %1656 = vmatprep.subr.mxu0 0.0
      %1657 = vmatpush1.msra.mxu0 0.0
      %1658 = vmatprep.subr.mxu0 0.0
      %1659 = vmatpush1.msra.mxu0 %v1623
      %1660 = vmatprep.subr.mxu0 0.0
      %1661 = vmatpush2.msra.mxu0 0.0
      %1662 = vmatprep.subr.mxu0 0.0
      %1663 = vmatpush2.msra.mxu0 0.0
      %1664 = vmatprep.subr.mxu0 0.0
      %1665 = vmatpush2.msra.mxu0 0.0
      %1666 = vmatprep.subr.mxu0 0.0
      %1667 = vmatpush2.msra.mxu0 0.0
      %1668 = vmatprep.subr.mxu0 0.0
      %1669 = vmatpush2.msra.mxu0 0.0
      %1670 = vmatprep.subr.mxu0 0.0
      %1671 = vmatpush2.msra.mxu0 0.0
      %1672 = vmatprep.subr.mxu0 0.0
      %1673 = vmatpush2.msra.mxu0 0.0
      %1674 = vmatprep.subr.mxu0 0.0
      %1675 = vmatpush2.msra.mxu0 0.0
      %1676 = vmatprep.subr.mxu0 0.0
      %1677 = vmatpush2.msra.mxu0 0.0
      %1678 = vmatprep.subr.mxu0 0.0
      %1679 = vmatpush2.msra.mxu0 0.0
      %1680 = vmatprep.subr.mxu0 0.0
      %1681 = vmatpush2.msra.mxu0 0.0
      %1682 = vmatprep.subr.mxu0 0.0
      %1683 = vmatpush2.msra.mxu0 0.0
      %1684 = vmatprep.subr.mxu0 0.0
      %1685 = vmatpush2.msra.mxu0 0.0
      %1686 = vmatprep.subr.mxu0 0.0
      %1687 = vmatpush2.msra.mxu0 0.0
      %1688 = vmatprep.subr.mxu0 0.0
      %1689 = vmatpush2.msra.mxu0 0.0
      %1690 = vmatprep.subr.mxu0 0.0
      %1691 = vmatpush2.msra.mxu0 0.0
      %1692 = vmatprep.mubr.f32.mxu0 0.0
      %1693 = vmatmul.mubr.f32.gmra.mxu0 %v1626
      %v1694 = vpop.f32.mrf.mxu0
      %v1695 = vadd.f32 0.0, %v1694
      %v1696 = vpop.f32.mrf.mxu0
      %1697 = vdwg.mxu0
      %1698 = vrot.lane.b32.xlu0 %v538, 16
      %v1699 = vpop.permute.xlu0 %1698
      %1700 = vrot.lane.b32.xlu0 %v530, 16
      %v1701 = vpop.permute.xlu0 %1700
      %v1702 = vsel %vm545, %v1699, 0
      %v1704 = vsel %vm545, %v1701, 0
      %1706 = vmatprep.subr.mxu0 0.0
      %1707 = vmatpush1.xpose.msra.mxu0 0.0
      %1708 = vmatprep.subr.mxu0 0.0
      %1709 = vmatpush1.xpose.msra.mxu0 0.0
      %1710 = vmatprep.subr.mxu0 0.0
      %1711 = vmatpush1.xpose.msra.mxu0 0.0
      %1712 = vmatprep.subr.mxu0 0.0
      %1713 = vmatpush1.xpose.msra.mxu0 0.0
      %1714 = vmatprep.subr.mxu0 0.0
      %1715 = vmatpush1.xpose.msra.mxu0 0.0
      %1716 = vmatprep.subr.mxu0 0.0
      %1717 = vmatpush1.xpose.msra.mxu0 0.0
      %1718 = vmatprep.subr.mxu0 0.0
      %1719 = vmatpush1.xpose.msra.mxu0 0.0
      %1720 = vmatprep.subr.mxu0 0.0
      %1721 = vmatpush1.xpose.msra.mxu0 0.0
      %1722 = vmatprep.subr.mxu0 0.0
      %1723 = vmatpush1.xpose.msra.mxu0 0.0
      %1724 = vmatprep.subr.mxu0 0.0
      %1725 = vmatpush1.xpose.msra.mxu0 0.0
      %1726 = vmatprep.subr.mxu0 0.0
      %1727 = vmatpush1.xpose.msra.mxu0 0.0
      %1728 = vmatprep.subr.mxu0 0.0
      %1729 = vmatpush1.xpose.msra.mxu0 0.0
      %1730 = vmatprep.subr.mxu0 0.0
      %1731 = vmatpush1.xpose.msra.mxu0 0.0
      %1732 = vmatprep.subr.mxu0 0.0
      %1733 = vmatpush1.xpose.msra.mxu0 0.0
      %1734 = vmatprep.subr.mxu0 0.0
      %1735 = vmatpush1.xpose.msra.mxu0 0.0
      %1736 = vmatprep.subr.mxu0 0.0
      %1737 = vmatpush1.xpose.msra.mxu0 %v1704
      %1738 = vmatprep.subr.mxu0 0.0
      %1739 = vmatpush2.xpose.msra.mxu0 0.0
      %1740 = vmatprep.subr.mxu0 0.0
      %1741 = vmatpush2.xpose.msra.mxu0 0.0
      %1742 = vmatprep.subr.mxu0 0.0
      %1743 = vmatpush2.xpose.msra.mxu0 0.0
      %1744 = vmatprep.subr.mxu0 0.0
      %1745 = vmatpush2.xpose.msra.mxu0 0.0
      %1746 = vmatprep.subr.mxu0 0.0
      %1747 = vmatpush2.xpose.msra.mxu0 0.0
      %1748 = vmatprep.subr.mxu0 0.0
      %1749 = vmatpush2.xpose.msra.mxu0 0.0
      %1750 = vmatprep.subr.mxu0 0.0
      %1751 = vmatpush2.xpose.msra.mxu0 0.0
      %1752 = vmatprep.subr.mxu0 0.0
      %1753 = vmatpush2.xpose.msra.mxu0 0.0
      %1754 = vmatprep.subr.mxu0 0.0
      %1755 = vmatpush2.xpose.msra.mxu0 0.0
      %1756 = vmatprep.subr.mxu0 0.0
      %1757 = vmatpush2.xpose.msra.mxu0 0.0
      %1758 = vmatprep.subr.mxu0 0.0
      %1759 = vmatpush2.xpose.msra.mxu0 0.0
      %1760 = vmatprep.subr.mxu0 0.0
      %1761 = vmatpush2.xpose.msra.mxu0 0.0
      %1762 = vmatprep.subr.mxu0 0.0
      %1763 = vmatpush2.xpose.msra.mxu0 0.0
      %1764 = vmatprep.subr.mxu0 0.0
      %1765 = vmatpush2.xpose.msra.mxu0 0.0
      %1766 = vmatprep.subr.mxu0 0.0
      %1767 = vmatpush2.xpose.msra.mxu0 0.0
      %1768 = vmatprep.subr.mxu0 0.0
      %1769 = vmatpush2.xpose.msra.mxu0 0.0
      %1770 = vmatprep.mubr.f32.mxu0 0.0
      %1771 = vmatmul.mubr.f32.gmra.mxu0 %v1702
      %v1772 = vpop.f32.mrf.mxu0
      %v1773 = vadd.f32 %v543, %v1772
      %v1774 = vpop.f32.mrf.mxu0
      %1775 = vdwg.mxu0
      %v1776 = vsel %vm622, %v1773, -inf
      %1777 = vmax.xlane.f32.xlu0 %v1776
      %v1778 = vpop.xlane.xlu0 %1777
      %v1779 = vsub.f32 %v1773, %v1778
      %v1780 = vmul.f32 %v1779, 1.442695
      %v1781 = vpow.pop %v1780
      %v1782 = vsel %vm622, %v1781, 0.0
      %1783 = vadd.xlane.f32.xlu0 %v1782
      %v1784 = vpop.xlane.xlu0 %1783
      %v1785 = vrcp.pop %v1784
      %v1786 = vmul.f32 %v1781, %v1785
      %1787 = vrot.lane.b32.xlu0 %v532, 16
      %v1788 = vpop.permute.xlu0 %1787
      %v1791 = vsel %vm622, %v1786, 0
      %1793 = vmatprep.subr.mxu0 0.0
      %1794 = vmatpush1.msra.mxu0 0.0
      %1795 = vmatprep.subr.mxu0 0.0
      %1796 = vmatpush1.msra.mxu0 0.0
      %1797 = vmatprep.subr.mxu0 0.0
      %1798 = vmatpush1.msra.mxu0 0.0
      %1799 = vmatprep.subr.mxu0 0.0
      %1800 = vmatpush1.msra.mxu0 0.0
      %1801 = vmatprep.subr.mxu0 0.0
      %1802 = vmatpush1.msra.mxu0 0.0
      %1803 = vmatprep.subr.mxu0 0.0
      %1804 = vmatpush1.msra.mxu0 0.0
      %1805 = vmatprep.subr.mxu0 0.0
      %1806 = vmatpush1.msra.mxu0 0.0
      %1807 = vmatprep.subr.mxu0 0.0
      %1808 = vmatpush1.msra.mxu0 0.0
      %1809 = vmatprep.subr.mxu0 0.0
      %1810 = vmatpush1.msra.mxu0 0.0
      %1811 = vmatprep.subr.mxu0 0.0
      %1812 = vmatpush1.msra.mxu0 0.0
      %1813 = vmatprep.subr.mxu0 0.0
      %1814 = vmatpush1.msra.mxu0 0.0
      %1815 = vmatprep.subr.mxu0 0.0
      %1816 = vmatpush1.msra.mxu0 0.0
      %1817 = vmatprep.subr.mxu0 0.0
      %1818 = vmatpush1.msra.mxu0 0.0
      %1819 = vmatprep.subr.mxu0 0.0
      %1820 = vmatpush1.msra.mxu0 0.0
      %1821 = vmatprep.subr.mxu0 0.0
      %1822 = vmatpush1.msra.mxu0 0.0
      %1823 = vmatprep.subr.mxu0 0.0
      %1824 = vmatpush1.msra.mxu0 %v1788
      %1825 = vmatprep.subr.mxu0 0.0
      %1826 = vmatpush2.msra.mxu0 0.0
      %1827 = vmatprep.subr.mxu0 0.0
      %1828 = vmatpush2.msra.mxu0 0.0
      %1829 = vmatprep.subr.mxu0 0.0
      %1830 = vmatpush2.msra.mxu0 0.0
      %1831 = vmatprep.subr.mxu0 0.0
      %1832 = vmatpush2.msra.mxu0 0.0
      %1833 = vmatprep.subr.mxu0 0.0
      %1834 = vmatpush2.msra.mxu0 0.0
      %1835 = vmatprep.subr.mxu0 0.0
      %1836 = vmatpush2.msra.mxu0 0.0
      %1837 = vmatprep.subr.mxu0 0.0
      %1838 = vmatpush2.msra.mxu0 0.0
      %1839 = vmatprep.subr.mxu0 0.0
      %1840 = vmatpush2.msra.mxu0 0.0
      %1841 = vmatprep.subr.mxu0 0.0
      %1842 = vmatpush2.msra.mxu0 0.0
      %1843 = vmatprep.subr.mxu0 0.0
      %1844 = vmatpush2.msra.mxu0 0.0
      %1845 = vmatprep.subr.mxu0 0.0
      %1846 = vmatpush2.msra.mxu0 0.0
      %1847 = vmatprep.subr.mxu0 0.0
      %1848 = vmatpush2.msra.mxu0 0.0
      %1849 = vmatprep.subr.mxu0 0.0
      %1850 = vmatpush2.msra.mxu0 0.0
      %1851 = vmatprep.subr.mxu0 0.0
      %1852 = vmatpush2.msra.mxu0 0.0
      %1853 = vmatprep.subr.mxu0 0.0
      %1854 = vmatpush2.msra.mxu0 0.0
      %1855 = vmatprep.subr.mxu0 0.0
      %1856 = vmatpush2.msra.mxu0 0.0
      %1857 = vmatprep.mubr.f32.mxu0 0.0
      %1858 = vmatmul.mubr.f32.gmra.mxu0 %v1791
      %v1859 = vpop.f32.mrf.mxu0
      %v1860 = vadd.f32 0.0, %v1859
      %v1861 = vpop.f32.mrf.mxu0
      %1862 = vdwg.mxu0
      %1864 = vrot.lane.b32.xlu0 %v870, 16
      %v1865 = vpop.permute.xlu0 %1864
      %1868 = vrot.lane.b32.xlu0 %v1035, 32
      %v1869 = vpop.permute.xlu0 %1868
      %1872 = vrot.lane.b32.xlu0 %v1200, 48
      %v1873 = vpop.permute.xlu0 %1872
      %1876 = vrot.lane.b32.xlu0 %v1365, 64
      %v1877 = vpop.permute.xlu0 %1876
      %1880 = vrot.lane.b32.xlu0 %v1530, 80
      %v1881 = vpop.permute.xlu0 %1880
      %1884 = vrot.lane.b32.xlu0 %v1695, 96
      %v1885 = vpop.permute.xlu0 %1884
      %1888 = vrot.lane.b32.xlu0 %v1860, 112
      %v1889 = vpop.permute.xlu0 %1888
      %v1891 = vsel %vm545, %v704, %v1865
      %vm1892 = vcmask 261120
      %v1893 = vsel %vm1892, %v1891, %v1869
      %vm1894 = vcmask 392192
      %v1895 = vsel %vm1894, %v1893, %v1873
      %vm1896 = vcmask 523264
      %v1897 = vsel %vm1896, %v1895, %v1877
      %vm1898 = vcmask 654336
      %v1899 = vsel %vm1898, %v1897, %v1881
      %vm1900 = vcmask 785408
      %v1901 = vsel %vm1900, %v1899, %v1885
      %vm1902 = vcmask 916480
      %v1903 = vsel %vm1902, %v1901, %v1889
      %v1904 = vpack.c.bf16 %v1903, %v1903
      %v1905 = vld [vmem:[%s6] sm:$0xff]
      %v1906 = vld [vmem:[%s6 + $0x8] sm:$0xff]
      %v1907 = vld [vmem:[%s6 + $0x10] sm:$0xff]
      %v1908 = vld [vmem:[%s6 + $0x18] sm:$0xff]
      %v1909 = vld [vmem:[%s6 + $0x20] sm:$0xff]
      %v1910 = vld [vmem:[%s6 + $0x28] sm:$0xff]
      %v1911 = vld [vmem:[%s6 + $0x30] sm:$0xff]
      %v1912 = vld [vmem:[%s6 + $0x38] sm:$0xff]
      %v1913 = vld [vmem:[%s6 + $0x40] sm:$0xff]
      %v1914 = vld [vmem:[%s6 + $0x48] sm:$0xff]
      %v1915 = vld [vmem:[%s6 + $0x50] sm:$0xff]
      %v1916 = vld [vmem:[%s6 + $0x58] sm:$0xff]
      %v1917 = vld [vmem:[%s6 + $0x60] sm:$0xff]
      %v1918 = vld [vmem:[%s6 + $0x68] sm:$0xff]
      %v1919 = vld [vmem:[%s6 + $0x70] sm:$0xff]
      %v1920 = vld [vmem:[%s6 + $0x78] sm:$0xff]
      %v1921 = vpack.c.bf16 %v1906, %v1905
      %v1922 = vpack.c.bf16 %v1908, %v1907
      %v1923 = vpack.c.bf16 %v1910, %v1909
      %v1924 = vpack.c.bf16 %v1912, %v1911
      %v1925 = vpack.c.bf16 %v1914, %v1913
      %v1926 = vpack.c.bf16 %v1916, %v1915
      %v1927 = vpack.c.bf16 %v1918, %v1917
      %v1928 = vpack.c.bf16 %v1920, %v1919
      %v1929 = vld [vmem:[%s7] sm:$0x1]
      %v1931 = vlaneseq
      %v1932 = vshrl.u32 %v1931, 7
      %v1933 = vsub.s32 0, %v1932
      %v1934 = vrot.slane %v1929, %v1933
      %1936 = vmatprep.subr.bf16.mxu0 0
      %1937 = vmatpush1.bf16.msra.mxu0 %v1928
      %1938 = vmatprep.subr.bf16.mxu0 0
      %1939 = vmatpush1.bf16.msra.mxu0 %v1927
      %1940 = vmatprep.subr.bf16.mxu0 0
      %1941 = vmatpush1.bf16.msra.mxu0 %v1926
      %1942 = vmatprep.subr.bf16.mxu0 0
      %1943 = vmatpush1.bf16.msra.mxu0 %v1925
      %1944 = vmatprep.subr.bf16.mxu0 0
      %1945 = vmatpush1.bf16.msra.mxu0 %v1924
      %1946 = vmatprep.subr.bf16.mxu0 0
      %1947 = vmatpush1.bf16.msra.mxu0 %v1923
      %1948 = vmatprep.subr.bf16.mxu0 0
      %1949 = vmatpush1.bf16.msra.mxu0 %v1922
      %1950 = vmatprep.subr.bf16.mxu0 0
      %1951 = vmatpush1.bf16.msra.mxu0 %v1921
      %1952 = vmatprep.subr.bf16.mxu0 0
      %1953 = vmatpush2.bf16.msra.mxu0 0
      %1954 = vmatprep.subr.bf16.mxu0 0
      %1955 = vmatpush2.bf16.msra.mxu0 0
      %1956 = vmatprep.subr.bf16.mxu0 0
      %1957 = vmatpush2.bf16.msra.mxu0 0
      %1958 = vmatprep.subr.bf16.mxu0 0
      %1959 = vmatpush2.bf16.msra.mxu0 0
      %1960 = vmatprep.subr.bf16.mxu0 0
      %1961 = vmatpush2.bf16.msra.mxu0 0
      %1962 = vmatprep.subr.bf16.mxu0 0
      %1963 = vmatpush2.bf16.msra.mxu0 0
      %1964 = vmatprep.subr.bf16.mxu0 0
      %1965 = vmatpush2.bf16.msra.mxu0 0
      %1966 = vmatprep.subr.bf16.mxu0 0
      %1967 = vmatpush2.bf16.msra.mxu0 0
      %1968 = vmatprep.mubr.bf16.mxu0 0
      %1969 = vmatmul.mubr.bf16.gmra.mxu0 %v1904
      %v1970 = vpop.f32.mrf.mxu0
      %v1971 = vadd.f32 %v1934, %v1970
      %v1972 = vpop.f32.mrf.mxu0
      %v1973 = vpop.f32.mrf.mxu0
      %v1974 = vpop.f32.mrf.mxu0
      %1975 = vdwg.mxu0
      %1976 = vst [vmem:[%s358] sm:$0xff] %v1971
      %p1977 = scmp.lt.s32.totalorder %s20, 1
      %s1978 = scalar_select %p1977, %s20, 1
      %s1979 = smul.addr %s1978, 8
      %s1980 = scalar_lea.vmem %s9, %s1979
      // Predicated region
      $region57: #{one2one_forward.23} parent=55 // pred_check
        %p1981 = pneg %p242
      $region58: #{one2one_forward.23} parent=55 // pred_check_branch
        %1983 = sbr.rel (%p1981) target = $region60
      $region59: #{one2one_forward.23} parent=55 // pred_region
        _
      $region60: #{one2one_forward.23} parent=55 // pred_fallthru
        _
    $region56: #{one2one_forward.23} parent=5 // pred_fallthru
      _
    %p1984 = scmp.le.s32.totalorder 2, %s15
    // Predicated region
    $region61: #{one2one_forward.23} parent=5 // pred_check
      %p1985 = pneg %p1984
    $region62: #{one2one_forward.23} parent=5 // pred_check_branch
      %1987 = sbr.rel (%p1985) target = $region64
    $region63: #{one2one_forward.23} parent=5 // pred_region
      %s1988 = ssub.s32 %s15, 2
      // Predicated region
      $region65: #{one2one_forward.23} parent=63 // pred_check
        %p1989 = pneg %p248
      $region66: #{one2one_forward.23} parent=63 // pred_check_branch
        %1991 = sbr.rel (%p1989) target = $region68
      $region67: #{one2one_forward.23} parent=63 // pred_region
        %p1992 = scmp.lt.s32.totalorder %s21, 1
        %s1993 = scalar_select %p1992, %s21, 1
        %s1994 = smul.addr %s1993, 8
        %s1995 = scalar_lea.vmem %s9, %s1994
      $region68: #{one2one_forward.23} parent=63 // pred_fallthru
        _
    $region64: #{one2one_forward.23} parent=5 // pred_fallthru
      _
  $region6: #{one2one_forward.23} parent=0 // loop_footer
    %s19 = sadd.s32 1, %s15
  $region7: #{one2one_forward.23} parent=0 // loop_footer_branch
    %14 = sbr.rel target = $region3
  $region8: #{one2one_forward.23} parent=0 // loop_exit
    _

// kernel: one2one_forward.45
$region0: #{one2one_forward.45}
  #allocation0 [shape = 'u32[]', space=smem, size = 0x4, offset = 0x4, fixed_abs, tag = 'smem constant byte address 0x4 - core index']
  #allocation1 [shape = 'u32[144,128]{1,0:T(1,128)}', space=vmem, size = 0x12000, scoped, tag = 'internal scratch']
  %s0 = inlined_call_operand.vmem [shape: f32[16,128], index: 0, kind: input, shape index: {}]
  %s1 = inlined_call_operand.vmem [shape: f32[128,128], index: 1, kind: input, shape index: {}]
  %s2 = inlined_call_operand.vmem [shape: f32[1,128], index: 2, kind: input, shape index: {}]
  %s3 = inlined_call_operand.hbm [shape: f32[16,128], index: 3, kind: output, shape index: {}]
  %s4 = sld [smem:[#allocation0]]
  $region22: #{one2one_forward.45} parent=0
    _
  %s6 = ssub.s32 1, %s4
  %s7 = scalar_select 0, %s6, %s4
  $region1: #{one2one_forward.45} parent=0
    #allocation2 [shape = 'u8[8192]{0}', space=vmem, size = 0x2000, scoped, tag = 'output window, operand 0, single buffered']
    #allocation3 [shape = 's32[1]{0}', space=sflag, size = 0x4, scoped, tag = 'scoped memory for one2one_forward.45']
    %8 = vsyncpa [#allocation3], 0
    // Predicated region
    $region2: #{one2one_forward.45} parent=1 // pred_check
      _
    $region3: #{one2one_forward.45} parent=1 // pred_check_branch
      %10 = sbr.rel (0) target = $region5
    $region4: #{one2one_forward.45} parent=1 // pred_region
      _
    $region5: #{one2one_forward.45} parent=1 // pred_fallthru
      _
    // Predicated region
    $region6: #{one2one_forward.45} parent=1 // pred_check
      _
    $region7: #{one2one_forward.45} parent=1 // pred_check_branch
      %12 = sbr.rel (0) target = $region9
    $region8: #{one2one_forward.45} parent=1 // pred_region
      _
    $region9: #{one2one_forward.45} parent=1 // pred_fallthru
      _
    // Predicated region
    $region10: #{one2one_forward.45} parent=1 // pred_check
      _
    $region11: #{one2one_forward.45} parent=1 // pred_check_branch
      %14 = sbr.rel (0) target = $region13
    $region12: #{one2one_forward.45} parent=1 // pred_region
      _
    $region13: #{one2one_forward.45} parent=1 // pred_fallthru
      _
    %v16 = vld [vmem:[%s0] sm:$0xff]
    %v17 = vld [vmem:[%s0 + $0x8] sm:$0xff]
    %v18 = vpack.c.bf16 %v17, %v16
    %v19 = vld [vmem:[%s1] sm:$0xff]
    %v20 = vld [vmem:[%s1 + $0x8] sm:$0xff]
    %v21 = vld [vmem:[%s1 + $0x10] sm:$0xff]
    %v22 = vld [vmem:[%s1 + $0x18] sm:$0xff]
    %v23 = vld [vmem:[%s1 + $0x20] sm:$0xff]
    %v24 = vld [vmem:[%s1 + $0x28] sm:$0xff]
    %v25 = vld [vmem:[%s1 + $0x30] sm:$0xff]
    %v26 = vld [vmem:[%s1 + $0x38] sm:$0xff]
    %v27 = vld [vmem:[%s1 + $0x40] sm:$0xff]
    %v28 = vld [vmem:[%s1 + $0x48] sm:$0xff]
    %v29 = vld [vmem:[%s1 + $0x50] sm:$0xff]
    %v30 = vld [vmem:[%s1 + $0x58] sm:$0xff]
    %v31 = vld [vmem:[%s1 + $0x60] sm:$0xff]
    %v32 = vld [vmem:[%s1 + $0x68] sm:$0xff]
    %v33 = vld [vmem:[%s1 + $0x70] sm:$0xff]
    %v34 = vld [vmem:[%s1 + $0x78] sm:$0xff]
    %v35 = vpack.c.bf16 %v20, %v19
    %v36 = vpack.c.bf16 %v22, %v21
    %v37 = vpack.c.bf16 %v24, %v23
    %v38 = vpack.c.bf16 %v26, %v25
    %v39 = vpack.c.bf16 %v28, %v27
    %v40 = vpack.c.bf16 %v30, %v29
    %v41 = vpack.c.bf16 %v32, %v31
    %v42 = vpack.c.bf16 %v34, %v33
    %v43 = vld [vmem:[%s2] sm:$0x1]
    %v45 = vlaneseq
    %v46 = vshrl.u32 %v45, 7
    %v47 = vsub.s32 0, %v46
    %v48 = vrot.slane %v43, %v47
    %50 = vmatprep.subr.bf16.mxu0 0
    %51 = vmatpush1.bf16.msra.mxu0 %v42
    %52 = vmatprep.subr.bf16.mxu0 0
    %53 = vmatpush1.bf16.msra.mxu0 %v41
    %54 = vmatprep.subr.bf16.mxu0 0
    %55 = vmatpush1.bf16.msra.mxu0 %v40
    %56 = vmatprep.subr.bf16.mxu0 0
    %57 = vmatpush1.bf16.msra.mxu0 %v39
    %58 = vmatprep.subr.bf16.mxu0 0
    %59 = vmatpush1.bf16.msra.mxu0 %v38
    %60 = vmatprep.subr.bf16.mxu0 0
    %61 = vmatpush1.bf16.msra.mxu0 %v37
    %62 = vmatprep.subr.bf16.mxu0 0
    %63 = vmatpush1.bf16.msra.mxu0 %v36
    %64 = vmatprep.subr.bf16.mxu0 0
    %65 = vmatpush1.bf16.msra.mxu0 %v35
    %66 = vmatprep.subr.bf16.mxu0 0
    %67 = vmatpush2.bf16.msra.mxu0 0
    %68 = vmatprep.subr.bf16.mxu0 0
    %69 = vmatpush2.bf16.msra.mxu0 0
    %70 = vmatprep.subr.bf16.mxu0 0
    %71 = vmatpush2.bf16.msra.mxu0 0
    %72 = vmatprep.subr.bf16.mxu0 0
    %73 = vmatpush2.bf16.msra.mxu0 0
    %74 = vmatprep.subr.bf16.mxu0 0
    %75 = vmatpush2.bf16.msra.mxu0 0
    %76 = vmatprep.subr.bf16.mxu0 0
    %77 = vmatpush2.bf16.msra.mxu0 0
    %78 = vmatprep.subr.bf16.mxu0 0
    %79 = vmatpush2.bf16.msra.mxu0 0
    %80 = vmatprep.subr.bf16.mxu0 0
    %81 = vmatpush2.bf16.msra.mxu0 0
    %82 = vmatprep.mubr.bf16.mxu0 0
    %83 = vmatmul.mubr.bf16.gmra.mxu0 %v18
    %v84 = vpop.f32.mrf.mxu0
    %v85 = vadd.f32 %v48, %v84
    %v86 = vpop.f32.mrf.mxu0
    %v87 = vpop.f32.mrf.mxu0
    %v88 = vadd.f32 %v48, %v87
    %v89 = vpop.f32.mrf.mxu0
    %90 = vdwg.mxu0
    %91 = vmax.xlane.f32.xlu0 %v85
    %v92 = vpop.xlane.xlu0 %91
    %93 = vmax.xlane.f32.xlu0 %v88
    %v94 = vpop.xlane.xlu0 %93
    %v95 = vsub.f32 %v85, %v92
    %v96 = vsub.f32 %v88, %v94
    %v97 = vmul.f32 %v95, 1.442695
    %v98 = vpow.pop %v97
    %v99 = vmul.f32 %v96, 1.442695
    %v100 = vpow.pop %v99
    %101 = vadd.xlane.f32.xlu0 %v98
    %v102 = vpop.xlane.xlu0 %101
    %103 = vadd.xlane.f32.xlu0 %v100
    %v104 = vpop.xlane.xlu0 %103
    %v105 = vlog2.pop %v102
    %v106 = vmul.f32 %v105, 0.6931472
    %v107 = vlog2.pop %v104
    %v108 = vmul.f32 %v107, 0.6931472
    %v109 = vsub.f32 %v95, %v106
    %v110 = vsub.f32 %v96, %v108
    %111 = vst [vmem:[#allocation2] sm:$0xff] %v109
    %112 = vst [vmem:[#allocation2 + $0x8] sm:$0xff] %v110
    // Predicated region
    $region14: #{one2one_forward.45} parent=1 // pred_check
      _
    $region15: #{one2one_forward.45} parent=1 // pred_check_branch
      %114 = sbr.rel (0) target = $region17
    $region16: #{one2one_forward.45} parent=1 // pred_region
      %s116 = ssub.s32 256, 256
      %117 = vsyncadd [#allocation3], %s116
      %s118 = sshll.u32 [#allocation2], 4
      %s119 = int_to_ptr.vmem [resolvable:$true] %s118
      %124 = dma.vmem_to_hbm [thread:$0]  %s119, 256, %s3, [#allocation3], 128, 128, 8
    $region17: #{one2one_forward.45} parent=1 // pred_fallthru
      _
    // Predicated region
    $region18: #{one2one_forward.45} parent=1 // pred_check
      _
    $region19: #{one2one_forward.45} parent=1 // pred_check_branch
      %126 = sbr.rel (0) target = $region21
    $region20: #{one2one_forward.45} parent=1 // pred_region
      %127 = dma.done [#allocation3], 256
    $region21: #{one2one_forward.45} parent=1 // pred_fallthru
      _
    %128 = vsyncpa [#allocation3], 1

// kernel: one2one_forward.34
$region0: #{one2one_forward.34}
  #allocation0 [shape = 'u32[]', space=smem, size = 0x4, offset = 0x4, fixed_abs, tag = 'smem constant byte address 0x4 - core index']
  #allocation1 [shape = 'u32[144,128]{1,0:T(1,128)}', space=vmem, size = 0x12000, scoped, tag = 'internal scratch']
  %s0 = inlined_call_operand.vmem [shape: f32[2,8,128], index: 0, kind: input, shape index: {}]
  %s1 = inlined_call_operand.vmem [shape: f32[2,8,128], index: 1, kind: input, shape index: {}]
  %s2 = inlined_call_operand.vmem [shape: f32[128,128], index: 2, kind: input, shape index: {}]
  %s3 = inlined_call_operand.vmem [shape: f32[1,128], index: 3, kind: input, shape index: {}]
  %s4 = inlined_call_operand.vmem [shape: f32[128,256], index: 4, kind: input, shape index: {}]
  %s5 = inlined_call_operand.vmem [shape: f32[1,256], index: 5, kind: input, shape index: {}]
  %s6 = inlined_call_operand.vmem [shape: f32[128,128], index: 6, kind: input, shape index: {}]
  %s7 = inlined_call_operand.vmem [shape: f32[1,128], index: 7, kind: input, shape index: {}]
  %s8 = inlined_call_operand.vmem [shape: f32[2,8,128], index: 8, kind: output, shape index: {}]
  %s9 = sld [smem:[#allocation0]]
  $region65: #{one2one_forward.34} parent=0
    _
  %s11 = ssub.s32 1, %s9
  %s12 = scalar_select 0, %s11, %s9
  loop: start=0, step=1, limit=4
  $region2: #{one2one_forward.34} parent=0 // loop_pre_header
    _
  $region3: #{one2one_forward.34} parent=0 // loop_header
    %s14 = sphi 0, %s18
    %p15 = scmp.ge.s32.totalorder %s14, 4
    %s24 = sphi 0, %s26
    %s27 = sphi 0, %s24
    %s28 = sphi 0, %s27
    %s44 = sphi 0, %s28
    %s50 = sphi 0, %s52
    %s53 = sphi 0, %s50
    %s54 = sphi 0, %s53
    %s70 = sphi 0, %s54
    %s74 = sphi 0, %s74
    %s76 = sphi 0, %s74
    %s77 = sphi 0, %s76
    %s91 = sphi 0, %s77
    %s95 = sphi 0, %s95
    %s97 = sphi 0, %s95
    %s98 = sphi 0, %s97
    %s112 = sphi 0, %s98
    %s116 = sphi 0, %s116
    %s118 = sphi 0, %s116
    %s119 = sphi 0, %s118
    %s133 = sphi 0, %s119
    %s137 = sphi 0, %s137
    %s139 = sphi 0, %s137
    %s140 = sphi 0, %s139
    %s154 = sphi 0, %s140
    %s158 = sphi 0, %s158
    %s160 = sphi 0, %s158
    %s161 = sphi 0, %s160
    %s175 = sphi 0, %s161
    %s179 = sphi 0, %s179
    %s181 = sphi 0, %s179
    %s182 = sphi 0, %s181
    %s196 = sphi 0, %s182
    %s202 = sphi 0, %s204
    %s205 = sphi 0, %s202
    %s206 = sphi 0, %s205
    %s222 = sphi 0, %s206
  $region4: #{one2one_forward.34} parent=0 // loop_header_branch
    %17 = sbr.rel (%p15) target = $region8
  $region5: #{one2one_forward.34} parent=0 // loop_body
    %s19 = ssub.s32 %s14, 1
    %s20 = ssub.s32 %s14, 2
    %s21 = sadd.s32 %s14, 1
    %s22 = ssub.s32 %s14, %s21
    %p23 = scmp.eq.s32.totalorder %s22, 0
    %s25 = sadd.s32 %s24, 1
    %s26 = scalar_select %p23, %s24, %s25
    %p29 = pneg %p23
    %p30 = scmp.eq.s32.totalorder %s14, 1
    %p31 = por %p29, %p30
    %p32 = scmp.ne.s32.totalorder %s24, %s27
    %p33 = scmp.eq.s32.totalorder %s14, 0
    %p34 = por %p32, %p33
    %p35 = scmp.ne.s32.totalorder %s24, %s27
    %p36 = scmp.eq.s32.totalorder %s19, 1
    %p37 = por %p35, %p36
    %p38 = scmp.ne.s32.totalorder %s27, %s28
    %p39 = scmp.eq.s32.totalorder %s19, 0
    %p40 = por %p38, %p39
    %p41 = scmp.ne.s32.totalorder %s27, %s28
    %p42 = scmp.eq.s32.totalorder %s20, 1
    %p43 = por %p41, %p42
    %p45 = scmp.ne.s32.totalorder %s28, %s44
    %p46 = scmp.eq.s32.totalorder %s20, 0
    %p47 = por %p45, %p46
    %s48 = ssub.s32 %s14, %s21
    %p49 = scmp.eq.s32.totalorder %s48, 0
    %s51 = sadd.s32 %s50, 1
    %s52 = scalar_select %p49, %s50, %s51
    %p55 = pneg %p49
    %p56 = scmp.eq.s32.totalorder %s14, 1
    %p57 = por %p55, %p56
    %p58 = scmp.ne.s32.totalorder %s50, %s53
    %p59 = scmp.eq.s32.totalorder %s14, 0
    %p60 = por %p58, %p59
    %p61 = scmp.ne.s32.totalorder %s50, %s53
    %p62 = scmp.eq.s32.totalorder %s19, 1
    %p63 = por %p61, %p62
    %p64 = scmp.ne.s32.totalorder %s53, %s54
    %p65 = scmp.eq.s32.totalorder %s19, 0
    %p66 = por %p64, %p65
    %p67 = scmp.ne.s32.totalorder %s53, %s54
    %p68 = scmp.eq.s32.totalorder %s20, 1
    %p69 = por %p67, %p68
    %p71 = scmp.ne.s32.totalorder %s54, %s70
    %p72 = scmp.eq.s32.totalorder %s20, 0
    %p73 = por %p71, %p72
    %s75 = sadd.s32 %s74, 1
    %p78 = scmp.eq.s32.totalorder %s14, 1
    %p79 = scmp.ne.s32.totalorder %s74, %s76
    %p80 = scmp.eq.s32.totalorder %s14, 0
    %p81 = por %p79, %p80
    %p82 = scmp.ne.s32.totalorder %s74, %s76
    %p83 = scmp.eq.s32.totalorder %s19, 1
    %p84 = por %p82, %p83
    %p85 = scmp.ne.s32.totalorder %s76, %s77
    %p86 = scmp.eq.s32.totalorder %s19, 0
    %p87 = por %p85, %p86
    %p88 = scmp.ne.s32.totalorder %s76, %s77
    %p89 = scmp.eq.s32.totalorder %s20, 1
    %p90 = por %p88, %p89
    %p92 = scmp.ne.s32.totalorder %s77, %s91
    %p93 = scmp.eq.s32.totalorder %s20, 0
    %p94 = por %p92, %p93
    %s96 = sadd.s32 %s95, 1
    %p99 = scmp.eq.s32.totalorder %s14, 1
    %p100 = scmp.ne.s32.totalorder %s95, %s97
    %p101 = scmp.eq.s32.totalorder %s14, 0
    %p102 = por %p100, %p101
    %p103 = scmp.ne.s32.totalorder %s95, %s97
    %p104 = scmp.eq.s32.totalorder %s19, 1
    %p105 = por %p103, %p104
    %p106 = scmp.ne.s32.totalorder %s97, %s98
    %p107 = scmp.eq.s32.totalorder %s19, 0
    %p108 = por %p106, %p107
    %p109 = scmp.ne.s32.totalorder %s97, %s98
    %p110 = scmp.eq.s32.totalorder %s20, 1
    %p111 = por %p109, %p110
    %p113 = scmp.ne.s32.totalorder %s98, %s112
    %p114 = scmp.eq.s32.totalorder %s20, 0
    %p115 = por %p113, %p114
    %s117 = sadd.s32 %s116, 1
    %p120 = scmp.eq.s32.totalorder %s14, 1
    %p121 = scmp.ne.s32.totalorder %s116, %s118
    %p122 = scmp.eq.s32.totalorder %s14, 0
    %p123 = por %p121, %p122
    %p124 = scmp.ne.s32.totalorder %s116, %s118
    %p125 = scmp.eq.s32.totalorder %s19, 1
    %p126 = por %p124, %p125
    %p127 = scmp.ne.s32.totalorder %s118, %s119
    %p128 = scmp.eq.s32.totalorder %s19, 0
    %p129 = por %p127, %p128
    %p130 = scmp.ne.s32.totalorder %s118, %s119
    %p131 = scmp.eq.s32.totalorder %s20, 1
    %p132 = por %p130, %p131
    %p134 = scmp.ne.s32.totalorder %s119, %s133
    %p135 = scmp.eq.s32.totalorder %s20, 0
    %p136 = por %p134, %p135
    %s138 = sadd.s32 %s137, 1
    %p141 = scmp.eq.s32.totalorder %s14, 1
    %p142 = scmp.ne.s32.totalorder %s137, %s139
    %p143 = scmp.eq.s32.totalorder %s14, 0
    %p144 = por %p142, %p143
    %p145 = scmp.ne.s32.totalorder %s137, %s139
    %p146 = scmp.eq.s32.totalorder %s19, 1
    %p147 = por %p145, %p146
    %p148 = scmp.ne.s32.totalorder %s139, %s140
    %p149 = scmp.eq.s32.totalorder %s19, 0
    %p150 = por %p148, %p149
    %p151 = scmp.ne.s32.totalorder %s139, %s140
    %p152 = scmp.eq.s32.totalorder %s20, 1
    %p153 = por %p151, %p152
    %p155 = scmp.ne.s32.totalorder %s140, %s154
    %p156 = scmp.eq.s32.totalorder %s20, 0
    %p157 = por %p155, %p156
    %s159 = sadd.s32 %s158, 1
    %p162 = scmp.eq.s32.totalorder %s14, 1
    %p163 = scmp.ne.s32.totalorder %s158, %s160
    %p164 = scmp.eq.s32.totalorder %s14, 0
    %p165 = por %p163, %p164
    %p166 = scmp.ne.s32.totalorder %s158, %s160
    %p167 = scmp.eq.s32.totalorder %s19, 1
    %p168 = por %p166, %p167
    %p169 = scmp.ne.s32.totalorder %s160, %s161
    %p170 = scmp.eq.s32.totalorder %s19, 0
    %p171 = por %p169, %p170
    %p172 = scmp.ne.s32.totalorder %s160, %s161
    %p173 = scmp.eq.s32.totalorder %s20, 1
    %p174 = por %p172, %p173
    %p176 = scmp.ne.s32.totalorder %s161, %s175
    %p177 = scmp.eq.s32.totalorder %s20, 0
    %p178 = por %p176, %p177
    %s180 = sadd.s32 %s179, 1
    %p183 = scmp.eq.s32.totalorder %s14, 1
    %p184 = scmp.ne.s32.totalorder %s179, %s181
    %p185 = scmp.eq.s32.totalorder %s14, 0
    %p186 = por %p184, %p185
    %p187 = scmp.ne.s32.totalorder %s179, %s181
    %p188 = scmp.eq.s32.totalorder %s19, 1
    %p189 = por %p187, %p188
    %p190 = scmp.ne.s32.totalorder %s181, %s182
    %p191 = scmp.eq.s32.totalorder %s19, 0
    %p192 = por %p190, %p191
    %p193 = scmp.ne.s32.totalorder %s181, %s182
    %p194 = scmp.eq.s32.totalorder %s20, 1
    %p195 = por %p193, %p194
    %p197 = scmp.ne.s32.totalorder %s182, %s196
    %p198 = scmp.eq.s32.totalorder %s20, 0
    %p199 = por %p197, %p198
    %s200 = ssub.s32 %s14, %s21
    %p201 = scmp.eq.s32.totalorder %s200, 0
    %s203 = sadd.s32 %s202, 1
    %s204 = scalar_select %p201, %s202, %s203
    %p207 = pneg %p201
    %p208 = scmp.eq.s32.totalorder %s14, 1
    %p209 = por %p207, %p208
    %p210 = scmp.ne.s32.totalorder %s202, %s205
    %p211 = scmp.eq.s32.totalorder %s14, 0
    %p212 = por %p210, %p211
    %p213 = scmp.ne.s32.totalorder %s202, %s205
    %p214 = scmp.eq.s32.totalorder %s19, 1
    %p215 = por %p213, %p214
    %p216 = scmp.ne.s32.totalorder %s205, %s206
    %p217 = scmp.eq.s32.totalorder %s19, 0
    %p218 = por %p216, %p217
    %p219 = scmp.ne.s32.totalorder %s205, %s206
    %p220 = scmp.eq.s32.totalorder %s20, 1
    %p221 = por %p219, %p220
    %p223 = scmp.ne.s32.totalorder %s206, %s222
    %p224 = scmp.eq.s32.totalorder %s20, 0
    %p225 = por %p223, %p224
    %p226 = scmp.le.s32.totalorder 1, %s14
    %p227 = scmp.lt.s32.totalorder %s14, 3
    %p228 = pnand %p226, %p227
    %p229 = pneg %p228
    // Predicated region
    $region9: #{one2one_forward.34} parent=5 // pred_check
      _
    $region10: #{one2one_forward.34} parent=5 // pred_check_branch
      %231 = sbr.rel (%p228) target = $region12
    $region11: #{one2one_forward.34} parent=5 // pred_region
      %s232 = ssub.s32 %s14, 1
      // Predicated region
      $region13: #{one2one_forward.34} parent=11 // pred_check
        %p233 = pneg %p87
      $region14: #{one2one_forward.34} parent=11 // pred_check_branch
        %235 = sbr.rel (%p233) target = $region16
      $region15: #{one2one_forward.34} parent=11 // pred_region
        _
      $region16: #{one2one_forward.34} parent=11 // pred_fallthru
        _
      // Predicated region
      $region17: #{one2one_forward.34} parent=11 // pred_check
        %p236 = pneg %p108
      $region18: #{one2one_forward.34} parent=11 // pred_check_branch
        %238 = sbr.rel (%p236) target = $region20
      $region19: #{one2one_forward.34} parent=11 // pred_region
        _
      $region20: #{one2one_forward.34} parent=11 // pred_fallthru
        _
      // Predicated region
      $region21: #{one2one_forward.34} parent=11 // pred_check
        %p239 = pneg %p129
      $region22: #{one2one_forward.34} parent=11 // pred_check_branch
        %241 = sbr.rel (%p239) target = $region24
      $region23: #{one2one_forward.34} parent=11 // pred_region
        _
      $region24: #{one2one_forward.34} parent=11 // pred_fallthru
        _
      // Predicated region
      $region25: #{one2one_forward.34} parent=11 // pred_check
        %p242 = pneg %p150
      $region26: #{one2one_forward.34} parent=11 // pred_check_branch
        %244 = sbr.rel (%p242) target = $region28
      $region27: #{one2one_forward.34} parent=11 // pred_region
        _
      $region28: #{one2one_forward.34} parent=11 // pred_fallthru
        _
      // Predicated region
      $region29: #{one2one_forward.34} parent=11 // pred_check
        %p245 = pneg %p171
      $region30: #{one2one_forward.34} parent=11 // pred_check_branch
        %247 = sbr.rel (%p245) target = $region32
      $region31: #{one2one_forward.34} parent=11 // pred_region
        _
      $region32: #{one2one_forward.34} parent=11 // pred_fallthru
        _
      // Predicated region
      $region33: #{one2one_forward.34} parent=11 // pred_check
        %p248 = pneg %p192
      $region34: #{one2one_forward.34} parent=11 // pred_check_branch
        %250 = sbr.rel (%p248) target = $region36
      $region35: #{one2one_forward.34} parent=11 // pred_region
        _
      $region36: #{one2one_forward.34} parent=11 // pred_fallthru
        _
    $region12: #{one2one_forward.34} parent=5 // pred_fallthru
      _
    %p251 = scmp.lt.s32.totalorder %s14, 2
    // Predicated region
    $region37: #{one2one_forward.34} parent=5 // pred_check
      %p252 = pneg %p251
    $region38: #{one2one_forward.34} parent=5 // pred_check_branch
      %254 = sbr.rel (%p252) target = $region40
    $region39: #{one2one_forward.34} parent=5 // pred_region
      // Predicated region
      $region41: #{one2one_forward.34} parent=39 // pred_check
        %p255 = pneg %p34
      $region42: #{one2one_forward.34} parent=39 // pred_check_branch
        %257 = sbr.rel (%p255) target = $region44
      $region43: #{one2one_forward.34} parent=39 // pred_region
        %p258 = scmp.lt.s32.totalorder %s14, 1
        %s259 = scalar_select %p258, %s14, 1
        %s260 = smul.addr %s259, 8
        %s261 = scalar_lea.vmem %s0, %s260
      $region44: #{one2one_forward.34} parent=39 // pred_fallthru
        _
      // Predicated region
      $region45: #{one2one_forward.34} parent=39 // pred_check
        %p262 = pneg %p60
      $region46: #{one2one_forward.34} parent=39 // pred_check_branch
        %264 = sbr.rel (%p262) target = $region48
      $region47: #{one2one_forward.34} parent=39 // pred_region
        %p265 = scmp.lt.s32.totalorder %s14, 1
        %s266 = scalar_select %p265, %s14, 1
        %s267 = smul.addr %s266, 8
        %s268 = scalar_lea.vmem %s1, %s267
      $region48: #{one2one_forward.34} parent=39 // pred_fallthru
        _
    $region40: #{one2one_forward.34} parent=5 // pred_fallthru
      _
    %p269 = scmp.le.s32.totalorder 1, %s14
    %p270 = scmp.lt.s32.totalorder %s14, 3
    %p271 = pnand %p269, %p270
    %p272 = pneg %p271
    // Predicated region
    $region49: #{one2one_forward.34} parent=5 // pred_check
      _
    $region50: #{one2one_forward.34} parent=5 // pred_check_branch
      %274 = sbr.rel (%p271) target = $region52
    $region51: #{one2one_forward.34} parent=5 // pred_region
      %s275 = ssub.s32 %s14, 1
      %p276 = scmp.lt.s32.totalorder %s19, 1
      %s277 = scalar_select %p276, %s19, 1
      %s278 = smul.addr %s277, 8
      %s279 = scalar_lea.vmem %s0, %s278
      %p280 = pneg %p40
      %p281 = pneg %p37
      %p282 = scmp.lt.s32.totalorder %s19, 1
      %s283 = scalar_select %p282, %s19, 1
      %s284 = smul.addr %s283, 8
      %s285 = scalar_lea.vmem %s1, %s284
      %p286 = pneg %p66
      %p287 = pneg %p63
      %p288 = pneg %p87
      %p289 = pneg %p84
      %p290 = pneg %p108
      %p291 = pneg %p105
      %p292 = pneg %p129
      %p293 = pneg %p126
      %p294 = pneg %p150
      %p295 = pneg %p147
      %p296 = pneg %p171
      %p297 = pneg %p168
      %p298 = pneg %p192
      %p299 = pneg %p189
      %p300 = pneg %p218
      %p301 = pneg %p215
      %p302 = scmp.lt.s32.totalorder %s19, 1
      %s303 = scalar_select %p302, %s19, 1
      %s304 = smul.addr %s303, 8
      %s305 = scalar_lea.vmem %s8, %s304
      %p306 = scmp.lt.s32.totalorder %s19, 1
      %s307 = scalar_select %p306, %s19, 1
      %s308 = smul.addr %s307, 8
      %s309 = scalar_lea.vmem %s0, %s308
      %p310 = scmp.lt.s32.totalorder %s19, 1
      %s311 = scalar_select %p310, %s19, 1
      %s312 = smul.addr %s311, 8
      %s313 = scalar_lea.vmem %s1, %s312
      %p314 = scmp.lt.s32.totalorder %s19, 1
      %s315 = scalar_select %p314, %s19, 1
      %s316 = smul.addr %s315, 8
      %s317 = scalar_lea.vmem %s8, %s316
      %v319 = vld [vmem:[%s309] sm:$0xff]
      %v320 = vld [vmem:[%s313] sm:$0xff]
      %v321 = vpack.c.bf16 %v319, %v319
      %v322 = vld [vmem:[%s2] sm:$0xff]
      %v323 = vld [vmem:[%s2 + $0x8] sm:$0xff]
      %v324 = vld [vmem:[%s2 + $0x10] sm:$0xff]
      %v325 = vld [vmem:[%s2 + $0x18] sm:$0xff]
      %v326 = vld [vmem:[%s2 + $0x20] sm:$0xff]
      %v327 = vld [vmem:[%s2 + $0x28] sm:$0xff]
      %v328 = vld [vmem:[%s2 + $0x30] sm:$0xff]
      %v329 = vld [vmem:[%s2 + $0x38] sm:$0xff]
      %v330 = vld [vmem:[%s2 + $0x40] sm:$0xff]
      %v331 = vld [vmem:[%s2 + $0x48] sm:$0xff]
      %v332 = vld [vmem:[%s2 + $0x50] sm:$0xff]
      %v333 = vld [vmem:[%s2 + $0x58] sm:$0xff]
      %v334 = vld [vmem:[%s2 + $0x60] sm:$0xff]
      %v335 = vld [vmem:[%s2 + $0x68] sm:$0xff]
      %v336 = vld [vmem:[%s2 + $0x70] sm:$0xff]
      %v337 = vld [vmem:[%s2 + $0x78] sm:$0xff]
      %v338 = vpack.c.bf16 %v323, %v322
      %v339 = vpack.c.bf16 %v325, %v324
      %v340 = vpack.c.bf16 %v327, %v326
      %v341 = vpack.c.bf16 %v329, %v328
      %v342 = vpack.c.bf16 %v331, %v330
      %v343 = vpack.c.bf16 %v333, %v332
      %v344 = vpack.c.bf16 %v335, %v334
      %v345 = vpack.c.bf16 %v337, %v336
      %v346 = vld [vmem:[%s3] sm:$0x1]
      %v348 = vlaneseq
      %v349 = vshrl.u32 %v348, 7
      %v350 = vsub.s32 0, %v349
      %v351 = vrot.slane %v346, %v350
      %353 = vmatprep.subr.bf16.mxu0 0
      %354 = vmatpush1.bf16.msra.mxu0 %v345
      %355 = vmatprep.subr.bf16.mxu0 0
      %356 = vmatpush1.bf16.msra.mxu0 %v344
      %357 = vmatprep.subr.bf16.mxu0 0
      %358 = vmatpush1.bf16.msra.mxu0 %v343
      %359 = vmatprep.subr.bf16.mxu0 0
      %360 = vmatpush1.bf16.msra.mxu0 %v342
      %361 = vmatprep.subr.bf16.mxu0 0
      %362 = vmatpush1.bf16.msra.mxu0 %v341
      %363 = vmatprep.subr.bf16.mxu0 0
      %364 = vmatpush1.bf16.msra.mxu0 %v340
      %365 = vmatprep.subr.bf16.mxu0 0
      %366 = vmatpush1.bf16.msra.mxu0 %v339
      %367 = vmatprep.subr.bf16.mxu0 0
      %368 = vmatpush1.bf16.msra.mxu0 %v338
      %369 = vmatprep.subr.bf16.mxu0 0
      %370 = vmatpush2.bf16.msra.mxu0 0
      %371 = vmatprep.subr.bf16.mxu0 0
      %372 = vmatpush2.bf16.msra.mxu0 0
      %373 = vmatprep.subr.bf16.mxu0 0
      %374 = vmatpush2.bf16.msra.mxu0 0
      %375 = vmatprep.subr.bf16.mxu0 0
      %376 = vmatpush2.bf16.msra.mxu0 0
      %377 = vmatprep.subr.bf16.mxu0 0
      %378 = vmatpush2.bf16.msra.mxu0 0
      %379 = vmatprep.subr.bf16.mxu0 0
      %380 = vmatpush2.bf16.msra.mxu0 0
      %381 = vmatprep.subr.bf16.mxu0 0
      %382 = vmatpush2.bf16.msra.mxu0 0
      %383 = vmatprep.subr.bf16.mxu0 0
      %384 = vmatpush2.bf16.msra.mxu0 0
      %385 = vmatprep.mubr.bf16.mxu0 0
      %386 = vmatmul.mubr.bf16.gmra.mxu0 %v321
      %v387 = vpop.f32.mrf.mxu0
      %v388 = vadd.f32 %v351, %v387
      %v389 = vpop.f32.mrf.mxu0
      %v390 = vpop.f32.mrf.mxu0
      %v391 = vpop.f32.mrf.mxu0
      %392 = vdwg.mxu0
      %v393 = vpack.c.bf16 %v320, %v320
      %v394 = vld [vmem:[%s4] sm:$0xff]
      %v395 = vld [vmem:[%s4 + $0x8] sm:$0xff]
      %v396 = vld [vmem:[%s4 + $0x10] sm:$0xff]
      %v397 = vld [vmem:[%s4 + $0x18] sm:$0xff]
      %v398 = vld [vmem:[%s4 + $0x20] sm:$0xff]
      %v399 = vld [vmem:[%s4 + $0x28] sm:$0xff]
      %v400 = vld [vmem:[%s4 + $0x30] sm:$0xff]
      %v401 = vld [vmem:[%s4 + $0x38] sm:$0xff]
      %v402 = vld [vmem:[%s4 + $0x40] sm:$0xff]
      %v403 = vld [vmem:[%s4 + $0x48] sm:$0xff]
      %v404 = vld [vmem:[%s4 + $0x50] sm:$0xff]
      %v405 = vld [vmem:[%s4 + $0x58] sm:$0xff]
      %v406 = vld [vmem:[%s4 + $0x60] sm:$0xff]
      %v407 = vld [vmem:[%s4 + $0x68] sm:$0xff]
      %v408 = vld [vmem:[%s4 + $0x70] sm:$0xff]
      %v409 = vld [vmem:[%s4 + $0x78] sm:$0xff]
      %v410 = vld [vmem:[%s4 + $0x80] sm:$0xff]
      %v411 = vld [vmem:[%s4 + $0x88] sm:$0xff]
      %v412 = vld [vmem:[%s4 + $0x90] sm:$0xff]
      %v413 = vld [vmem:[%s4 + $0x98] sm:$0xff]
      %v414 = vld [vmem:[%s4 + $0xa0] sm:$0xff]
      %v415 = vld [vmem:[%s4 + $0xa8] sm:$0xff]
      %v416 = vld [vmem:[%s4 + $0xb0] sm:$0xff]
      %v417 = vld [vmem:[%s4 + $0xb8] sm:$0xff]
      %v418 = vld [vmem:[%s4 + $0xc0] sm:$0xff]
      %v419 = vld [vmem:[%s4 + $0xc8] sm:$0xff]
      %v420 = vld [vmem:[%s4 + $0xd0] sm:$0xff]
      %v421 = vld [vmem:[%s4 + $0xd8] sm:$0xff]
      %v422 = vld [vmem:[%s4 + $0xe0] sm:$0xff]
      %v423 = vld [vmem:[%s4 + $0xe8] sm:$0xff]
      %v424 = vld [vmem:[%s4 + $0xf0] sm:$0xff]
      %v425 = vld [vmem:[%s4 + $0xf8] sm:$0xff]
      %v426 = vpack.c.bf16 %v396, %v394
      %v427 = vpack.c.bf16 %v397, %v395
      %v428 = vpack.c.bf16 %v400, %v398
      %v429 = vpack.c.bf16 %v401, %v399
      %v430 = vpack.c.bf16 %v404, %v402
      %v431 = vpack.c.bf16 %v405, %v403
      %v432 = vpack.c.bf16 %v408, %v406
      %v433 = vpack.c.bf16 %v409, %v407
      %v434 = vpack.c.bf16 %v412, %v410
      %v435 = vpack.c.bf16 %v413, %v411
      %v436 = vpack.c.bf16 %v416, %v414
      %v437 = vpack.c.bf16 %v417, %v415
      %v438 = vpack.c.bf16 %v420, %v418
      %v439 = vpack.c.bf16 %v421, %v419
      %v440 = vpack.c.bf16 %v424, %v422
      %v441 = vpack.c.bf16 %v425, %v423
      %v442 = vld [vmem:[%s5] sm:$0x3]
      %v444 = vlaneseq
      %v445 = vshrl.u32 %v444, 7
      %v446 = vsub.s32 0, %v445
      %v447 = vrot.slane %v442, %v446
      %v448 = vlaneseq
      %v449 = vshrl.u32 %v448, 7
      %v450 = vsub.s32 1, %v449
      %v451 = vrot.slane %v442, %v450
      %454 = vmatprep.subr.bf16.mxu0 %v441
      %455 = vmatpush1.bf16.msra.mxu0 %v440
      %456 = vmatprep.subr.bf16.mxu0 %v439
      %457 = vmatpush1.bf16.msra.mxu0 %v438
      %458 = vmatprep.subr.bf16.mxu0 %v437
      %459 = vmatpush1.bf16.msra.mxu0 %v436
      %460 = vmatprep.subr.bf16.mxu0 %v435
      %461 = vmatpush1.bf16.msra.mxu0 %v434
      %462 = vmatprep.subr.bf16.mxu0 %v433
      %463 = vmatpush1.bf16.msra.mxu0 %v432
      %464 = vmatprep.subr.bf16.mxu0 %v431
      %465 = vmatpush1.bf16.msra.mxu0 %v430
      %466 = vmatprep.subr.bf16.mxu0 %v429
      %467 = vmatpush1.bf16.msra.mxu0 %v428
      %468 = vmatprep.subr.bf16.mxu0 %v427
      %469 = vmatpush1.bf16.msra.mxu0 %v426
      %470 = vmatprep.subr.bf16.mxu0 0
      %471 = vmatpush2.bf16.msra.mxu0 0
      %472 = vmatprep.subr.bf16.mxu0 0
      %473 = vmatpush2.bf16.msra.mxu0 0
      %474 = vmatprep.subr.bf16.mxu0 0
      %475 = vmatpush2.bf16.msra.mxu0 0
      %476 = vmatprep.subr.bf16.mxu0 0
      %477 = vmatpush2.bf16.msra.mxu0 0
      %478 = vmatprep.subr.bf16.mxu0 0
      %479 = vmatpush2.bf16.msra.mxu0 0
      %480 = vmatprep.subr.bf16.mxu0 0
      %481 = vmatpush2.bf16.msra.mxu0 0
      %482 = vmatprep.subr.bf16.mxu0 0
      %483 = vmatpush2.bf16.msra.mxu0 0
      %484 = vmatprep.subr.bf16.mxu0 0
      %485 = vmatpush2.bf16.msra.mxu0 0
      %486 = vmatprep.mubr.bf16.mxu0 0
      %487 = vmatmul.mubr.bf16.gmra.mxu0 %v393
      %v488 = vpop.f32.mrf.mxu0
      %v489 = vadd.f32 %v447, %v488
      %v490 = vpop.f32.mrf.mxu0
      %v491 = vadd.f32 %v451, %v490
      %v492 = vpop.f32.mrf.mxu0
      %v493 = vpop.f32.mrf.mxu0
      %494 = vdwg.mxu0
      %v495 = vmul.f32 %v388, 0.25
      %vm496 = vcmask 130048
      %v498 = vsel %vm496, %v495, 0
      %v501 = vsel %vm496, %v489, 0
      %503 = vmatprep.subr.mxu0 0.0
      %504 = vmatpush1.xpose.msra.mxu0 0.0
      %505 = vmatprep.subr.mxu0 0.0
      %506 = vmatpush1.xpose.msra.mxu0 0.0
      %507 = vmatprep.subr.mxu0 0.0
      %508 = vmatpush1.xpose.msra.mxu0 0.0
      %509 = vmatprep.subr.mxu0 0.0
      %510 = vmatpush1.xpose.msra.mxu0 0.0
      %511 = vmatprep.subr.mxu0 0.0
      %512 = vmatpush1.xpose.msra.mxu0 0.0
      %513 = vmatprep.subr.mxu0 0.0
      %514 = vmatpush1.xpose.msra.mxu0 0.0
      %515 = vmatprep.subr.mxu0 0.0
      %516 = vmatpush1.xpose.msra.mxu0 0.0
      %517 = vmatprep.subr.mxu0 0.0
      %518 = vmatpush1.xpose.msra.mxu0 0.0
      %519 = vmatprep.subr.mxu0 0.0
      %520 = vmatpush1.xpose.msra.mxu0 0.0
      %521 = vmatprep.subr.mxu0 0.0
      %522 = vmatpush1.xpose.msra.mxu0 0.0
      %523 = vmatprep.subr.mxu0 0.0
      %524 = vmatpush1.xpose.msra.mxu0 0.0
      %525 = vmatprep.subr.mxu0 0.0
      %526 = vmatpush1.xpose.msra.mxu0 0.0
      %527 = vmatprep.subr.mxu0 0.0
      %528 = vmatpush1.xpose.msra.mxu0 0.0
      %529 = vmatprep.subr.mxu0 0.0
      %530 = vmatpush1.xpose.msra.mxu0 0.0
      %531 = vmatprep.subr.mxu0 0.0
      %532 = vmatpush1.xpose.msra.mxu0 0.0
      %533 = vmatprep.subr.mxu0 0.0
      %534 = vmatpush1.xpose.msra.mxu0 %v501
      %535 = vmatprep.subr.mxu0 0.0
      %536 = vmatpush2.xpose.msra.mxu0 0.0
      %537 = vmatprep.subr.mxu0 0.0
      %538 = vmatpush2.xpose.msra.mxu0 0.0
      %539 = vmatprep.subr.mxu0 0.0
      %540 = vmatpush2.xpose.msra.mxu0 0.0
      %541 = vmatprep.subr.mxu0 0.0
      %542 = vmatpush2.xpose.msra.mxu0 0.0
      %543 = vmatprep.subr.mxu0 0.0
      %544 = vmatpush2.xpose.msra.mxu0 0.0
      %545 = vmatprep.subr.mxu0 0.0
      %546 = vmatpush2.xpose.msra.mxu0 0.0
      %547 = vmatprep.subr.mxu0 0.0
      %548 = vmatpush2.xpose.msra.mxu0 0.0
      %549 = vmatprep.subr.mxu0 0.0
      %550 = vmatpush2.xpose.msra.mxu0 0.0
      %551 = vmatprep.subr.mxu0 0.0
      %552 = vmatpush2.xpose.msra.mxu0 0.0
      %553 = vmatprep.subr.mxu0 0.0
      %554 = vmatpush2.xpose.msra.mxu0 0.0
      %555 = vmatprep.subr.mxu0 0.0
      %556 = vmatpush2.xpose.msra.mxu0 0.0
      %557 = vmatprep.subr.mxu0 0.0
      %558 = vmatpush2.xpose.msra.mxu0 0.0
      %559 = vmatprep.subr.mxu0 0.0
      %560 = vmatpush2.xpose.msra.mxu0 0.0
      %561 = vmatprep.subr.mxu0 0.0
      %562 = vmatpush2.xpose.msra.mxu0 0.0
      %563 = vmatprep.subr.mxu0 0.0
      %564 = vmatpush2.xpose.msra.mxu0 0.0
      %565 = vmatprep.subr.mxu0 0.0
      %566 = vmatpush2.xpose.msra.mxu0 0.0
      %567 = vmatprep.mubr.f32.mxu0 0.0
      %568 = vmatmul.mubr.f32.gmra.mxu0 %v498
      %v569 = vpop.f32.mrf.mxu0
      %v570 = vadd.f32 0.0, %v569
      %v571 = vpop.f32.mrf.mxu0
      %572 = vdwg.mxu0
      %vm573 = vcmask 64512
      %v574 = vsel %vm573, %v570, -inf
      %575 = vmax.xlane.f32.xlu0 %v574
      %v576 = vpop.xlane.xlu0 %575
      %v577 = vsub.f32 %v570, %v576
      %v578 = vmul.f32 %v577, 1.442695
      %v579 = vpow.pop %v578
      %v580 = vsel %vm573, %v579, 0.0
      %581 = vadd.xlane.f32.xlu0 %v580
      %v582 = vpop.xlane.xlu0 %581
      %v583 = vrcp.pop %v582
      %v584 = vmul.f32 %v579, %v583
      %v586 = vsel %vm573, %v584, 0
      %588 = vmatprep.subr.mxu0 0.0
      %589 = vmatpush1.msra.mxu0 0.0
      %590 = vmatprep.subr.mxu0 0.0
      %591 = vmatpush1.msra.mxu0 0.0
      %592 = vmatprep.subr.mxu0 0.0
      %593 = vmatpush1.msra.mxu0 0.0
      %594 = vmatprep.subr.mxu0 0.0
      %595 = vmatpush1.msra.mxu0 0.0
      %596 = vmatprep.subr.mxu0 0.0
      %597 = vmatpush1.msra.mxu0 0.0
      %598 = vmatprep.subr.mxu0 0.0
      %599 = vmatpush1.msra.mxu0 0.0
      %600 = vmatprep.subr.mxu0 0.0
      %601 = vmatpush1.msra.mxu0 0.0
      %602 = vmatprep.subr.mxu0 0.0
      %603 = vmatpush1.msra.mxu0 0.0
      %604 = vmatprep.subr.mxu0 0.0
      %605 = vmatpush1.msra.mxu0 0.0
      %606 = vmatprep.subr.mxu0 0.0
      %607 = vmatpush1.msra.mxu0 0.0
      %608 = vmatprep.subr.mxu0 0.0
      %609 = vmatpush1.msra.mxu0 0.0
      %610 = vmatprep.subr.mxu0 0.0
      %611 = vmatpush1.msra.mxu0 0.0
      %612 = vmatprep.subr.mxu0 0.0
      %613 = vmatpush1.msra.mxu0 0.0
      %614 = vmatprep.subr.mxu0 0.0
      %615 = vmatpush1.msra.mxu0 0.0
      %616 = vmatprep.subr.mxu0 0.0
      %617 = vmatpush1.msra.mxu0 0.0
      %618 = vmatprep.subr.mxu0 0.0
      %619 = vmatpush1.msra.mxu0 %v491
      %620 = vmatprep.subr.mxu0 0.0
      %621 = vmatpush2.msra.mxu0 0.0
      %622 = vmatprep.subr.mxu0 0.0
      %623 = vmatpush2.msra.mxu0 0.0
      %624 = vmatprep.subr.mxu0 0.0
      %625 = vmatpush2.msra.mxu0 0.0
      %626 = vmatprep.subr.mxu0 0.0
      %627 = vmatpush2.msra.mxu0 0.0
      %628 = vmatprep.subr.mxu0 0.0
      %629 = vmatpush2.msra.mxu0 0.0
      %630 = vmatprep.subr.mxu0 0.0
      %631 = vmatpush2.msra.mxu0 0.0
      %632 = vmatprep.subr.mxu0 0.0
      %633 = vmatpush2.msra.mxu0 0.0
      %634 = vmatprep.subr.mxu0 0.0
      %635 = vmatpush2.msra.mxu0 0.0
      %636 = vmatprep.subr.mxu0 0.0
      %637 = vmatpush2.msra.mxu0 0.0
      %638 = vmatprep.subr.mxu0 0.0
      %639 = vmatpush2.msra.mxu0 0.0
      %640 = vmatprep.subr.mxu0 0.0
      %641 = vmatpush2.msra.mxu0 0.0
      %642 = vmatprep.subr.mxu0 0.0
      %643 = vmatpush2.msra.mxu0 0.0
      %644 = vmatprep.subr.mxu0 0.0
      %645 = vmatpush2.msra.mxu0 0.0
      %646 = vmatprep.subr.mxu0 0.0
      %647 = vmatpush2.msra.mxu0 0.0
      %648 = vmatprep.subr.mxu0 0.0
      %649 = vmatpush2.msra.mxu0 0.0
      %650 = vmatprep.subr.mxu0 0.0
      %651 = vmatpush2.msra.mxu0 0.0
      %652 = vmatprep.mubr.f32.mxu0 0.0
      %653 = vmatmul.mubr.f32.gmra.mxu0 %v586
      %v654 = vpop.f32.mrf.mxu0
      %v655 = vadd.f32 0.0, %v654
      %v656 = vpop.f32.mrf.mxu0
      %657 = vdwg.mxu0
      %658 = vrot.lane.b32.xlu0 %v495, 112
      %v659 = vpop.permute.xlu0 %658
      %660 = vrot.lane.b32.xlu0 %v489, 112
      %v661 = vpop.permute.xlu0 %660
      %v662 = vsel %vm496, %v659, 0
      %v664 = vsel %vm496, %v661, 0
      %666 = vmatprep.subr.mxu0 0.0
      %667 = vmatpush1.xpose.msra.mxu0 0.0
      %668 = vmatprep.subr.mxu0 0.0
      %669 = vmatpush1.xpose.msra.mxu0 0.0
      %670 = vmatprep.subr.mxu0 0.0
      %671 = vmatpush1.xpose.msra.mxu0 0.0
      %672 = vmatprep.subr.mxu0 0.0
      %673 = vmatpush1.xpose.msra.mxu0 0.0
      %674 = vmatprep.subr.mxu0 0.0
      %675 = vmatpush1.xpose.msra.mxu0 0.0
      %676 = vmatprep.subr.mxu0 0.0
      %677 = vmatpush1.xpose.msra.mxu0 0.0
      %678 = vmatprep.subr.mxu0 0.0
      %679 = vmatpush1.xpose.msra.mxu0 0.0
      %680 = vmatprep.subr.mxu0 0.0
      %681 = vmatpush1.xpose.msra.mxu0 0.0
      %682 = vmatprep.subr.mxu0 0.0
      %683 = vmatpush1.xpose.msra.mxu0 0.0
      %684 = vmatprep.subr.mxu0 0.0
      %685 = vmatpush1.xpose.msra.mxu0 0.0
      %686 = vmatprep.subr.mxu0 0.0
      %687 = vmatpush1.xpose.msra.mxu0 0.0
      %688 = vmatprep.subr.mxu0 0.0
      %689 = vmatpush1.xpose.msra.mxu0 0.0
      %690 = vmatprep.subr.mxu0 0.0
      %691 = vmatpush1.xpose.msra.mxu0 0.0
      %692 = vmatprep.subr.mxu0 0.0
      %693 = vmatpush1.xpose.msra.mxu0 0.0
      %694 = vmatprep.subr.mxu0 0.0
      %695 = vmatpush1.xpose.msra.mxu0 0.0
      %696 = vmatprep.subr.mxu0 0.0
      %697 = vmatpush1.xpose.msra.mxu0 %v664
      %698 = vmatprep.subr.mxu0 0.0
      %699 = vmatpush2.xpose.msra.mxu0 0.0
      %700 = vmatprep.subr.mxu0 0.0
      %701 = vmatpush2.xpose.msra.mxu0 0.0
      %702 = vmatprep.subr.mxu0 0.0
      %703 = vmatpush2.xpose.msra.mxu0 0.0
      %704 = vmatprep.subr.mxu0 0.0
      %705 = vmatpush2.xpose.msra.mxu0 0.0
      %706 = vmatprep.subr.mxu0 0.0
      %707 = vmatpush2.xpose.msra.mxu0 0.0
      %708 = vmatprep.subr.mxu0 0.0
      %709 = vmatpush2.xpose.msra.mxu0 0.0
      %710 = vmatprep.subr.mxu0 0.0
      %711 = vmatpush2.xpose.msra.mxu0 0.0
      %712 = vmatprep.subr.mxu0 0.0
      %713 = vmatpush2.xpose.msra.mxu0 0.0
      %714 = vmatprep.subr.mxu0 0.0
      %715 = vmatpush2.xpose.msra.mxu0 0.0
      %716 = vmatprep.subr.mxu0 0.0
      %717 = vmatpush2.xpose.msra.mxu0 0.0
      %718 = vmatprep.subr.mxu0 0.0
      %719 = vmatpush2.xpose.msra.mxu0 0.0
      %720 = vmatprep.subr.mxu0 0.0
      %721 = vmatpush2.xpose.msra.mxu0 0.0
      %722 = vmatprep.subr.mxu0 0.0
      %723 = vmatpush2.xpose.msra.mxu0 0.0
      %724 = vmatprep.subr.mxu0 0.0
      %725 = vmatpush2.xpose.msra.mxu0 0.0
      %726 = vmatprep.subr.mxu0 0.0
      %727 = vmatpush2.xpose.msra.mxu0 0.0
      %728 = vmatprep.subr.mxu0 0.0
      %729 = vmatpush2.xpose.msra.mxu0 0.0
      %730 = vmatprep.mubr.f32.mxu0 0.0
      %731 = vmatmul.mubr.f32.gmra.mxu0 %v662
      %v732 = vpop.f32.mrf.mxu0
      %v733 = vadd.f32 0.0, %v732
      %v734 = vpop.f32.mrf.mxu0
      %735 = vdwg.mxu0
      %v736 = vsel %vm573, %v733, -inf
      %737 = vmax.xlane.f32.xlu0 %v736
      %v738 = vpop.xlane.xlu0 %737
      %v739 = vsub.f32 %v733, %v738
      %v740 = vmul.f32 %v739, 1.442695
      %v741 = vpow.pop %v740
      %v742 = vsel %vm573, %v741, 0.0
      %743 = vadd.xlane.f32.xlu0 %v742
      %v744 = vpop.xlane.xlu0 %743
      %v745 = vrcp.pop %v744
      %v746 = vmul.f32 %v741, %v745
      %748 = vrot.lane.b32.xlu0 %v491, 112
      %v749 = vpop.permute.xlu0 %748
      %v752 = vsel %vm573, %v746, 0
      %754 = vmatprep.subr.mxu0 0.0
      %755 = vmatpush1.msra.mxu0 0.0
      %756 = vmatprep.subr.mxu0 0.0
      %757 = vmatpush1.msra.mxu0 0.0
      %758 = vmatprep.subr.mxu0 0.0
      %759 = vmatpush1.msra.mxu0 0.0
      %760 = vmatprep.subr.mxu0 0.0
      %761 = vmatpush1.msra.mxu0 0.0
      %762 = vmatprep.subr.mxu0 0.0
      %763 = vmatpush1.msra.mxu0 0.0
      %764 = vmatprep.subr.mxu0 0.0
      %765 = vmatpush1.msra.mxu0 0.0
      %766 = vmatprep.subr.mxu0 0.0
      %767 = vmatpush1.msra.mxu0 0.0
      %768 = vmatprep.subr.mxu0 0.0
      %769 = vmatpush1.msra.mxu0 0.0
      %770 = vmatprep.subr.mxu0 0.0
      %771 = vmatpush1.msra.mxu0 0.0
      %772 = vmatprep.subr.mxu0 0.0
      %773 = vmatpush1.msra.mxu0 0.0
      %774 = vmatprep.subr.mxu0 0.0
      %775 = vmatpush1.msra.mxu0 0.0
      %776 = vmatprep.subr.mxu0 0.0
      %777 = vmatpush1.msra.mxu0 0.0
      %778 = vmatprep.subr.mxu0 0.0
      %779 = vmatpush1.msra.mxu0 0.0
      %780 = vmatprep.subr.mxu0 0.0
      %781 = vmatpush1.msra.mxu0 0.0
      %782 = vmatprep.subr.mxu0 0.0
      %783 = vmatpush1.msra.mxu0 0.0
      %784 = vmatprep.subr.mxu0 0.0
      %785 = vmatpush1.msra.mxu0 %v749
      %786 = vmatprep.subr.mxu0 0.0
      %787 = vmatpush2.msra.mxu0 0.0
      %788 = vmatprep.subr.mxu0 0.0
      %789 = vmatpush2.msra.mxu0 0.0
      %790 = vmatprep.subr.mxu0 0.0
      %791 = vmatpush2.msra.mxu0 0.0
      %792 = vmatprep.subr.mxu0 0.0
      %793 = vmatpush2.msra.mxu0 0.0
      %794 = vmatprep.subr.mxu0 0.0
      %795 = vmatpush2.msra.mxu0 0.0
      %796 = vmatprep.subr.mxu0 0.0
      %797 = vmatpush2.msra.mxu0 0.0
      %798 = vmatprep.subr.mxu0 0.0
      %799 = vmatpush2.msra.mxu0 0.0
      %800 = vmatprep.subr.mxu0 0.0
      %801 = vmatpush2.msra.mxu0 0.0
      %802 = vmatprep.subr.mxu0 0.0
      %803 = vmatpush2.msra.mxu0 0.0
      %804 = vmatprep.subr.mxu0 0.0
      %805 = vmatpush2.msra.mxu0 0.0
      %806 = vmatprep.subr.mxu0 0.0
      %807 = vmatpush2.msra.mxu0 0.0
      %808 = vmatprep.subr.mxu0 0.0
      %809 = vmatpush2.msra.mxu0 0.0
      %810 = vmatprep.subr.mxu0 0.0
      %811 = vmatpush2.msra.mxu0 0.0
      %812 = vmatprep.subr.mxu0 0.0
      %813 = vmatpush2.msra.mxu0 0.0
      %814 = vmatprep.subr.mxu0 0.0
      %815 = vmatpush2.msra.mxu0 0.0
      %816 = vmatprep.subr.mxu0 0.0
      %817 = vmatpush2.msra.mxu0 0.0
      %818 = vmatprep.mubr.f32.mxu0 0.0
      %819 = vmatmul.mubr.f32.gmra.mxu0 %v752
      %v820 = vpop.f32.mrf.mxu0
      %v821 = vadd.f32 0.0, %v820
      %v822 = vpop.f32.mrf.mxu0
      %823 = vdwg.mxu0
      %824 = vrot.lane.b32.xlu0 %v495, 96
      %v825 = vpop.permute.xlu0 %824
      %826 = vrot.lane.b32.xlu0 %v489, 96
      %v827 = vpop.permute.xlu0 %826
      %v828 = vsel %vm496, %v825, 0
      %v830 = vsel %vm496, %v827, 0
      %832 = vmatprep.subr.mxu0 0.0
      %833 = vmatpush1.xpose.msra.mxu0 0.0
      %834 = vmatprep.subr.mxu0 0.0
      %835 = vmatpush1.xpose.msra.mxu0 0.0
      %836 = vmatprep.subr.mxu0 0.0
      %837 = vmatpush1.xpose.msra.mxu0 0.0
      %838 = vmatprep.subr.mxu0 0.0
      %839 = vmatpush1.xpose.msra.mxu0 0.0
      %840 = vmatprep.subr.mxu0 0.0
      %841 = vmatpush1.xpose.msra.mxu0 0.0
      %842 = vmatprep.subr.mxu0 0.0
      %843 = vmatpush1.xpose.msra.mxu0 0.0
      %844 = vmatprep.subr.mxu0 0.0
      %845 = vmatpush1.xpose.msra.mxu0 0.0
      %846 = vmatprep.subr.mxu0 0.0
      %847 = vmatpush1.xpose.msra.mxu0 0.0
      %848 = vmatprep.subr.mxu0 0.0
      %849 = vmatpush1.xpose.msra.mxu0 0.0
      %850 = vmatprep.subr.mxu0 0.0
      %851 = vmatpush1.xpose.msra.mxu0 0.0
      %852 = vmatprep.subr.mxu0 0.0
      %853 = vmatpush1.xpose.msra.mxu0 0.0
      %854 = vmatprep.subr.mxu0 0.0
      %855 = vmatpush1.xpose.msra.mxu0 0.0
      %856 = vmatprep.subr.mxu0 0.0
      %857 = vmatpush1.xpose.msra.mxu0 0.0
      %858 = vmatprep.subr.mxu0 0.0
      %859 = vmatpush1.xpose.msra.mxu0 0.0
      %860 = vmatprep.subr.mxu0 0.0
      %861 = vmatpush1.xpose.msra.mxu0 0.0
      %862 = vmatprep.subr.mxu0 0.0
      %863 = vmatpush1.xpose.msra.mxu0 %v830
      %864 = vmatprep.subr.mxu0 0.0
      %865 = vmatpush2.xpose.msra.mxu0 0.0
      %866 = vmatprep.subr.mxu0 0.0
      %867 = vmatpush2.xpose.msra.mxu0 0.0
      %868 = vmatprep.subr.mxu0 0.0
      %869 = vmatpush2.xpose.msra.mxu0 0.0
      %870 = vmatprep.subr.mxu0 0.0
      %871 = vmatpush2.xpose.msra.mxu0 0.0
      %872 = vmatprep.subr.mxu0 0.0
      %873 = vmatpush2.xpose.msra.mxu0 0.0
      %874 = vmatprep.subr.mxu0 0.0
      %875 = vmatpush2.xpose.msra.mxu0 0.0
      %876 = vmatprep.subr.mxu0 0.0
      %877 = vmatpush2.xpose.msra.mxu0 0.0
      %878 = vmatprep.subr.mxu0 0.0
      %879 = vmatpush2.xpose.msra.mxu0 0.0
      %880 = vmatprep.subr.mxu0 0.0
      %881 = vmatpush2.xpose.msra.mxu0 0.0
      %882 = vmatprep.subr.mxu0 0.0
      %883 = vmatpush2.xpose.msra.mxu0 0.0
      %884 = vmatprep.subr.mxu0 0.0
      %885 = vmatpush2.xpose.msra.mxu0 0.0
      %886 = vmatprep.subr.mxu0 0.0
      %887 = vmatpush2.xpose.msra.mxu0 0.0
      %888 = vmatprep.subr.mxu0 0.0
      %889 = vmatpush2.xpose.msra.mxu0 0.0
      %890 = vmatprep.subr.mxu0 0.0
      %891 = vmatpush2.xpose.msra.mxu0 0.0
      %892 = vmatprep.subr.mxu0 0.0
      %893 = vmatpush2.xpose.msra.mxu0 0.0
      %894 = vmatprep.subr.mxu0 0.0
      %895 = vmatpush2.xpose.msra.mxu0 0.0
      %896 = vmatprep.mubr.f32.mxu0 0.0
      %897 = vmatmul.mubr.f32.gmra.mxu0 %v828
      %v898 = vpop.f32.mrf.mxu0
      %v899 = vadd.f32 0.0, %v898
      %v900 = vpop.f32.mrf.mxu0
      %901 = vdwg.mxu0
      %v902 = vsel %vm573, %v899, -inf
      %903 = vmax.xlane.f32.xlu0 %v902
      %v904 = vpop.xlane.xlu0 %903
      %v905 = vsub.f32 %v899, %v904
      %v906 = vmul.f32 %v905, 1.442695
      %v907 = vpow.pop %v906
      %v908 = vsel %vm573, %v907, 0.0
      %909 = vadd.xlane.f32.xlu0 %v908
      %v910 = vpop.xlane.xlu0 %909
      %v911 = vrcp.pop %v910
      %v912 = vmul.f32 %v907, %v911
      %913 = vrot.lane.b32.xlu0 %v491, 96
      %v914 = vpop.permute.xlu0 %913
      %v917 = vsel %vm573, %v912, 0
      %919 = vmatprep.subr.mxu0 0.0
      %920 = vmatpush1.msra.mxu0 0.0
      %921 = vmatprep.subr.mxu0 0.0
      %922 = vmatpush1.msra.mxu0 0.0
      %923 = vmatprep.subr.mxu0 0.0
      %924 = vmatpush1.msra.mxu0 0.0
      %925 = vmatprep.subr.mxu0 0.0
      %926 = vmatpush1.msra.mxu0 0.0
      %927 = vmatprep.subr.mxu0 0.0
      %928 = vmatpush1.msra.mxu0 0.0
      %929 = vmatprep.subr.mxu0 0.0
      %930 = vmatpush1.msra.mxu0 0.0
      %931 = vmatprep.subr.mxu0 0.0
      %932 = vmatpush1.msra.mxu0 0.0
      %933 = vmatprep.subr.mxu0 0.0
      %934 = vmatpush1.msra.mxu0 0.0
      %935 = vmatprep.subr.mxu0 0.0
      %936 = vmatpush1.msra.mxu0 0.0
      %937 = vmatprep.subr.mxu0 0.0
      %938 = vmatpush1.msra.mxu0 0.0
      %939 = vmatprep.subr.mxu0 0.0
      %940 = vmatpush1.msra.mxu0 0.0
      %941 = vmatprep.subr.mxu0 0.0
      %942 = vmatpush1.msra.mxu0 0.0
      %943 = vmatprep.subr.mxu0 0.0
      %944 = vmatpush1.msra.mxu0 0.0
      %945 = vmatprep.subr.mxu0 0.0
      %946 = vmatpush1.msra.mxu0 0.0
      %947 = vmatprep.subr.mxu0 0.0
      %948 = vmatpush1.msra.mxu0 0.0
      %949 = vmatprep.subr.mxu0 0.0
      %950 = vmatpush1.msra.mxu0 %v914
      %951 = vmatprep.subr.mxu0 0.0
      %952 = vmatpush2.msra.mxu0 0.0
      %953 = vmatprep.subr.mxu0 0.0
      %954 = vmatpush2.msra.mxu0 0.0
      %955 = vmatprep.subr.mxu0 0.0
      %956 = vmatpush2.msra.mxu0 0.0
      %957 = vmatprep.subr.mxu0 0.0
      %958 = vmatpush2.msra.mxu0 0.0
      %959 = vmatprep.subr.mxu0 0.0
      %960 = vmatpush2.msra.mxu0 0.0
      %961 = vmatprep.subr.mxu0 0.0
      %962 = vmatpush2.msra.mxu0 0.0
      %963 = vmatprep.subr.mxu0 0.0
      %964 = vmatpush2.msra.mxu0 0.0
      %965 = vmatprep.subr.mxu0 0.0
      %966 = vmatpush2.msra.mxu0 0.0
      %967 = vmatprep.subr.mxu0 0.0
      %968 = vmatpush2.msra.mxu0 0.0
      %969 = vmatprep.subr.mxu0 0.0
      %970 = vmatpush2.msra.mxu0 0.0
      %971 = vmatprep.subr.mxu0 0.0
      %972 = vmatpush2.msra.mxu0 0.0
      %973 = vmatprep.subr.mxu0 0.0
      %974 = vmatpush2.msra.mxu0 0.0
      %975 = vmatprep.subr.mxu0 0.0
      %976 = vmatpush2.msra.mxu0 0.0
      %977 = vmatprep.subr.mxu0 0.0
      %978 = vmatpush2.msra.mxu0 0.0
      %979 = vmatprep.subr.mxu0 0.0
      %980 = vmatpush2.msra.mxu0 0.0
      %981 = vmatprep.subr.mxu0 0.0
      %982 = vmatpush2.msra.mxu0 0.0
      %983 = vmatprep.mubr.f32.mxu0 0.0
      %984 = vmatmul.mubr.f32.gmra.mxu0 %v917
      %v985 = vpop.f32.mrf.mxu0
      %v986 = vadd.f32 0.0, %v985
      %v987 = vpop.f32.mrf.mxu0
      %988 = vdwg.mxu0
      %989 = vrot.lane.b32.xlu0 %v495, 80
      %v990 = vpop.permute.xlu0 %989
      %991 = vrot.lane.b32.xlu0 %v489, 80
      %v992 = vpop.permute.xlu0 %991
      %v993 = vsel %vm496, %v990, 0
      %v995 = vsel %vm496, %v992, 0
      %997 = vmatprep.subr.mxu0 0.0
      %998 = vmatpush1.xpose.msra.mxu0 0.0
      %999 = vmatprep.subr.mxu0 0.0
      %1000 = vmatpush1.xpose.msra.mxu0 0.0
      %1001 = vmatprep.subr.mxu0 0.0
      %1002 = vmatpush1.xpose.msra.mxu0 0.0
      %1003 = vmatprep.subr.mxu0 0.0
      %1004 = vmatpush1.xpose.msra.mxu0 0.0
      %1005 = vmatprep.subr.mxu0 0.0
      %1006 = vmatpush1.xpose.msra.mxu0 0.0
      %1007 = vmatprep.subr.mxu0 0.0
      %1008 = vmatpush1.xpose.msra.mxu0 0.0
      %1009 = vmatprep.subr.mxu0 0.0
      %1010 = vmatpush1.xpose.msra.mxu0 0.0
      %1011 = vmatprep.subr.mxu0 0.0
      %1012 = vmatpush1.xpose.msra.mxu0 0.0
      %1013 = vmatprep.subr.mxu0 0.0
      %1014 = vmatpush1.xpose.msra.mxu0 0.0
      %1015 = vmatprep.subr.mxu0 0.0
      %1016 = vmatpush1.xpose.msra.mxu0 0.0
      %1017 = vmatprep.subr.mxu0 0.0
      %1018 = vmatpush1.xpose.msra.mxu0 0.0
      %1019 = vmatprep.subr.mxu0 0.0
      %1020 = vmatpush1.xpose.msra.mxu0 0.0
      %1021 = vmatprep.subr.mxu0 0.0
      %1022 = vmatpush1.xpose.msra.mxu0 0.0
      %1023 = vmatprep.subr.mxu0 0.0
      %1024 = vmatpush1.xpose.msra.mxu0 0.0
      %1025 = vmatprep.subr.mxu0 0.0
      %1026 = vmatpush1.xpose.msra.mxu0 0.0
      %1027 = vmatprep.subr.mxu0 0.0
      %1028 = vmatpush1.xpose.msra.mxu0 %v995
      %1029 = vmatprep.subr.mxu0 0.0
      %1030 = vmatpush2.xpose.msra.mxu0 0.0
      %1031 = vmatprep.subr.mxu0 0.0
      %1032 = vmatpush2.xpose.msra.mxu0 0.0
      %1033 = vmatprep.subr.mxu0 0.0
      %1034 = vmatpush2.xpose.msra.mxu0 0.0
      %1035 = vmatprep.subr.mxu0 0.0
      %1036 = vmatpush2.xpose.msra.mxu0 0.0
      %1037 = vmatprep.subr.mxu0 0.0
      %1038 = vmatpush2.xpose.msra.mxu0 0.0
      %1039 = vmatprep.subr.mxu0 0.0
      %1040 = vmatpush2.xpose.msra.mxu0 0.0
      %1041 = vmatprep.subr.mxu0 0.0
      %1042 = vmatpush2.xpose.msra.mxu0 0.0
      %1043 = vmatprep.subr.mxu0 0.0
      %1044 = vmatpush2.xpose.msra.mxu0 0.0
      %1045 = vmatprep.subr.mxu0 0.0
      %1046 = vmatpush2.xpose.msra.mxu0 0.0
      %1047 = vmatprep.subr.mxu0 0.0
      %1048 = vmatpush2.xpose.msra.mxu0 0.0
      %1049 = vmatprep.subr.mxu0 0.0
      %1050 = vmatpush2.xpose.msra.mxu0 0.0
      %1051 = vmatprep.subr.mxu0 0.0
      %1052 = vmatpush2.xpose.msra.mxu0 0.0
      %1053 = vmatprep.subr.mxu0 0.0
      %1054 = vmatpush2.xpose.msra.mxu0 0.0
      %1055 = vmatprep.subr.mxu0 0.0
      %1056 = vmatpush2.xpose.msra.mxu0 0.0
      %1057 = vmatprep.subr.mxu0 0.0
      %1058 = vmatpush2.xpose.msra.mxu0 0.0
      %1059 = vmatprep.subr.mxu0 0.0
      %1060 = vmatpush2.xpose.msra.mxu0 0.0
      %1061 = vmatprep.mubr.f32.mxu0 0.0
      %1062 = vmatmul.mubr.f32.gmra.mxu0 %v993
      %v1063 = vpop.f32.mrf.mxu0
      %v1064 = vadd.f32 0.0, %v1063
      %v1065 = vpop.f32.mrf.mxu0
      %1066 = vdwg.mxu0
      %v1067 = vsel %vm573, %v1064, -inf
      %1068 = vmax.xlane.f32.xlu0 %v1067
      %v1069 = vpop.xlane.xlu0 %1068
      %v1070 = vsub.f32 %v1064, %v1069
      %v1071 = vmul.f32 %v1070, 1.442695
      %v1072 = vpow.pop %v1071
      %v1073 = vsel %vm573, %v1072, 0.0
      %1074 = vadd.xlane.f32.xlu0 %v1073
      %v1075 = vpop.xlane.xlu0 %1074
      %v1076 = vrcp.pop %v1075
      %v1077 = vmul.f32 %v1072, %v1076
      %1078 = vrot.lane.b32.xlu0 %v491, 80
      %v1079 = vpop.permute.xlu0 %1078
      %v1082 = vsel %vm573, %v1077, 0
      %1084 = vmatprep.subr.mxu0 0.0
      %1085 = vmatpush1.msra.mxu0 0.0
      %1086 = vmatprep.subr.mxu0 0.0
      %1087 = vmatpush1.msra.mxu0 0.0
      %1088 = vmatprep.subr.mxu0 0.0
      %1089 = vmatpush1.msra.mxu0 0.0
      %1090 = vmatprep.subr.mxu0 0.0
      %1091 = vmatpush1.msra.mxu0 0.0
      %1092 = vmatprep.subr.mxu0 0.0
      %1093 = vmatpush1.msra.mxu0 0.0
      %1094 = vmatprep.subr.mxu0 0.0
      %1095 = vmatpush1.msra.mxu0 0.0
      %1096 = vmatprep.subr.mxu0 0.0
      %1097 = vmatpush1.msra.mxu0 0.0
      %1098 = vmatprep.subr.mxu0 0.0
      %1099 = vmatpush1.msra.mxu0 0.0
      %1100 = vmatprep.subr.mxu0 0.0
      %1101 = vmatpush1.msra.mxu0 0.0
      %1102 = vmatprep.subr.mxu0 0.0
      %1103 = vmatpush1.msra.mxu0 0.0
      %1104 = vmatprep.subr.mxu0 0.0
      %1105 = vmatpush1.msra.mxu0 0.0
      %1106 = vmatprep.subr.mxu0 0.0
      %1107 = vmatpush1.msra.mxu0 0.0
      %1108 = vmatprep.subr.mxu0 0.0
      %1109 = vmatpush1.msra.mxu0 0.0
      %1110 = vmatprep.subr.mxu0 0.0
      %1111 = vmatpush1.msra.mxu0 0.0
      %1112 = vmatprep.subr.mxu0 0.0
      %1113 = vmatpush1.msra.mxu0 0.0
      %1114 = vmatprep.subr.mxu0 0.0
      %1115 = vmatpush1.msra.mxu0 %v1079
      %1116 = vmatprep.subr.mxu0 0.0
      %1117 = vmatpush2.msra.mxu0 0.0
      %1118 = vmatprep.subr.mxu0 0.0
      %1119 = vmatpush2.msra.mxu0 0.0
      %1120 = vmatprep.subr.mxu0 0.0
      %1121 = vmatpush2.msra.mxu0 0.0
      %1122 = vmatprep.subr.mxu0 0.0
      %1123 = vmatpush2.msra.mxu0 0.0
      %1124 = vmatprep.subr.mxu0 0.0
      %1125 = vmatpush2.msra.mxu0 0.0
      %1126 = vmatprep.subr.mxu0 0.0
      %1127 = vmatpush2.msra.mxu0 0.0
      %1128 = vmatprep.subr.mxu0 0.0
      %1129 = vmatpush2.msra.mxu0 0.0
      %1130 = vmatprep.subr.mxu0 0.0
      %1131 = vmatpush2.msra.mxu0 0.0
      %1132 = vmatprep.subr.mxu0 0.0
      %1133 = vmatpush2.msra.mxu0 0.0
      %1134 = vmatprep.subr.mxu0 0.0
      %1135 = vmatpush2.msra.mxu0 0.0
      %1136 = vmatprep.subr.mxu0 0.0
      %1137 = vmatpush2.msra.mxu0 0.0
      %1138 = vmatprep.subr.mxu0 0.0
      %1139 = vmatpush2.msra.mxu0 0.0
      %1140 = vmatprep.subr.mxu0 0.0
      %1141 = vmatpush2.msra.mxu0 0.0
      %1142 = vmatprep.subr.mxu0 0.0
      %1143 = vmatpush2.msra.mxu0 0.0
      %1144 = vmatprep.subr.mxu0 0.0
      %1145 = vmatpush2.msra.mxu0 0.0
      %1146 = vmatprep.subr.mxu0 0.0
      %1147 = vmatpush2.msra.mxu0 0.0
      %1148 = vmatprep.mubr.f32.mxu0 0.0
      %1149 = vmatmul.mubr.f32.gmra.mxu0 %v1082
      %v1150 = vpop.f32.mrf.mxu0
      %v1151 = vadd.f32 0.0, %v1150
      %v1152 = vpop.f32.mrf.mxu0
      %1153 = vdwg.mxu0
      %1154 = vrot.lane.b32.xlu0 %v495, 64
      %v1155 = vpop.permute.xlu0 %1154
      %1156 = vrot.lane.b32.xlu0 %v489, 64
      %v1157 = vpop.permute.xlu0 %1156
      %v1158 = vsel %vm496, %v1155, 0
      %v1160 = vsel %vm496, %v1157, 0
      %1162 = vmatprep.subr.mxu0 0.0
      %1163 = vmatpush1.xpose.msra.mxu0 0.0
      %1164 = vmatprep.subr.mxu0 0.0
      %1165 = vmatpush1.xpose.msra.mxu0 0.0
      %1166 = vmatprep.subr.mxu0 0.0
      %1167 = vmatpush1.xpose.msra.mxu0 0.0
      %1168 = vmatprep.subr.mxu0 0.0
      %1169 = vmatpush1.xpose.msra.mxu0 0.0
      %1170 = vmatprep.subr.mxu0 0.0
      %1171 = vmatpush1.xpose.msra.mxu0 0.0
      %1172 = vmatprep.subr.mxu0 0.0
      %1173 = vmatpush1.xpose.msra.mxu0 0.0
      %1174 = vmatprep.subr.mxu0 0.0
      %1175 = vmatpush1.xpose.msra.mxu0 0.0
      %1176 = vmatprep.subr.mxu0 0.0
      %1177 = vmatpush1.xpose.msra.mxu0 0.0
      %1178 = vmatprep.subr.mxu0 0.0
      %1179 = vmatpush1.xpose.msra.mxu0 0.0
      %1180 = vmatprep.subr.mxu0 0.0
      %1181 = vmatpush1.xpose.msra.mxu0 0.0
      %1182 = vmatprep.subr.mxu0 0.0
      %1183 = vmatpush1.xpose.msra.mxu0 0.0
      %1184 = vmatprep.subr.mxu0 0.0
      %1185 = vmatpush1.xpose.msra.mxu0 0.0
      %1186 = vmatprep.subr.mxu0 0.0
      %1187 = vmatpush1.xpose.msra.mxu0 0.0
      %1188 = vmatprep.subr.mxu0 0.0
      %1189 = vmatpush1.xpose.msra.mxu0 0.0
      %1190 = vmatprep.subr.mxu0 0.0
      %1191 = vmatpush1.xpose.msra.mxu0 0.0
      %1192 = vmatprep.subr.mxu0 0.0
      %1193 = vmatpush1.xpose.msra.mxu0 %v1160
      %1194 = vmatprep.subr.mxu0 0.0
      %1195 = vmatpush2.xpose.msra.mxu0 0.0
      %1196 = vmatprep.subr.mxu0 0.0
      %1197 = vmatpush2.xpose.msra.mxu0 0.0
      %1198 = vmatprep.subr.mxu0 0.0
      %1199 = vmatpush2.xpose.msra.mxu0 0.0
      %1200 = vmatprep.subr.mxu0 0.0
      %1201 = vmatpush2.xpose.msra.mxu0 0.0
      %1202 = vmatprep.subr.mxu0 0.0
      %1203 = vmatpush2.xpose.msra.mxu0 0.0
      %1204 = vmatprep.subr.mxu0 0.0
      %1205 = vmatpush2.xpose.msra.mxu0 0.0
      %1206 = vmatprep.subr.mxu0 0.0
      %1207 = vmatpush2.xpose.msra.mxu0 0.0
      %1208 = vmatprep.subr.mxu0 0.0
      %1209 = vmatpush2.xpose.msra.mxu0 0.0
      %1210 = vmatprep.subr.mxu0 0.0
      %1211 = vmatpush2.xpose.msra.mxu0 0.0
      %1212 = vmatprep.subr.mxu0 0.0
      %1213 = vmatpush2.xpose.msra.mxu0 0.0
      %1214 = vmatprep.subr.mxu0 0.0
      %1215 = vmatpush2.xpose.msra.mxu0 0.0
      %1216 = vmatprep.subr.mxu0 0.0
      %1217 = vmatpush2.xpose.msra.mxu0 0.0
      %1218 = vmatprep.subr.mxu0 0.0
      %1219 = vmatpush2.xpose.msra.mxu0 0.0
      %1220 = vmatprep.subr.mxu0 0.0
      %1221 = vmatpush2.xpose.msra.mxu0 0.0
      %1222 = vmatprep.subr.mxu0 0.0
      %1223 = vmatpush2.xpose.msra.mxu0 0.0
      %1224 = vmatprep.subr.mxu0 0.0
      %1225 = vmatpush2.xpose.msra.mxu0 0.0
      %1226 = vmatprep.mubr.f32.mxu0 0.0
      %1227 = vmatmul.mubr.f32.gmra.mxu0 %v1158
      %v1228 = vpop.f32.mrf.mxu0
      %v1229 = vadd.f32 0.0, %v1228
      %v1230 = vpop.f32.mrf.mxu0
      %1231 = vdwg.mxu0
      %v1232 = vsel %vm573, %v1229, -inf
      %1233 = vmax.xlane.f32.xlu0 %v1232
      %v1234 = vpop.xlane.xlu0 %1233
      %v1235 = vsub.f32 %v1229, %v1234
      %v1236 = vmul.f32 %v1235, 1.442695
      %v1237 = vpow.pop %v1236
      %v1238 = vsel %vm573, %v1237, 0.0
      %1239 = vadd.xlane.f32.xlu0 %v1238
      %v1240 = vpop.xlane.xlu0 %1239
      %v1241 = vrcp.pop %v1240
      %v1242 = vmul.f32 %v1237, %v1241
      %1243 = vrot.lane.b32.xlu0 %v491, 64
      %v1244 = vpop.permute.xlu0 %1243
      %v1247 = vsel %vm573, %v1242, 0
      %1249 = vmatprep.subr.mxu0 0.0
      %1250 = vmatpush1.msra.mxu0 0.0
      %1251 = vmatprep.subr.mxu0 0.0
      %1252 = vmatpush1.msra.mxu0 0.0
      %1253 = vmatprep.subr.mxu0 0.0
      %1254 = vmatpush1.msra.mxu0 0.0
      %1255 = vmatprep.subr.mxu0 0.0
      %1256 = vmatpush1.msra.mxu0 0.0
      %1257 = vmatprep.subr.mxu0 0.0
      %1258 = vmatpush1.msra.mxu0 0.0
      %1259 = vmatprep.subr.mxu0 0.0
      %1260 = vmatpush1.msra.mxu0 0.0
      %1261 = vmatprep.subr.mxu0 0.0
      %1262 = vmatpush1.msra.mxu0 0.0
      %1263 = vmatprep.subr.mxu0 0.0
      %1264 = vmatpush1.msra.mxu0 0.0
      %1265 = vmatprep.subr.mxu0 0.0
      %1266 = vmatpush1.msra.mxu0 0.0
      %1267 = vmatprep.subr.mxu0 0.0
      %1268 = vmatpush1.msra.mxu0 0.0
      %1269 = vmatprep.subr.mxu0 0.0
      %1270 = vmatpush1.msra.mxu0 0.0
      %1271 = vmatprep.subr.mxu0 0.0
      %1272 = vmatpush1.msra.mxu0 0.0
      %1273 = vmatprep.subr.mxu0 0.0
      %1274 = vmatpush1.msra.mxu0 0.0
      %1275 = vmatprep.subr.mxu0 0.0
      %1276 = vmatpush1.msra.mxu0 0.0
      %1277 = vmatprep.subr.mxu0 0.0
      %1278 = vmatpush1.msra.mxu0 0.0
      %1279 = vmatprep.subr.mxu0 0.0
      %1280 = vmatpush1.msra.mxu0 %v1244
      %1281 = vmatprep.subr.mxu0 0.0
      %1282 = vmatpush2.msra.mxu0 0.0
      %1283 = vmatprep.subr.mxu0 0.0
      %1284 = vmatpush2.msra.mxu0 0.0
      %1285 = vmatprep.subr.mxu0 0.0
      %1286 = vmatpush2.msra.mxu0 0.0
      %1287 = vmatprep.subr.mxu0 0.0
      %1288 = vmatpush2.msra.mxu0 0.0
      %1289 = vmatprep.subr.mxu0 0.0
      %1290 = vmatpush2.msra.mxu0 0.0
      %1291 = vmatprep.subr.mxu0 0.0
      %1292 = vmatpush2.msra.mxu0 0.0
      %1293 = vmatprep.subr.mxu0 0.0
      %1294 = vmatpush2.msra.mxu0 0.0
      %1295 = vmatprep.subr.mxu0 0.0
      %1296 = vmatpush2.msra.mxu0 0.0
      %1297 = vmatprep.subr.mxu0 0.0
      %1298 = vmatpush2.msra.mxu0 0.0
      %1299 = vmatprep.subr.mxu0 0.0
      %1300 = vmatpush2.msra.mxu0 0.0
      %1301 = vmatprep.subr.mxu0 0.0
      %1302 = vmatpush2.msra.mxu0 0.0
      %1303 = vmatprep.subr.mxu0 0.0
      %1304 = vmatpush2.msra.mxu0 0.0
      %1305 = vmatprep.subr.mxu0 0.0
      %1306 = vmatpush2.msra.mxu0 0.0
      %1307 = vmatprep.subr.mxu0 0.0
      %1308 = vmatpush2.msra.mxu0 0.0
      %1309 = vmatprep.subr.mxu0 0.0
      %1310 = vmatpush2.msra.mxu0 0.0
      %1311 = vmatprep.subr.mxu0 0.0
      %1312 = vmatpush2.msra.mxu0 0.0
      %1313 = vmatprep.mubr.f32.mxu0 0.0
      %1314 = vmatmul.mubr.f32.gmra.mxu0 %v1247
      %v1315 = vpop.f32.mrf.mxu0
      %v1316 = vadd.f32 0.0, %v1315
      %v1317 = vpop.f32.mrf.mxu0
      %1318 = vdwg.mxu0
      %1319 = vrot.lane.b32.xlu0 %v495, 48
      %v1320 = vpop.permute.xlu0 %1319
      %1321 = vrot.lane.b32.xlu0 %v489, 48
      %v1322 = vpop.permute.xlu0 %1321
      %v1323 = vsel %vm496, %v1320, 0
      %v1325 = vsel %vm496, %v1322, 0
      %1327 = vmatprep.subr.mxu0 0.0
      %1328 = vmatpush1.xpose.msra.mxu0 0.0
      %1329 = vmatprep.subr.mxu0 0.0
      %1330 = vmatpush1.xpose.msra.mxu0 0.0
      %1331 = vmatprep.subr.mxu0 0.0
      %1332 = vmatpush1.xpose.msra.mxu0 0.0
      %1333 = vmatprep.subr.mxu0 0.0
      %1334 = vmatpush1.xpose.msra.mxu0 0.0
      %1335 = vmatprep.subr.mxu0 0.0
      %1336 = vmatpush1.xpose.msra.mxu0 0.0
      %1337 = vmatprep.subr.mxu0 0.0
      %1338 = vmatpush1.xpose.msra.mxu0 0.0
      %1339 = vmatprep.subr.mxu0 0.0
      %1340 = vmatpush1.xpose.msra.mxu0 0.0
      %1341 = vmatprep.subr.mxu0 0.0
      %1342 = vmatpush1.xpose.msra.mxu0 0.0
      %1343 = vmatprep.subr.mxu0 0.0
      %1344 = vmatpush1.xpose.msra.mxu0 0.0
      %1345 = vmatprep.subr.mxu0 0.0
      %1346 = vmatpush1.xpose.msra.mxu0 0.0
      %1347 = vmatprep.subr.mxu0 0.0
      %1348 = vmatpush1.xpose.msra.mxu0 0.0
      %1349 = vmatprep.subr.mxu0 0.0
      %1350 = vmatpush1.xpose.msra.mxu0 0.0
      %1351 = vmatprep.subr.mxu0 0.0
      %1352 = vmatpush1.xpose.msra.mxu0 0.0
      %1353 = vmatprep.subr.mxu0 0.0
      %1354 = vmatpush1.xpose.msra.mxu0 0.0
      %1355 = vmatprep.subr.mxu0 0.0
      %1356 = vmatpush1.xpose.msra.mxu0 0.0
      %1357 = vmatprep.subr.mxu0 0.0
      %1358 = vmatpush1.xpose.msra.mxu0 %v1325
      %1359 = vmatprep.subr.mxu0 0.0
      %1360 = vmatpush2.xpose.msra.mxu0 0.0
      %1361 = vmatprep.subr.mxu0 0.0
      %1362 = vmatpush2.xpose.msra.mxu0 0.0
      %1363 = vmatprep.subr.mxu0 0.0
      %1364 = vmatpush2.xpose.msra.mxu0 0.0
      %1365 = vmatprep.subr.mxu0 0.0
      %1366 = vmatpush2.xpose.msra.mxu0 0.0
      %1367 = vmatprep.subr.mxu0 0.0
      %1368 = vmatpush2.xpose.msra.mxu0 0.0
      %1369 = vmatprep.subr.mxu0 0.0
      %1370 = vmatpush2.xpose.msra.mxu0 0.0
      %1371 = vmatprep.subr.mxu0 0.0
      %1372 = vmatpush2.xpose.msra.mxu0 0.0
      %1373 = vmatprep.subr.mxu0 0.0
      %1374 = vmatpush2.xpose.msra.mxu0 0.0
      %1375 = vmatprep.subr.mxu0 0.0
      %1376 = vmatpush2.xpose.msra.mxu0 0.0
      %1377 = vmatprep.subr.mxu0 0.0
      %1378 = vmatpush2.xpose.msra.mxu0 0.0
      %1379 = vmatprep.subr.mxu0 0.0
      %1380 = vmatpush2.xpose.msra.mxu0 0.0
      %1381 = vmatprep.subr.mxu0 0.0
      %1382 = vmatpush2.xpose.msra.mxu0 0.0
      %1383 = vmatprep.subr.mxu0 0.0
      %1384 = vmatpush2.xpose.msra.mxu0 0.0
      %1385 = vmatprep.subr.mxu0 0.0
      %1386 = vmatpush2.xpose.msra.mxu0 0.0
      %1387 = vmatprep.subr.mxu0 0.0
      %1388 = vmatpush2.xpose.msra.mxu0 0.0
      %1389 = vmatprep.subr.mxu0 0.0
      %1390 = vmatpush2.xpose.msra.mxu0 0.0
      %1391 = vmatprep.mubr.f32.mxu0 0.0
      %1392 = vmatmul.mubr.f32.gmra.mxu0 %v1323
      %v1393 = vpop.f32.mrf.mxu0
      %v1394 = vadd.f32 0.0, %v1393
      %v1395 = vpop.f32.mrf.mxu0
      %1396 = vdwg.mxu0
      %v1397 = vsel %vm573, %v1394, -inf
      %1398 = vmax.xlane.f32.xlu0 %v1397
      %v1399 = vpop.xlane.xlu0 %1398
      %v1400 = vsub.f32 %v1394, %v1399
      %v1401 = vmul.f32 %v1400, 1.442695
      %v1402 = vpow.pop %v1401
      %v1403 = vsel %vm573, %v1402, 0.0
      %1404 = vadd.xlane.f32.xlu0 %v1403
      %v1405 = vpop.xlane.xlu0 %1404
      %v1406 = vrcp.pop %v1405
      %v1407 = vmul.f32 %v1402, %v1406
      %1408 = vrot.lane.b32.xlu0 %v491, 48
      %v1409 = vpop.permute.xlu0 %1408
      %v1412 = vsel %vm573, %v1407, 0
      %1414 = vmatprep.subr.mxu0 0.0
      %1415 = vmatpush1.msra.mxu0 0.0
      %1416 = vmatprep.subr.mxu0 0.0
      %1417 = vmatpush1.msra.mxu0 0.0
      %1418 = vmatprep.subr.mxu0 0.0
      %1419 = vmatpush1.msra.mxu0 0.0
      %1420 = vmatprep.subr.mxu0 0.0
      %1421 = vmatpush1.msra.mxu0 0.0
      %1422 = vmatprep.subr.mxu0 0.0
      %1423 = vmatpush1.msra.mxu0 0.0
      %1424 = vmatprep.subr.mxu0 0.0
      %1425 = vmatpush1.msra.mxu0 0.0
      %1426 = vmatprep.subr.mxu0 0.0
      %1427 = vmatpush1.msra.mxu0 0.0
      %1428 = vmatprep.subr.mxu0 0.0
      %1429 = vmatpush1.msra.mxu0 0.0
      %1430 = vmatprep.subr.mxu0 0.0
      %1431 = vmatpush1.msra.mxu0 0.0
      %1432 = vmatprep.subr.mxu0 0.0
      %1433 = vmatpush1.msra.mxu0 0.0
      %1434 = vmatprep.subr.mxu0 0.0
      %1435 = vmatpush1.msra.mxu0 0.0
      %1436 = vmatprep.subr.mxu0 0.0
      %1437 = vmatpush1.msra.mxu0 0.0
      %1438 = vmatprep.subr.mxu0 0.0
      %1439 = vmatpush1.msra.mxu0 0.0
      %1440 = vmatprep.subr.mxu0 0.0
      %1441 = vmatpush1.msra.mxu0 0.0
      %1442 = vmatprep.subr.mxu0 0.0
      %1443 = vmatpush1.msra.mxu0 0.0
      %1444 = vmatprep.subr.mxu0 0.0
      %1445 = vmatpush1.msra.mxu0 %v1409
      %1446 = vmatprep.subr.mxu0 0.0
      %1447 = vmatpush2.msra.mxu0 0.0
      %1448 = vmatprep.subr.mxu0 0.0
      %1449 = vmatpush2.msra.mxu0 0.0
      %1450 = vmatprep.subr.mxu0 0.0
      %1451 = vmatpush2.msra.mxu0 0.0
      %1452 = vmatprep.subr.mxu0 0.0
      %1453 = vmatpush2.msra.mxu0 0.0
      %1454 = vmatprep.subr.mxu0 0.0
      %1455 = vmatpush2.msra.mxu0 0.0
      %1456 = vmatprep.subr.mxu0 0.0
      %1457 = vmatpush2.msra.mxu0 0.0
      %1458 = vmatprep.subr.mxu0 0.0
      %1459 = vmatpush2.msra.mxu0 0.0
      %1460 = vmatprep.subr.mxu0 0.0
      %1461 = vmatpush2.msra.mxu0 0.0
      %1462 = vmatprep.subr.mxu0 0.0
      %1463 = vmatpush2.msra.mxu0 0.0
      %1464 = vmatprep.subr.mxu0 0.0
      %1465 = vmatpush2.msra.mxu0 0.0
      %1466 = vmatprep.subr.mxu0 0.0
      %1467 = vmatpush2.msra.mxu0 0.0
      %1468 = vmatprep.subr.mxu0 0.0
      %1469 = vmatpush2.msra.mxu0 0.0
      %1470 = vmatprep.subr.mxu0 0.0
      %1471 = vmatpush2.msra.mxu0 0.0
      %1472 = vmatprep.subr.mxu0 0.0
      %1473 = vmatpush2.msra.mxu0 0.0
      %1474 = vmatprep.subr.mxu0 0.0
      %1475 = vmatpush2.msra.mxu0 0.0
      %1476 = vmatprep.subr.mxu0 0.0
      %1477 = vmatpush2.msra.mxu0 0.0
      %1478 = vmatprep.mubr.f32.mxu0 0.0
      %1479 = vmatmul.mubr.f32.gmra.mxu0 %v1412
      %v1480 = vpop.f32.mrf.mxu0
      %v1481 = vadd.f32 0.0, %v1480
      %v1482 = vpop.f32.mrf.mxu0
      %1483 = vdwg.mxu0
      %1484 = vrot.lane.b32.xlu0 %v495, 32
      %v1485 = vpop.permute.xlu0 %1484
      %1486 = vrot.lane.b32.xlu0 %v489, 32
      %v1487 = vpop.permute.xlu0 %1486
      %v1488 = vsel %vm496, %v1485, 0
      %v1490 = vsel %vm496, %v1487, 0
      %1492 = vmatprep.subr.mxu0 0.0
      %1493 = vmatpush1.xpose.msra.mxu0 0.0
      %1494 = vmatprep.subr.mxu0 0.0
      %1495 = vmatpush1.xpose.msra.mxu0 0.0
      %1496 = vmatprep.subr.mxu0 0.0
      %1497 = vmatpush1.xpose.msra.mxu0 0.0
      %1498 = vmatprep.subr.mxu0 0.0
      %1499 = vmatpush1.xpose.msra.mxu0 0.0
      %1500 = vmatprep.subr.mxu0 0.0
      %1501 = vmatpush1.xpose.msra.mxu0 0.0
      %1502 = vmatprep.subr.mxu0 0.0
      %1503 = vmatpush1.xpose.msra.mxu0 0.0
      %1504 = vmatprep.subr.mxu0 0.0
      %1505 = vmatpush1.xpose.msra.mxu0 0.0
      %1506 = vmatprep.subr.mxu0 0.0
      %1507 = vmatpush1.xpose.msra.mxu0 0.0
      %1508 = vmatprep.subr.mxu0 0.0
      %1509 = vmatpush1.xpose.msra.mxu0 0.0
      %1510 = vmatprep.subr.mxu0 0.0
      %1511 = vmatpush1.xpose.msra.mxu0 0.0
      %1512 = vmatprep.subr.mxu0 0.0
      %1513 = vmatpush1.xpose.msra.mxu0 0.0
      %1514 = vmatprep.subr.mxu0 0.0
      %1515 = vmatpush1.xpose.msra.mxu0 0.0
      %1516 = vmatprep.subr.mxu0 0.0
      %1517 = vmatpush1.xpose.msra.mxu0 0.0
      %1518 = vmatprep.subr.mxu0 0.0
      %1519 = vmatpush1.xpose.msra.mxu0 0.0
      %1520 = vmatprep.subr.mxu0 0.0
      %1521 = vmatpush1.xpose.msra.mxu0 0.0
      %1522 = vmatprep.subr.mxu0 0.0
      %1523 = vmatpush1.xpose.msra.mxu0 %v1490
      %1524 = vmatprep.subr.mxu0 0.0
      %1525 = vmatpush2.xpose.msra.mxu0 0.0
      %1526 = vmatprep.subr.mxu0 0.0
      %1527 = vmatpush2.xpose.msra.mxu0 0.0
      %1528 = vmatprep.subr.mxu0 0.0
      %1529 = vmatpush2.xpose.msra.mxu0 0.0
      %1530 = vmatprep.subr.mxu0 0.0
      %1531 = vmatpush2.xpose.msra.mxu0 0.0
      %1532 = vmatprep.subr.mxu0 0.0
      %1533 = vmatpush2.xpose.msra.mxu0 0.0
      %1534 = vmatprep.subr.mxu0 0.0
      %1535 = vmatpush2.xpose.msra.mxu0 0.0
      %1536 = vmatprep.subr.mxu0 0.0
      %1537 = vmatpush2.xpose.msra.mxu0 0.0
      %1538 = vmatprep.subr.mxu0 0.0
      %1539 = vmatpush2.xpose.msra.mxu0 0.0
      %1540 = vmatprep.subr.mxu0 0.0
      %1541 = vmatpush2.xpose.msra.mxu0 0.0
      %1542 = vmatprep.subr.mxu0 0.0
      %1543 = vmatpush2.xpose.msra.mxu0 0.0
      %1544 = vmatprep.subr.mxu0 0.0
      %1545 = vmatpush2.xpose.msra.mxu0 0.0
      %1546 = vmatprep.subr.mxu0 0.0
      %1547 = vmatpush2.xpose.msra.mxu0 0.0
      %1548 = vmatprep.subr.mxu0 0.0
      %1549 = vmatpush2.xpose.msra.mxu0 0.0
      %1550 = vmatprep.subr.mxu0 0.0
      %1551 = vmatpush2.xpose.msra.mxu0 0.0
      %1552 = vmatprep.subr.mxu0 0.0
      %1553 = vmatpush2.xpose.msra.mxu0 0.0
      %1554 = vmatprep.subr.mxu0 0.0
      %1555 = vmatpush2.xpose.msra.mxu0 0.0
      %1556 = vmatprep.mubr.f32.mxu0 0.0
      %1557 = vmatmul.mubr.f32.gmra.mxu0 %v1488
      %v1558 = vpop.f32.mrf.mxu0
      %v1559 = vadd.f32 0.0, %v1558
      %v1560 = vpop.f32.mrf.mxu0
      %1561 = vdwg.mxu0
      %v1562 = vsel %vm573, %v1559, -inf
      %1563 = vmax.xlane.f32.xlu0 %v1562
      %v1564 = vpop.xlane.xlu0 %1563
      %v1565 = vsub.f32 %v1559, %v1564
      %v1566 = vmul.f32 %v1565, 1.442695
      %v1567 = vpow.pop %v1566
      %v1568 = vsel %vm573, %v1567, 0.0
      %1569 = vadd.xlane.f32.xlu0 %v1568
      %v1570 = vpop.xlane.xlu0 %1569
      %v1571 = vrcp.pop %v1570
      %v1572 = vmul.f32 %v1567, %v1571
      %1573 = vrot.lane.b32.xlu0 %v491, 32
      %v1574 = vpop.permute.xlu0 %1573
      %v1577 = vsel %vm573, %v1572, 0
      %1579 = vmatprep.subr.mxu0 0.0
      %1580 = vmatpush1.msra.mxu0 0.0
      %1581 = vmatprep.subr.mxu0 0.0
      %1582 = vmatpush1.msra.mxu0 0.0
      %1583 = vmatprep.subr.mxu0 0.0
      %1584 = vmatpush1.msra.mxu0 0.0
      %1585 = vmatprep.subr.mxu0 0.0
      %1586 = vmatpush1.msra.mxu0 0.0
      %1587 = vmatprep.subr.mxu0 0.0
      %1588 = vmatpush1.msra.mxu0 0.0
      %1589 = vmatprep.subr.mxu0 0.0
      %1590 = vmatpush1.msra.mxu0 0.0
      %1591 = vmatprep.subr.mxu0 0.0
      %1592 = vmatpush1.msra.mxu0 0.0
      %1593 = vmatprep.subr.mxu0 0.0
      %1594 = vmatpush1.msra.mxu0 0.0
      %1595 = vmatprep.subr.mxu0 0.0
      %1596 = vmatpush1.msra.mxu0 0.0
      %1597 = vmatprep.subr.mxu0 0.0
      %1598 = vmatpush1.msra.mxu0 0.0
      %1599 = vmatprep.subr.mxu0 0.0
      %1600 = vmatpush1.msra.mxu0 0.0
      %1601 = vmatprep.subr.mxu0 0.0
      %1602 = vmatpush1.msra.mxu0 0.0
      %1603 = vmatprep.subr.mxu0 0.0
      %1604 = vmatpush1.msra.mxu0 0.0
      %1605 = vmatprep.subr.mxu0 0.0
      %1606 = vmatpush1.msra.mxu0 0.0
      %1607 = vmatprep.subr.mxu0 0.0
      %1608 = vmatpush1.msra.mxu0 0.0
      %1609 = vmatprep.subr.mxu0 0.0
      %1610 = vmatpush1.msra.mxu0 %v1574
      %1611 = vmatprep.subr.mxu0 0.0
      %1612 = vmatpush2.msra.mxu0 0.0
      %1613 = vmatprep.subr.mxu0 0.0
      %1614 = vmatpush2.msra.mxu0 0.0
      %1615 = vmatprep.subr.mxu0 0.0
      %1616 = vmatpush2.msra.mxu0 0.0
      %1617 = vmatprep.subr.mxu0 0.0
      %1618 = vmatpush2.msra.mxu0 0.0
      %1619 = vmatprep.subr.mxu0 0.0
      %1620 = vmatpush2.msra.mxu0 0.0
      %1621 = vmatprep.subr.mxu0 0.0
      %1622 = vmatpush2.msra.mxu0 0.0
      %1623 = vmatprep.subr.mxu0 0.0
      %1624 = vmatpush2.msra.mxu0 0.0
      %1625 = vmatprep.subr.mxu0 0.0
      %1626 = vmatpush2.msra.mxu0 0.0
      %1627 = vmatprep.subr.mxu0 0.0
      %1628 = vmatpush2.msra.mxu0 0.0
      %1629 = vmatprep.subr.mxu0 0.0
      %1630 = vmatpush2.msra.mxu0 0.0
      %1631 = vmatprep.subr.mxu0 0.0
      %1632 = vmatpush2.msra.mxu0 0.0
      %1633 = vmatprep.subr.mxu0 0.0
      %1634 = vmatpush2.msra.mxu0 0.0
      %1635 = vmatprep.subr.mxu0 0.0
      %1636 = vmatpush2.msra.mxu0 0.0
      %1637 = vmatprep.subr.mxu0 0.0
      %1638 = vmatpush2.msra.mxu0 0.0
      %1639 = vmatprep.subr.mxu0 0.0
      %1640 = vmatpush2.msra.mxu0 0.0
      %1641 = vmatprep.subr.mxu0 0.0
      %1642 = vmatpush2.msra.mxu0 0.0
      %1643 = vmatprep.mubr.f32.mxu0 0.0
      %1644 = vmatmul.mubr.f32.gmra.mxu0 %v1577
      %v1645 = vpop.f32.mrf.mxu0
      %v1646 = vadd.f32 0.0, %v1645
      %v1647 = vpop.f32.mrf.mxu0
      %1648 = vdwg.mxu0
      %1649 = vrot.lane.b32.xlu0 %v495, 16
      %v1650 = vpop.permute.xlu0 %1649
      %1651 = vrot.lane.b32.xlu0 %v489, 16
      %v1652 = vpop.permute.xlu0 %1651
      %v1653 = vsel %vm496, %v1650, 0
      %v1655 = vsel %vm496, %v1652, 0
      %1657 = vmatprep.subr.mxu0 0.0
      %1658 = vmatpush1.xpose.msra.mxu0 0.0
      %1659 = vmatprep.subr.mxu0 0.0
      %1660 = vmatpush1.xpose.msra.mxu0 0.0
      %1661 = vmatprep.subr.mxu0 0.0
      %1662 = vmatpush1.xpose.msra.mxu0 0.0
      %1663 = vmatprep.subr.mxu0 0.0
      %1664 = vmatpush1.xpose.msra.mxu0 0.0
      %1665 = vmatprep.subr.mxu0 0.0
      %1666 = vmatpush1.xpose.msra.mxu0 0.0
      %1667 = vmatprep.subr.mxu0 0.0
      %1668 = vmatpush1.xpose.msra.mxu0 0.0
      %1669 = vmatprep.subr.mxu0 0.0
      %1670 = vmatpush1.xpose.msra.mxu0 0.0
      %1671 = vmatprep.subr.mxu0 0.0
      %1672 = vmatpush1.xpose.msra.mxu0 0.0
      %1673 = vmatprep.subr.mxu0 0.0
      %1674 = vmatpush1.xpose.msra.mxu0 0.0
      %1675 = vmatprep.subr.mxu0 0.0
      %1676 = vmatpush1.xpose.msra.mxu0 0.0
      %1677 = vmatprep.subr.mxu0 0.0
      %1678 = vmatpush1.xpose.msra.mxu0 0.0
      %1679 = vmatprep.subr.mxu0 0.0
      %1680 = vmatpush1.xpose.msra.mxu0 0.0
      %1681 = vmatprep.subr.mxu0 0.0
      %1682 = vmatpush1.xpose.msra.mxu0 0.0
      %1683 = vmatprep.subr.mxu0 0.0
      %1684 = vmatpush1.xpose.msra.mxu0 0.0
      %1685 = vmatprep.subr.mxu0 0.0
      %1686 = vmatpush1.xpose.msra.mxu0 0.0
      %1687 = vmatprep.subr.mxu0 0.0
      %1688 = vmatpush1.xpose.msra.mxu0 %v1655
      %1689 = vmatprep.subr.mxu0 0.0
      %1690 = vmatpush2.xpose.msra.mxu0 0.0
      %1691 = vmatprep.subr.mxu0 0.0
      %1692 = vmatpush2.xpose.msra.mxu0 0.0
      %1693 = vmatprep.subr.mxu0 0.0
      %1694 = vmatpush2.xpose.msra.mxu0 0.0
      %1695 = vmatprep.subr.mxu0 0.0
      %1696 = vmatpush2.xpose.msra.mxu0 0.0
      %1697 = vmatprep.subr.mxu0 0.0
      %1698 = vmatpush2.xpose.msra.mxu0 0.0
      %1699 = vmatprep.subr.mxu0 0.0
      %1700 = vmatpush2.xpose.msra.mxu0 0.0
      %1701 = vmatprep.subr.mxu0 0.0
      %1702 = vmatpush2.xpose.msra.mxu0 0.0
      %1703 = vmatprep.subr.mxu0 0.0
      %1704 = vmatpush2.xpose.msra.mxu0 0.0
      %1705 = vmatprep.subr.mxu0 0.0
      %1706 = vmatpush2.xpose.msra.mxu0 0.0
      %1707 = vmatprep.subr.mxu0 0.0
      %1708 = vmatpush2.xpose.msra.mxu0 0.0
      %1709 = vmatprep.subr.mxu0 0.0
      %1710 = vmatpush2.xpose.msra.mxu0 0.0
      %1711 = vmatprep.subr.mxu0 0.0
      %1712 = vmatpush2.xpose.msra.mxu0 0.0
      %1713 = vmatprep.subr.mxu0 0.0
      %1714 = vmatpush2.xpose.msra.mxu0 0.0
      %1715 = vmatprep.subr.mxu0 0.0
      %1716 = vmatpush2.xpose.msra.mxu0 0.0
      %1717 = vmatprep.subr.mxu0 0.0
      %1718 = vmatpush2.xpose.msra.mxu0 0.0
      %1719 = vmatprep.subr.mxu0 0.0
      %1720 = vmatpush2.xpose.msra.mxu0 0.0
      %1721 = vmatprep.mubr.f32.mxu0 0.0
      %1722 = vmatmul.mubr.f32.gmra.mxu0 %v1653
      %v1723 = vpop.f32.mrf.mxu0
      %v1724 = vadd.f32 0.0, %v1723
      %v1725 = vpop.f32.mrf.mxu0
      %1726 = vdwg.mxu0
      %v1727 = vsel %vm573, %v1724, -inf
      %1728 = vmax.xlane.f32.xlu0 %v1727
      %v1729 = vpop.xlane.xlu0 %1728
      %v1730 = vsub.f32 %v1724, %v1729
      %v1731 = vmul.f32 %v1730, 1.442695
      %v1732 = vpow.pop %v1731
      %v1733 = vsel %vm573, %v1732, 0.0
      %1734 = vadd.xlane.f32.xlu0 %v1733
      %v1735 = vpop.xlane.xlu0 %1734
      %v1736 = vrcp.pop %v1735
      %v1737 = vmul.f32 %v1732, %v1736
      %1738 = vrot.lane.b32.xlu0 %v491, 16
      %v1739 = vpop.permute.xlu0 %1738
      %v1742 = vsel %vm573, %v1737, 0
      %1744 = vmatprep.subr.mxu0 0.0
      %1745 = vmatpush1.msra.mxu0 0.0
      %1746 = vmatprep.subr.mxu0 0.0
      %1747 = vmatpush1.msra.mxu0 0.0
      %1748 = vmatprep.subr.mxu0 0.0
      %1749 = vmatpush1.msra.mxu0 0.0
      %1750 = vmatprep.subr.mxu0 0.0
      %1751 = vmatpush1.msra.mxu0 0.0
      %1752 = vmatprep.subr.mxu0 0.0
      %1753 = vmatpush1.msra.mxu0 0.0
      %1754 = vmatprep.subr.mxu0 0.0
      %1755 = vmatpush1.msra.mxu0 0.0
      %1756 = vmatprep.subr.mxu0 0.0
      %1757 = vmatpush1.msra.mxu0 0.0
      %1758 = vmatprep.subr.mxu0 0.0
      %1759 = vmatpush1.msra.mxu0 0.0
      %1760 = vmatprep.subr.mxu0 0.0
      %1761 = vmatpush1.msra.mxu0 0.0
      %1762 = vmatprep.subr.mxu0 0.0
      %1763 = vmatpush1.msra.mxu0 0.0
      %1764 = vmatprep.subr.mxu0 0.0
      %1765 = vmatpush1.msra.mxu0 0.0
      %1766 = vmatprep.subr.mxu0 0.0
      %1767 = vmatpush1.msra.mxu0 0.0
      %1768 = vmatprep.subr.mxu0 0.0
      %1769 = vmatpush1.msra.mxu0 0.0
      %1770 = vmatprep.subr.mxu0 0.0
      %1771 = vmatpush1.msra.mxu0 0.0
      %1772 = vmatprep.subr.mxu0 0.0
      %1773 = vmatpush1.msra.mxu0 0.0
      %1774 = vmatprep.subr.mxu0 0.0
      %1775 = vmatpush1.msra.mxu0 %v1739
      %1776 = vmatprep.subr.mxu0 0.0
      %1777 = vmatpush2.msra.mxu0 0.0
      %1778 = vmatprep.subr.mxu0 0.0
      %1779 = vmatpush2.msra.mxu0 0.0
      %1780 = vmatprep.subr.mxu0 0.0
      %1781 = vmatpush2.msra.mxu0 0.0
      %1782 = vmatprep.subr.mxu0 0.0
      %1783 = vmatpush2.msra.mxu0 0.0
      %1784 = vmatprep.subr.mxu0 0.0
      %1785 = vmatpush2.msra.mxu0 0.0
      %1786 = vmatprep.subr.mxu0 0.0
      %1787 = vmatpush2.msra.mxu0 0.0
      %1788 = vmatprep.subr.mxu0 0.0
      %1789 = vmatpush2.msra.mxu0 0.0
      %1790 = vmatprep.subr.mxu0 0.0
      %1791 = vmatpush2.msra.mxu0 0.0
      %1792 = vmatprep.subr.mxu0 0.0
      %1793 = vmatpush2.msra.mxu0 0.0
      %1794 = vmatprep.subr.mxu0 0.0
      %1795 = vmatpush2.msra.mxu0 0.0
      %1796 = vmatprep.subr.mxu0 0.0
      %1797 = vmatpush2.msra.mxu0 0.0
      %1798 = vmatprep.subr.mxu0 0.0
      %1799 = vmatpush2.msra.mxu0 0.0
      %1800 = vmatprep.subr.mxu0 0.0
      %1801 = vmatpush2.msra.mxu0 0.0
      %1802 = vmatprep.subr.mxu0 0.0
      %1803 = vmatpush2.msra.mxu0 0.0
      %1804 = vmatprep.subr.mxu0 0.0
      %1805 = vmatpush2.msra.mxu0 0.0
      %1806 = vmatprep.subr.mxu0 0.0
      %1807 = vmatpush2.msra.mxu0 0.0
      %1808 = vmatprep.mubr.f32.mxu0 0.0
      %1809 = vmatmul.mubr.f32.gmra.mxu0 %v1742
      %v1810 = vpop.f32.mrf.mxu0
      %v1811 = vadd.f32 0.0, %v1810
      %v1812 = vpop.f32.mrf.mxu0
      %1813 = vdwg.mxu0
      %1815 = vrot.lane.b32.xlu0 %v821, 16
      %v1816 = vpop.permute.xlu0 %1815
      %1819 = vrot.lane.b32.xlu0 %v986, 32
      %v1820 = vpop.permute.xlu0 %1819
      %1823 = vrot.lane.b32.xlu0 %v1151, 48
      %v1824 = vpop.permute.xlu0 %1823
      %1827 = vrot.lane.b32.xlu0 %v1316, 64
      %v1828 = vpop.permute.xlu0 %1827
      %1831 = vrot.lane.b32.xlu0 %v1481, 80
      %v1832 = vpop.permute.xlu0 %1831
      %1835 = vrot.lane.b32.xlu0 %v1646, 96
      %v1836 = vpop.permute.xlu0 %1835
      %1839 = vrot.lane.b32.xlu0 %v1811, 112
      %v1840 = vpop.permute.xlu0 %1839
      %v1842 = vsel %vm496, %v655, %v1816
      %vm1843 = vcmask 261120
      %v1844 = vsel %vm1843, %v1842, %v1820
      %vm1845 = vcmask 392192
      %v1846 = vsel %vm1845, %v1844, %v1824
      %vm1847 = vcmask 523264
      %v1848 = vsel %vm1847, %v1846, %v1828
      %vm1849 = vcmask 654336
      %v1850 = vsel %vm1849, %v1848, %v1832
      %vm1851 = vcmask 785408
      %v1852 = vsel %vm1851, %v1850, %v1836
      %vm1853 = vcmask 916480
      %v1854 = vsel %vm1853, %v1852, %v1840
      %v1855 = vpack.c.bf16 %v1854, %v1854
      %v1856 = vld [vmem:[%s6] sm:$0xff]
      %v1857 = vld [vmem:[%s6 + $0x8] sm:$0xff]
      %v1858 = vld [vmem:[%s6 + $0x10] sm:$0xff]
      %v1859 = vld [vmem:[%s6 + $0x18] sm:$0xff]
      %v1860 = vld [vmem:[%s6 + $0x20] sm:$0xff]
      %v1861 = vld [vmem:[%s6 + $0x28] sm:$0xff]
      %v1862 = vld [vmem:[%s6 + $0x30] sm:$0xff]
      %v1863 = vld [vmem:[%s6 + $0x38] sm:$0xff]
      %v1864 = vld [vmem:[%s6 + $0x40] sm:$0xff]
      %v1865 = vld [vmem:[%s6 + $0x48] sm:$0xff]
      %v1866 = vld [vmem:[%s6 + $0x50] sm:$0xff]
      %v1867 = vld [vmem:[%s6 + $0x58] sm:$0xff]
      %v1868 = vld [vmem:[%s6 + $0x60] sm:$0xff]
      %v1869 = vld [vmem:[%s6 + $0x68] sm:$0xff]
      %v1870 = vld [vmem:[%s6 + $0x70] sm:$0xff]
      %v1871 = vld [vmem:[%s6 + $0x78] sm:$0xff]
      %v1872 = vpack.c.bf16 %v1857, %v1856
      %v1873 = vpack.c.bf16 %v1859, %v1858
      %v1874 = vpack.c.bf16 %v1861, %v1860
      %v1875 = vpack.c.bf16 %v1863, %v1862
      %v1876 = vpack.c.bf16 %v1865, %v1864
      %v1877 = vpack.c.bf16 %v1867, %v1866
      %v1878 = vpack.c.bf16 %v1869, %v1868
      %v1879 = vpack.c.bf16 %v1871, %v1870
      %v1880 = vld [vmem:[%s7] sm:$0x1]
      %v1882 = vlaneseq
      %v1883 = vshrl.u32 %v1882, 7
      %v1884 = vsub.s32 0, %v1883
      %v1885 = vrot.slane %v1880, %v1884
      %1887 = vmatprep.subr.bf16.mxu0 0
      %1888 = vmatpush1.bf16.msra.mxu0 %v1879
      %1889 = vmatprep.subr.bf16.mxu0 0
      %1890 = vmatpush1.bf16.msra.mxu0 %v1878
      %1891 = vmatprep.subr.bf16.mxu0 0
      %1892 = vmatpush1.bf16.msra.mxu0 %v1877
      %1893 = vmatprep.subr.bf16.mxu0 0
      %1894 = vmatpush1.bf16.msra.mxu0 %v1876
      %1895 = vmatprep.subr.bf16.mxu0 0
      %1896 = vmatpush1.bf16.msra.mxu0 %v1875
      %1897 = vmatprep.subr.bf16.mxu0 0
      %1898 = vmatpush1.bf16.msra.mxu0 %v1874
      %1899 = vmatprep.subr.bf16.mxu0 0
      %1900 = vmatpush1.bf16.msra.mxu0 %v1873
      %1901 = vmatprep.subr.bf16.mxu0 0
      %1902 = vmatpush1.bf16.msra.mxu0 %v1872
      %1903 = vmatprep.subr.bf16.mxu0 0
      %1904 = vmatpush2.bf16.msra.mxu0 0
      %1905 = vmatprep.subr.bf16.mxu0 0
      %1906 = vmatpush2.bf16.msra.mxu0 0
      %1907 = vmatprep.subr.bf16.mxu0 0
      %1908 = vmatpush2.bf16.msra.mxu0 0
      %1909 = vmatprep.subr.bf16.mxu0 0
      %1910 = vmatpush2.bf16.msra.mxu0 0
      %1911 = vmatprep.subr.bf16.mxu0 0
      %1912 = vmatpush2.bf16.msra.mxu0 0
      %1913 = vmatprep.subr.bf16.mxu0 0
      %1914 = vmatpush2.bf16.msra.mxu0 0
      %1915 = vmatprep.subr.bf16.mxu0 0
      %1916 = vmatpush2.bf16.msra.mxu0 0
      %1917 = vmatprep.subr.bf16.mxu0 0
      %1918 = vmatpush2.bf16.msra.mxu0 0
      %1919 = vmatprep.mubr.bf16.mxu0 0
      %1920 = vmatmul.mubr.bf16.gmra.mxu0 %v1855
      %v1921 = vpop.f32.mrf.mxu0
      %v1922 = vadd.f32 %v1885, %v1921
      %v1923 = vpop.f32.mrf.mxu0
      %v1924 = vpop.f32.mrf.mxu0
      %v1925 = vpop.f32.mrf.mxu0
      %1926 = vdwg.mxu0
      %1927 = vst [vmem:[%s317] sm:$0xff] %v1922
      %p1928 = scmp.lt.s32.totalorder %s19, 1
      %s1929 = scalar_select %p1928, %s19, 1
      %s1930 = smul.addr %s1929, 8
      %s1931 = scalar_lea.vmem %s8, %s1930
      // Predicated region
      $region53: #{one2one_forward.34} parent=51 // pred_check
        %p1932 = pneg %p215
      $region54: #{one2one_forward.34} parent=51 // pred_check_branch
        %1934 = sbr.rel (%p1932) target = $region56
      $region55: #{one2one_forward.34} parent=51 // pred_region
        _
      $region56: #{one2one_forward.34} parent=51 // pred_fallthru
        _
    $region52: #{one2one_forward.34} parent=5 // pred_fallthru
      _
    %p1935 = scmp.le.s32.totalorder 2, %s14
    // Predicated region
    $region57: #{one2one_forward.34} parent=5 // pred_check
      %p1936 = pneg %p1935
    $region58: #{one2one_forward.34} parent=5 // pred_check_branch
      %1938 = sbr.rel (%p1936) target = $region60
    $region59: #{one2one_forward.34} parent=5 // pred_region
      %s1939 = ssub.s32 %s14, 2
      // Predicated region
      $region61: #{one2one_forward.34} parent=59 // pred_check
        %p1940 = pneg %p221
      $region62: #{one2one_forward.34} parent=59 // pred_check_branch
        %1942 = sbr.rel (%p1940) target = $region64
      $region63: #{one2one_forward.34} parent=59 // pred_region
        %p1943 = scmp.lt.s32.totalorder %s20, 1
        %s1944 = scalar_select %p1943, %s20, 1
        %s1945 = smul.addr %s1944, 8
        %s1946 = scalar_lea.vmem %s8, %s1945
      $region64: #{one2one_forward.34} parent=59 // pred_fallthru
        _
    $region60: #{one2one_forward.34} parent=5 // pred_fallthru
      _
  $region6: #{one2one_forward.34} parent=0 // loop_footer
    %s18 = sadd.s32 1, %s14
  $region7: #{one2one_forward.34} parent=0 // loop_footer_branch
    %13 = sbr.rel target = $region3
  $region8: #{one2one_forward.34} parent=0 // loop_exit
    _

// kernel: one2one_forward.32
$region0: #{one2one_forward.32}
  #allocation0 [shape = 'u32[]', space=smem, size = 0x4, offset = 0x4, fixed_abs, tag = 'smem constant byte address 0x4 - core index']
  #allocation1 [shape = 'u32[144,128]{1,0:T(1,128)}', space=vmem, size = 0x12000, scoped, tag = 'internal scratch']
  %s0 = inlined_call_operand.vmem [shape: f32[2,8,128], index: 0, kind: input, shape index: {}, may-alias: {0,1}]
  %s1 = inlined_call_operand.vmem [shape: f32[2,8,128], index: 1, kind: input, shape index: {}, may-alias: {0,1}]
  %s2 = inlined_call_operand.vmem [shape: f32[128,128], index: 2, kind: input, shape index: {}]
  %s3 = inlined_call_operand.vmem [shape: f32[1,128], index: 3, kind: input, shape index: {}]
  %s4 = inlined_call_operand.vmem [shape: f32[128,256], index: 4, kind: input, shape index: {}]
  %s5 = inlined_call_operand.vmem [shape: f32[1,256], index: 5, kind: input, shape index: {}]
  %s6 = inlined_call_operand.vmem [shape: f32[128,128], index: 6, kind: input, shape index: {}]
  %s7 = inlined_call_operand.vmem [shape: f32[1,128], index: 7, kind: input, shape index: {}]
  %s8 = inlined_call_operand.vmem [shape: f32[2,1,8], index: 8, kind: input, shape index: {}]
  %s9 = inlined_call_operand.vmem [shape: f32[2,8,128], index: 9, kind: output, shape index: {}]
  %s10 = sld [smem:[#allocation0]]
  $region69: #{one2one_forward.32} parent=0
    _
  %s12 = ssub.s32 1, %s10
  %s13 = scalar_select 0, %s12, %s10
  loop: start=0, step=1, limit=4
  $region2: #{one2one_forward.32} parent=0 // loop_pre_header
    _
  $region3: #{one2one_forward.32} parent=0 // loop_header
    %s15 = sphi 0, %s19
    %p16 = scmp.ge.s32.totalorder %s15, 4
    %s25 = sphi 0, %s27
    %s28 = sphi 0, %s25
    %s29 = sphi 0, %s28
    %s45 = sphi 0, %s29
    %s51 = sphi 0, %s53
    %s54 = sphi 0, %s51
    %s55 = sphi 0, %s54
    %s71 = sphi 0, %s55
    %s75 = sphi 0, %s75
    %s77 = sphi 0, %s75
    %s78 = sphi 0, %s77
    %s92 = sphi 0, %s78
    %s96 = sphi 0, %s96
    %s98 = sphi 0, %s96
    %s99 = sphi 0, %s98
    %s113 = sphi 0, %s99
    %s117 = sphi 0, %s117
    %s119 = sphi 0, %s117
    %s120 = sphi 0, %s119
    %s134 = sphi 0, %s120
    %s138 = sphi 0, %s138
    %s140 = sphi 0, %s138
    %s141 = sphi 0, %s140
    %s155 = sphi 0, %s141
    %s159 = sphi 0, %s159
    %s161 = sphi 0, %s159
    %s162 = sphi 0, %s161
    %s176 = sphi 0, %s162
    %s180 = sphi 0, %s180
    %s182 = sphi 0, %s180
    %s183 = sphi 0, %s182
    %s197 = sphi 0, %s183
    %s203 = sphi 0, %s205
    %s206 = sphi 0, %s203
    %s207 = sphi 0, %s206
    %s223 = sphi 0, %s207
    %s229 = sphi 0, %s231
    %s232 = sphi 0, %s229
    %s233 = sphi 0, %s232
    %s249 = sphi 0, %s233
  $region4: #{one2one_forward.32} parent=0 // loop_header_branch
    %18 = sbr.rel (%p16) target = $region8
  $region5: #{one2one_forward.32} parent=0 // loop_body
    %s20 = ssub.s32 %s15, 1
    %s21 = ssub.s32 %s15, 2
    %s22 = sadd.s32 %s15, 1
    %s23 = ssub.s32 %s15, %s22
    %p24 = scmp.eq.s32.totalorder %s23, 0
    %s26 = sadd.s32 %s25, 1
    %s27 = scalar_select %p24, %s25, %s26
    %p30 = pneg %p24
    %p31 = scmp.eq.s32.totalorder %s15, 1
    %p32 = por %p30, %p31
    %p33 = scmp.ne.s32.totalorder %s25, %s28
    %p34 = scmp.eq.s32.totalorder %s15, 0
    %p35 = por %p33, %p34
    %p36 = scmp.ne.s32.totalorder %s25, %s28
    %p37 = scmp.eq.s32.totalorder %s20, 1
    %p38 = por %p36, %p37
    %p39 = scmp.ne.s32.totalorder %s28, %s29
    %p40 = scmp.eq.s32.totalorder %s20, 0
    %p41 = por %p39, %p40
    %p42 = scmp.ne.s32.totalorder %s28, %s29
    %p43 = scmp.eq.s32.totalorder %s21, 1
    %p44 = por %p42, %p43
    %p46 = scmp.ne.s32.totalorder %s29, %s45
    %p47 = scmp.eq.s32.totalorder %s21, 0
    %p48 = por %p46, %p47
    %s49 = ssub.s32 %s15, %s22
    %p50 = scmp.eq.s32.totalorder %s49, 0
    %s52 = sadd.s32 %s51, 1
    %s53 = scalar_select %p50, %s51, %s52
    %p56 = pneg %p50
    %p57 = scmp.eq.s32.totalorder %s15, 1
    %p58 = por %p56, %p57
    %p59 = scmp.ne.s32.totalorder %s51, %s54
    %p60 = scmp.eq.s32.totalorder %s15, 0
    %p61 = por %p59, %p60
    %p62 = scmp.ne.s32.totalorder %s51, %s54
    %p63 = scmp.eq.s32.totalorder %s20, 1
    %p64 = por %p62, %p63
    %p65 = scmp.ne.s32.totalorder %s54, %s55
    %p66 = scmp.eq.s32.totalorder %s20, 0
    %p67 = por %p65, %p66
    %p68 = scmp.ne.s32.totalorder %s54, %s55
    %p69 = scmp.eq.s32.totalorder %s21, 1
    %p70 = por %p68, %p69
    %p72 = scmp.ne.s32.totalorder %s55, %s71
    %p73 = scmp.eq.s32.totalorder %s21, 0
    %p74 = por %p72, %p73
    %s76 = sadd.s32 %s75, 1
    %p79 = scmp.eq.s32.totalorder %s15, 1
    %p80 = scmp.ne.s32.totalorder %s75, %s77
    %p81 = scmp.eq.s32.totalorder %s15, 0
    %p82 = por %p80, %p81
    %p83 = scmp.ne.s32.totalorder %s75, %s77
    %p84 = scmp.eq.s32.totalorder %s20, 1
    %p85 = por %p83, %p84
    %p86 = scmp.ne.s32.totalorder %s77, %s78
    %p87 = scmp.eq.s32.totalorder %s20, 0
    %p88 = por %p86, %p87
    %p89 = scmp.ne.s32.totalorder %s77, %s78
    %p90 = scmp.eq.s32.totalorder %s21, 1
    %p91 = por %p89, %p90
    %p93 = scmp.ne.s32.totalorder %s78, %s92
    %p94 = scmp.eq.s32.totalorder %s21, 0
    %p95 = por %p93, %p94
    %s97 = sadd.s32 %s96, 1
    %p100 = scmp.eq.s32.totalorder %s15, 1
    %p101 = scmp.ne.s32.totalorder %s96, %s98
    %p102 = scmp.eq.s32.totalorder %s15, 0
    %p103 = por %p101, %p102
    %p104 = scmp.ne.s32.totalorder %s96, %s98
    %p105 = scmp.eq.s32.totalorder %s20, 1
    %p106 = por %p104, %p105
    %p107 = scmp.ne.s32.totalorder %s98, %s99
    %p108 = scmp.eq.s32.totalorder %s20, 0
    %p109 = por %p107, %p108
    %p110 = scmp.ne.s32.totalorder %s98, %s99
    %p111 = scmp.eq.s32.totalorder %s21, 1
    %p112 = por %p110, %p111
    %p114 = scmp.ne.s32.totalorder %s99, %s113
    %p115 = scmp.eq.s32.totalorder %s21, 0
    %p116 = por %p114, %p115
    %s118 = sadd.s32 %s117, 1
    %p121 = scmp.eq.s32.totalorder %s15, 1
    %p122 = scmp.ne.s32.totalorder %s117, %s119
    %p123 = scmp.eq.s32.totalorder %s15, 0
    %p124 = por %p122, %p123
    %p125 = scmp.ne.s32.totalorder %s117, %s119
    %p126 = scmp.eq.s32.totalorder %s20, 1
    %p127 = por %p125, %p126
    %p128 = scmp.ne.s32.totalorder %s119, %s120
    %p129 = scmp.eq.s32.totalorder %s20, 0
    %p130 = por %p128, %p129
    %p131 = scmp.ne.s32.totalorder %s119, %s120
    %p132 = scmp.eq.s32.totalorder %s21, 1
    %p133 = por %p131, %p132
    %p135 = scmp.ne.s32.totalorder %s120, %s134
    %p136 = scmp.eq.s32.totalorder %s21, 0
    %p137 = por %p135, %p136
    %s139 = sadd.s32 %s138, 1
    %p142 = scmp.eq.s32.totalorder %s15, 1
    %p143 = scmp.ne.s32.totalorder %s138, %s140
    %p144 = scmp.eq.s32.totalorder %s15, 0
    %p145 = por %p143, %p144
    %p146 = scmp.ne.s32.totalorder %s138, %s140
    %p147 = scmp.eq.s32.totalorder %s20, 1
    %p148 = por %p146, %p147
    %p149 = scmp.ne.s32.totalorder %s140, %s141
    %p150 = scmp.eq.s32.totalorder %s20, 0
    %p151 = por %p149, %p150
    %p152 = scmp.ne.s32.totalorder %s140, %s141
    %p153 = scmp.eq.s32.totalorder %s21, 1
    %p154 = por %p152, %p153
    %p156 = scmp.ne.s32.totalorder %s141, %s155
    %p157 = scmp.eq.s32.totalorder %s21, 0
    %p158 = por %p156, %p157
    %s160 = sadd.s32 %s159, 1
    %p163 = scmp.eq.s32.totalorder %s15, 1
    %p164 = scmp.ne.s32.totalorder %s159, %s161
    %p165 = scmp.eq.s32.totalorder %s15, 0
    %p166 = por %p164, %p165
    %p167 = scmp.ne.s32.totalorder %s159, %s161
    %p168 = scmp.eq.s32.totalorder %s20, 1
    %p169 = por %p167, %p168
    %p170 = scmp.ne.s32.totalorder %s161, %s162
    %p171 = scmp.eq.s32.totalorder %s20, 0
    %p172 = por %p170, %p171
    %p173 = scmp.ne.s32.totalorder %s161, %s162
    %p174 = scmp.eq.s32.totalorder %s21, 1
    %p175 = por %p173, %p174
    %p177 = scmp.ne.s32.totalorder %s162, %s176
    %p178 = scmp.eq.s32.totalorder %s21, 0
    %p179 = por %p177, %p178
    %s181 = sadd.s32 %s180, 1
    %p184 = scmp.eq.s32.totalorder %s15, 1
    %p185 = scmp.ne.s32.totalorder %s180, %s182
    %p186 = scmp.eq.s32.totalorder %s15, 0
    %p187 = por %p185, %p186
    %p188 = scmp.ne.s32.totalorder %s180, %s182
    %p189 = scmp.eq.s32.totalorder %s20, 1
    %p190 = por %p188, %p189
    %p191 = scmp.ne.s32.totalorder %s182, %s183
    %p192 = scmp.eq.s32.totalorder %s20, 0
    %p193 = por %p191, %p192
    %p194 = scmp.ne.s32.totalorder %s182, %s183
    %p195 = scmp.eq.s32.totalorder %s21, 1
    %p196 = por %p194, %p195
    %p198 = scmp.ne.s32.totalorder %s183, %s197
    %p199 = scmp.eq.s32.totalorder %s21, 0
    %p200 = por %p198, %p199
    %s201 = ssub.s32 %s15, %s22
    %p202 = scmp.eq.s32.totalorder %s201, 0
    %s204 = sadd.s32 %s203, 1
    %s205 = scalar_select %p202, %s203, %s204
    %p208 = pneg %p202
    %p209 = scmp.eq.s32.totalorder %s15, 1
    %p210 = por %p208, %p209
    %p211 = scmp.ne.s32.totalorder %s203, %s206
    %p212 = scmp.eq.s32.totalorder %s15, 0
    %p213 = por %p211, %p212
    %p214 = scmp.ne.s32.totalorder %s203, %s206
    %p215 = scmp.eq.s32.totalorder %s20, 1
    %p216 = por %p214, %p215
    %p217 = scmp.ne.s32.totalorder %s206, %s207
    %p218 = scmp.eq.s32.totalorder %s20, 0
    %p219 = por %p217, %p218
    %p220 = scmp.ne.s32.totalorder %s206, %s207
    %p221 = scmp.eq.s32.totalorder %s21, 1
    %p222 = por %p220, %p221
    %p224 = scmp.ne.s32.totalorder %s207, %s223
    %p225 = scmp.eq.s32.totalorder %s21, 0
    %p226 = por %p224, %p225
    %s227 = ssub.s32 %s15, %s22
    %p228 = scmp.eq.s32.totalorder %s227, 0
    %s230 = sadd.s32 %s229, 1
    %s231 = scalar_select %p228, %s229, %s230
    %p234 = pneg %p228
    %p235 = scmp.eq.s32.totalorder %s15, 1
    %p236 = por %p234, %p235
    %p237 = scmp.ne.s32.totalorder %s229, %s232
    %p238 = scmp.eq.s32.totalorder %s15, 0
    %p239 = por %p237, %p238
    %p240 = scmp.ne.s32.totalorder %s229, %s232
    %p241 = scmp.eq.s32.totalorder %s20, 1
    %p242 = por %p240, %p241
    %p243 = scmp.ne.s32.totalorder %s232, %s233
    %p244 = scmp.eq.s32.totalorder %s20, 0
    %p245 = por %p243, %p244
    %p246 = scmp.ne.s32.totalorder %s232, %s233
    %p247 = scmp.eq.s32.totalorder %s21, 1
    %p248 = por %p246, %p247
    %p250 = scmp.ne.s32.totalorder %s233, %s249
    %p251 = scmp.eq.s32.totalorder %s21, 0
    %p252 = por %p250, %p251
    %p253 = scmp.le.s32.totalorder 1, %s15
    %p254 = scmp.lt.s32.totalorder %s15, 3
    %p255 = pnand %p253, %p254
    %p256 = pneg %p255
    // Predicated region
    $region9: #{one2one_forward.32} parent=5 // pred_check
      _
    $region10: #{one2one_forward.32} parent=5 // pred_check_branch
      %258 = sbr.rel (%p255) target = $region12
    $region11: #{one2one_forward.32} parent=5 // pred_region
      %s259 = ssub.s32 %s15, 1
      // Predicated region
      $region13: #{one2one_forward.32} parent=11 // pred_check
        %p260 = pneg %p88
      $region14: #{one2one_forward.32} parent=11 // pred_check_branch
        %262 = sbr.rel (%p260) target = $region16
      $region15: #{one2one_forward.32} parent=11 // pred_region
        _
      $region16: #{one2one_forward.32} parent=11 // pred_fallthru
        _
      // Predicated region
      $region17: #{one2one_forward.32} parent=11 // pred_check
        %p263 = pneg %p109
      $region18: #{one2one_forward.32} parent=11 // pred_check_branch
        %265 = sbr.rel (%p263) target = $region20
      $region19: #{one2one_forward.32} parent=11 // pred_region
        _
      $region20: #{one2one_forward.32} parent=11 // pred_fallthru
        _
      // Predicated region
      $region21: #{one2one_forward.32} parent=11 // pred_check
        %p266 = pneg %p130
      $region22: #{one2one_forward.32} parent=11 // pred_check_branch
        %268 = sbr.rel (%p266) target = $region24
      $region23: #{one2one_forward.32} parent=11 // pred_region
        _
      $region24: #{one2one_forward.32} parent=11 // pred_fallthru
        _
      // Predicated region
      $region25: #{one2one_forward.32} parent=11 // pred_check
        %p269 = pneg %p151
      $region26: #{one2one_forward.32} parent=11 // pred_check_branch
        %271 = sbr.rel (%p269) target = $region28
      $region27: #{one2one_forward.32} parent=11 // pred_region
        _
      $region28: #{one2one_forward.32} parent=11 // pred_fallthru
        _
      // Predicated region
      $region29: #{one2one_forward.32} parent=11 // pred_check
        %p272 = pneg %p172
      $region30: #{one2one_forward.32} parent=11 // pred_check_branch
        %274 = sbr.rel (%p272) target = $region32
      $region31: #{one2one_forward.32} parent=11 // pred_region
        _
      $region32: #{one2one_forward.32} parent=11 // pred_fallthru
        _
      // Predicated region
      $region33: #{one2one_forward.32} parent=11 // pred_check
        %p275 = pneg %p193
      $region34: #{one2one_forward.32} parent=11 // pred_check_branch
        %277 = sbr.rel (%p275) target = $region36
      $region35: #{one2one_forward.32} parent=11 // pred_region
        _
      $region36: #{one2one_forward.32} parent=11 // pred_fallthru
        _
    $region12: #{one2one_forward.32} parent=5 // pred_fallthru
      _
    %p278 = scmp.lt.s32.totalorder %s15, 2
    // Predicated region
    $region37: #{one2one_forward.32} parent=5 // pred_check
      %p279 = pneg %p278
    $region38: #{one2one_forward.32} parent=5 // pred_check_branch
      %281 = sbr.rel (%p279) target = $region40
    $region39: #{one2one_forward.32} parent=5 // pred_region
      // Predicated region
      $region41: #{one2one_forward.32} parent=39 // pred_check
        %p282 = pneg %p35
      $region42: #{one2one_forward.32} parent=39 // pred_check_branch
        %284 = sbr.rel (%p282) target = $region44
      $region43: #{one2one_forward.32} parent=39 // pred_region
        %p285 = scmp.lt.s32.totalorder %s15, 1
        %s286 = scalar_select %p285, %s15, 1
        %s287 = smul.addr %s286, 8
        %s288 = scalar_lea.vmem %s0, %s287
      $region44: #{one2one_forward.32} parent=39 // pred_fallthru
        _
      // Predicated region
      $region45: #{one2one_forward.32} parent=39 // pred_check
        %p289 = pneg %p61
      $region46: #{one2one_forward.32} parent=39 // pred_check_branch
        %291 = sbr.rel (%p289) target = $region48
      $region47: #{one2one_forward.32} parent=39 // pred_region
        %p292 = scmp.lt.s32.totalorder %s15, 1
        %s293 = scalar_select %p292, %s15, 1
        %s294 = smul.addr %s293, 8
        %s295 = scalar_lea.vmem %s1, %s294
      $region48: #{one2one_forward.32} parent=39 // pred_fallthru
        _
      // Predicated region
      $region49: #{one2one_forward.32} parent=39 // pred_check
        %p296 = pneg %p213
      $region50: #{one2one_forward.32} parent=39 // pred_check_branch
        %298 = sbr.rel (%p296) target = $region52
      $region51: #{one2one_forward.32} parent=39 // pred_region
        %p299 = scmp.lt.s32.totalorder %s15, 1
        %s300 = scalar_select %p299, %s15, 1
        %s301 = scalar_lea.vmem %s8, %s300
      $region52: #{one2one_forward.32} parent=39 // pred_fallthru
        _
    $region40: #{one2one_forward.32} parent=5 // pred_fallthru
      _
    %p302 = scmp.le.s32.totalorder 1, %s15
    %p303 = scmp.lt.s32.totalorder %s15, 3
    %p304 = pnand %p302, %p303
    %p305 = pneg %p304
    // Predicated region
    $region53: #{one2one_forward.32} parent=5 // pred_check
      _
    $region54: #{one2one_forward.32} parent=5 // pred_check_branch
      %307 = sbr.rel (%p304) target = $region56
    $region55: #{one2one_forward.32} parent=5 // pred_region
      %s308 = ssub.s32 %s15, 1
      %p309 = scmp.lt.s32.totalorder %s20, 1
      %s310 = scalar_select %p309, %s20, 1
      %s311 = smul.addr %s310, 8
      %s312 = scalar_lea.vmem %s0, %s311
      %p313 = pneg %p41
      %p314 = pneg %p38
      %p315 = scmp.lt.s32.totalorder %s20, 1
      %s316 = scalar_select %p315, %s20, 1
      %s317 = smul.addr %s316, 8
      %s318 = scalar_lea.vmem %s1, %s317
      %p319 = pneg %p67
      %p320 = pneg %p64
      %p321 = pneg %p88
      %p322 = pneg %p85
      %p323 = pneg %p109
      %p324 = pneg %p106
      %p325 = pneg %p130
      %p326 = pneg %p127
      %p327 = pneg %p151
      %p328 = pneg %p148
      %p329 = pneg %p172
      %p330 = pneg %p169
      %p331 = pneg %p193
      %p332 = pneg %p190
      %p333 = scmp.lt.s32.totalorder %s20, 1
      %s334 = scalar_select %p333, %s20, 1
      %s335 = scalar_lea.vmem %s8, %s334
      %p336 = pneg %p219
      %p337 = pneg %p216
      %p338 = pneg %p245
      %p339 = pneg %p242
      %p340 = scmp.lt.s32.totalorder %s20, 1
      %s341 = scalar_select %p340, %s20, 1
      %s342 = smul.addr %s341, 8
      %s343 = scalar_lea.vmem %s9, %s342
      %p344 = scmp.lt.s32.totalorder %s20, 1
      %s345 = scalar_select %p344, %s20, 1
      %s346 = smul.addr %s345, 8
      %s347 = scalar_lea.vmem %s0, %s346
      %p348 = scmp.lt.s32.totalorder %s20, 1
      %s349 = scalar_select %p348, %s20, 1
      %s350 = smul.addr %s349, 8
      %s351 = scalar_lea.vmem %s1, %s350
      %p352 = scmp.lt.s32.totalorder %s20, 1
      %s353 = scalar_select %p352, %s20, 1
      %s354 = scalar_lea.vmem %s8, %s353
      %p355 = scmp.lt.s32.totalorder %s20, 1
      %s356 = scalar_select %p355, %s20, 1
      %s357 = smul.addr %s356, 8
      %s358 = scalar_lea.vmem %s9, %s357
      %v360 = vld [vmem:[%s347] sm:$0xff]
      %v361 = vld [vmem:[%s351] sm:$0xff]
      %v362 = vpack.c.bf16 %v360, %v360
      %v363 = vld [vmem:[%s2] sm:$0xff]
      %v364 = vld [vmem:[%s2 + $0x8] sm:$0xff]
      %v365 = vld [vmem:[%s2 + $0x10] sm:$0xff]
      %v366 = vld [vmem:[%s2 + $0x18] sm:$0xff]
      %v367 = vld [vmem:[%s2 + $0x20] sm:$0xff]
      %v368 = vld [vmem:[%s2 + $0x28] sm:$0xff]
      %v369 = vld [vmem:[%s2 + $0x30] sm:$0xff]
      %v370 = vld [vmem:[%s2 + $0x38] sm:$0xff]
      %v371 = vld [vmem:[%s2 + $0x40] sm:$0xff]
      %v372 = vld [vmem:[%s2 + $0x48] sm:$0xff]
      %v373 = vld [vmem:[%s2 + $0x50] sm:$0xff]
      %v374 = vld [vmem:[%s2 + $0x58] sm:$0xff]
      %v375 = vld [vmem:[%s2 + $0x60] sm:$0xff]
      %v376 = vld [vmem:[%s2 + $0x68] sm:$0xff]
      %v377 = vld [vmem:[%s2 + $0x70] sm:$0xff]
      %v378 = vld [vmem:[%s2 + $0x78] sm:$0xff]
      %v379 = vpack.c.bf16 %v364, %v363
      %v380 = vpack.c.bf16 %v366, %v365
      %v381 = vpack.c.bf16 %v368, %v367
      %v382 = vpack.c.bf16 %v370, %v369
      %v383 = vpack.c.bf16 %v372, %v371
      %v384 = vpack.c.bf16 %v374, %v373
      %v385 = vpack.c.bf16 %v376, %v375
      %v386 = vpack.c.bf16 %v378, %v377
      %v387 = vld [vmem:[%s3] sm:$0x1]
      %v389 = vlaneseq
      %v390 = vshrl.u32 %v389, 7
      %v391 = vsub.s32 0, %v390
      %v392 = vrot.slane %v387, %v391
      %394 = vmatprep.subr.bf16.mxu0 0
      %395 = vmatpush1.bf16.msra.mxu0 %v386
      %396 = vmatprep.subr.bf16.mxu0 0
      %397 = vmatpush1.bf16.msra.mxu0 %v385
      %398 = vmatprep.subr.bf16.mxu0 0
      %399 = vmatpush1.bf16.msra.mxu0 %v384
      %400 = vmatprep.subr.bf16.mxu0 0
      %401 = vmatpush1.bf16.msra.mxu0 %v383
      %402 = vmatprep.subr.bf16.mxu0 0
      %403 = vmatpush1.bf16.msra.mxu0 %v382
      %404 = vmatprep.subr.bf16.mxu0 0
      %405 = vmatpush1.bf16.msra.mxu0 %v381
      %406 = vmatprep.subr.bf16.mxu0 0
      %407 = vmatpush1.bf16.msra.mxu0 %v380
      %408 = vmatprep.subr.bf16.mxu0 0
      %409 = vmatpush1.bf16.msra.mxu0 %v379
      %410 = vmatprep.subr.bf16.mxu0 0
      %411 = vmatpush2.bf16.msra.mxu0 0
      %412 = vmatprep.subr.bf16.mxu0 0
      %413 = vmatpush2.bf16.msra.mxu0 0
      %414 = vmatprep.subr.bf16.mxu0 0
      %415 = vmatpush2.bf16.msra.mxu0 0
      %416 = vmatprep.subr.bf16.mxu0 0
      %417 = vmatpush2.bf16.msra.mxu0 0
      %418 = vmatprep.subr.bf16.mxu0 0
      %419 = vmatpush2.bf16.msra.mxu0 0
      %420 = vmatprep.subr.bf16.mxu0 0
      %421 = vmatpush2.bf16.msra.mxu0 0
      %422 = vmatprep.subr.bf16.mxu0 0
      %423 = vmatpush2.bf16.msra.mxu0 0
      %424 = vmatprep.subr.bf16.mxu0 0
      %425 = vmatpush2.bf16.msra.mxu0 0
      %426 = vmatprep.mubr.bf16.mxu0 0
      %427 = vmatmul.mubr.bf16.gmra.mxu0 %v362
      %v428 = vpop.f32.mrf.mxu0
      %v429 = vadd.f32 %v392, %v428
      %v430 = vpop.f32.mrf.mxu0
      %v431 = vpop.f32.mrf.mxu0
      %v432 = vpop.f32.mrf.mxu0
      %433 = vdwg.mxu0
      %v434 = vpack.c.bf16 %v361, %v361
      %v435 = vld [vmem:[%s4] sm:$0xff]
      %v436 = vld [vmem:[%s4 + $0x8] sm:$0xff]
      %v437 = vld [vmem:[%s4 + $0x10] sm:$0xff]
      %v438 = vld [vmem:[%s4 + $0x18] sm:$0xff]
      %v439 = vld [vmem:[%s4 + $0x20] sm:$0xff]
      %v440 = vld [vmem:[%s4 + $0x28] sm:$0xff]
      %v441 = vld [vmem:[%s4 + $0x30] sm:$0xff]
      %v442 = vld [vmem:[%s4 + $0x38] sm:$0xff]
      %v443 = vld [vmem:[%s4 + $0x40] sm:$0xff]
      %v444 = vld [vmem:[%s4 + $0x48] sm:$0xff]
      %v445 = vld [vmem:[%s4 + $0x50] sm:$0xff]
      %v446 = vld [vmem:[%s4 + $0x58] sm:$0xff]
      %v447 = vld [vmem:[%s4 + $0x60] sm:$0xff]
      %v448 = vld [vmem:[%s4 + $0x68] sm:$0xff]
      %v449 = vld [vmem:[%s4 + $0x70] sm:$0xff]
      %v450 = vld [vmem:[%s4 + $0x78] sm:$0xff]
      %v451 = vld [vmem:[%s4 + $0x80] sm:$0xff]
      %v452 = vld [vmem:[%s4 + $0x88] sm:$0xff]
      %v453 = vld [vmem:[%s4 + $0x90] sm:$0xff]
      %v454 = vld [vmem:[%s4 + $0x98] sm:$0xff]
      %v455 = vld [vmem:[%s4 + $0xa0] sm:$0xff]
      %v456 = vld [vmem:[%s4 + $0xa8] sm:$0xff]
      %v457 = vld [vmem:[%s4 + $0xb0] sm:$0xff]
      %v458 = vld [vmem:[%s4 + $0xb8] sm:$0xff]
      %v459 = vld [vmem:[%s4 + $0xc0] sm:$0xff]
      %v460 = vld [vmem:[%s4 + $0xc8] sm:$0xff]
      %v461 = vld [vmem:[%s4 + $0xd0] sm:$0xff]
      %v462 = vld [vmem:[%s4 + $0xd8] sm:$0xff]
      %v463 = vld [vmem:[%s4 + $0xe0] sm:$0xff]
      %v464 = vld [vmem:[%s4 + $0xe8] sm:$0xff]
      %v465 = vld [vmem:[%s4 + $0xf0] sm:$0xff]
      %v466 = vld [vmem:[%s4 + $0xf8] sm:$0xff]
      %v467 = vpack.c.bf16 %v437, %v435
      %v468 = vpack.c.bf16 %v438, %v436
      %v469 = vpack.c.bf16 %v441, %v439
      %v470 = vpack.c.bf16 %v442, %v440
      %v471 = vpack.c.bf16 %v445, %v443
      %v472 = vpack.c.bf16 %v446, %v444
      %v473 = vpack.c.bf16 %v449, %v447
      %v474 = vpack.c.bf16 %v450, %v448
      %v475 = vpack.c.bf16 %v453, %v451
      %v476 = vpack.c.bf16 %v454, %v452
      %v477 = vpack.c.bf16 %v457, %v455
      %v478 = vpack.c.bf16 %v458, %v456
      %v479 = vpack.c.bf16 %v461, %v459
      %v480 = vpack.c.bf16 %v462, %v460
      %v481 = vpack.c.bf16 %v465, %v463
      %v482 = vpack.c.bf16 %v466, %v464
      %v483 = vld [vmem:[%s5] sm:$0x3]
      %v485 = vlaneseq
      %v486 = vshrl.u32 %v485, 7
      %v487 = vsub.s32 0, %v486
      %v488 = vrot.slane %v483, %v487
      %v489 = vlaneseq
      %v490 = vshrl.u32 %v489, 7
      %v491 = vsub.s32 1, %v490
      %v492 = vrot.slane %v483, %v491
      %495 = vmatprep.subr.bf16.mxu0 %v482
      %496 = vmatpush1.bf16.msra.mxu0 %v481
      %497 = vmatprep.subr.bf16.mxu0 %v480
      %498 = vmatpush1.bf16.msra.mxu0 %v479
      %499 = vmatprep.subr.bf16.mxu0 %v478
      %500 = vmatpush1.bf16.msra.mxu0 %v477
      %501 = vmatprep.subr.bf16.mxu0 %v476
      %502 = vmatpush1.bf16.msra.mxu0 %v475
      %503 = vmatprep.subr.bf16.mxu0 %v474
      %504 = vmatpush1.bf16.msra.mxu0 %v473
      %505 = vmatprep.subr.bf16.mxu0 %v472
      %506 = vmatpush1.bf16.msra.mxu0 %v471
      %507 = vmatprep.subr.bf16.mxu0 %v470
      %508 = vmatpush1.bf16.msra.mxu0 %v469
      %509 = vmatprep.subr.bf16.mxu0 %v468
      %510 = vmatpush1.bf16.msra.mxu0 %v467
      %511 = vmatprep.subr.bf16.mxu0 0
      %512 = vmatpush2.bf16.msra.mxu0 0
      %513 = vmatprep.subr.bf16.mxu0 0
      %514 = vmatpush2.bf16.msra.mxu0 0
      %515 = vmatprep.subr.bf16.mxu0 0
      %516 = vmatpush2.bf16.msra.mxu0 0
      %517 = vmatprep.subr.bf16.mxu0 0
      %518 = vmatpush2.bf16.msra.mxu0 0
      %519 = vmatprep.subr.bf16.mxu0 0
      %520 = vmatpush2.bf16.msra.mxu0 0
      %521 = vmatprep.subr.bf16.mxu0 0
      %522 = vmatpush2.bf16.msra.mxu0 0
      %523 = vmatprep.subr.bf16.mxu0 0
      %524 = vmatpush2.bf16.msra.mxu0 0
      %525 = vmatprep.subr.bf16.mxu0 0
      %526 = vmatpush2.bf16.msra.mxu0 0
      %527 = vmatprep.mubr.bf16.mxu0 0
      %528 = vmatmul.mubr.bf16.gmra.mxu0 %v434
      %v529 = vpop.f32.mrf.mxu0
      %v530 = vadd.f32 %v488, %v529
      %v531 = vpop.f32.mrf.mxu0
      %v532 = vadd.f32 %v492, %v531
      %v533 = vpop.f32.mrf.mxu0
      %v534 = vpop.f32.mrf.mxu0
      %535 = vdwg.mxu0
      %v536 = vld [vmem:[%s354] sm:$0x1]
      %v537 = vmul.f32 %v536, -1e+09
      %v538 = vlaneseq
      %v539 = vshrl.u32 %v538, 7
      %v540 = vlaneseq
      %v541 = vand.u32 %v540, 127
      %vm542 = vcmp.gt.s32.totalorder %v541, %v539
      %v543 = vsel %vm542, -1e+09, 0.0
      %v545 = vlaneseq
      %v546 = vshrl.u32 %v545, 7
      %v547 = vsub.s32 0, %v546
      %v548 = vrot.slane %v537, %v547
      %v550 = vadd.f32 %v548, %v543
      %v551 = vmul.f32 %v429, 0.25
      %vm552 = vcmask 130048
      %v554 = vsel %vm552, %v551, 0
      %v557 = vsel %vm552, %v530, 0
      %559 = vmatprep.subr.mxu0 0.0
      %560 = vmatpush1.xpose.msra.mxu0 0.0
      %561 = vmatprep.subr.mxu0 0.0
      %562 = vmatpush1.xpose.msra.mxu0 0.0
      %563 = vmatprep.subr.mxu0 0.0
      %564 = vmatpush1.xpose.msra.mxu0 0.0
      %565 = vmatprep.subr.mxu0 0.0
      %566 = vmatpush1.xpose.msra.mxu0 0.0
      %567 = vmatprep.subr.mxu0 0.0
      %568 = vmatpush1.xpose.msra.mxu0 0.0
      %569 = vmatprep.subr.mxu0 0.0
      %570 = vmatpush1.xpose.msra.mxu0 0.0
      %571 = vmatprep.subr.mxu0 0.0
      %572 = vmatpush1.xpose.msra.mxu0 0.0
      %573 = vmatprep.subr.mxu0 0.0
      %574 = vmatpush1.xpose.msra.mxu0 0.0
      %575 = vmatprep.subr.mxu0 0.0
      %576 = vmatpush1.xpose.msra.mxu0 0.0
      %577 = vmatprep.subr.mxu0 0.0
      %578 = vmatpush1.xpose.msra.mxu0 0.0
      %579 = vmatprep.subr.mxu0 0.0
      %580 = vmatpush1.xpose.msra.mxu0 0.0
      %581 = vmatprep.subr.mxu0 0.0
      %582 = vmatpush1.xpose.msra.mxu0 0.0
      %583 = vmatprep.subr.mxu0 0.0
      %584 = vmatpush1.xpose.msra.mxu0 0.0
      %585 = vmatprep.subr.mxu0 0.0
      %586 = vmatpush1.xpose.msra.mxu0 0.0
      %587 = vmatprep.subr.mxu0 0.0
      %588 = vmatpush1.xpose.msra.mxu0 0.0
      %589 = vmatprep.subr.mxu0 0.0
      %590 = vmatpush1.xpose.msra.mxu0 %v557
      %591 = vmatprep.subr.mxu0 0.0
      %592 = vmatpush2.xpose.msra.mxu0 0.0
      %593 = vmatprep.subr.mxu0 0.0
      %594 = vmatpush2.xpose.msra.mxu0 0.0
      %595 = vmatprep.subr.mxu0 0.0
      %596 = vmatpush2.xpose.msra.mxu0 0.0
      %597 = vmatprep.subr.mxu0 0.0
      %598 = vmatpush2.xpose.msra.mxu0 0.0
      %599 = vmatprep.subr.mxu0 0.0
      %600 = vmatpush2.xpose.msra.mxu0 0.0
      %601 = vmatprep.subr.mxu0 0.0
      %602 = vmatpush2.xpose.msra.mxu0 0.0
      %603 = vmatprep.subr.mxu0 0.0
      %604 = vmatpush2.xpose.msra.mxu0 0.0
      %605 = vmatprep.subr.mxu0 0.0
      %606 = vmatpush2.xpose.msra.mxu0 0.0
      %607 = vmatprep.subr.mxu0 0.0
      %608 = vmatpush2.xpose.msra.mxu0 0.0
      %609 = vmatprep.subr.mxu0 0.0
      %610 = vmatpush2.xpose.msra.mxu0 0.0
      %611 = vmatprep.subr.mxu0 0.0
      %612 = vmatpush2.xpose.msra.mxu0 0.0
      %613 = vmatprep.subr.mxu0 0.0
      %614 = vmatpush2.xpose.msra.mxu0 0.0
      %615 = vmatprep.subr.mxu0 0.0
      %616 = vmatpush2.xpose.msra.mxu0 0.0
      %617 = vmatprep.subr.mxu0 0.0
      %618 = vmatpush2.xpose.msra.mxu0 0.0
      %619 = vmatprep.subr.mxu0 0.0
      %620 = vmatpush2.xpose.msra.mxu0 0.0
      %621 = vmatprep.subr.mxu0 0.0
      %622 = vmatpush2.xpose.msra.mxu0 0.0
      %623 = vmatprep.mubr.f32.mxu0 0.0
      %624 = vmatmul.mubr.f32.gmra.mxu0 %v554
      %v625 = vpop.f32.mrf.mxu0
      %v626 = vadd.f32 %v550, %v625
      %v627 = vpop.f32.mrf.mxu0
      %628 = vdwg.mxu0
      %vm629 = vcmask 64512
      %v630 = vsel %vm629, %v626, -inf
      %631 = vmax.xlane.f32.xlu0 %v630
      %v632 = vpop.xlane.xlu0 %631
      %v633 = vsub.f32 %v626, %v632
      %v634 = vmul.f32 %v633, 1.442695
      %v635 = vpow.pop %v634
      %v636 = vsel %vm629, %v635, 0.0
      %637 = vadd.xlane.f32.xlu0 %v636
      %v638 = vpop.xlane.xlu0 %637
      %v639 = vrcp.pop %v638
      %v640 = vmul.f32 %v635, %v639
      %v642 = vsel %vm629, %v640, 0
      %644 = vmatprep.subr.mxu0 0.0
      %645 = vmatpush1.msra.mxu0 0.0
      %646 = vmatprep.subr.mxu0 0.0
      %647 = vmatpush1.msra.mxu0 0.0
      %648 = vmatprep.subr.mxu0 0.0
      %649 = vmatpush1.msra.mxu0 0.0
      %650 = vmatprep.subr.mxu0 0.0
      %651 = vmatpush1.msra.mxu0 0.0
      %652 = vmatprep.subr.mxu0 0.0
      %653 = vmatpush1.msra.mxu0 0.0
      %654 = vmatprep.subr.mxu0 0.0
      %655 = vmatpush1.msra.mxu0 0.0
      %656 = vmatprep.subr.mxu0 0.0
      %657 = vmatpush1.msra.mxu0 0.0
      %658 = vmatprep.subr.mxu0 0.0
      %659 = vmatpush1.msra.mxu0 0.0
      %660 = vmatprep.subr.mxu0 0.0
      %661 = vmatpush1.msra.mxu0 0.0
      %662 = vmatprep.subr.mxu0 0.0
      %663 = vmatpush1.msra.mxu0 0.0
      %664 = vmatprep.subr.mxu0 0.0
      %665 = vmatpush1.msra.mxu0 0.0
      %666 = vmatprep.subr.mxu0 0.0
      %667 = vmatpush1.msra.mxu0 0.0
      %668 = vmatprep.subr.mxu0 0.0
      %669 = vmatpush1.msra.mxu0 0.0
      %670 = vmatprep.subr.mxu0 0.0
      %671 = vmatpush1.msra.mxu0 0.0
      %672 = vmatprep.subr.mxu0 0.0
      %673 = vmatpush1.msra.mxu0 0.0
      %674 = vmatprep.subr.mxu0 0.0
      %675 = vmatpush1.msra.mxu0 %v532
      %676 = vmatprep.subr.mxu0 0.0
      %677 = vmatpush2.msra.mxu0 0.0
      %678 = vmatprep.subr.mxu0 0.0
      %679 = vmatpush2.msra.mxu0 0.0
      %680 = vmatprep.subr.mxu0 0.0
      %681 = vmatpush2.msra.mxu0 0.0
      %682 = vmatprep.subr.mxu0 0.0
      %683 = vmatpush2.msra.mxu0 0.0
      %684 = vmatprep.subr.mxu0 0.0
      %685 = vmatpush2.msra.mxu0 0.0
      %686 = vmatprep.subr.mxu0 0.0
      %687 = vmatpush2.msra.mxu0 0.0
      %688 = vmatprep.subr.mxu0 0.0
      %689 = vmatpush2.msra.mxu0 0.0
      %690 = vmatprep.subr.mxu0 0.0
      %691 = vmatpush2.msra.mxu0 0.0
      %692 = vmatprep.subr.mxu0 0.0
      %693 = vmatpush2.msra.mxu0 0.0
      %694 = vmatprep.subr.mxu0 0.0
      %695 = vmatpush2.msra.mxu0 0.0
      %696 = vmatprep.subr.mxu0 0.0
      %697 = vmatpush2.msra.mxu0 0.0
      %698 = vmatprep.subr.mxu0 0.0
      %699 = vmatpush2.msra.mxu0 0.0
      %700 = vmatprep.subr.mxu0 0.0
      %701 = vmatpush2.msra.mxu0 0.0
      %702 = vmatprep.subr.mxu0 0.0
      %703 = vmatpush2.msra.mxu0 0.0
      %704 = vmatprep.subr.mxu0 0.0
      %705 = vmatpush2.msra.mxu0 0.0
      %706 = vmatprep.subr.mxu0 0.0
      %707 = vmatpush2.msra.mxu0 0.0
      %708 = vmatprep.mubr.f32.mxu0 0.0
      %709 = vmatmul.mubr.f32.gmra.mxu0 %v642
      %v710 = vpop.f32.mrf.mxu0
      %v711 = vadd.f32 0.0, %v710
      %v712 = vpop.f32.mrf.mxu0
      %713 = vdwg.mxu0
      %714 = vrot.lane.b32.xlu0 %v551, 112
      %v715 = vpop.permute.xlu0 %714
      %716 = vrot.lane.b32.xlu0 %v530, 112
      %v717 = vpop.permute.xlu0 %716
      %v718 = vsel %vm552, %v715, 0
      %v720 = vsel %vm552, %v717, 0
      %722 = vmatprep.subr.mxu0 0.0
      %723 = vmatpush1.xpose.msra.mxu0 0.0
      %724 = vmatprep.subr.mxu0 0.0
      %725 = vmatpush1.xpose.msra.mxu0 0.0
      %726 = vmatprep.subr.mxu0 0.0
      %727 = vmatpush1.xpose.msra.mxu0 0.0
      %728 = vmatprep.subr.mxu0 0.0
      %729 = vmatpush1.xpose.msra.mxu0 0.0
      %730 = vmatprep.subr.mxu0 0.0
      %731 = vmatpush1.xpose.msra.mxu0 0.0
      %732 = vmatprep.subr.mxu0 0.0
      %733 = vmatpush1.xpose.msra.mxu0 0.0
      %734 = vmatprep.subr.mxu0 0.0
      %735 = vmatpush1.xpose.msra.mxu0 0.0
      %736 = vmatprep.subr.mxu0 0.0
      %737 = vmatpush1.xpose.msra.mxu0 0.0
      %738 = vmatprep.subr.mxu0 0.0
      %739 = vmatpush1.xpose.msra.mxu0 0.0
      %740 = vmatprep.subr.mxu0 0.0
      %741 = vmatpush1.xpose.msra.mxu0 0.0
      %742 = vmatprep.subr.mxu0 0.0
      %743 = vmatpush1.xpose.msra.mxu0 0.0
      %744 = vmatprep.subr.mxu0 0.0
      %745 = vmatpush1.xpose.msra.mxu0 0.0
      %746 = vmatprep.subr.mxu0 0.0
      %747 = vmatpush1.xpose.msra.mxu0 0.0
      %748 = vmatprep.subr.mxu0 0.0
      %749 = vmatpush1.xpose.msra.mxu0 0.0
      %750 = vmatprep.subr.mxu0 0.0
      %751 = vmatpush1.xpose.msra.mxu0 0.0
      %752 = vmatprep.subr.mxu0 0.0
      %753 = vmatpush1.xpose.msra.mxu0 %v720
      %754 = vmatprep.subr.mxu0 0.0
      %755 = vmatpush2.xpose.msra.mxu0 0.0
      %756 = vmatprep.subr.mxu0 0.0
      %757 = vmatpush2.xpose.msra.mxu0 0.0
      %758 = vmatprep.subr.mxu0 0.0
      %759 = vmatpush2.xpose.msra.mxu0 0.0
      %760 = vmatprep.subr.mxu0 0.0
      %761 = vmatpush2.xpose.msra.mxu0 0.0
      %762 = vmatprep.subr.mxu0 0.0
      %763 = vmatpush2.xpose.msra.mxu0 0.0
      %764 = vmatprep.subr.mxu0 0.0
      %765 = vmatpush2.xpose.msra.mxu0 0.0
      %766 = vmatprep.subr.mxu0 0.0
      %767 = vmatpush2.xpose.msra.mxu0 0.0
      %768 = vmatprep.subr.mxu0 0.0
      %769 = vmatpush2.xpose.msra.mxu0 0.0
      %770 = vmatprep.subr.mxu0 0.0
      %771 = vmatpush2.xpose.msra.mxu0 0.0
      %772 = vmatprep.subr.mxu0 0.0
      %773 = vmatpush2.xpose.msra.mxu0 0.0
      %774 = vmatprep.subr.mxu0 0.0
      %775 = vmatpush2.xpose.msra.mxu0 0.0
      %776 = vmatprep.subr.mxu0 0.0
      %777 = vmatpush2.xpose.msra.mxu0 0.0
      %778 = vmatprep.subr.mxu0 0.0
      %779 = vmatpush2.xpose.msra.mxu0 0.0
      %780 = vmatprep.subr.mxu0 0.0
      %781 = vmatpush2.xpose.msra.mxu0 0.0
      %782 = vmatprep.subr.mxu0 0.0
      %783 = vmatpush2.xpose.msra.mxu0 0.0
      %784 = vmatprep.subr.mxu0 0.0
      %785 = vmatpush2.xpose.msra.mxu0 0.0
      %786 = vmatprep.mubr.f32.mxu0 0.0
      %787 = vmatmul.mubr.f32.gmra.mxu0 %v718
      %v788 = vpop.f32.mrf.mxu0
      %v789 = vadd.f32 %v550, %v788
      %v790 = vpop.f32.mrf.mxu0
      %791 = vdwg.mxu0
      %v792 = vsel %vm629, %v789, -inf
      %793 = vmax.xlane.f32.xlu0 %v792
      %v794 = vpop.xlane.xlu0 %793
      %v795 = vsub.f32 %v789, %v794
      %v796 = vmul.f32 %v795, 1.442695
      %v797 = vpow.pop %v796
      %v798 = vsel %vm629, %v797, 0.0
      %799 = vadd.xlane.f32.xlu0 %v798
      %v800 = vpop.xlane.xlu0 %799
      %v801 = vrcp.pop %v800
      %v802 = vmul.f32 %v797, %v801
      %804 = vrot.lane.b32.xlu0 %v532, 112
      %v805 = vpop.permute.xlu0 %804
      %v808 = vsel %vm629, %v802, 0
      %810 = vmatprep.subr.mxu0 0.0
      %811 = vmatpush1.msra.mxu0 0.0
      %812 = vmatprep.subr.mxu0 0.0
      %813 = vmatpush1.msra.mxu0 0.0
      %814 = vmatprep.subr.mxu0 0.0
      %815 = vmatpush1.msra.mxu0 0.0
      %816 = vmatprep.subr.mxu0 0.0
      %817 = vmatpush1.msra.mxu0 0.0
      %818 = vmatprep.subr.mxu0 0.0
      %819 = vmatpush1.msra.mxu0 0.0
      %820 = vmatprep.subr.mxu0 0.0
      %821 = vmatpush1.msra.mxu0 0.0
      %822 = vmatprep.subr.mxu0 0.0
      %823 = vmatpush1.msra.mxu0 0.0
      %824 = vmatprep.subr.mxu0 0.0
      %825 = vmatpush1.msra.mxu0 0.0
      %826 = vmatprep.subr.mxu0 0.0
      %827 = vmatpush1.msra.mxu0 0.0
      %828 = vmatprep.subr.mxu0 0.0
      %829 = vmatpush1.msra.mxu0 0.0
      %830 = vmatprep.subr.mxu0 0.0
      %831 = vmatpush1.msra.mxu0 0.0
      %832 = vmatprep.subr.mxu0 0.0
      %833 = vmatpush1.msra.mxu0 0.0
      %834 = vmatprep.subr.mxu0 0.0
      %835 = vmatpush1.msra.mxu0 0.0
      %836 = vmatprep.subr.mxu0 0.0
      %837 = vmatpush1.msra.mxu0 0.0
      %838 = vmatprep.subr.mxu0 0.0
      %839 = vmatpush1.msra.mxu0 0.0
      %840 = vmatprep.subr.mxu0 0.0
      %841 = vmatpush1.msra.mxu0 %v805
      %842 = vmatprep.subr.mxu0 0.0
      %843 = vmatpush2.msra.mxu0 0.0
      %844 = vmatprep.subr.mxu0 0.0
      %845 = vmatpush2.msra.mxu0 0.0
      %846 = vmatprep.subr.mxu0 0.0
      %847 = vmatpush2.msra.mxu0 0.0
      %848 = vmatprep.subr.mxu0 0.0
      %849 = vmatpush2.msra.mxu0 0.0
      %850 = vmatprep.subr.mxu0 0.0
      %851 = vmatpush2.msra.mxu0 0.0
      %852 = vmatprep.subr.mxu0 0.0
      %853 = vmatpush2.msra.mxu0 0.0
      %854 = vmatprep.subr.mxu0 0.0
      %855 = vmatpush2.msra.mxu0 0.0
      %856 = vmatprep.subr.mxu0 0.0
      %857 = vmatpush2.msra.mxu0 0.0
      %858 = vmatprep.subr.mxu0 0.0
      %859 = vmatpush2.msra.mxu0 0.0
      %860 = vmatprep.subr.mxu0 0.0
      %861 = vmatpush2.msra.mxu0 0.0
      %862 = vmatprep.subr.mxu0 0.0
      %863 = vmatpush2.msra.mxu0 0.0
      %864 = vmatprep.subr.mxu0 0.0
      %865 = vmatpush2.msra.mxu0 0.0
      %866 = vmatprep.subr.mxu0 0.0
      %867 = vmatpush2.msra.mxu0 0.0
      %868 = vmatprep.subr.mxu0 0.0
      %869 = vmatpush2.msra.mxu0 0.0
      %870 = vmatprep.subr.mxu0 0.0
      %871 = vmatpush2.msra.mxu0 0.0
      %872 = vmatprep.subr.mxu0 0.0
      %873 = vmatpush2.msra.mxu0 0.0
      %874 = vmatprep.mubr.f32.mxu0 0.0
      %875 = vmatmul.mubr.f32.gmra.mxu0 %v808
      %v876 = vpop.f32.mrf.mxu0
      %v877 = vadd.f32 0.0, %v876
      %v878 = vpop.f32.mrf.mxu0
      %879 = vdwg.mxu0
      %880 = vrot.lane.b32.xlu0 %v551, 96
      %v881 = vpop.permute.xlu0 %880
      %882 = vrot.lane.b32.xlu0 %v530, 96
      %v883 = vpop.permute.xlu0 %882
      %v884 = vsel %vm552, %v881, 0
      %v886 = vsel %vm552, %v883, 0
      %888 = vmatprep.subr.mxu0 0.0
      %889 = vmatpush1.xpose.msra.mxu0 0.0
      %890 = vmatprep.subr.mxu0 0.0
      %891 = vmatpush1.xpose.msra.mxu0 0.0
      %892 = vmatprep.subr.mxu0 0.0
      %893 = vmatpush1.xpose.msra.mxu0 0.0
      %894 = vmatprep.subr.mxu0 0.0
      %895 = vmatpush1.xpose.msra.mxu0 0.0
      %896 = vmatprep.subr.mxu0 0.0
      %897 = vmatpush1.xpose.msra.mxu0 0.0
      %898 = vmatprep.subr.mxu0 0.0
      %899 = vmatpush1.xpose.msra.mxu0 0.0
      %900 = vmatprep.subr.mxu0 0.0
      %901 = vmatpush1.xpose.msra.mxu0 0.0
      %902 = vmatprep.subr.mxu0 0.0
      %903 = vmatpush1.xpose.msra.mxu0 0.0
      %904 = vmatprep.subr.mxu0 0.0
      %905 = vmatpush1.xpose.msra.mxu0 0.0
      %906 = vmatprep.subr.mxu0 0.0
      %907 = vmatpush1.xpose.msra.mxu0 0.0
      %908 = vmatprep.subr.mxu0 0.0
      %909 = vmatpush1.xpose.msra.mxu0 0.0
      %910 = vmatprep.subr.mxu0 0.0
      %911 = vmatpush1.xpose.msra.mxu0 0.0
      %912 = vmatprep.subr.mxu0 0.0
      %913 = vmatpush1.xpose.msra.mxu0 0.0
      %914 = vmatprep.subr.mxu0 0.0
      %915 = vmatpush1.xpose.msra.mxu0 0.0
      %916 = vmatprep.subr.mxu0 0.0
      %917 = vmatpush1.xpose.msra.mxu0 0.0
      %918 = vmatprep.subr.mxu0 0.0
      %919 = vmatpush1.xpose.msra.mxu0 %v886
      %920 = vmatprep.subr.mxu0 0.0
      %921 = vmatpush2.xpose.msra.mxu0 0.0
      %922 = vmatprep.subr.mxu0 0.0
      %923 = vmatpush2.xpose.msra.mxu0 0.0
      %924 = vmatprep.subr.mxu0 0.0
      %925 = vmatpush2.xpose.msra.mxu0 0.0
      %926 = vmatprep.subr.mxu0 0.0
      %927 = vmatpush2.xpose.msra.mxu0 0.0
      %928 = vmatprep.subr.mxu0 0.0
      %929 = vmatpush2.xpose.msra.mxu0 0.0
      %930 = vmatprep.subr.mxu0 0.0
      %931 = vmatpush2.xpose.msra.mxu0 0.0
      %932 = vmatprep.subr.mxu0 0.0
      %933 = vmatpush2.xpose.msra.mxu0 0.0
      %934 = vmatprep.subr.mxu0 0.0
      %935 = vmatpush2.xpose.msra.mxu0 0.0
      %936 = vmatprep.subr.mxu0 0.0
      %937 = vmatpush2.xpose.msra.mxu0 0.0
      %938 = vmatprep.subr.mxu0 0.0
      %939 = vmatpush2.xpose.msra.mxu0 0.0
      %940 = vmatprep.subr.mxu0 0.0
      %941 = vmatpush2.xpose.msra.mxu0 0.0
      %942 = vmatprep.subr.mxu0 0.0
      %943 = vmatpush2.xpose.msra.mxu0 0.0
      %944 = vmatprep.subr.mxu0 0.0
      %945 = vmatpush2.xpose.msra.mxu0 0.0
      %946 = vmatprep.subr.mxu0 0.0
      %947 = vmatpush2.xpose.msra.mxu0 0.0
      %948 = vmatprep.subr.mxu0 0.0
      %949 = vmatpush2.xpose.msra.mxu0 0.0
      %950 = vmatprep.subr.mxu0 0.0
      %951 = vmatpush2.xpose.msra.mxu0 0.0
      %952 = vmatprep.mubr.f32.mxu0 0.0
      %953 = vmatmul.mubr.f32.gmra.mxu0 %v884
      %v954 = vpop.f32.mrf.mxu0
      %v955 = vadd.f32 %v550, %v954
      %v956 = vpop.f32.mrf.mxu0
      %957 = vdwg.mxu0
      %v958 = vsel %vm629, %v955, -inf
      %959 = vmax.xlane.f32.xlu0 %v958
      %v960 = vpop.xlane.xlu0 %959
      %v961 = vsub.f32 %v955, %v960
      %v962 = vmul.f32 %v961, 1.442695
      %v963 = vpow.pop %v962
      %v964 = vsel %vm629, %v963, 0.0
      %965 = vadd.xlane.f32.xlu0 %v964
      %v966 = vpop.xlane.xlu0 %965
      %v967 = vrcp.pop %v966
      %v968 = vmul.f32 %v963, %v967
      %969 = vrot.lane.b32.xlu0 %v532, 96
      %v970 = vpop.permute.xlu0 %969
      %v973 = vsel %vm629, %v968, 0
      %975 = vmatprep.subr.mxu0 0.0
      %976 = vmatpush1.msra.mxu0 0.0
      %977 = vmatprep.subr.mxu0 0.0
      %978 = vmatpush1.msra.mxu0 0.0
      %979 = vmatprep.subr.mxu0 0.0
      %980 = vmatpush1.msra.mxu0 0.0
      %981 = vmatprep.subr.mxu0 0.0
      %982 = vmatpush1.msra.mxu0 0.0
      %983 = vmatprep.subr.mxu0 0.0
      %984 = vmatpush1.msra.mxu0 0.0
      %985 = vmatprep.subr.mxu0 0.0
      %986 = vmatpush1.msra.mxu0 0.0
      %987 = vmatprep.subr.mxu0 0.0
      %988 = vmatpush1.msra.mxu0 0.0
      %989 = vmatprep.subr.mxu0 0.0
      %990 = vmatpush1.msra.mxu0 0.0
      %991 = vmatprep.subr.mxu0 0.0
      %992 = vmatpush1.msra.mxu0 0.0
      %993 = vmatprep.subr.mxu0 0.0
      %994 = vmatpush1.msra.mxu0 0.0
      %995 = vmatprep.subr.mxu0 0.0
      %996 = vmatpush1.msra.mxu0 0.0
      %997 = vmatprep.subr.mxu0 0.0
      %998 = vmatpush1.msra.mxu0 0.0
      %999 = vmatprep.subr.mxu0 0.0
      %1000 = vmatpush1.msra.mxu0 0.0
      %1001 = vmatprep.subr.mxu0 0.0
      %1002 = vmatpush1.msra.mxu0 0.0
      %1003 = vmatprep.subr.mxu0 0.0
      %1004 = vmatpush1.msra.mxu0 0.0
      %1005 = vmatprep.subr.mxu0 0.0
      %1006 = vmatpush1.msra.mxu0 %v970
      %1007 = vmatprep.subr.mxu0 0.0
      %1008 = vmatpush2.msra.mxu0 0.0
      %1009 = vmatprep.subr.mxu0 0.0
      %1010 = vmatpush2.msra.mxu0 0.0
      %1011 = vmatprep.subr.mxu0 0.0
      %1012 = vmatpush2.msra.mxu0 0.0
      %1013 = vmatprep.subr.mxu0 0.0
      %1014 = vmatpush2.msra.mxu0 0.0
      %1015 = vmatprep.subr.mxu0 0.0
      %1016 = vmatpush2.msra.mxu0 0.0
      %1017 = vmatprep.subr.mxu0 0.0
      %1018 = vmatpush2.msra.mxu0 0.0
      %1019 = vmatprep.subr.mxu0 0.0
      %1020 = vmatpush2.msra.mxu0 0.0
      %1021 = vmatprep.subr.mxu0 0.0
      %1022 = vmatpush2.msra.mxu0 0.0
      %1023 = vmatprep.subr.mxu0 0.0
      %1024 = vmatpush2.msra.mxu0 0.0
      %1025 = vmatprep.subr.mxu0 0.0
      %1026 = vmatpush2.msra.mxu0 0.0
      %1027 = vmatprep.subr.mxu0 0.0
      %1028 = vmatpush2.msra.mxu0 0.0
      %1029 = vmatprep.subr.mxu0 0.0
      %1030 = vmatpush2.msra.mxu0 0.0
      %1031 = vmatprep.subr.mxu0 0.0
      %1032 = vmatpush2.msra.mxu0 0.0
      %1033 = vmatprep.subr.mxu0 0.0
      %1034 = vmatpush2.msra.mxu0 0.0
      %1035 = vmatprep.subr.mxu0 0.0
      %1036 = vmatpush2.msra.mxu0 0.0
      %1037 = vmatprep.subr.mxu0 0.0
      %1038 = vmatpush2.msra.mxu0 0.0
      %1039 = vmatprep.mubr.f32.mxu0 0.0
      %1040 = vmatmul.mubr.f32.gmra.mxu0 %v973
      %v1041 = vpop.f32.mrf.mxu0
      %v1042 = vadd.f32 0.0, %v1041
      %v1043 = vpop.f32.mrf.mxu0
      %1044 = vdwg.mxu0
      %1045 = vrot.lane.b32.xlu0 %v551, 80
      %v1046 = vpop.permute.xlu0 %1045
      %1047 = vrot.lane.b32.xlu0 %v530, 80
      %v1048 = vpop.permute.xlu0 %1047
      %v1049 = vsel %vm552, %v1046, 0
      %v1051 = vsel %vm552, %v1048, 0
      %1053 = vmatprep.subr.mxu0 0.0
      %1054 = vmatpush1.xpose.msra.mxu0 0.0
      %1055 = vmatprep.subr.mxu0 0.0
      %1056 = vmatpush1.xpose.msra.mxu0 0.0
      %1057 = vmatprep.subr.mxu0 0.0
      %1058 = vmatpush1.xpose.msra.mxu0 0.0
      %1059 = vmatprep.subr.mxu0 0.0
      %1060 = vmatpush1.xpose.msra.mxu0 0.0
      %1061 = vmatprep.subr.mxu0 0.0
      %1062 = vmatpush1.xpose.msra.mxu0 0.0
      %1063 = vmatprep.subr.mxu0 0.0
      %1064 = vmatpush1.xpose.msra.mxu0 0.0
      %1065 = vmatprep.subr.mxu0 0.0
      %1066 = vmatpush1.xpose.msra.mxu0 0.0
      %1067 = vmatprep.subr.mxu0 0.0
      %1068 = vmatpush1.xpose.msra.mxu0 0.0
      %1069 = vmatprep.subr.mxu0 0.0
      %1070 = vmatpush1.xpose.msra.mxu0 0.0
      %1071 = vmatprep.subr.mxu0 0.0
      %1072 = vmatpush1.xpose.msra.mxu0 0.0
      %1073 = vmatprep.subr.mxu0 0.0
      %1074 = vmatpush1.xpose.msra.mxu0 0.0
      %1075 = vmatprep.subr.mxu0 0.0
      %1076 = vmatpush1.xpose.msra.mxu0 0.0
      %1077 = vmatprep.subr.mxu0 0.0
      %1078 = vmatpush1.xpose.msra.mxu0 0.0
      %1079 = vmatprep.subr.mxu0 0.0
      %1080 = vmatpush1.xpose.msra.mxu0 0.0
      %1081 = vmatprep.subr.mxu0 0.0
      %1082 = vmatpush1.xpose.msra.mxu0 0.0
      %1083 = vmatprep.subr.mxu0 0.0
      %1084 = vmatpush1.xpose.msra.mxu0 %v1051
      %1085 = vmatprep.subr.mxu0 0.0
      %1086 = vmatpush2.xpose.msra.mxu0 0.0
      %1087 = vmatprep.subr.mxu0 0.0
      %1088 = vmatpush2.xpose.msra.mxu0 0.0
      %1089 = vmatprep.subr.mxu0 0.0
      %1090 = vmatpush2.xpose.msra.mxu0 0.0
      %1091 = vmatprep.subr.mxu0 0.0
      %1092 = vmatpush2.xpose.msra.mxu0 0.0
      %1093 = vmatprep.subr.mxu0 0.0
      %1094 = vmatpush2.xpose.msra.mxu0 0.0
      %1095 = vmatprep.subr.mxu0 0.0
      %1096 = vmatpush2.xpose.msra.mxu0 0.0
      %1097 = vmatprep.subr.mxu0 0.0
      %1098 = vmatpush2.xpose.msra.mxu0 0.0
      %1099 = vmatprep.subr.mxu0 0.0
      %1100 = vmatpush2.xpose.msra.mxu0 0.0
      %1101 = vmatprep.subr.mxu0 0.0
      %1102 = vmatpush2.xpose.msra.mxu0 0.0
      %1103 = vmatprep.subr.mxu0 0.0
      %1104 = vmatpush2.xpose.msra.mxu0 0.0
      %1105 = vmatprep.subr.mxu0 0.0
      %1106 = vmatpush2.xpose.msra.mxu0 0.0
      %1107 = vmatprep.subr.mxu0 0.0
      %1108 = vmatpush2.xpose.msra.mxu0 0.0
      %1109 = vmatprep.subr.mxu0 0.0
      %1110 = vmatpush2.xpose.msra.mxu0 0.0
      %1111 = vmatprep.subr.mxu0 0.0
      %1112 = vmatpush2.xpose.msra.mxu0 0.0
      %1113 = vmatprep.subr.mxu0 0.0
      %1114 = vmatpush2.xpose.msra.mxu0 0.0
      %1115 = vmatprep.subr.mxu0 0.0
      %1116 = vmatpush2.xpose.msra.mxu0 0.0
      %1117 = vmatprep.mubr.f32.mxu0 0.0
      %1118 = vmatmul.mubr.f32.gmra.mxu0 %v1049
      %v1119 = vpop.f32.mrf.mxu0
      %v1120 = vadd.f32 %v550, %v1119
      %v1121 = vpop.f32.mrf.mxu0
      %1122 = vdwg.mxu0
      %v1123 = vsel %vm629, %v1120, -inf
      %1124 = vmax.xlane.f32.xlu0 %v1123
      %v1125 = vpop.xlane.xlu0 %1124
      %v1126 = vsub.f32 %v1120, %v1125
      %v1127 = vmul.f32 %v1126, 1.442695
      %v1128 = vpow.pop %v1127
      %v1129 = vsel %vm629, %v1128, 0.0
      %1130 = vadd.xlane.f32.xlu0 %v1129
      %v1131 = vpop.xlane.xlu0 %1130
      %v1132 = vrcp.pop %v1131
      %v1133 = vmul.f32 %v1128, %v1132
      %1134 = vrot.lane.b32.xlu0 %v532, 80
      %v1135 = vpop.permute.xlu0 %1134
      %v1138 = vsel %vm629, %v1133, 0
      %1140 = vmatprep.subr.mxu0 0.0
      %1141 = vmatpush1.msra.mxu0 0.0
      %1142 = vmatprep.subr.mxu0 0.0
      %1143 = vmatpush1.msra.mxu0 0.0
      %1144 = vmatprep.subr.mxu0 0.0
      %1145 = vmatpush1.msra.mxu0 0.0
      %1146 = vmatprep.subr.mxu0 0.0
      %1147 = vmatpush1.msra.mxu0 0.0
      %1148 = vmatprep.subr.mxu0 0.0
      %1149 = vmatpush1.msra.mxu0 0.0
      %1150 = vmatprep.subr.mxu0 0.0
      %1151 = vmatpush1.msra.mxu0 0.0
      %1152 = vmatprep.subr.mxu0 0.0
      %1153 = vmatpush1.msra.mxu0 0.0
      %1154 = vmatprep.subr.mxu0 0.0
      %1155 = vmatpush1.msra.mxu0 0.0
      %1156 = vmatprep.subr.mxu0 0.0
      %1157 = vmatpush1.msra.mxu0 0.0
      %1158 = vmatprep.subr.mxu0 0.0
      %1159 = vmatpush1.msra.mxu0 0.0
      %1160 = vmatprep.subr.mxu0 0.0
      %1161 = vmatpush1.msra.mxu0 0.0
      %1162 = vmatprep.subr.mxu0 0.0
      %1163 = vmatpush1.msra.mxu0 0.0
      %1164 = vmatprep.subr.mxu0 0.0
      %1165 = vmatpush1.msra.mxu0 0.0
      %1166 = vmatprep.subr.mxu0 0.0
      %1167 = vmatpush1.msra.mxu0 0.0
      %1168 = vmatprep.subr.mxu0 0.0
      %1169 = vmatpush1.msra.mxu0 0.0
      %1170 = vmatprep.subr.mxu0 0.0
      %1171 = vmatpush1.msra.mxu0 %v1135
      %1172 = vmatprep.subr.mxu0 0.0
      %1173 = vmatpush2.msra.mxu0 0.0
      %1174 = vmatprep.subr.mxu0 0.0
      %1175 = vmatpush2.msra.mxu0 0.0
      %1176 = vmatprep.subr.mxu0 0.0
      %1177 = vmatpush2.msra.mxu0 0.0
      %1178 = vmatprep.subr.mxu0 0.0
      %1179 = vmatpush2.msra.mxu0 0.0
      %1180 = vmatprep.subr.mxu0 0.0
      %1181 = vmatpush2.msra.mxu0 0.0
      %1182 = vmatprep.subr.mxu0 0.0
      %1183 = vmatpush2.msra.mxu0 0.0
      %1184 = vmatprep.subr.mxu0 0.0
      %1185 = vmatpush2.msra.mxu0 0.0
      %1186 = vmatprep.subr.mxu0 0.0
      %1187 = vmatpush2.msra.mxu0 0.0
      %1188 = vmatprep.subr.mxu0 0.0
      %1189 = vmatpush2.msra.mxu0 0.0
      %1190 = vmatprep.subr.mxu0 0.0
      %1191 = vmatpush2.msra.mxu0 0.0
      %1192 = vmatprep.subr.mxu0 0.0
      %1193 = vmatpush2.msra.mxu0 0.0
      %1194 = vmatprep.subr.mxu0 0.0
      %1195 = vmatpush2.msra.mxu0 0.0
      %1196 = vmatprep.subr.mxu0 0.0
      %1197 = vmatpush2.msra.mxu0 0.0
      %1198 = vmatprep.subr.mxu0 0.0
      %1199 = vmatpush2.msra.mxu0 0.0
      %1200 = vmatprep.subr.mxu0 0.0
      %1201 = vmatpush2.msra.mxu0 0.0
      %1202 = vmatprep.subr.mxu0 0.0
      %1203 = vmatpush2.msra.mxu0 0.0
      %1204 = vmatprep.mubr.f32.mxu0 0.0
      %1205 = vmatmul.mubr.f32.gmra.mxu0 %v1138
      %v1206 = vpop.f32.mrf.mxu0
      %v1207 = vadd.f32 0.0, %v1206
      %v1208 = vpop.f32.mrf.mxu0
      %1209 = vdwg.mxu0
      %1210 = vrot.lane.b32.xlu0 %v551, 64
      %v1211 = vpop.permute.xlu0 %1210
      %1212 = vrot.lane.b32.xlu0 %v530, 64
      %v1213 = vpop.permute.xlu0 %1212
      %v1214 = vsel %vm552, %v1211, 0
      %v1216 = vsel %vm552, %v1213, 0
      %1218 = vmatprep.subr.mxu0 0.0
      %1219 = vmatpush1.xpose.msra.mxu0 0.0
      %1220 = vmatprep.subr.mxu0 0.0
      %1221 = vmatpush1.xpose.msra.mxu0 0.0
      %1222 = vmatprep.subr.mxu0 0.0
      %1223 = vmatpush1.xpose.msra.mxu0 0.0
      %1224 = vmatprep.subr.mxu0 0.0
      %1225 = vmatpush1.xpose.msra.mxu0 0.0
      %1226 = vmatprep.subr.mxu0 0.0
      %1227 = vmatpush1.xpose.msra.mxu0 0.0
      %1228 = vmatprep.subr.mxu0 0.0
      %1229 = vmatpush1.xpose.msra.mxu0 0.0
      %1230 = vmatprep.subr.mxu0 0.0
      %1231 = vmatpush1.xpose.msra.mxu0 0.0
      %1232 = vmatprep.subr.mxu0 0.0
      %1233 = vmatpush1.xpose.msra.mxu0 0.0
      %1234 = vmatprep.subr.mxu0 0.0
      %1235 = vmatpush1.xpose.msra.mxu0 0.0
      %1236 = vmatprep.subr.mxu0 0.0
      %1237 = vmatpush1.xpose.msra.mxu0 0.0
      %1238 = vmatprep.subr.mxu0 0.0
      %1239 = vmatpush1.xpose.msra.mxu0 0.0
      %1240 = vmatprep.subr.mxu0 0.0
      %1241 = vmatpush1.xpose.msra.mxu0 0.0
      %1242 = vmatprep.subr.mxu0 0.0
      %1243 = vmatpush1.xpose.msra.mxu0 0.0
      %1244 = vmatprep.subr.mxu0 0.0
      %1245 = vmatpush1.xpose.msra.mxu0 0.0
      %1246 = vmatprep.subr.mxu0 0.0
      %1247 = vmatpush1.xpose.msra.mxu0 0.0
      %1248 = vmatprep.subr.mxu0 0.0
      %1249 = vmatpush1.xpose.msra.mxu0 %v1216
      %1250 = vmatprep.subr.mxu0 0.0
      %1251 = vmatpush2.xpose.msra.mxu0 0.0
      %1252 = vmatprep.subr.mxu0 0.0
      %1253 = vmatpush2.xpose.msra.mxu0 0.0
      %1254 = vmatprep.subr.mxu0 0.0
      %1255 = vmatpush2.xpose.msra.mxu0 0.0
      %1256 = vmatprep.subr.mxu0 0.0
      %1257 = vmatpush2.xpose.msra.mxu0 0.0
      %1258 = vmatprep.subr.mxu0 0.0
      %1259 = vmatpush2.xpose.msra.mxu0 0.0
      %1260 = vmatprep.subr.mxu0 0.0
      %1261 = vmatpush2.xpose.msra.mxu0 0.0
      %1262 = vmatprep.subr.mxu0 0.0
      %1263 = vmatpush2.xpose.msra.mxu0 0.0
      %1264 = vmatprep.subr.mxu0 0.0
      %1265 = vmatpush2.xpose.msra.mxu0 0.0
      %1266 = vmatprep.subr.mxu0 0.0
      %1267 = vmatpush2.xpose.msra.mxu0 0.0
      %1268 = vmatprep.subr.mxu0 0.0
      %1269 = vmatpush2.xpose.msra.mxu0 0.0
      %1270 = vmatprep.subr.mxu0 0.0
      %1271 = vmatpush2.xpose.msra.mxu0 0.0
      %1272 = vmatprep.subr.mxu0 0.0
      %1273 = vmatpush2.xpose.msra.mxu0 0.0
      %1274 = vmatprep.subr.mxu0 0.0
      %1275 = vmatpush2.xpose.msra.mxu0 0.0
      %1276 = vmatprep.subr.mxu0 0.0
      %1277 = vmatpush2.xpose.msra.mxu0 0.0
      %1278 = vmatprep.subr.mxu0 0.0
      %1279 = vmatpush2.xpose.msra.mxu0 0.0
      %1280 = vmatprep.subr.mxu0 0.0
      %1281 = vmatpush2.xpose.msra.mxu0 0.0
      %1282 = vmatprep.mubr.f32.mxu0 0.0
      %1283 = vmatmul.mubr.f32.gmra.mxu0 %v1214
      %v1284 = vpop.f32.mrf.mxu0
      %v1285 = vadd.f32 %v550, %v1284
      %v1286 = vpop.f32.mrf.mxu0
      %1287 = vdwg.mxu0
      %v1288 = vsel %vm629, %v1285, -inf
      %1289 = vmax.xlane.f32.xlu0 %v1288
      %v1290 = vpop.xlane.xlu0 %1289
      %v1291 = vsub.f32 %v1285, %v1290
      %v1292 = vmul.f32 %v1291, 1.442695
      %v1293 = vpow.pop %v1292
      %v1294 = vsel %vm629, %v1293, 0.0
      %1295 = vadd.xlane.f32.xlu0 %v1294
      %v1296 = vpop.xlane.xlu0 %1295
      %v1297 = vrcp.pop %v1296
      %v1298 = vmul.f32 %v1293, %v1297
      %1299 = vrot.lane.b32.xlu0 %v532, 64
      %v1300 = vpop.permute.xlu0 %1299
      %v1303 = vsel %vm629, %v1298, 0
      %1305 = vmatprep.subr.mxu0 0.0
      %1306 = vmatpush1.msra.mxu0 0.0
      %1307 = vmatprep.subr.mxu0 0.0
      %1308 = vmatpush1.msra.mxu0 0.0
      %1309 = vmatprep.subr.mxu0 0.0
      %1310 = vmatpush1.msra.mxu0 0.0
      %1311 = vmatprep.subr.mxu0 0.0
      %1312 = vmatpush1.msra.mxu0 0.0
      %1313 = vmatprep.subr.mxu0 0.0
      %1314 = vmatpush1.msra.mxu0 0.0
      %1315 = vmatprep.subr.mxu0 0.0
      %1316 = vmatpush1.msra.mxu0 0.0
      %1317 = vmatprep.subr.mxu0 0.0
      %1318 = vmatpush1.msra.mxu0 0.0
      %1319 = vmatprep.subr.mxu0 0.0
      %1320 = vmatpush1.msra.mxu0 0.0
      %1321 = vmatprep.subr.mxu0 0.0
      %1322 = vmatpush1.msra.mxu0 0.0
      %1323 = vmatprep.subr.mxu0 0.0
      %1324 = vmatpush1.msra.mxu0 0.0
      %1325 = vmatprep.subr.mxu0 0.0
      %1326 = vmatpush1.msra.mxu0 0.0
      %1327 = vmatprep.subr.mxu0 0.0
      %1328 = vmatpush1.msra.mxu0 0.0
      %1329 = vmatprep.subr.mxu0 0.0
      %1330 = vmatpush1.msra.mxu0 0.0
      %1331 = vmatprep.subr.mxu0 0.0
      %1332 = vmatpush1.msra.mxu0 0.0
      %1333 = vmatprep.subr.mxu0 0.0
      %1334 = vmatpush1.msra.mxu0 0.0
      %1335 = vmatprep.subr.mxu0 0.0
      %1336 = vmatpush1.msra.mxu0 %v1300
      %1337 = vmatprep.subr.mxu0 0.0
      %1338 = vmatpush2.msra.mxu0 0.0
      %1339 = vmatprep.subr.mxu0 0.0
      %1340 = vmatpush2.msra.mxu0 0.0
      %1341 = vmatprep.subr.mxu0 0.0
      %1342 = vmatpush2.msra.mxu0 0.0
      %1343 = vmatprep.subr.mxu0 0.0
      %1344 = vmatpush2.msra.mxu0 0.0
      %1345 = vmatprep.subr.mxu0 0.0
      %1346 = vmatpush2.msra.mxu0 0.0
      %1347 = vmatprep.subr.mxu0 0.0
      %1348 = vmatpush2.msra.mxu0 0.0
      %1349 = vmatprep.subr.mxu0 0.0
      %1350 = vmatpush2.msra.mxu0 0.0
      %1351 = vmatprep.subr.mxu0 0.0
      %1352 = vmatpush2.msra.mxu0 0.0
      %1353 = vmatprep.subr.mxu0 0.0
      %1354 = vmatpush2.msra.mxu0 0.0
      %1355 = vmatprep.subr.mxu0 0.0
      %1356 = vmatpush2.msra.mxu0 0.0
      %1357 = vmatprep.subr.mxu0 0.0
      %1358 = vmatpush2.msra.mxu0 0.0
      %1359 = vmatprep.subr.mxu0 0.0
      %1360 = vmatpush2.msra.mxu0 0.0
      %1361 = vmatprep.subr.mxu0 0.0
      %1362 = vmatpush2.msra.mxu0 0.0
      %1363 = vmatprep.subr.mxu0 0.0
      %1364 = vmatpush2.msra.mxu0 0.0
      %1365 = vmatprep.subr.mxu0 0.0
      %1366 = vmatpush2.msra.mxu0 0.0
      %1367 = vmatprep.subr.mxu0 0.0
      %1368 = vmatpush2.msra.mxu0 0.0
      %1369 = vmatprep.mubr.f32.mxu0 0.0
      %1370 = vmatmul.mubr.f32.gmra.mxu0 %v1303
      %v1371 = vpop.f32.mrf.mxu0
      %v1372 = vadd.f32 0.0, %v1371
      %v1373 = vpop.f32.mrf.mxu0
      %1374 = vdwg.mxu0
      %1375 = vrot.lane.b32.xlu0 %v551, 48
      %v1376 = vpop.permute.xlu0 %1375
      %1377 = vrot.lane.b32.xlu0 %v530, 48
      %v1378 = vpop.permute.xlu0 %1377
      %v1379 = vsel %vm552, %v1376, 0
      %v1381 = vsel %vm552, %v1378, 0
      %1383 = vmatprep.subr.mxu0 0.0
      %1384 = vmatpush1.xpose.msra.mxu0 0.0
      %1385 = vmatprep.subr.mxu0 0.0
      %1386 = vmatpush1.xpose.msra.mxu0 0.0
      %1387 = vmatprep.subr.mxu0 0.0
      %1388 = vmatpush1.xpose.msra.mxu0 0.0
      %1389 = vmatprep.subr.mxu0 0.0
      %1390 = vmatpush1.xpose.msra.mxu0 0.0
      %1391 = vmatprep.subr.mxu0 0.0
      %1392 = vmatpush1.xpose.msra.mxu0 0.0
      %1393 = vmatprep.subr.mxu0 0.0
      %1394 = vmatpush1.xpose.msra.mxu0 0.0
      %1395 = vmatprep.subr.mxu0 0.0
      %1396 = vmatpush1.xpose.msra.mxu0 0.0
      %1397 = vmatprep.subr.mxu0 0.0
      %1398 = vmatpush1.xpose.msra.mxu0 0.0
      %1399 = vmatprep.subr.mxu0 0.0
      %1400 = vmatpush1.xpose.msra.mxu0 0.0
      %1401 = vmatprep.subr.mxu0 0.0
      %1402 = vmatpush1.xpose.msra.mxu0 0.0
      %1403 = vmatprep.subr.mxu0 0.0
      %1404 = vmatpush1.xpose.msra.mxu0 0.0
      %1405 = vmatprep.subr.mxu0 0.0
      %1406 = vmatpush1.xpose.msra.mxu0 0.0
      %1407 = vmatprep.subr.mxu0 0.0
      %1408 = vmatpush1.xpose.msra.mxu0 0.0
      %1409 = vmatprep.subr.mxu0 0.0
      %1410 = vmatpush1.xpose.msra.mxu0 0.0
      %1411 = vmatprep.subr.mxu0 0.0
      %1412 = vmatpush1.xpose.msra.mxu0 0.0
      %1413 = vmatprep.subr.mxu0 0.0
      %1414 = vmatpush1.xpose.msra.mxu0 %v1381
      %1415 = vmatprep.subr.mxu0 0.0
      %1416 = vmatpush2.xpose.msra.mxu0 0.0
      %1417 = vmatprep.subr.mxu0 0.0
      %1418 = vmatpush2.xpose.msra.mxu0 0.0
      %1419 = vmatprep.subr.mxu0 0.0
      %1420 = vmatpush2.xpose.msra.mxu0 0.0
      %1421 = vmatprep.subr.mxu0 0.0
      %1422 = vmatpush2.xpose.msra.mxu0 0.0
      %1423 = vmatprep.subr.mxu0 0.0
      %1424 = vmatpush2.xpose.msra.mxu0 0.0
      %1425 = vmatprep.subr.mxu0 0.0
      %1426 = vmatpush2.xpose.msra.mxu0 0.0
      %1427 = vmatprep.subr.mxu0 0.0
      %1428 = vmatpush2.xpose.msra.mxu0 0.0
      %1429 = vmatprep.subr.mxu0 0.0
      %1430 = vmatpush2.xpose.msra.mxu0 0.0
      %1431 = vmatprep.subr.mxu0 0.0
      %1432 = vmatpush2.xpose.msra.mxu0 0.0
      %1433 = vmatprep.subr.mxu0 0.0
      %1434 = vmatpush2.xpose.msra.mxu0 0.0
      %1435 = vmatprep.subr.mxu0 0.0
      %1436 = vmatpush2.xpose.msra.mxu0 0.0
      %1437 = vmatprep.subr.mxu0 0.0
      %1438 = vmatpush2.xpose.msra.mxu0 0.0
      %1439 = vmatprep.subr.mxu0 0.0
      %1440 = vmatpush2.xpose.msra.mxu0 0.0
      %1441 = vmatprep.subr.mxu0 0.0
      %1442 = vmatpush2.xpose.msra.mxu0 0.0
      %1443 = vmatprep.subr.mxu0 0.0
      %1444 = vmatpush2.xpose.msra.mxu0 0.0
      %1445 = vmatprep.subr.mxu0 0.0
      %1446 = vmatpush2.xpose.msra.mxu0 0.0
      %1447 = vmatprep.mubr.f32.mxu0 0.0
      %1448 = vmatmul.mubr.f32.gmra.mxu0 %v1379
      %v1449 = vpop.f32.mrf.mxu0
      %v1450 = vadd.f32 %v550, %v1449
      %v1451 = vpop.f32.mrf.mxu0
      %1452 = vdwg.mxu0
      %v1453 = vsel %vm629, %v1450, -inf
      %1454 = vmax.xlane.f32.xlu0 %v1453
      %v1455 = vpop.xlane.xlu0 %1454
      %v1456 = vsub.f32 %v1450, %v1455
      %v1457 = vmul.f32 %v1456, 1.442695
      %v1458 = vpow.pop %v1457
      %v1459 = vsel %vm629, %v1458, 0.0
      %1460 = vadd.xlane.f32.xlu0 %v1459
      %v1461 = vpop.xlane.xlu0 %1460
      %v1462 = vrcp.pop %v1461
      %v1463 = vmul.f32 %v1458, %v1462
      %1464 = vrot.lane.b32.xlu0 %v532, 48
      %v1465 = vpop.permute.xlu0 %1464
      %v1468 = vsel %vm629, %v1463, 0
      %1470 = vmatprep.subr.mxu0 0.0
      %1471 = vmatpush1.msra.mxu0 0.0
      %1472 = vmatprep.subr.mxu0 0.0
      %1473 = vmatpush1.msra.mxu0 0.0
      %1474 = vmatprep.subr.mxu0 0.0
      %1475 = vmatpush1.msra.mxu0 0.0
      %1476 = vmatprep.subr.mxu0 0.0
      %1477 = vmatpush1.msra.mxu0 0.0
      %1478 = vmatprep.subr.mxu0 0.0
      %1479 = vmatpush1.msra.mxu0 0.0
      %1480 = vmatprep.subr.mxu0 0.0
      %1481 = vmatpush1.msra.mxu0 0.0
      %1482 = vmatprep.subr.mxu0 0.0
      %1483 = vmatpush1.msra.mxu0 0.0
      %1484 = vmatprep.subr.mxu0 0.0
      %1485 = vmatpush1.msra.mxu0 0.0
      %1486 = vmatprep.subr.mxu0 0.0
      %1487 = vmatpush1.msra.mxu0 0.0
      %1488 = vmatprep.subr.mxu0 0.0
      %1489 = vmatpush1.msra.mxu0 0.0
      %1490 = vmatprep.subr.mxu0 0.0
      %1491 = vmatpush1.msra.mxu0 0.0
      %1492 = vmatprep.subr.mxu0 0.0
      %1493 = vmatpush1.msra.mxu0 0.0
      %1494 = vmatprep.subr.mxu0 0.0
      %1495 = vmatpush1.msra.mxu0 0.0
      %1496 = vmatprep.subr.mxu0 0.0
      %1497 = vmatpush1.msra.mxu0 0.0
      %1498 = vmatprep.subr.mxu0 0.0
      %1499 = vmatpush1.msra.mxu0 0.0
      %1500 = vmatprep.subr.mxu0 0.0
      %1501 = vmatpush1.msra.mxu0 %v1465
      %1502 = vmatprep.subr.mxu0 0.0
      %1503 = vmatpush2.msra.mxu0 0.0
      %1504 = vmatprep.subr.mxu0 0.0
      %1505 = vmatpush2.msra.mxu0 0.0
      %1506 = vmatprep.subr.mxu0 0.0
      %1507 = vmatpush2.msra.mxu0 0.0
      %1508 = vmatprep.subr.mxu0 0.0
      %1509 = vmatpush2.msra.mxu0 0.0
      %1510 = vmatprep.subr.mxu0 0.0
      %1511 = vmatpush2.msra.mxu0 0.0
      %1512 = vmatprep.subr.mxu0 0.0
      %1513 = vmatpush2.msra.mxu0 0.0
      %1514 = vmatprep.subr.mxu0 0.0
      %1515 = vmatpush2.msra.mxu0 0.0
      %1516 = vmatprep.subr.mxu0 0.0
      %1517 = vmatpush2.msra.mxu0 0.0
      %1518 = vmatprep.subr.mxu0 0.0
      %1519 = vmatpush2.msra.mxu0 0.0
      %1520 = vmatprep.subr.mxu0 0.0
      %1521 = vmatpush2.msra.mxu0 0.0
      %1522 = vmatprep.subr.mxu0 0.0
      %1523 = vmatpush2.msra.mxu0 0.0
      %1524 = vmatprep.subr.mxu0 0.0
      %1525 = vmatpush2.msra.mxu0 0.0
      %1526 = vmatprep.subr.mxu0 0.0
      %1527 = vmatpush2.msra.mxu0 0.0
      %1528 = vmatprep.subr.mxu0 0.0
      %1529 = vmatpush2.msra.mxu0 0.0
      %1530 = vmatprep.subr.mxu0 0.0
      %1531 = vmatpush2.msra.mxu0 0.0
      %1532 = vmatprep.subr.mxu0 0.0
      %1533 = vmatpush2.msra.mxu0 0.0
      %1534 = vmatprep.mubr.f32.mxu0 0.0
      %1535 = vmatmul.mubr.f32.gmra.mxu0 %v1468
      %v1536 = vpop.f32.mrf.mxu0
      %v1537 = vadd.f32 0.0, %v1536
      %v1538 = vpop.f32.mrf.mxu0
      %1539 = vdwg.mxu0
      %1540 = vrot.lane.b32.xlu0 %v551, 32
      %v1541 = vpop.permute.xlu0 %1540
      %1542 = vrot.lane.b32.xlu0 %v530, 32
      %v1543 = vpop.permute.xlu0 %1542
      %v1544 = vsel %vm552, %v1541, 0
      %v1546 = vsel %vm552, %v1543, 0
      %1548 = vmatprep.subr.mxu0 0.0
      %1549 = vmatpush1.xpose.msra.mxu0 0.0
      %1550 = vmatprep.subr.mxu0 0.0
      %1551 = vmatpush1.xpose.msra.mxu0 0.0
      %1552 = vmatprep.subr.mxu0 0.0
      %1553 = vmatpush1.xpose.msra.mxu0 0.0
      %1554 = vmatprep.subr.mxu0 0.0
      %1555 = vmatpush1.xpose.msra.mxu0 0.0
      %1556 = vmatprep.subr.mxu0 0.0
      %1557 = vmatpush1.xpose.msra.mxu0 0.0
      %1558 = vmatprep.subr.mxu0 0.0
      %1559 = vmatpush1.xpose.msra.mxu0 0.0
      %1560 = vmatprep.subr.mxu0 0.0
      %1561 = vmatpush1.xpose.msra.mxu0 0.0
      %1562 = vmatprep.subr.mxu0 0.0
      %1563 = vmatpush1.xpose.msra.mxu0 0.0
      %1564 = vmatprep.subr.mxu0 0.0
      %1565 = vmatpush1.xpose.msra.mxu0 0.0
      %1566 = vmatprep.subr.mxu0 0.0
      %1567 = vmatpush1.xpose.msra.mxu0 0.0
      %1568 = vmatprep.subr.mxu0 0.0
      %1569 = vmatpush1.xpose.msra.mxu0 0.0
      %1570 = vmatprep.subr.mxu0 0.0
      %1571 = vmatpush1.xpose.msra.mxu0 0.0
      %1572 = vmatprep.subr.mxu0 0.0
      %1573 = vmatpush1.xpose.msra.mxu0 0.0
      %1574 = vmatprep.subr.mxu0 0.0
      %1575 = vmatpush1.xpose.msra.mxu0 0.0
      %1576 = vmatprep.subr.mxu0 0.0
      %1577 = vmatpush1.xpose.msra.mxu0 0.0
      %1578 = vmatprep.subr.mxu0 0.0
      %1579 = vmatpush1.xpose.msra.mxu0 %v1546
      %1580 = vmatprep.subr.mxu0 0.0
      %1581 = vmatpush2.xpose.msra.mxu0 0.0
      %1582 = vmatprep.subr.mxu0 0.0
      %1583 = vmatpush2.xpose.msra.mxu0 0.0
      %1584 = vmatprep.subr.mxu0 0.0
      %1585 = vmatpush2.xpose.msra.mxu0 0.0
      %1586 = vmatprep.subr.mxu0 0.0
      %1587 = vmatpush2.xpose.msra.mxu0 0.0
      %1588 = vmatprep.subr.mxu0 0.0
      %1589 = vmatpush2.xpose.msra.mxu0 0.0
      %1590 = vmatprep.subr.mxu0 0.0
      %1591 = vmatpush2.xpose.msra.mxu0 0.0
      %1592 = vmatprep.subr.mxu0 0.0
      %1593 = vmatpush2.xpose.msra.mxu0 0.0
      %1594 = vmatprep.subr.mxu0 0.0
      %1595 = vmatpush2.xpose.msra.mxu0 0.0
      %1596 = vmatprep.subr.mxu0 0.0
      %1597 = vmatpush2.xpose.msra.mxu0 0.0
      %1598 = vmatprep.subr.mxu0 0.0
      %1599 = vmatpush2.xpose.msra.mxu0 0.0
      %1600 = vmatprep.subr.mxu0 0.0
      %1601 = vmatpush2.xpose.msra.mxu0 0.0
      %1602 = vmatprep.subr.mxu0 0.0
      %1603 = vmatpush2.xpose.msra.mxu0 0.0
      %1604 = vmatprep.subr.mxu0 0.0
      %1605 = vmatpush2.xpose.msra.mxu0 0.0
      %1606 = vmatprep.subr.mxu0 0.0
      %1607 = vmatpush2.xpose.msra.mxu0 0.0
      %1608 = vmatprep.subr.mxu0 0.0
      %1609 = vmatpush2.xpose.msra.mxu0 0.0
      %1610 = vmatprep.subr.mxu0 0.0
      %1611 = vmatpush2.xpose.msra.mxu0 0.0
      %1612 = vmatprep.mubr.f32.mxu0 0.0
      %1613 = vmatmul.mubr.f32.gmra.mxu0 %v1544
      %v1614 = vpop.f32.mrf.mxu0
      %v1615 = vadd.f32 %v550, %v1614
      %v1616 = vpop.f32.mrf.mxu0
      %1617 = vdwg.mxu0
      %v1618 = vsel %vm629, %v1615, -inf
      %1619 = vmax.xlane.f32.xlu0 %v1618
      %v1620 = vpop.xlane.xlu0 %1619
      %v1621 = vsub.f32 %v1615, %v1620
      %v1622 = vmul.f32 %v1621, 1.442695
      %v1623 = vpow.pop %v1622
      %v1624 = vsel %vm629, %v1623, 0.0
      %1625 = vadd.xlane.f32.xlu0 %v1624
      %v1626 = vpop.xlane.xlu0 %1625
      %v1627 = vrcp.pop %v1626
      %v1628 = vmul.f32 %v1623, %v1627
      %1629 = vrot.lane.b32.xlu0 %v532, 32
      %v1630 = vpop.permute.xlu0 %1629
      %v1633 = vsel %vm629, %v1628, 0
      %1635 = vmatprep.subr.mxu0 0.0
      %1636 = vmatpush1.msra.mxu0 0.0
      %1637 = vmatprep.subr.mxu0 0.0
      %1638 = vmatpush1.msra.mxu0 0.0
      %1639 = vmatprep.subr.mxu0 0.0
      %1640 = vmatpush1.msra.mxu0 0.0
      %1641 = vmatprep.subr.mxu0 0.0
      %1642 = vmatpush1.msra.mxu0 0.0
      %1643 = vmatprep.subr.mxu0 0.0
      %1644 = vmatpush1.msra.mxu0 0.0
      %1645 = vmatprep.subr.mxu0 0.0
      %1646 = vmatpush1.msra.mxu0 0.0
      %1647 = vmatprep.subr.mxu0 0.0
      %1648 = vmatpush1.msra.mxu0 0.0
      %1649 = vmatprep.subr.mxu0 0.0
      %1650 = vmatpush1.msra.mxu0 0.0
      %1651 = vmatprep.subr.mxu0 0.0
      %1652 = vmatpush1.msra.mxu0 0.0
      %1653 = vmatprep.subr.mxu0 0.0
      %1654 = vmatpush1.msra.mxu0 0.0
      %1655 = vmatprep.subr.mxu0 0.0
      %1656 = vmatpush1.msra.mxu0 0.0
      %1657 = vmatprep.subr.mxu0 0.0
      %1658 = vmatpush1.msra.mxu0 0.0
      %1659 = vmatprep.subr.mxu0 0.0
      %1660 = vmatpush1.msra.mxu0 0.0
      %1661 = vmatprep.subr.mxu0 0.0
      %1662 = vmatpush1.msra.mxu0 0.0
      %1663 = vmatprep.subr.mxu0 0.0
      %1664 = vmatpush1.msra.mxu0 0.0
      %1665 = vmatprep.subr.mxu0 0.0
      %1666 = vmatpush1.msra.mxu0 %v1630
      %1667 = vmatprep.subr.mxu0 0.0
      %1668 = vmatpush2.msra.mxu0 0.0
      %1669 = vmatprep.subr.mxu0 0.0
      %1670 = vmatpush2.msra.mxu0 0.0
      %1671 = vmatprep.subr.mxu0 0.0
      %1672 = vmatpush2.msra.mxu0 0.0
      %1673 = vmatprep.subr.mxu0 0.0
      %1674 = vmatpush2.msra.mxu0 0.0
      %1675 = vmatprep.subr.mxu0 0.0
      %1676 = vmatpush2.msra.mxu0 0.0
      %1677 = vmatprep.subr.mxu0 0.0
      %1678 = vmatpush2.msra.mxu0 0.0
      %1679 = vmatprep.subr.mxu0 0.0
      %1680 = vmatpush2.msra.mxu0 0.0
      %1681 = vmatprep.subr.mxu0 0.0
      %1682 = vmatpush2.msra.mxu0 0.0
      %1683 = vmatprep.subr.mxu0 0.0
      %1684 = vmatpush2.msra.mxu0 0.0
      %1685 = vmatprep.subr.mxu0 0.0
      %1686 = vmatpush2.msra.mxu0 0.0
      %1687 = vmatprep.subr.mxu0 0.0
      %1688 = vmatpush2.msra.mxu0 0.0
      %1689 = vmatprep.subr.mxu0 0.0
      %1690 = vmatpush2.msra.mxu0 0.0
      %1691 = vmatprep.subr.mxu0 0.0
      %1692 = vmatpush2.msra.mxu0 0.0
      %1693 = vmatprep.subr.mxu0 0.0
      %1694 = vmatpush2.msra.mxu0 0.0
      %1695 = vmatprep.subr.mxu0 0.0
      %1696 = vmatpush2.msra.mxu0 0.0
      %1697 = vmatprep.subr.mxu0 0.0
      %1698 = vmatpush2.msra.mxu0 0.0
      %1699 = vmatprep.mubr.f32.mxu0 0.0
      %1700 = vmatmul.mubr.f32.gmra.mxu0 %v1633
      %v1701 = vpop.f32.mrf.mxu0
      %v1702 = vadd.f32 0.0, %v1701
      %v1703 = vpop.f32.mrf.mxu0
      %1704 = vdwg.mxu0
      %1705 = vrot.lane.b32.xlu0 %v551, 16
      %v1706 = vpop.permute.xlu0 %1705
      %1707 = vrot.lane.b32.xlu0 %v530, 16
      %v1708 = vpop.permute.xlu0 %1707
      %v1709 = vsel %vm552, %v1706, 0
      %v1711 = vsel %vm552, %v1708, 0
      %1713 = vmatprep.subr.mxu0 0.0
      %1714 = vmatpush1.xpose.msra.mxu0 0.0
      %1715 = vmatprep.subr.mxu0 0.0
      %1716 = vmatpush1.xpose.msra.mxu0 0.0
      %1717 = vmatprep.subr.mxu0 0.0
      %1718 = vmatpush1.xpose.msra.mxu0 0.0
      %1719 = vmatprep.subr.mxu0 0.0
      %1720 = vmatpush1.xpose.msra.mxu0 0.0
      %1721 = vmatprep.subr.mxu0 0.0
      %1722 = vmatpush1.xpose.msra.mxu0 0.0
      %1723 = vmatprep.subr.mxu0 0.0
      %1724 = vmatpush1.xpose.msra.mxu0 0.0
      %1725 = vmatprep.subr.mxu0 0.0
      %1726 = vmatpush1.xpose.msra.mxu0 0.0
      %1727 = vmatprep.subr.mxu0 0.0
      %1728 = vmatpush1.xpose.msra.mxu0 0.0
      %1729 = vmatprep.subr.mxu0 0.0
      %1730 = vmatpush1.xpose.msra.mxu0 0.0
      %1731 = vmatprep.subr.mxu0 0.0
      %1732 = vmatpush1.xpose.msra.mxu0 0.0
      %1733 = vmatprep.subr.mxu0 0.0
      %1734 = vmatpush1.xpose.msra.mxu0 0.0
      %1735 = vmatprep.subr.mxu0 0.0
      %1736 = vmatpush1.xpose.msra.mxu0 0.0
      %1737 = vmatprep.subr.mxu0 0.0
      %1738 = vmatpush1.xpose.msra.mxu0 0.0
      %1739 = vmatprep.subr.mxu0 0.0
      %1740 = vmatpush1.xpose.msra.mxu0 0.0
      %1741 = vmatprep.subr.mxu0 0.0
      %1742 = vmatpush1.xpose.msra.mxu0 0.0
      %1743 = vmatprep.subr.mxu0 0.0
      %1744 = vmatpush1.xpose.msra.mxu0 %v1711
      %1745 = vmatprep.subr.mxu0 0.0
      %1746 = vmatpush2.xpose.msra.mxu0 0.0
      %1747 = vmatprep.subr.mxu0 0.0
      %1748 = vmatpush2.xpose.msra.mxu0 0.0
      %1749 = vmatprep.subr.mxu0 0.0
      %1750 = vmatpush2.xpose.msra.mxu0 0.0
      %1751 = vmatprep.subr.mxu0 0.0
      %1752 = vmatpush2.xpose.msra.mxu0 0.0
      %1753 = vmatprep.subr.mxu0 0.0
      %1754 = vmatpush2.xpose.msra.mxu0 0.0
      %1755 = vmatprep.subr.mxu0 0.0
      %1756 = vmatpush2.xpose.msra.mxu0 0.0
      %1757 = vmatprep.subr.mxu0 0.0
      %1758 = vmatpush2.xpose.msra.mxu0 0.0
      %1759 = vmatprep.subr.mxu0 0.0
      %1760 = vmatpush2.xpose.msra.mxu0 0.0
      %1761 = vmatprep.subr.mxu0 0.0
      %1762 = vmatpush2.xpose.msra.mxu0 0.0
      %1763 = vmatprep.subr.mxu0 0.0
      %1764 = vmatpush2.xpose.msra.mxu0 0.0
      %1765 = vmatprep.subr.mxu0 0.0
      %1766 = vmatpush2.xpose.msra.mxu0 0.0
      %1767 = vmatprep.subr.mxu0 0.0
      %1768 = vmatpush2.xpose.msra.mxu0 0.0
      %1769 = vmatprep.subr.mxu0 0.0
      %1770 = vmatpush2.xpose.msra.mxu0 0.0
      %1771 = vmatprep.subr.mxu0 0.0
      %1772 = vmatpush2.xpose.msra.mxu0 0.0
      %1773 = vmatprep.subr.mxu0 0.0
      %1774 = vmatpush2.xpose.msra.mxu0 0.0
      %1775 = vmatprep.subr.mxu0 0.0
      %1776 = vmatpush2.xpose.msra.mxu0 0.0
      %1777 = vmatprep.mubr.f32.mxu0 0.0
      %1778 = vmatmul.mubr.f32.gmra.mxu0 %v1709
      %v1779 = vpop.f32.mrf.mxu0
      %v1780 = vadd.f32 %v550, %v1779
      %v1781 = vpop.f32.mrf.mxu0
      %1782 = vdwg.mxu0
      %v1783 = vsel %vm629, %v1780, -inf
      %1784 = vmax.xlane.f32.xlu0 %v1783
      %v1785 = vpop.xlane.xlu0 %1784
      %v1786 = vsub.f32 %v1780, %v1785
      %v1787 = vmul.f32 %v1786, 1.442695
      %v1788 = vpow.pop %v1787
      %v1789 = vsel %vm629, %v1788, 0.0
      %1790 = vadd.xlane.f32.xlu0 %v1789
      %v1791 = vpop.xlane.xlu0 %1790
      %v1792 = vrcp.pop %v1791
      %v1793 = vmul.f32 %v1788, %v1792
      %1794 = vrot.lane.b32.xlu0 %v532, 16
      %v1795 = vpop.permute.xlu0 %1794
      %v1798 = vsel %vm629, %v1793, 0
      %1800 = vmatprep.subr.mxu0 0.0
      %1801 = vmatpush1.msra.mxu0 0.0
      %1802 = vmatprep.subr.mxu0 0.0
      %1803 = vmatpush1.msra.mxu0 0.0
      %1804 = vmatprep.subr.mxu0 0.0
      %1805 = vmatpush1.msra.mxu0 0.0
      %1806 = vmatprep.subr.mxu0 0.0
      %1807 = vmatpush1.msra.mxu0 0.0
      %1808 = vmatprep.subr.mxu0 0.0
      %1809 = vmatpush1.msra.mxu0 0.0
      %1810 = vmatprep.subr.mxu0 0.0
      %1811 = vmatpush1.msra.mxu0 0.0
      %1812 = vmatprep.subr.mxu0 0.0
      %1813 = vmatpush1.msra.mxu0 0.0
      %1814 = vmatprep.subr.mxu0 0.0
      %1815 = vmatpush1.msra.mxu0 0.0
      %1816 = vmatprep.subr.mxu0 0.0
      %1817 = vmatpush1.msra.mxu0 0.0
      %1818 = vmatprep.subr.mxu0 0.0
      %1819 = vmatpush1.msra.mxu0 0.0
      %1820 = vmatprep.subr.mxu0 0.0
      %1821 = vmatpush1.msra.mxu0 0.0
      %1822 = vmatprep.subr.mxu0 0.0
      %1823 = vmatpush1.msra.mxu0 0.0
      %1824 = vmatprep.subr.mxu0 0.0
      %1825 = vmatpush1.msra.mxu0 0.0
      %1826 = vmatprep.subr.mxu0 0.0
      %1827 = vmatpush1.msra.mxu0 0.0
      %1828 = vmatprep.subr.mxu0 0.0
      %1829 = vmatpush1.msra.mxu0 0.0
      %1830 = vmatprep.subr.mxu0 0.0
      %1831 = vmatpush1.msra.mxu0 %v1795
      %1832 = vmatprep.subr.mxu0 0.0
      %1833 = vmatpush2.msra.mxu0 0.0
      %1834 = vmatprep.subr.mxu0 0.0
      %1835 = vmatpush2.msra.mxu0 0.0
      %1836 = vmatprep.subr.mxu0 0.0
      %1837 = vmatpush2.msra.mxu0 0.0
      %1838 = vmatprep.subr.mxu0 0.0
      %1839 = vmatpush2.msra.mxu0 0.0
      %1840 = vmatprep.subr.mxu0 0.0
      %1841 = vmatpush2.msra.mxu0 0.0
      %1842 = vmatprep.subr.mxu0 0.0
      %1843 = vmatpush2.msra.mxu0 0.0
      %1844 = vmatprep.subr.mxu0 0.0
      %1845 = vmatpush2.msra.mxu0 0.0
      %1846 = vmatprep.subr.mxu0 0.0
      %1847 = vmatpush2.msra.mxu0 0.0
      %1848 = vmatprep.subr.mxu0 0.0
      %1849 = vmatpush2.msra.mxu0 0.0
      %1850 = vmatprep.subr.mxu0 0.0
      %1851 = vmatpush2.msra.mxu0 0.0
      %1852 = vmatprep.subr.mxu0 0.0
      %1853 = vmatpush2.msra.mxu0 0.0
      %1854 = vmatprep.subr.mxu0 0.0
      %1855 = vmatpush2.msra.mxu0 0.0
      %1856 = vmatprep.subr.mxu0 0.0
      %1857 = vmatpush2.msra.mxu0 0.0
      %1858 = vmatprep.subr.mxu0 0.0
      %1859 = vmatpush2.msra.mxu0 0.0
      %1860 = vmatprep.subr.mxu0 0.0
      %1861 = vmatpush2.msra.mxu0 0.0
      %1862 = vmatprep.subr.mxu0 0.0
      %1863 = vmatpush2.msra.mxu0 0.0
      %1864 = vmatprep.mubr.f32.mxu0 0.0
      %1865 = vmatmul.mubr.f32.gmra.mxu0 %v1798
      %v1866 = vpop.f32.mrf.mxu0
      %v1867 = vadd.f32 0.0, %v1866
      %v1868 = vpop.f32.mrf.mxu0
      %1869 = vdwg.mxu0
      %1871 = vrot.lane.b32.xlu0 %v877, 16
      %v1872 = vpop.permute.xlu0 %1871
      %1875 = vrot.lane.b32.xlu0 %v1042, 32
      %v1876 = vpop.permute.xlu0 %1875
      %1879 = vrot.lane.b32.xlu0 %v1207, 48
      %v1880 = vpop.permute.xlu0 %1879
      %1883 = vrot.lane.b32.xlu0 %v1372, 64
      %v1884 = vpop.permute.xlu0 %1883
      %1887 = vrot.lane.b32.xlu0 %v1537, 80
      %v1888 = vpop.permute.xlu0 %1887
      %1891 = vrot.lane.b32.xlu0 %v1702, 96
      %v1892 = vpop.permute.xlu0 %1891
      %1895 = vrot.lane.b32.xlu0 %v1867, 112
      %v1896 = vpop.permute.xlu0 %1895
      %v1898 = vsel %vm552, %v711, %v1872
      %vm1899 = vcmask 261120
      %v1900 = vsel %vm1899, %v1898, %v1876
      %vm1901 = vcmask 392192
      %v1902 = vsel %vm1901, %v1900, %v1880
      %vm1903 = vcmask 523264
      %v1904 = vsel %vm1903, %v1902, %v1884
      %vm1905 = vcmask 654336
      %v1906 = vsel %vm1905, %v1904, %v1888
      %vm1907 = vcmask 785408
      %v1908 = vsel %vm1907, %v1906, %v1892
      %vm1909 = vcmask 916480
      %v1910 = vsel %vm1909, %v1908, %v1896
      %v1911 = vpack.c.bf16 %v1910, %v1910
      %v1912 = vld [vmem:[%s6] sm:$0xff]
      %v1913 = vld [vmem:[%s6 + $0x8] sm:$0xff]
      %v1914 = vld [vmem:[%s6 + $0x10] sm:$0xff]
      %v1915 = vld [vmem:[%s6 + $0x18] sm:$0xff]
      %v1916 = vld [vmem:[%s6 + $0x20] sm:$0xff]
      %v1917 = vld [vmem:[%s6 + $0x28] sm:$0xff]
      %v1918 = vld [vmem:[%s6 + $0x30] sm:$0xff]
      %v1919 = vld [vmem:[%s6 + $0x38] sm:$0xff]
      %v1920 = vld [vmem:[%s6 + $0x40] sm:$0xff]
      %v1921 = vld [vmem:[%s6 + $0x48] sm:$0xff]
      %v1922 = vld [vmem:[%s6 + $0x50] sm:$0xff]
      %v1923 = vld [vmem:[%s6 + $0x58] sm:$0xff]
      %v1924 = vld [vmem:[%s6 + $0x60] sm:$0xff]
      %v1925 = vld [vmem:[%s6 + $0x68] sm:$0xff]
      %v1926 = vld [vmem:[%s6 + $0x70] sm:$0xff]
      %v1927 = vld [vmem:[%s6 + $0x78] sm:$0xff]
      %v1928 = vpack.c.bf16 %v1913, %v1912
      %v1929 = vpack.c.bf16 %v1915, %v1914
      %v1930 = vpack.c.bf16 %v1917, %v1916
      %v1931 = vpack.c.bf16 %v1919, %v1918
      %v1932 = vpack.c.bf16 %v1921, %v1920
      %v1933 = vpack.c.bf16 %v1923, %v1922
      %v1934 = vpack.c.bf16 %v1925, %v1924
      %v1935 = vpack.c.bf16 %v1927, %v1926
      %v1936 = vld [vmem:[%s7] sm:$0x1]
      %v1938 = vlaneseq
      %v1939 = vshrl.u32 %v1938, 7
      %v1940 = vsub.s32 0, %v1939
      %v1941 = vrot.slane %v1936, %v1940
      %1943 = vmatprep.subr.bf16.mxu0 0
      %1944 = vmatpush1.bf16.msra.mxu0 %v1935
      %1945 = vmatprep.subr.bf16.mxu0 0
      %1946 = vmatpush1.bf16.msra.mxu0 %v1934
      %1947 = vmatprep.subr.bf16.mxu0 0
      %1948 = vmatpush1.bf16.msra.mxu0 %v1933
      %1949 = vmatprep.subr.bf16.mxu0 0
      %1950 = vmatpush1.bf16.msra.mxu0 %v1932
      %1951 = vmatprep.subr.bf16.mxu0 0
      %1952 = vmatpush1.bf16.msra.mxu0 %v1931
      %1953 = vmatprep.subr.bf16.mxu0 0
      %1954 = vmatpush1.bf16.msra.mxu0 %v1930
      %1955 = vmatprep.subr.bf16.mxu0 0
      %1956 = vmatpush1.bf16.msra.mxu0 %v1929
      %1957 = vmatprep.subr.bf16.mxu0 0
      %1958 = vmatpush1.bf16.msra.mxu0 %v1928
      %1959 = vmatprep.subr.bf16.mxu0 0
      %1960 = vmatpush2.bf16.msra.mxu0 0
      %1961 = vmatprep.subr.bf16.mxu0 0
      %1962 = vmatpush2.bf16.msra.mxu0 0
      %1963 = vmatprep.subr.bf16.mxu0 0
      %1964 = vmatpush2.bf16.msra.mxu0 0
      %1965 = vmatprep.subr.bf16.mxu0 0
      %1966 = vmatpush2.bf16.msra.mxu0 0
      %1967 = vmatprep.subr.bf16.mxu0 0
      %1968 = vmatpush2.bf16.msra.mxu0 0
      %1969 = vmatprep.subr.bf16.mxu0 0
      %1970 = vmatpush2.bf16.msra.mxu0 0
      %1971 = vmatprep.subr.bf16.mxu0 0
      %1972 = vmatpush2.bf16.msra.mxu0 0
      %1973 = vmatprep.subr.bf16.mxu0 0
      %1974 = vmatpush2.bf16.msra.mxu0 0
      %1975 = vmatprep.mubr.bf16.mxu0 0
      %1976 = vmatmul.mubr.bf16.gmra.mxu0 %v1911
      %v1977 = vpop.f32.mrf.mxu0
      %v1978 = vadd.f32 %v1941, %v1977
      %v1979 = vpop.f32.mrf.mxu0
      %v1980 = vpop.f32.mrf.mxu0
      %v1981 = vpop.f32.mrf.mxu0
      %1982 = vdwg.mxu0
      %1983 = vst [vmem:[%s358] sm:$0xff] %v1978
      %p1984 = scmp.lt.s32.totalorder %s20, 1
      %s1985 = scalar_select %p1984, %s20, 1
      %s1986 = smul.addr %s1985, 8
      %s1987 = scalar_lea.vmem %s9, %s1986
      // Predicated region
      $region57: #{one2one_forward.32} parent=55 // pred_check
        %p1988 = pneg %p242
      $region58: #{one2one_forward.32} parent=55 // pred_check_branch
        %1990 = sbr.rel (%p1988) target = $region60
      $region59: #{one2one_forward.32} parent=55 // pred_region
        _
      $region60: #{one2one_forward.32} parent=55 // pred_fallthru
        _
    $region56: #{one2one_forward.32} parent=5 // pred_fallthru
      _
    %p1991 = scmp.le.s32.totalorder 2, %s15
    // Predicated region
    $region61: #{one2one_forward.32} parent=5 // pred_check
      %p1992 = pneg %p1991
    $region62: #{one2one_forward.32} parent=5 // pred_check_branch
      %1994 = sbr.rel (%p1992) target = $region64
    $region63: #{one2one_forward.32} parent=5 // pred_region
      %s1995 = ssub.s32 %s15, 2
      // Predicated region
      $region65: #{one2one_forward.32} parent=63 // pred_check
        %p1996 = pneg %p248
      $region66: #{one2one_forward.32} parent=63 // pred_check_branch
        %1998 = sbr.rel (%p1996) target = $region68
      $region67: #{one2one_forward.32} parent=63 // pred_region
        %p1999 = scmp.lt.s32.totalorder %s21, 1
        %s2000 = scalar_select %p1999, %s21, 1
        %s2001 = smul.addr %s2000, 8
        %s2002 = scalar_lea.vmem %s9, %s2001
      $region68: #{one2one_forward.32} parent=63 // pred_fallthru
        _
    $region64: #{one2one_forward.32} parent=5 // pred_fallthru
      _
  $region6: #{one2one_forward.32} parent=0 // loop_footer
    %s19 = sadd.s32 1, %s15
  $region7: #{one2one_forward.32} parent=0 // loop_footer_branch
    %14 = sbr.rel target = $region3
  $region8: #{one2one_forward.32} parent=0 // loop_exit
    _

</llo_original>
